<compile_context>
chip_gen: v7x
topology: tpu7x:2x2x1
jax: 0.10.0
libtpu: 0.0.40
codegen_flags: <defaults>
</compile_context>

<pallas_src>
import functools

import jax
import jax.numpy as jnp
from jax import lax
from jax.experimental import pallas as pl
from jax.experimental.pallas import tpu as pltpu

VOCAB_SIZE = 39
HIDDEN_SIZE = 256
N_LAYERS = 2
VOCAB_PAD = 128   # lane-dense padded input-feature dim
HEAD_PAD = 128    # lane-dense padded linear-head output dim


# ---------------------------------------------------------------------------
# Fused Pallas kernel: 2 LSTM layers (wavefront) + Linear + Sigmoid in one call
# ---------------------------------------------------------------------------
def _fused_lstm_kernel(x_ref,                       # (S*Bp, VOCAB_PAD) f32, time-major
                       h0_ref, c0_ref,              # (2, Bp, H) f32
                       wih1_ref, whh1_ref, b1_ref,  # (VOCAB_PAD,4H) bf16, (H,4H) bf16, (1,4H) f32
                       w2_ref, b2_ref,              # (2H,4H) bf16 [Wih2;Whh2], (1,4H) f32
                       wlin_ref, blin_ref,          # (H, HEAD_PAD) bf16, (1, HEAD_PAD) f32
                       sig_ref,                     # (Bp, HEAD_PAD) f32
                       hN_ref, cN_ref,              # (2, Bp, H) f32
                       gx_sc,                       # (S, Bp, 4H) f32 scratch: hoisted x-proj
                       *, S, Bp, H, unroll):
    bf16 = jnp.bfloat16

    # ---- Layer 1 input projection, hoisted out of the recurrence (one big bf16 matmul) ----
    xg = jnp.dot(x_ref[...].astype(bf16), wih1_ref[...],
                 preferred_element_type=jnp.float32)            # (S*Bp, 4H) f32
    gx_sc[...] = xg.reshape(S, Bp, 4 * H) + b1_ref[...]

    def gate_math(gates, c):
        # gates: (Bp, 4H) f32 preactivations in PyTorch [i, f, g, o] order.
        if_sig = pl.reciprocal(1.0 + jnp.exp(-gates[:, 0:2 * H]), approx=True)  # (Bp, 2H)
        i_g = if_sig[:, 0:H]
        f_g = if_sig[:, H:2 * H]
        g_g = jnp.tanh(gates[:, 2 * H:3 * H])
        o_g = pl.reciprocal(1.0 + jnp.exp(-gates[:, 3 * H:4 * H]), approx=True)
        c_new = f_g * c + i_g * g_g
        h_new = o_g * jnp.tanh(c_new)
        return h_new, c_new

    def l1_step(t, h1, c1):
        gates = gx_sc[t] + jnp.dot(h1.astype(bf16), whh1_ref[...],
                                   preferred_element_type=jnp.float32)          # (Bp, 4H)
        return gate_math(gates, c1)

    def l2_step(h1_in, h2, c2):
        h12 = jnp.concatenate([h1_in, h2], axis=1).astype(bf16)                 # (Bp, 2H)
        gates = jnp.dot(h12, w2_ref[...],
                        preferred_element_type=jnp.float32) + b2_ref[...]       # (Bp, 4H)
        return gate_math(gates, c2)

    # ---- Wavefront recurrence: iteration k does L1 step k and L2 step k-1 ----
    h1, c1 = l1_step(0, h0_ref[0], c0_ref[0])          # prologue: L1 step 0
    h2, c2 = h0_ref[1], c0_ref[1]

    def body(k, carry):
        h1, c1, h2, c2 = carry
        h2n, c2n = l2_step(h1, h2, c2)                  # L2 step k-1 (uses old h1 = h1_{k-1})
        h1n, c1n = l1_step(k, h1, c1)                   # L1 step k   (independent of L2 step)
        return h1n, c1n, h2n, c2n

    h1, c1, h2, c2 = lax.fori_loop(1, S, body, (h1, c1, h2, c2), unroll=unroll)

    h2, c2 = l2_step(h1, h2, c2)                        # epilogue: L2 step S-1

    # ---- Final Linear + Sigmoid on the last timestep's top-layer hidden state ----
    z = jnp.dot(h2.astype(bf16), wlin_ref[...],
                preferred_element_type=jnp.float32) + blin_ref[...]
    sig_ref[...] = jax.nn.sigmoid(z)                    # exact sigmoid for the visible output

    # Final states written exactly once.
    hN_ref[0] = h1
    hN_ref[1] = h2
    cN_ref[0] = c1
    cN_ref[1] = c2


def fused_lstm_forward(x_flat, h0, c0, params, *, S, Bp, H):
    """x_flat: (S*Bp, VOCAB_PAD) f32; h0, c0: (2, Bp, H) f32.
    Returns (sig (Bp, HEAD_PAD), hN (2,Bp,H), cN (2,Bp,H))."""
    # Bounded unroll: full for short sequences, partial for long ones.
    trip = max(S - 1, 1)
    unroll = trip if trip <= 16 else 8

    kernel = functools.partial(_fused_lstm_kernel, S=S, Bp=Bp, H=H, unroll=unroll)

    out_shapes = (
        jax.ShapeDtypeStruct((Bp, HEAD_PAD), jnp.float32),
        jax.ShapeDtypeStruct((N_LAYERS, Bp, H), jnp.float32),
        jax.ShapeDtypeStruct((N_LAYERS, Bp, H), jnp.float32),
    )

    # Explicit VMEM budget (inputs + outputs + scratch, x2 headroom), capped at v7x physical.
    operands = (x_flat, h0, c0,
                params["wih1"], params["whh1"], params["b1"],
                params["w2"], params["b2"],
                params["wlin"], params["blin"])
    n_bytes = sum(int(a.size) * a.dtype.itemsize for a in operands)
    n_bytes += Bp * HEAD_PAD * 4 + 2 * N_LAYERS * Bp * H * 4 * 2   # outputs
    n_bytes += S * Bp * 4 * H * 4                                  # gx scratch
    vmem_limit = int(min(64 * 1024 * 1024, max(2 * n_bytes + (4 << 20), 16 << 20)))

    # TODO(synk): for long sequences, add a time-chunk grid axis ("arbitrary") carrying
    #             (h1,c1,h2,c2) in scratch so VMEM stays bounded (v7x has only 64 MiB).
    # TODO(synk): for large batches on v7x, shard padded-batch tiles across the two
    #             TensorCores via a leading "parallel" grid axis; at B=2 single-core wins.
    return pl.pallas_call(
        kernel,
        out_shape=out_shapes,
        scratch_shapes=[
            pltpu.VMEM((S, Bp, 4 * H), jnp.float32),   # hoisted layer-1 gate projections
        ],
        compiler_params=pltpu.CompilerParams(vmem_limit_bytes=vmem_limit),
    )(*operands)


# ---------------------------------------------------------------------------
# Parameter init (deterministic, PyTorch-LSTM-style uniform(-1/sqrt(H), 1/sqrt(H)))
# Weights are stored pre-transposed, lane-padded and bf16 for the kernel.
# ---------------------------------------------------------------------------
def init_params(key, vocab=VOCAB_SIZE, hidden=HIDDEN_SIZE):
    k = 1.0 / jnp.sqrt(jnp.float32(hidden))
    params = {}

    # layer 1
    key, k1, k2, k3, k4 = jax.random.split(key, 5)
    w_ih1 = jax.random.uniform(k1, (4 * hidden, vocab), jnp.float32, -k, k)
    w_hh1 = jax.random.uniform(k2, (4 * hidden, hidden), jnp.float32, -k, k)
    b_ih1 = jax.random.uniform(k3, (4 * hidden,), jnp.float32, -k, k)
    b_hh1 = jax.random.uniform(k4, (4 * hidden,), jnp.float32, -k, k)
    wih1_t = jnp.pad(jnp.transpose(w_ih1), ((0, VOCAB_PAD - vocab), (0, 0)))   # (VOCAB_PAD,4H)
    params["wih1"] = wih1_t.astype(jnp.bfloat16)
    params["whh1"] = jnp.transpose(w_hh1).astype(jnp.bfloat16)                 # (H, 4H)
    params["b1"] = (b_ih1 + b_hh1).reshape(1, 4 * hidden)                      # f32

    # layer 2 — stacked [Wih2^T ; Whh2^T] for the fused (Bp,2H)@(2H,4H) gate matmul
    key, k1, k2, k3, k4 = jax.random.split(key, 5)
    w_ih2 = jax.random.uniform(k1, (4 * hidden, hidden), jnp.float32, -k, k)
    w_hh2 = jax.random.uniform(k2, (4 * hidden, hidden), jnp.float32, -k, k)
    b_ih2 = jax.random.uniform(k3, (4 * hidden,), jnp.float32, -k, k)
    b_hh2 = jax.random.uniform(k4, (4 * hidden,), jnp.float32, -k, k)
    params["w2"] = jnp.concatenate(
        [jnp.transpose(w_ih2), jnp.transpose(w_hh2)], axis=0).astype(jnp.bfloat16)  # (2H,4H)
    params["b2"] = (b_ih2 + b_hh2).reshape(1, 4 * hidden)                      # f32

    # linear head
    key, k5, k6 = jax.random.split(key, 3)
    w_lin = jax.random.uniform(k5, (1, hidden), jnp.float32, -k, k)
    b_lin = jax.random.uniform(k6, (1,), jnp.float32, -k, k)
    params["wlin"] = jnp.pad(jnp.transpose(w_lin),
                             ((0, 0), (0, HEAD_PAD - 1))).astype(jnp.bfloat16)  # (H, HEAD_PAD)
    params["blin"] = jnp.pad(b_lin.reshape(1, 1), ((0, 0), (0, HEAD_PAD - 1)))  # (1, HEAD_PAD)
    return params


# ---------------------------------------------------------------------------
# Forward pass matching lstm_name.forward
# ---------------------------------------------------------------------------
@jax.jit
def lstm_name_forward(ip, hidden, params):
    """ip: (B, S, vocab) f32; hidden = (h0, c0) each (n_layers, B, H).
    Returns (sig_out (B,), (h_n, c_n))."""
    h0, c0 = hidden
    B, S, V = ip.shape
    H = HIDDEN_SIZE
    Bp = max(8, ((B + 7) // 8) * 8)                     # sublane-aligned batch

    # time-major, pad batch to Bp and vocab to VOCAB_PAD, flatten to (S*Bp, VOCAB_PAD)
    x = jnp.transpose(ip, (1, 0, 2))                    # (S, B, V)
    x = jnp.pad(x, ((0, 0), (0, Bp - B), (0, VOCAB_PAD - V)))
    x_flat = x.reshape(S * Bp, VOCAB_PAD)

    h0p = jnp.pad(h0, ((0, 0), (0, Bp - B), (0, 0)))
    c0p = jnp.pad(c0, ((0, 0), (0, Bp - B), (0, 0)))

    sig, h_n, c_n = fused_lstm_forward(x_flat, h0p, c0p, params, S=S, Bp=Bp, H=H)

    sig_out = sig[:B, 0]                                # == sig_out.view(B, -1)[:, -1]
    return sig_out, (h_n[:, :B, :], c_n[:, :B, :])


# ---------------------------------------------------------------------------
# Pure-JAX f32 reference (same bf16-rounded weights, exact math) for validation
# ---------------------------------------------------------------------------
def reference_forward(ip, hidden, params):
    h0, c0 = hidden
    B, S, V = ip.shape
    H = HIDDEN_SIZE
    wih1 = params["wih1"].astype(jnp.float32)[:V]       # (V, 4H)
    whh1 = params["whh1"].astype(jnp.float32)           # (H, 4H)
    b1 = params["b1"][0]
    w2 = params["w2"].astype(jnp.float32)
    wih2, whh2 = w2[:H], w2[H:]
    b2 = params["b2"][0]
    wlin = params["wlin"].astype(jnp.float32)[:, :1]    # (H, 1)
    blin = params["blin"][0, 0]

    def lstm_layer(x_seq, h, c, wih, whh, b):
        def step(carry, x_t):
            h, c = carry
            g = x_t @ wih + h @ whh + b
            i = jax.nn.sigmoid(g[:, :H])
            f = jax.nn.sigmoid(g[:, H:2 * H])
            gg = jnp.tanh(g[:, 2 * H:3 * H])
            o = jax.nn.sigmoid(g[:, 3 * H:])
            c = f * c + i * gg
            h = o * jnp.tanh(c)
            return (h, c), h
        (h, c), hs = lax.scan(step, (h, c), x_seq)
        return hs, h, c

    x_seq = jnp.transpose(ip, (1, 0, 2))                # (S, B, V)
    hs1, h1, c1 = lstm_layer(x_seq, h0[0], c0[0], wih1, whh1, b1)
    hs2, h2, c2 = lstm_layer(hs1, h0[1], c0[1], wih2, whh2, b2)
    sig = jax.nn.sigmoid(hs2[-1] @ wlin + blin)[:, 0]
    return sig, (jnp.stack([h1, h2]), jnp.stack([c1, c2]))


if __name__ == "__main__":
    key = jax.random.PRNGKey(0)
    kp, kx = jax.random.split(key)

    B, S = 2, 8
    params = init_params(kp)

    ip = jax.random.normal(kx, (B, S, VOCAB_SIZE), jnp.float32)
    h0 = jnp.zeros((N_LAYERS, B, HIDDEN_SIZE), jnp.float32)
    c0 = jnp.zeros((N_LAYERS, B, HIDDEN_SIZE), jnp.float32)

    sig_out, (h_n, c_n) = lstm_name_forward(ip, (h0, c0), params)
    jax.block_until_ready((sig_out, h_n, c_n))

    assert sig_out.shape == (B,)
    assert h_n.shape == (N_LAYERS, B, HIDDEN_SIZE)
    assert c_n.shape == (N_LAYERS, B, HIDDEN_SIZE)
    assert bool(jnp.all(jnp.isfinite(sig_out)))
    assert bool(jnp.all(sig_out > 0.0)) and bool(jnp.all(sig_out < 1.0))

    # Loose-tolerance check against an f32 reference (bf16 matmuls + approx sigmoid drift).
    sig_ref, (h_ref, c_ref) = reference_forward(ip, (h0, c0), params)
    assert float(jnp.max(jnp.abs(sig_out - sig_ref))) < 7.5e-2
    assert float(jnp.max(jnp.abs(h_n - h_ref))) < 7.5e-2
    assert float(jnp.max(jnp.abs(c_n - c_ref))) < 1.5e-1

    print("KERNEL_OK")
</pallas_src>

<mosaic_0001>
module attributes {stable_mosaic.version = 11 : i64} {
  func.func @_fused_lstm_kernel(%arg0: memref<64x128xf32, #tpu.memory_space<vmem>>, %arg1: memref<2x8x256xf32, #tpu.memory_space<vmem>>, %arg2: memref<2x8x256xf32, #tpu.memory_space<vmem>>, %arg3: memref<128x1024xbf16, #tpu.memory_space<vmem>>, %arg4: memref<256x1024xbf16, #tpu.memory_space<vmem>>, %arg5: memref<1x1024xf32, #tpu.memory_space<vmem>>, %arg6: memref<512x1024xbf16, #tpu.memory_space<vmem>>, %arg7: memref<1x1024xf32, #tpu.memory_space<vmem>>, %arg8: memref<256x128xbf16, #tpu.memory_space<vmem>>, %arg9: memref<1x128xf32, #tpu.memory_space<vmem>>, %arg10: memref<8x128xf32, #tpu.memory_space<vmem>>, %arg11: memref<2x8x256xf32, #tpu.memory_space<vmem>>, %arg12: memref<2x8x256xf32, #tpu.memory_space<vmem>>, %arg13: memref<8x8x1024xf32, #tpu.memory_space<vmem>>) attributes {dimension_semantics = [], scalar_prefetch = 0 : i64, scratch_operands = 1 : i64, tpu.core_type = #tpu.core_type<tc>} {
    %c0 = arith.constant 0 : index
    %c0_0 = arith.constant 0 : index
    %0 = vector.load %arg0[%c0, %c0_0] : memref<64x128xf32, #tpu.memory_space<vmem>>, vector<64x128xf32>
    %1 = arith.truncf %0 : vector<64x128xf32> to vector<64x128xbf16>
    %c0_1 = arith.constant 0 : index
    %c0_2 = arith.constant 0 : index
    %2 = vector.load %arg3[%c0_1, %c0_2] : memref<128x1024xbf16, #tpu.memory_space<vmem>>, vector<128x1024xbf16>
    %cst = arith.constant dense<0.000000e+00> : vector<64x1024xf32>
    %3 = tpu.matmul %1, %2, %cst {dimension_numbers = #tpu.dot_dimension_numbers<[1], [0], [0], [1], [0, 0, 1, 1], [], []>} : vector<64x128xbf16>, vector<128x1024xbf16>, vector<64x1024xf32> -> vector<64x1024xf32>
    %4 = vector.shape_cast %3 : vector<64x1024xf32> to vector<8x8x1024xf32>
    %c0_3 = arith.constant 0 : index
    %c0_4 = arith.constant 0 : index
    %5 = vector.load %arg5[%c0_3, %c0_4] : memref<1x1024xf32, #tpu.memory_space<vmem>>, vector<1x1024xf32>
    %6 = vector.shape_cast %5 : vector<1x1024xf32> to vector<1x1x1024xf32>
    %7 = vector.broadcast %6 : vector<1x1x1024xf32> to vector<8x8x1024xf32>
    %8 = arith.addf %4, %7 : vector<8x8x1024xf32>
    %c0_5 = arith.constant 0 : index
    %c0_6 = arith.constant 0 : index
    %c0_7 = arith.constant 0 : index
    %9 = vector.load %arg13[%c0_5, %c0_6, %c0_7] : memref<8x8x1024xf32, #tpu.memory_space<vmem>>, vector<8x8x1024xf32>
    tpu.vector_store %arg13[%c0_5, %c0_6, %c0_7], %8 {strides = array<i32>} : memref<8x8x1024xf32, #tpu.memory_space<vmem>>, vector<8x8x1024xf32>,
    %c0_8 = arith.constant 0 : index
    %c0_9 = arith.constant 0 : index
    %c0_10 = arith.constant 0 : index
    %10 = vector.load %arg1[%c0_8, %c0_9, %c0_10] : memref<2x8x256xf32, #tpu.memory_space<vmem>>, vector<1x8x256xf32>
    %11 = vector.shape_cast %10 : vector<1x8x256xf32> to vector<8x256xf32>
    %c0_11 = arith.constant 0 : index
    %c0_12 = arith.constant 0 : index
    %c0_13 = arith.constant 0 : index
    %12 = vector.load %arg2[%c0_11, %c0_12, %c0_13] : memref<2x8x256xf32, #tpu.memory_space<vmem>>, vector<1x8x256xf32>
    %13 = vector.shape_cast %12 : vector<1x8x256xf32> to vector<8x256xf32>
    %c0_14 = arith.constant 0 : index
    %c0_15 = arith.constant 0 : index
    %c0_16 = arith.constant 0 : index
    %14 = vector.load %arg13[%c0_14, %c0_15, %c0_16] : memref<8x8x1024xf32, #tpu.memory_space<vmem>>, vector<1x8x1024xf32>
    %15 = vector.shape_cast %14 : vector<1x8x1024xf32> to vector<8x1024xf32>
    %16 = arith.truncf %11 : vector<8x256xf32> to vector<8x256xbf16>
    %c0_17 = arith.constant 0 : index
    %c0_18 = arith.constant 0 : index
    %17 = vector.load %arg4[%c0_17, %c0_18] : memref<256x1024xbf16, #tpu.memory_space<vmem>>, vector<256x1024xbf16>
    %cst_19 = arith.constant dense<0.000000e+00> : vector<8x1024xf32>
    %18 = tpu.matmul %16, %17, %cst_19 {dimension_numbers = #tpu.dot_dimension_numbers<[1], [0], [0], [1], [0, 0, 1, 1], [], []>} : vector<8x256xbf16>, vector<256x1024xbf16>, vector<8x1024xf32> -> vector<8x1024xf32>
    %19 = arith.addf %15, %18 : vector<8x1024xf32>
    %20 = vector.extract_strided_slice %19 {offsets = [0, 0], sizes = [8, 512], strides = [1, 1]} : vector<8x1024xf32> to vector<8x512xf32>
    %cst_20 = arith.constant 0.000000e+00 : f32
    %21 = vector.broadcast %cst_20 : f32 to vector<8x512xf32>
    %22 = arith.subf %21, %20 : vector<8x512xf32>
    %23 = math.exp %22 : vector<8x512xf32>
    %cst_21 = arith.constant 1.000000e+00 : f32
    %24 = vector.broadcast %cst_21 : f32 to vector<8x512xf32>
    %25 = arith.addf %24, %23 : vector<8x512xf32>
    %26 = tpu.reciprocal %25 {approx = true} : vector<8x512xf32> -> vector<8x512xf32>
    %27 = vector.extract_strided_slice %26 {offsets = [0, 0], sizes = [8, 256], strides = [1, 1]} : vector<8x512xf32> to vector<8x256xf32>
    %28 = vector.extract_strided_slice %26 {offsets = [0, 256], sizes = [8, 256], strides = [1, 1]} : vector<8x512xf32> to vector<8x256xf32>
    %29 = vector.extract_strided_slice %19 {offsets = [0, 512], sizes = [8, 256], strides = [1, 1]} : vector<8x1024xf32> to vector<8x256xf32>
    %30 = math.tanh %29 : vector<8x256xf32>
    %31 = vector.extract_strided_slice %19 {offsets = [0, 768], sizes = [8, 256], strides = [1, 1]} : vector<8x1024xf32> to vector<8x256xf32>
    %cst_22 = arith.constant 0.000000e+00 : f32
    %32 = vector.broadcast %cst_22 : f32 to vector<8x256xf32>
    %33 = arith.subf %32, %31 : vector<8x256xf32>
    %34 = math.exp %33 : vector<8x256xf32>
    %cst_23 = arith.constant 1.000000e+00 : f32
    %35 = vector.broadcast %cst_23 : f32 to vector<8x256xf32>
    %36 = arith.addf %35, %34 : vector<8x256xf32>
    %37 = tpu.reciprocal %36 {approx = true} : vector<8x256xf32> -> vector<8x256xf32>
    %38 = arith.mulf %28, %13 : vector<8x256xf32>
    %39 = arith.mulf %27, %30 : vector<8x256xf32>
    %40 = arith.addf %38, %39 : vector<8x256xf32>
    %41 = math.tanh %40 : vector<8x256xf32>
    %42 = arith.mulf %37, %41 : vector<8x256xf32>
    %c1 = arith.constant 1 : index
    %c0_24 = arith.constant 0 : index
    %c0_25 = arith.constant 0 : index
    %43 = vector.load %arg1[%c1, %c0_24, %c0_25] : memref<2x8x256xf32, #tpu.memory_space<vmem>>, vector<1x8x256xf32>
    %44 = vector.shape_cast %43 : vector<1x8x256xf32> to vector<8x256xf32>
    %c1_26 = arith.constant 1 : index
    %c0_27 = arith.constant 0 : index
    %c0_28 = arith.constant 0 : index
    %45 = vector.load %arg2[%c1_26, %c0_27, %c0_28] : memref<2x8x256xf32, #tpu.memory_space<vmem>>, vector<1x8x256xf32>
    %46 = vector.shape_cast %45 : vector<1x8x256xf32> to vector<8x256xf32>
    %c1_i32 = arith.constant 1 : i32
    %47 = tpu.concatenate %42, %44 in 1 : vector<8x256xf32>, vector<8x256xf32> -> vector<8x512xf32>
    %48 = arith.truncf %47 : vector<8x512xf32> to vector<8x512xbf16>
    %c0_29 = arith.constant 0 : index
    %c0_30 = arith.constant 0 : index
    %49 = vector.load %arg6[%c0_29, %c0_30] : memref<512x1024xbf16, #tpu.memory_space<vmem>>, vector<512x1024xbf16>
    %cst_31 = arith.constant dense<0.000000e+00> : vector<8x1024xf32>
    %50 = tpu.matmul %48, %49, %cst_31 {dimension_numbers = #tpu.dot_dimension_numbers<[1], [0], [0], [1], [0, 0, 1, 1], [], []>} : vector<8x512xbf16>, vector<512x1024xbf16>, vector<8x1024xf32> -> vector<8x1024xf32>
    %c0_32 = arith.constant 0 : index
    %c0_33 = arith.constant 0 : index
    %51 = vector.load %arg7[%c0_32, %c0_33] : memref<1x1024xf32, #tpu.memory_space<vmem>>, vector<1x1024xf32>
    %52 = vector.broadcast %51 : vector<1x1024xf32> to vector<8x1024xf32>
    %53 = arith.addf %50, %52 : vector<8x1024xf32>
    %54 = vector.extract_strided_slice %53 {offsets = [0, 0], sizes = [8, 512], strides = [1, 1]} : vector<8x1024xf32> to vector<8x512xf32>
    %cst_34 = arith.constant 0.000000e+00 : f32
    %55 = vector.broadcast %cst_34 : f32 to vector<8x512xf32>
    %56 = arith.subf %55, %54 : vector<8x512xf32>
    %57 = math.exp %56 : vector<8x512xf32>
    %cst_35 = arith.constant 1.000000e+00 : f32
    %58 = vector.broadcast %cst_35 : f32 to vector<8x512xf32>
    %59 = arith.addf %58, %57 : vector<8x512xf32>
    %60 = tpu.reciprocal %59 {approx = true} : vector<8x512xf32> -> vector<8x512xf32>
    %61 = vector.extract_strided_slice %60 {offsets = [0, 0], sizes = [8, 256], strides = [1, 1]} : vector<8x512xf32> to vector<8x256xf32>
    %62 = vector.extract_strided_slice %60 {offsets = [0, 256], sizes = [8, 256], strides = [1, 1]} : vector<8x512xf32> to vector<8x256xf32>
    %63 = vector.extract_strided_slice %53 {offsets = [0, 512], sizes = [8, 256], strides = [1, 1]} : vector<8x1024xf32> to vector<8x256xf32>
    %64 = math.tanh %63 : vector<8x256xf32>
    %65 = vector.extract_strided_slice %53 {offsets = [0, 768], sizes = [8, 256], strides = [1, 1]} : vector<8x1024xf32> to vector<8x256xf32>
    %cst_36 = arith.constant 0.000000e+00 : f32
    %66 = vector.broadcast %cst_36 : f32 to vector<8x256xf32>
    %67 = arith.subf %66, %65 : vector<8x256xf32>
    %68 = math.exp %67 : vector<8x256xf32>
    %cst_37 = arith.constant 1.000000e+00 : f32
    %69 = vector.broadcast %cst_37 : f32 to vector<8x256xf32>
    %70 = arith.addf %69, %68 : vector<8x256xf32>
    %71 = tpu.reciprocal %70 {approx = true} : vector<8x256xf32> -> vector<8x256xf32>
    %72 = arith.mulf %62, %46 : vector<8x256xf32>
    %73 = arith.mulf %61, %64 : vector<8x256xf32>
    %74 = arith.addf %72, %73 : vector<8x256xf32>
    %75 = math.tanh %74 : vector<8x256xf32>
    %76 = arith.mulf %71, %75 : vector<8x256xf32>
    %77 = arith.index_cast %c1_i32 : i32 to index
    %c0_38 = arith.constant 0 : index
    %c0_39 = arith.constant 0 : index
    %78 = vector.load %arg13[%77, %c0_38, %c0_39] : memref<8x8x1024xf32, #tpu.memory_space<vmem>>, vector<1x8x1024xf32>
    %79 = vector.shape_cast %78 : vector<1x8x1024xf32> to vector<8x1024xf32>
    %80 = arith.truncf %42 : vector<8x256xf32> to vector<8x256xbf16>
    %c0_40 = arith.constant 0 : index
    %c0_41 = arith.constant 0 : index
    %81 = vector.load %arg4[%c0_40, %c0_41] : memref<256x1024xbf16, #tpu.memory_space<vmem>>, vector<256x1024xbf16>
    %cst_42 = arith.constant dense<0.000000e+00> : vector<8x1024xf32>
    %82 = tpu.matmul %80, %81, %cst_42 {dimension_numbers = #tpu.dot_dimension_numbers<[1], [0], [0], [1], [0, 0, 1, 1], [], []>} : vector<8x256xbf16>, vector<256x1024xbf16>, vector<8x1024xf32> -> vector<8x1024xf32>
    %83 = arith.addf %79, %82 : vector<8x1024xf32>
    %84 = vector.extract_strided_slice %83 {offsets = [0, 0], sizes = [8, 512], strides = [1, 1]} : vector<8x1024xf32> to vector<8x512xf32>
    %cst_43 = arith.constant 0.000000e+00 : f32
    %85 = vector.broadcast %cst_43 : f32 to vector<8x512xf32>
    %86 = arith.subf %85, %84 : vector<8x512xf32>
    %87 = math.exp %86 : vector<8x512xf32>
    %cst_44 = arith.constant 1.000000e+00 : f32
    %88 = vector.broadcast %cst_44 : f32 to vector<8x512xf32>
    %89 = arith.addf %88, %87 : vector<8x512xf32>
    %90 = tpu.reciprocal %89 {approx = true} : vector<8x512xf32> -> vector<8x512xf32>
    %91 = vector.extract_strided_slice %90 {offsets = [0, 0], sizes = [8, 256], strides = [1, 1]} : vector<8x512xf32> to vector<8x256xf32>
    %92 = vector.extract_strided_slice %90 {offsets = [0, 256], sizes = [8, 256], strides = [1, 1]} : vector<8x512xf32> to vector<8x256xf32>
    %93 = vector.extract_strided_slice %83 {offsets = [0, 512], sizes = [8, 256], strides = [1, 1]} : vector<8x1024xf32> to vector<8x256xf32>
    %94 = math.tanh %93 : vector<8x256xf32>
    %95 = vector.extract_strided_slice %83 {offsets = [0, 768], sizes = [8, 256], strides = [1, 1]} : vector<8x1024xf32> to vector<8x256xf32>
    %cst_45 = arith.constant 0.000000e+00 : f32
    %96 = vector.broadcast %cst_45 : f32 to vector<8x256xf32>
    %97 = arith.subf %96, %95 : vector<8x256xf32>
    %98 = math.exp %97 : vector<8x256xf32>
    %cst_46 = arith.constant 1.000000e+00 : f32
    %99 = vector.broadcast %cst_46 : f32 to vector<8x256xf32>
    %100 = arith.addf %99, %98 : vector<8x256xf32>
    %101 = tpu.reciprocal %100 {approx = true} : vector<8x256xf32> -> vector<8x256xf32>
    %102 = arith.mulf %92, %40 : vector<8x256xf32>
    %103 = arith.mulf %91, %94 : vector<8x256xf32>
    %104 = arith.addf %102, %103 : vector<8x256xf32>
    %105 = math.tanh %104 : vector<8x256xf32>
    %106 = arith.mulf %101, %105 : vector<8x256xf32>
    %c2_i32 = arith.constant 2 : i32
    %107 = tpu.concatenate %106, %76 in 1 : vector<8x256xf32>, vector<8x256xf32> -> vector<8x512xf32>
    %108 = arith.truncf %107 : vector<8x512xf32> to vector<8x512xbf16>
    %c0_47 = arith.constant 0 : index
    %c0_48 = arith.constant 0 : index
    %109 = vector.load %arg6[%c0_47, %c0_48] : memref<512x1024xbf16, #tpu.memory_space<vmem>>, vector<512x1024xbf16>
    %cst_49 = arith.constant dense<0.000000e+00> : vector<8x1024xf32>
    %110 = tpu.matmul %108, %109, %cst_49 {dimension_numbers = #tpu.dot_dimension_numbers<[1], [0], [0], [1], [0, 0, 1, 1], [], []>} : vector<8x512xbf16>, vector<512x1024xbf16>, vector<8x1024xf32> -> vector<8x1024xf32>
    %c0_50 = arith.constant 0 : index
    %c0_51 = arith.constant 0 : index
    %111 = vector.load %arg7[%c0_50, %c0_51] : memref<1x1024xf32, #tpu.memory_space<vmem>>, vector<1x1024xf32>
    %112 = vector.broadcast %111 : vector<1x1024xf32> to vector<8x1024xf32>
    %113 = arith.addf %110, %112 : vector<8x1024xf32>
    %114 = vector.extract_strided_slice %113 {offsets = [0, 0], sizes = [8, 512], strides = [1, 1]} : vector<8x1024xf32> to vector<8x512xf32>
    %cst_52 = arith.constant 0.000000e+00 : f32
    %115 = vector.broadcast %cst_52 : f32 to vector<8x512xf32>
    %116 = arith.subf %115, %114 : vector<8x512xf32>
    %117 = math.exp %116 : vector<8x512xf32>
    %cst_53 = arith.constant 1.000000e+00 : f32
    %118 = vector.broadcast %cst_53 : f32 to vector<8x512xf32>
    %119 = arith.addf %118, %117 : vector<8x512xf32>
    %120 = tpu.reciprocal %119 {approx = true} : vector<8x512xf32> -> vector<8x512xf32>
    %121 = vector.extract_strided_slice %120 {offsets = [0, 0], sizes = [8, 256], strides = [1, 1]} : vector<8x512xf32> to vector<8x256xf32>
    %122 = vector.extract_strided_slice %120 {offsets = [0, 256], sizes = [8, 256], strides = [1, 1]} : vector<8x512xf32> to vector<8x256xf32>
    %123 = vector.extract_strided_slice %113 {offsets = [0, 512], sizes = [8, 256], strides = [1, 1]} : vector<8x1024xf32> to vector<8x256xf32>
    %124 = math.tanh %123 : vector<8x256xf32>
    %125 = vector.extract_strided_slice %113 {offsets = [0, 768], sizes = [8, 256], strides = [1, 1]} : vector<8x1024xf32> to vector<8x256xf32>
    %cst_54 = arith.constant 0.000000e+00 : f32
    %126 = vector.broadcast %cst_54 : f32 to vector<8x256xf32>
    %127 = arith.subf %126, %125 : vector<8x256xf32>
    %128 = math.exp %127 : vector<8x256xf32>
    %cst_55 = arith.constant 1.000000e+00 : f32
    %129 = vector.broadcast %cst_55 : f32 to vector<8x256xf32>
    %130 = arith.addf %129, %128 : vector<8x256xf32>
    %131 = tpu.reciprocal %130 {approx = true} : vector<8x256xf32> -> vector<8x256xf32>
    %132 = arith.mulf %122, %74 : vector<8x256xf32>
    %133 = arith.mulf %121, %124 : vector<8x256xf32>
    %134 = arith.addf %132, %133 : vector<8x256xf32>
    %135 = math.tanh %134 : vector<8x256xf32>
    %136 = arith.mulf %131, %135 : vector<8x256xf32>
    %137 = arith.index_cast %c2_i32 : i32 to index
    %c0_56 = arith.constant 0 : index
    %c0_57 = arith.constant 0 : index
    %138 = vector.load %arg13[%137, %c0_56, %c0_57] : memref<8x8x1024xf32, #tpu.memory_space<vmem>>, vector<1x8x1024xf32>
    %139 = vector.shape_cast %138 : vector<1x8x1024xf32> to vector<8x1024xf32>
    %140 = arith.truncf %106 : vector<8x256xf32> to vector<8x256xbf16>
    %c0_58 = arith.constant 0 : index
    %c0_59 = arith.constant 0 : index
    %141 = vector.load %arg4[%c0_58, %c0_59] : memref<256x1024xbf16, #tpu.memory_space<vmem>>, vector<256x1024xbf16>
    %cst_60 = arith.constant dense<0.000000e+00> : vector<8x1024xf32>
    %142 = tpu.matmul %140, %141, %cst_60 {dimension_numbers = #tpu.dot_dimension_numbers<[1], [0], [0], [1], [0, 0, 1, 1], [], []>} : vector<8x256xbf16>, vector<256x1024xbf16>, vector<8x1024xf32> -> vector<8x1024xf32>
    %143 = arith.addf %139, %142 : vector<8x1024xf32>
    %144 = vector.extract_strided_slice %143 {offsets = [0, 0], sizes = [8, 512], strides = [1, 1]} : vector<8x1024xf32> to vector<8x512xf32>
    %cst_61 = arith.constant 0.000000e+00 : f32
    %145 = vector.broadcast %cst_61 : f32 to vector<8x512xf32>
    %146 = arith.subf %145, %144 : vector<8x512xf32>
    %147 = math.exp %146 : vector<8x512xf32>
    %cst_62 = arith.constant 1.000000e+00 : f32
    %148 = vector.broadcast %cst_62 : f32 to vector<8x512xf32>
    %149 = arith.addf %148, %147 : vector<8x512xf32>
    %150 = tpu.reciprocal %149 {approx = true} : vector<8x512xf32> -> vector<8x512xf32>
    %151 = vector.extract_strided_slice %150 {offsets = [0, 0], sizes = [8, 256], strides = [1, 1]} : vector<8x512xf32> to vector<8x256xf32>
    %152 = vector.extract_strided_slice %150 {offsets = [0, 256], sizes = [8, 256], strides = [1, 1]} : vector<8x512xf32> to vector<8x256xf32>
    %153 = vector.extract_strided_slice %143 {offsets = [0, 512], sizes = [8, 256], strides = [1, 1]} : vector<8x1024xf32> to vector<8x256xf32>
    %154 = math.tanh %153 : vector<8x256xf32>
    %155 = vector.extract_strided_slice %143 {offsets = [0, 768], sizes = [8, 256], strides = [1, 1]} : vector<8x1024xf32> to vector<8x256xf32>
    %cst_63 = arith.constant 0.000000e+00 : f32
    %156 = vector.broadcast %cst_63 : f32 to vector<8x256xf32>
    %157 = arith.subf %156, %155 : vector<8x256xf32>
    %158 = math.exp %157 : vector<8x256xf32>
    %cst_64 = arith.constant 1.000000e+00 : f32
    %159 = vector.broadcast %cst_64 : f32 to vector<8x256xf32>
    %160 = arith.addf %159, %158 : vector<8x256xf32>
    %161 = tpu.reciprocal %160 {approx = true} : vector<8x256xf32> -> vector<8x256xf32>
    %162 = arith.mulf %152, %104 : vector<8x256xf32>
    %163 = arith.mulf %151, %154 : vector<8x256xf32>
    %164 = arith.addf %162, %163 : vector<8x256xf32>
    %165 = math.tanh %164 : vector<8x256xf32>
    %166 = arith.mulf %161, %165 : vector<8x256xf32>
    %c3_i32 = arith.constant 3 : i32
    %167 = tpu.concatenate %166, %136 in 1 : vector<8x256xf32>, vector<8x256xf32> -> vector<8x512xf32>
    %168 = arith.truncf %167 : vector<8x512xf32> to vector<8x512xbf16>
    %c0_65 = arith.constant 0 : index
    %c0_66 = arith.constant 0 : index
    %169 = vector.load %arg6[%c0_65, %c0_66] : memref<512x1024xbf16, #tpu.memory_space<vmem>>, vector<512x1024xbf16>
    %cst_67 = arith.constant dense<0.000000e+00> : vector<8x1024xf32>
    %170 = tpu.matmul %168, %169, %cst_67 {dimension_numbers = #tpu.dot_dimension_numbers<[1], [0], [0], [1], [0, 0, 1, 1], [], []>} : vector<8x512xbf16>, vector<512x1024xbf16>, vector<8x1024xf32> -> vector<8x1024xf32>
    %c0_68 = arith.constant 0 : index
    %c0_69 = arith.constant 0 : index
    %171 = vector.load %arg7[%c0_68, %c0_69] : memref<1x1024xf32, #tpu.memory_space<vmem>>, vector<1x1024xf32>
    %172 = vector.broadcast %171 : vector<1x1024xf32> to vector<8x1024xf32>
    %173 = arith.addf %170, %172 : vector<8x1024xf32>
    %174 = vector.extract_strided_slice %173 {offsets = [0, 0], sizes = [8, 512], strides = [1, 1]} : vector<8x1024xf32> to vector<8x512xf32>
    %cst_70 = arith.constant 0.000000e+00 : f32
    %175 = vector.broadcast %cst_70 : f32 to vector<8x512xf32>
    %176 = arith.subf %175, %174 : vector<8x512xf32>
    %177 = math.exp %176 : vector<8x512xf32>
    %cst_71 = arith.constant 1.000000e+00 : f32
    %178 = vector.broadcast %cst_71 : f32 to vector<8x512xf32>
    %179 = arith.addf %178, %177 : vector<8x512xf32>
    %180 = tpu.reciprocal %179 {approx = true} : vector<8x512xf32> -> vector<8x512xf32>
    %181 = vector.extract_strided_slice %180 {offsets = [0, 0], sizes = [8, 256], strides = [1, 1]} : vector<8x512xf32> to vector<8x256xf32>
    %182 = vector.extract_strided_slice %180 {offsets = [0, 256], sizes = [8, 256], strides = [1, 1]} : vector<8x512xf32> to vector<8x256xf32>
    %183 = vector.extract_strided_slice %173 {offsets = [0, 512], sizes = [8, 256], strides = [1, 1]} : vector<8x1024xf32> to vector<8x256xf32>
    %184 = math.tanh %183 : vector<8x256xf32>
    %185 = vector.extract_strided_slice %173 {offsets = [0, 768], sizes = [8, 256], strides = [1, 1]} : vector<8x1024xf32> to vector<8x256xf32>
    %cst_72 = arith.constant 0.000000e+00 : f32
    %186 = vector.broadcast %cst_72 : f32 to vector<8x256xf32>
    %187 = arith.subf %186, %185 : vector<8x256xf32>
    %188 = math.exp %187 : vector<8x256xf32>
    %cst_73 = arith.constant 1.000000e+00 : f32
    %189 = vector.broadcast %cst_73 : f32 to vector<8x256xf32>
    %190 = arith.addf %189, %188 : vector<8x256xf32>
    %191 = tpu.reciprocal %190 {approx = true} : vector<8x256xf32> -> vector<8x256xf32>
    %192 = arith.mulf %182, %134 : vector<8x256xf32>
    %193 = arith.mulf %181, %184 : vector<8x256xf32>
    %194 = arith.addf %192, %193 : vector<8x256xf32>
    %195 = math.tanh %194 : vector<8x256xf32>
    %196 = arith.mulf %191, %195 : vector<8x256xf32>
    %197 = arith.index_cast %c3_i32 : i32 to index
    %c0_74 = arith.constant 0 : index
    %c0_75 = arith.constant 0 : index
    %198 = vector.load %arg13[%197, %c0_74, %c0_75] : memref<8x8x1024xf32, #tpu.memory_space<vmem>>, vector<1x8x1024xf32>
    %199 = vector.shape_cast %198 : vector<1x8x1024xf32> to vector<8x1024xf32>
    %200 = arith.truncf %166 : vector<8x256xf32> to vector<8x256xbf16>
    %c0_76 = arith.constant 0 : index
    %c0_77 = arith.constant 0 : index
    %201 = vector.load %arg4[%c0_76, %c0_77] : memref<256x1024xbf16, #tpu.memory_space<vmem>>, vector<256x1024xbf16>
    %cst_78 = arith.constant dense<0.000000e+00> : vector<8x1024xf32>
    %202 = tpu.matmul %200, %201, %cst_78 {dimension_numbers = #tpu.dot_dimension_numbers<[1], [0], [0], [1], [0, 0, 1, 1], [], []>} : vector<8x256xbf16>, vector<256x1024xbf16>, vector<8x1024xf32> -> vector<8x1024xf32>
    %203 = arith.addf %199, %202 : vector<8x1024xf32>
    %204 = vector.extract_strided_slice %203 {offsets = [0, 0], sizes = [8, 512], strides = [1, 1]} : vector<8x1024xf32> to vector<8x512xf32>
    %cst_79 = arith.constant 0.000000e+00 : f32
    %205 = vector.broadcast %cst_79 : f32 to vector<8x512xf32>
    %206 = arith.subf %205, %204 : vector<8x512xf32>
    %207 = math.exp %206 : vector<8x512xf32>
    %cst_80 = arith.constant 1.000000e+00 : f32
    %208 = vector.broadcast %cst_80 : f32 to vector<8x512xf32>
    %209 = arith.addf %208, %207 : vector<8x512xf32>
    %210 = tpu.reciprocal %209 {approx = true} : vector<8x512xf32> -> vector<8x512xf32>
    %211 = vector.extract_strided_slice %210 {offsets = [0, 0], sizes = [8, 256], strides = [1, 1]} : vector<8x512xf32> to vector<8x256xf32>
    %212 = vector.extract_strided_slice %210 {offsets = [0, 256], sizes = [8, 256], strides = [1, 1]} : vector<8x512xf32> to vector<8x256xf32>
    %213 = vector.extract_strided_slice %203 {offsets = [0, 512], sizes = [8, 256], strides = [1, 1]} : vector<8x1024xf32> to vector<8x256xf32>
    %214 = math.tanh %213 : vector<8x256xf32>
    %215 = vector.extract_strided_slice %203 {offsets = [0, 768], sizes = [8, 256], strides = [1, 1]} : vector<8x1024xf32> to vector<8x256xf32>
    %cst_81 = arith.constant 0.000000e+00 : f32
    %216 = vector.broadcast %cst_81 : f32 to vector<8x256xf32>
    %217 = arith.subf %216, %215 : vector<8x256xf32>
    %218 = math.exp %217 : vector<8x256xf32>
    %cst_82 = arith.constant 1.000000e+00 : f32
    %219 = vector.broadcast %cst_82 : f32 to vector<8x256xf32>
    %220 = arith.addf %219, %218 : vector<8x256xf32>
    %221 = tpu.reciprocal %220 {approx = true} : vector<8x256xf32> -> vector<8x256xf32>
    %222 = arith.mulf %212, %164 : vector<8x256xf32>
    %223 = arith.mulf %211, %214 : vector<8x256xf32>
    %224 = arith.addf %222, %223 : vector<8x256xf32>
    %225 = math.tanh %224 : vector<8x256xf32>
    %226 = arith.mulf %221, %225 : vector<8x256xf32>
    %c4_i32 = arith.constant 4 : i32
    %227 = tpu.concatenate %226, %196 in 1 : vector<8x256xf32>, vector<8x256xf32> -> vector<8x512xf32>
    %228 = arith.truncf %227 : vector<8x512xf32> to vector<8x512xbf16>
    %c0_83 = arith.constant 0 : index
    %c0_84 = arith.constant 0 : index
    %229 = vector.load %arg6[%c0_83, %c0_84] : memref<512x1024xbf16, #tpu.memory_space<vmem>>, vector<512x1024xbf16>
    %cst_85 = arith.constant dense<0.000000e+00> : vector<8x1024xf32>
    %230 = tpu.matmul %228, %229, %cst_85 {dimension_numbers = #tpu.dot_dimension_numbers<[1], [0], [0], [1], [0, 0, 1, 1], [], []>} : vector<8x512xbf16>, vector<512x1024xbf16>, vector<8x1024xf32> -> vector<8x1024xf32>
    %c0_86 = arith.constant 0 : index
    %c0_87 = arith.constant 0 : index
    %231 = vector.load %arg7[%c0_86, %c0_87] : memref<1x1024xf32, #tpu.memory_space<vmem>>, vector<1x1024xf32>
    %232 = vector.broadcast %231 : vector<1x1024xf32> to vector<8x1024xf32>
    %233 = arith.addf %230, %232 : vector<8x1024xf32>
    %234 = vector.extract_strided_slice %233 {offsets = [0, 0], sizes = [8, 512], strides = [1, 1]} : vector<8x1024xf32> to vector<8x512xf32>
    %cst_88 = arith.constant 0.000000e+00 : f32
    %235 = vector.broadcast %cst_88 : f32 to vector<8x512xf32>
    %236 = arith.subf %235, %234 : vector<8x512xf32>
    %237 = math.exp %236 : vector<8x512xf32>
    %cst_89 = arith.constant 1.000000e+00 : f32
    %238 = vector.broadcast %cst_89 : f32 to vector<8x512xf32>
    %239 = arith.addf %238, %237 : vector<8x512xf32>
    %240 = tpu.reciprocal %239 {approx = true} : vector<8x512xf32> -> vector<8x512xf32>
    %241 = vector.extract_strided_slice %240 {offsets = [0, 0], sizes = [8, 256], strides = [1, 1]} : vector<8x512xf32> to vector<8x256xf32>
    %242 = vector.extract_strided_slice %240 {offsets = [0, 256], sizes = [8, 256], strides = [1, 1]} : vector<8x512xf32> to vector<8x256xf32>
    %243 = vector.extract_strided_slice %233 {offsets = [0, 512], sizes = [8, 256], strides = [1, 1]} : vector<8x1024xf32> to vector<8x256xf32>
    %244 = math.tanh %243 : vector<8x256xf32>
    %245 = vector.extract_strided_slice %233 {offsets = [0, 768], sizes = [8, 256], strides = [1, 1]} : vector<8x1024xf32> to vector<8x256xf32>
    %cst_90 = arith.constant 0.000000e+00 : f32
    %246 = vector.broadcast %cst_90 : f32 to vector<8x256xf32>
    %247 = arith.subf %246, %245 : vector<8x256xf32>
    %248 = math.exp %247 : vector<8x256xf32>
    %cst_91 = arith.constant 1.000000e+00 : f32
    %249 = vector.broadcast %cst_91 : f32 to vector<8x256xf32>
    %250 = arith.addf %249, %248 : vector<8x256xf32>
    %251 = tpu.reciprocal %250 {approx = true} : vector<8x256xf32> -> vector<8x256xf32>
    %252 = arith.mulf %242, %194 : vector<8x256xf32>
    %253 = arith.mulf %241, %244 : vector<8x256xf32>
    %254 = arith.addf %252, %253 : vector<8x256xf32>
    %255 = math.tanh %254 : vector<8x256xf32>
    %256 = arith.mulf %251, %255 : vector<8x256xf32>
    %257 = arith.index_cast %c4_i32 : i32 to index
    %c0_92 = arith.constant 0 : index
    %c0_93 = arith.constant 0 : index
    %258 = vector.load %arg13[%257, %c0_92, %c0_93] : memref<8x8x1024xf32, #tpu.memory_space<vmem>>, vector<1x8x1024xf32>
    %259 = vector.shape_cast %258 : vector<1x8x1024xf32> to vector<8x1024xf32>
    %260 = arith.truncf %226 : vector<8x256xf32> to vector<8x256xbf16>
    %c0_94 = arith.constant 0 : index
    %c0_95 = arith.constant 0 : index
    %261 = vector.load %arg4[%c0_94, %c0_95] : memref<256x1024xbf16, #tpu.memory_space<vmem>>, vector<256x1024xbf16>
    %cst_96 = arith.constant dense<0.000000e+00> : vector<8x1024xf32>
    %262 = tpu.matmul %260, %261, %cst_96 {dimension_numbers = #tpu.dot_dimension_numbers<[1], [0], [0], [1], [0, 0, 1, 1], [], []>} : vector<8x256xbf16>, vector<256x1024xbf16>, vector<8x1024xf32> -> vector<8x1024xf32>
    %263 = arith.addf %259, %262 : vector<8x1024xf32>
    %264 = vector.extract_strided_slice %263 {offsets = [0, 0], sizes = [8, 512], strides = [1, 1]} : vector<8x1024xf32> to vector<8x512xf32>
    %cst_97 = arith.constant 0.000000e+00 : f32
    %265 = vector.broadcast %cst_97 : f32 to vector<8x512xf32>
    %266 = arith.subf %265, %264 : vector<8x512xf32>
    %267 = math.exp %266 : vector<8x512xf32>
    %cst_98 = arith.constant 1.000000e+00 : f32
    %268 = vector.broadcast %cst_98 : f32 to vector<8x512xf32>
    %269 = arith.addf %268, %267 : vector<8x512xf32>
    %270 = tpu.reciprocal %269 {approx = true} : vector<8x512xf32> -> vector<8x512xf32>
    %271 = vector.extract_strided_slice %270 {offsets = [0, 0], sizes = [8, 256], strides = [1, 1]} : vector<8x512xf32> to vector<8x256xf32>
    %272 = vector.extract_strided_slice %270 {offsets = [0, 256], sizes = [8, 256], strides = [1, 1]} : vector<8x512xf32> to vector<8x256xf32>
    %273 = vector.extract_strided_slice %263 {offsets = [0, 512], sizes = [8, 256], strides = [1, 1]} : vector<8x1024xf32> to vector<8x256xf32>
    %274 = math.tanh %273 : vector<8x256xf32>
    %275 = vector.extract_strided_slice %263 {offsets = [0, 768], sizes = [8, 256], strides = [1, 1]} : vector<8x1024xf32> to vector<8x256xf32>
    %cst_99 = arith.constant 0.000000e+00 : f32
    %276 = vector.broadcast %cst_99 : f32 to vector<8x256xf32>
    %277 = arith.subf %276, %275 : vector<8x256xf32>
    %278 = math.exp %277 : vector<8x256xf32>
    %cst_100 = arith.constant 1.000000e+00 : f32
    %279 = vector.broadcast %cst_100 : f32 to vector<8x256xf32>
    %280 = arith.addf %279, %278 : vector<8x256xf32>
    %281 = tpu.reciprocal %280 {approx = true} : vector<8x256xf32> -> vector<8x256xf32>
    %282 = arith.mulf %272, %224 : vector<8x256xf32>
    %283 = arith.mulf %271, %274 : vector<8x256xf32>
    %284 = arith.addf %282, %283 : vector<8x256xf32>
    %285 = math.tanh %284 : vector<8x256xf32>
    %286 = arith.mulf %281, %285 : vector<8x256xf32>
    %c5_i32 = arith.constant 5 : i32
    %287 = tpu.concatenate %286, %256 in 1 : vector<8x256xf32>, vector<8x256xf32> -> vector<8x512xf32>
    %288 = arith.truncf %287 : vector<8x512xf32> to vector<8x512xbf16>
    %c0_101 = arith.constant 0 : index
    %c0_102 = arith.constant 0 : index
    %289 = vector.load %arg6[%c0_101, %c0_102] : memref<512x1024xbf16, #tpu.memory_space<vmem>>, vector<512x1024xbf16>
    %cst_103 = arith.constant dense<0.000000e+00> : vector<8x1024xf32>
    %290 = tpu.matmul %288, %289, %cst_103 {dimension_numbers = #tpu.dot_dimension_numbers<[1], [0], [0], [1], [0, 0, 1, 1], [], []>} : vector<8x512xbf16>, vector<512x1024xbf16>, vector<8x1024xf32> -> vector<8x1024xf32>
    %c0_104 = arith.constant 0 : index
    %c0_105 = arith.constant 0 : index
    %291 = vector.load %arg7[%c0_104, %c0_105] : memref<1x1024xf32, #tpu.memory_space<vmem>>, vector<1x1024xf32>
    %292 = vector.broadcast %291 : vector<1x1024xf32> to vector<8x1024xf32>
    %293 = arith.addf %290, %292 : vector<8x1024xf32>
    %294 = vector.extract_strided_slice %293 {offsets = [0, 0], sizes = [8, 512], strides = [1, 1]} : vector<8x1024xf32> to vector<8x512xf32>
    %cst_106 = arith.constant 0.000000e+00 : f32
    %295 = vector.broadcast %cst_106 : f32 to vector<8x512xf32>
    %296 = arith.subf %295, %294 : vector<8x512xf32>
    %297 = math.exp %296 : vector<8x512xf32>
    %cst_107 = arith.constant 1.000000e+00 : f32
    %298 = vector.broadcast %cst_107 : f32 to vector<8x512xf32>
    %299 = arith.addf %298, %297 : vector<8x512xf32>
    %300 = tpu.reciprocal %299 {approx = true} : vector<8x512xf32> -> vector<8x512xf32>
    %301 = vector.extract_strided_slice %300 {offsets = [0, 0], sizes = [8, 256], strides = [1, 1]} : vector<8x512xf32> to vector<8x256xf32>
    %302 = vector.extract_strided_slice %300 {offsets = [0, 256], sizes = [8, 256], strides = [1, 1]} : vector<8x512xf32> to vector<8x256xf32>
    %303 = vector.extract_strided_slice %293 {offsets = [0, 512], sizes = [8, 256], strides = [1, 1]} : vector<8x1024xf32> to vector<8x256xf32>
    %304 = math.tanh %303 : vector<8x256xf32>
    %305 = vector.extract_strided_slice %293 {offsets = [0, 768], sizes = [8, 256], strides = [1, 1]} : vector<8x1024xf32> to vector<8x256xf32>
    %cst_108 = arith.constant 0.000000e+00 : f32
    %306 = vector.broadcast %cst_108 : f32 to vector<8x256xf32>
    %307 = arith.subf %306, %305 : vector<8x256xf32>
    %308 = math.exp %307 : vector<8x256xf32>
    %cst_109 = arith.constant 1.000000e+00 : f32
    %309 = vector.broadcast %cst_109 : f32 to vector<8x256xf32>
    %310 = arith.addf %309, %308 : vector<8x256xf32>
    %311 = tpu.reciprocal %310 {approx = true} : vector<8x256xf32> -> vector<8x256xf32>
    %312 = arith.mulf %302, %254 : vector<8x256xf32>
    %313 = arith.mulf %301, %304 : vector<8x256xf32>
    %314 = arith.addf %312, %313 : vector<8x256xf32>
    %315 = math.tanh %314 : vector<8x256xf32>
    %316 = arith.mulf %311, %315 : vector<8x256xf32>
    %317 = arith.index_cast %c5_i32 : i32 to index
    %c0_110 = arith.constant 0 : index
    %c0_111 = arith.constant 0 : index
    %318 = vector.load %arg13[%317, %c0_110, %c0_111] : memref<8x8x1024xf32, #tpu.memory_space<vmem>>, vector<1x8x1024xf32>
    %319 = vector.shape_cast %318 : vector<1x8x1024xf32> to vector<8x1024xf32>
    %320 = arith.truncf %286 : vector<8x256xf32> to vector<8x256xbf16>
    %c0_112 = arith.constant 0 : index
    %c0_113 = arith.constant 0 : index
    %321 = vector.load %arg4[%c0_112, %c0_113] : memref<256x1024xbf16, #tpu.memory_space<vmem>>, vector<256x1024xbf16>
    %cst_114 = arith.constant dense<0.000000e+00> : vector<8x1024xf32>
    %322 = tpu.matmul %320, %321, %cst_114 {dimension_numbers = #tpu.dot_dimension_numbers<[1], [0], [0], [1], [0, 0, 1, 1], [], []>} : vector<8x256xbf16>, vector<256x1024xbf16>, vector<8x1024xf32> -> vector<8x1024xf32>
    %323 = arith.addf %319, %322 : vector<8x1024xf32>
    %324 = vector.extract_strided_slice %323 {offsets = [0, 0], sizes = [8, 512], strides = [1, 1]} : vector<8x1024xf32> to vector<8x512xf32>
    %cst_115 = arith.constant 0.000000e+00 : f32
    %325 = vector.broadcast %cst_115 : f32 to vector<8x512xf32>
    %326 = arith.subf %325, %324 : vector<8x512xf32>
    %327 = math.exp %326 : vector<8x512xf32>
    %cst_116 = arith.constant 1.000000e+00 : f32
    %328 = vector.broadcast %cst_116 : f32 to vector<8x512xf32>
    %329 = arith.addf %328, %327 : vector<8x512xf32>
    %330 = tpu.reciprocal %329 {approx = true} : vector<8x512xf32> -> vector<8x512xf32>
    %331 = vector.extract_strided_slice %330 {offsets = [0, 0], sizes = [8, 256], strides = [1, 1]} : vector<8x512xf32> to vector<8x256xf32>
    %332 = vector.extract_strided_slice %330 {offsets = [0, 256], sizes = [8, 256], strides = [1, 1]} : vector<8x512xf32> to vector<8x256xf32>
    %333 = vector.extract_strided_slice %323 {offsets = [0, 512], sizes = [8, 256], strides = [1, 1]} : vector<8x1024xf32> to vector<8x256xf32>
    %334 = math.tanh %333 : vector<8x256xf32>
    %335 = vector.extract_strided_slice %323 {offsets = [0, 768], sizes = [8, 256], strides = [1, 1]} : vector<8x1024xf32> to vector<8x256xf32>
    %cst_117 = arith.constant 0.000000e+00 : f32
    %336 = vector.broadcast %cst_117 : f32 to vector<8x256xf32>
    %337 = arith.subf %336, %335 : vector<8x256xf32>
    %338 = math.exp %337 : vector<8x256xf32>
    %cst_118 = arith.constant 1.000000e+00 : f32
    %339 = vector.broadcast %cst_118 : f32 to vector<8x256xf32>
    %340 = arith.addf %339, %338 : vector<8x256xf32>
    %341 = tpu.reciprocal %340 {approx = true} : vector<8x256xf32> -> vector<8x256xf32>
    %342 = arith.mulf %332, %284 : vector<8x256xf32>
    %343 = arith.mulf %331, %334 : vector<8x256xf32>
    %344 = arith.addf %342, %343 : vector<8x256xf32>
    %345 = math.tanh %344 : vector<8x256xf32>
    %346 = arith.mulf %341, %345 : vector<8x256xf32>
    %c6_i32 = arith.constant 6 : i32
    %347 = tpu.concatenate %346, %316 in 1 : vector<8x256xf32>, vector<8x256xf32> -> vector<8x512xf32>
    %348 = arith.truncf %347 : vector<8x512xf32> to vector<8x512xbf16>
    %c0_119 = arith.constant 0 : index
    %c0_120 = arith.constant 0 : index
    %349 = vector.load %arg6[%c0_119, %c0_120] : memref<512x1024xbf16, #tpu.memory_space<vmem>>, vector<512x1024xbf16>
    %cst_121 = arith.constant dense<0.000000e+00> : vector<8x1024xf32>
    %350 = tpu.matmul %348, %349, %cst_121 {dimension_numbers = #tpu.dot_dimension_numbers<[1], [0], [0], [1], [0, 0, 1, 1], [], []>} : vector<8x512xbf16>, vector<512x1024xbf16>, vector<8x1024xf32> -> vector<8x1024xf32>
    %c0_122 = arith.constant 0 : index
    %c0_123 = arith.constant 0 : index
    %351 = vector.load %arg7[%c0_122, %c0_123] : memref<1x1024xf32, #tpu.memory_space<vmem>>, vector<1x1024xf32>
    %352 = vector.broadcast %351 : vector<1x1024xf32> to vector<8x1024xf32>
    %353 = arith.addf %350, %352 : vector<8x1024xf32>
    %354 = vector.extract_strided_slice %353 {offsets = [0, 0], sizes = [8, 512], strides = [1, 1]} : vector<8x1024xf32> to vector<8x512xf32>
    %cst_124 = arith.constant 0.000000e+00 : f32
    %355 = vector.broadcast %cst_124 : f32 to vector<8x512xf32>
    %356 = arith.subf %355, %354 : vector<8x512xf32>
    %357 = math.exp %356 : vector<8x512xf32>
    %cst_125 = arith.constant 1.000000e+00 : f32
    %358 = vector.broadcast %cst_125 : f32 to vector<8x512xf32>
    %359 = arith.addf %358, %357 : vector<8x512xf32>
    %360 = tpu.reciprocal %359 {approx = true} : vector<8x512xf32> -> vector<8x512xf32>
    %361 = vector.extract_strided_slice %360 {offsets = [0, 0], sizes = [8, 256], strides = [1, 1]} : vector<8x512xf32> to vector<8x256xf32>
    %362 = vector.extract_strided_slice %360 {offsets = [0, 256], sizes = [8, 256], strides = [1, 1]} : vector<8x512xf32> to vector<8x256xf32>
    %363 = vector.extract_strided_slice %353 {offsets = [0, 512], sizes = [8, 256], strides = [1, 1]} : vector<8x1024xf32> to vector<8x256xf32>
    %364 = math.tanh %363 : vector<8x256xf32>
    %365 = vector.extract_strided_slice %353 {offsets = [0, 768], sizes = [8, 256], strides = [1, 1]} : vector<8x1024xf32> to vector<8x256xf32>
    %cst_126 = arith.constant 0.000000e+00 : f32
    %366 = vector.broadcast %cst_126 : f32 to vector<8x256xf32>
    %367 = arith.subf %366, %365 : vector<8x256xf32>
    %368 = math.exp %367 : vector<8x256xf32>
    %cst_127 = arith.constant 1.000000e+00 : f32
    %369 = vector.broadcast %cst_127 : f32 to vector<8x256xf32>
    %370 = arith.addf %369, %368 : vector<8x256xf32>
    %371 = tpu.reciprocal %370 {approx = true} : vector<8x256xf32> -> vector<8x256xf32>
    %372 = arith.mulf %362, %314 : vector<8x256xf32>
    %373 = arith.mulf %361, %364 : vector<8x256xf32>
    %374 = arith.addf %372, %373 : vector<8x256xf32>
    %375 = math.tanh %374 : vector<8x256xf32>
    %376 = arith.mulf %371, %375 : vector<8x256xf32>
    %377 = arith.index_cast %c6_i32 : i32 to index
    %c0_128 = arith.constant 0 : index
    %c0_129 = arith.constant 0 : index
    %378 = vector.load %arg13[%377, %c0_128, %c0_129] : memref<8x8x1024xf32, #tpu.memory_space<vmem>>, vector<1x8x1024xf32>
    %379 = vector.shape_cast %378 : vector<1x8x1024xf32> to vector<8x1024xf32>
    %380 = arith.truncf %346 : vector<8x256xf32> to vector<8x256xbf16>
    %c0_130 = arith.constant 0 : index
    %c0_131 = arith.constant 0 : index
    %381 = vector.load %arg4[%c0_130, %c0_131] : memref<256x1024xbf16, #tpu.memory_space<vmem>>, vector<256x1024xbf16>
    %cst_132 = arith.constant dense<0.000000e+00> : vector<8x1024xf32>
    %382 = tpu.matmul %380, %381, %cst_132 {dimension_numbers = #tpu.dot_dimension_numbers<[1], [0], [0], [1], [0, 0, 1, 1], [], []>} : vector<8x256xbf16>, vector<256x1024xbf16>, vector<8x1024xf32> -> vector<8x1024xf32>
    %383 = arith.addf %379, %382 : vector<8x1024xf32>
    %384 = vector.extract_strided_slice %383 {offsets = [0, 0], sizes = [8, 512], strides = [1, 1]} : vector<8x1024xf32> to vector<8x512xf32>
    %cst_133 = arith.constant 0.000000e+00 : f32
    %385 = vector.broadcast %cst_133 : f32 to vector<8x512xf32>
    %386 = arith.subf %385, %384 : vector<8x512xf32>
    %387 = math.exp %386 : vector<8x512xf32>
    %cst_134 = arith.constant 1.000000e+00 : f32
    %388 = vector.broadcast %cst_134 : f32 to vector<8x512xf32>
    %389 = arith.addf %388, %387 : vector<8x512xf32>
    %390 = tpu.reciprocal %389 {approx = true} : vector<8x512xf32> -> vector<8x512xf32>
    %391 = vector.extract_strided_slice %390 {offsets = [0, 0], sizes = [8, 256], strides = [1, 1]} : vector<8x512xf32> to vector<8x256xf32>
    %392 = vector.extract_strided_slice %390 {offsets = [0, 256], sizes = [8, 256], strides = [1, 1]} : vector<8x512xf32> to vector<8x256xf32>
    %393 = vector.extract_strided_slice %383 {offsets = [0, 512], sizes = [8, 256], strides = [1, 1]} : vector<8x1024xf32> to vector<8x256xf32>
    %394 = math.tanh %393 : vector<8x256xf32>
    %395 = vector.extract_strided_slice %383 {offsets = [0, 768], sizes = [8, 256], strides = [1, 1]} : vector<8x1024xf32> to vector<8x256xf32>
    %cst_135 = arith.constant 0.000000e+00 : f32
    %396 = vector.broadcast %cst_135 : f32 to vector<8x256xf32>
    %397 = arith.subf %396, %395 : vector<8x256xf32>
    %398 = math.exp %397 : vector<8x256xf32>
    %cst_136 = arith.constant 1.000000e+00 : f32
    %399 = vector.broadcast %cst_136 : f32 to vector<8x256xf32>
    %400 = arith.addf %399, %398 : vector<8x256xf32>
    %401 = tpu.reciprocal %400 {approx = true} : vector<8x256xf32> -> vector<8x256xf32>
    %402 = arith.mulf %392, %344 : vector<8x256xf32>
    %403 = arith.mulf %391, %394 : vector<8x256xf32>
    %404 = arith.addf %402, %403 : vector<8x256xf32>
    %405 = math.tanh %404 : vector<8x256xf32>
    %406 = arith.mulf %401, %405 : vector<8x256xf32>
    %c7_i32 = arith.constant 7 : i32
    %407 = tpu.concatenate %406, %376 in 1 : vector<8x256xf32>, vector<8x256xf32> -> vector<8x512xf32>
    %408 = arith.truncf %407 : vector<8x512xf32> to vector<8x512xbf16>
    %c0_137 = arith.constant 0 : index
    %c0_138 = arith.constant 0 : index
    %409 = vector.load %arg6[%c0_137, %c0_138] : memref<512x1024xbf16, #tpu.memory_space<vmem>>, vector<512x1024xbf16>
    %cst_139 = arith.constant dense<0.000000e+00> : vector<8x1024xf32>
    %410 = tpu.matmul %408, %409, %cst_139 {dimension_numbers = #tpu.dot_dimension_numbers<[1], [0], [0], [1], [0, 0, 1, 1], [], []>} : vector<8x512xbf16>, vector<512x1024xbf16>, vector<8x1024xf32> -> vector<8x1024xf32>
    %c0_140 = arith.constant 0 : index
    %c0_141 = arith.constant 0 : index
    %411 = vector.load %arg7[%c0_140, %c0_141] : memref<1x1024xf32, #tpu.memory_space<vmem>>, vector<1x1024xf32>
    %412 = vector.broadcast %411 : vector<1x1024xf32> to vector<8x1024xf32>
    %413 = arith.addf %410, %412 : vector<8x1024xf32>
    %414 = vector.extract_strided_slice %413 {offsets = [0, 0], sizes = [8, 512], strides = [1, 1]} : vector<8x1024xf32> to vector<8x512xf32>
    %cst_142 = arith.constant 0.000000e+00 : f32
    %415 = vector.broadcast %cst_142 : f32 to vector<8x512xf32>
    %416 = arith.subf %415, %414 : vector<8x512xf32>
    %417 = math.exp %416 : vector<8x512xf32>
    %cst_143 = arith.constant 1.000000e+00 : f32
    %418 = vector.broadcast %cst_143 : f32 to vector<8x512xf32>
    %419 = arith.addf %418, %417 : vector<8x512xf32>
    %420 = tpu.reciprocal %419 {approx = true} : vector<8x512xf32> -> vector<8x512xf32>
    %421 = vector.extract_strided_slice %420 {offsets = [0, 0], sizes = [8, 256], strides = [1, 1]} : vector<8x512xf32> to vector<8x256xf32>
    %422 = vector.extract_strided_slice %420 {offsets = [0, 256], sizes = [8, 256], strides = [1, 1]} : vector<8x512xf32> to vector<8x256xf32>
    %423 = vector.extract_strided_slice %413 {offsets = [0, 512], sizes = [8, 256], strides = [1, 1]} : vector<8x1024xf32> to vector<8x256xf32>
    %424 = math.tanh %423 : vector<8x256xf32>
    %425 = vector.extract_strided_slice %413 {offsets = [0, 768], sizes = [8, 256], strides = [1, 1]} : vector<8x1024xf32> to vector<8x256xf32>
    %cst_144 = arith.constant 0.000000e+00 : f32
    %426 = vector.broadcast %cst_144 : f32 to vector<8x256xf32>
    %427 = arith.subf %426, %425 : vector<8x256xf32>
    %428 = math.exp %427 : vector<8x256xf32>
    %cst_145 = arith.constant 1.000000e+00 : f32
    %429 = vector.broadcast %cst_145 : f32 to vector<8x256xf32>
    %430 = arith.addf %429, %428 : vector<8x256xf32>
    %431 = tpu.reciprocal %430 {approx = true} : vector<8x256xf32> -> vector<8x256xf32>
    %432 = arith.mulf %422, %374 : vector<8x256xf32>
    %433 = arith.mulf %421, %424 : vector<8x256xf32>
    %434 = arith.addf %432, %433 : vector<8x256xf32>
    %435 = math.tanh %434 : vector<8x256xf32>
    %436 = arith.mulf %431, %435 : vector<8x256xf32>
    %437 = arith.index_cast %c7_i32 : i32 to index
    %c0_146 = arith.constant 0 : index
    %c0_147 = arith.constant 0 : index
    %438 = vector.load %arg13[%437, %c0_146, %c0_147] : memref<8x8x1024xf32, #tpu.memory_space<vmem>>, vector<1x8x1024xf32>
    %439 = vector.shape_cast %438 : vector<1x8x1024xf32> to vector<8x1024xf32>
    %440 = arith.truncf %406 : vector<8x256xf32> to vector<8x256xbf16>
    %c0_148 = arith.constant 0 : index
    %c0_149 = arith.constant 0 : index
    %441 = vector.load %arg4[%c0_148, %c0_149] : memref<256x1024xbf16, #tpu.memory_space<vmem>>, vector<256x1024xbf16>
    %cst_150 = arith.constant dense<0.000000e+00> : vector<8x1024xf32>
    %442 = tpu.matmul %440, %441, %cst_150 {dimension_numbers = #tpu.dot_dimension_numbers<[1], [0], [0], [1], [0, 0, 1, 1], [], []>} : vector<8x256xbf16>, vector<256x1024xbf16>, vector<8x1024xf32> -> vector<8x1024xf32>
    %443 = arith.addf %439, %442 : vector<8x1024xf32>
    %444 = vector.extract_strided_slice %443 {offsets = [0, 0], sizes = [8, 512], strides = [1, 1]} : vector<8x1024xf32> to vector<8x512xf32>
    %cst_151 = arith.constant 0.000000e+00 : f32
    %445 = vector.broadcast %cst_151 : f32 to vector<8x512xf32>
    %446 = arith.subf %445, %444 : vector<8x512xf32>
    %447 = math.exp %446 : vector<8x512xf32>
    %cst_152 = arith.constant 1.000000e+00 : f32
    %448 = vector.broadcast %cst_152 : f32 to vector<8x512xf32>
    %449 = arith.addf %448, %447 : vector<8x512xf32>
    %450 = tpu.reciprocal %449 {approx = true} : vector<8x512xf32> -> vector<8x512xf32>
    %451 = vector.extract_strided_slice %450 {offsets = [0, 0], sizes = [8, 256], strides = [1, 1]} : vector<8x512xf32> to vector<8x256xf32>
    %452 = vector.extract_strided_slice %450 {offsets = [0, 256], sizes = [8, 256], strides = [1, 1]} : vector<8x512xf32> to vector<8x256xf32>
    %453 = vector.extract_strided_slice %443 {offsets = [0, 512], sizes = [8, 256], strides = [1, 1]} : vector<8x1024xf32> to vector<8x256xf32>
    %454 = math.tanh %453 : vector<8x256xf32>
    %455 = vector.extract_strided_slice %443 {offsets = [0, 768], sizes = [8, 256], strides = [1, 1]} : vector<8x1024xf32> to vector<8x256xf32>
    %cst_153 = arith.constant 0.000000e+00 : f32
    %456 = vector.broadcast %cst_153 : f32 to vector<8x256xf32>
    %457 = arith.subf %456, %455 : vector<8x256xf32>
    %458 = math.exp %457 : vector<8x256xf32>
    %cst_154 = arith.constant 1.000000e+00 : f32
    %459 = vector.broadcast %cst_154 : f32 to vector<8x256xf32>
    %460 = arith.addf %459, %458 : vector<8x256xf32>
    %461 = tpu.reciprocal %460 {approx = true} : vector<8x256xf32> -> vector<8x256xf32>
    %462 = arith.mulf %452, %404 : vector<8x256xf32>
    %463 = arith.mulf %451, %454 : vector<8x256xf32>
    %464 = arith.addf %462, %463 : vector<8x256xf32>
    %465 = math.tanh %464 : vector<8x256xf32>
    %466 = arith.mulf %461, %465 : vector<8x256xf32>
    %c7_i32_155 = arith.constant 7 : i32
    %467 = tpu.concatenate %466, %436 in 1 : vector<8x256xf32>, vector<8x256xf32> -> vector<8x512xf32>
    %468 = arith.truncf %467 : vector<8x512xf32> to vector<8x512xbf16>
    %c0_156 = arith.constant 0 : index
    %c0_157 = arith.constant 0 : index
    %469 = vector.load %arg6[%c0_156, %c0_157] : memref<512x1024xbf16, #tpu.memory_space<vmem>>, vector<512x1024xbf16>
    %cst_158 = arith.constant dense<0.000000e+00> : vector<8x1024xf32>
    %470 = tpu.matmul %468, %469, %cst_158 {dimension_numbers = #tpu.dot_dimension_numbers<[1], [0], [0], [1], [0, 0, 1, 1], [], []>} : vector<8x512xbf16>, vector<512x1024xbf16>, vector<8x1024xf32> -> vector<8x1024xf32>
    %c0_159 = arith.constant 0 : index
    %c0_160 = arith.constant 0 : index
    %471 = vector.load %arg7[%c0_159, %c0_160] : memref<1x1024xf32, #tpu.memory_space<vmem>>, vector<1x1024xf32>
    %472 = vector.broadcast %471 : vector<1x1024xf32> to vector<8x1024xf32>
    %473 = arith.addf %470, %472 : vector<8x1024xf32>
    %474 = vector.extract_strided_slice %473 {offsets = [0, 0], sizes = [8, 512], strides = [1, 1]} : vector<8x1024xf32> to vector<8x512xf32>
    %cst_161 = arith.constant 0.000000e+00 : f32
    %475 = vector.broadcast %cst_161 : f32 to vector<8x512xf32>
    %476 = arith.subf %475, %474 : vector<8x512xf32>
    %477 = math.exp %476 : vector<8x512xf32>
    %cst_162 = arith.constant 1.000000e+00 : f32
    %478 = vector.broadcast %cst_162 : f32 to vector<8x512xf32>
    %479 = arith.addf %478, %477 : vector<8x512xf32>
    %480 = tpu.reciprocal %479 {approx = true} : vector<8x512xf32> -> vector<8x512xf32>
    %481 = vector.extract_strided_slice %480 {offsets = [0, 0], sizes = [8, 256], strides = [1, 1]} : vector<8x512xf32> to vector<8x256xf32>
    %482 = vector.extract_strided_slice %480 {offsets = [0, 256], sizes = [8, 256], strides = [1, 1]} : vector<8x512xf32> to vector<8x256xf32>
    %483 = vector.extract_strided_slice %473 {offsets = [0, 512], sizes = [8, 256], strides = [1, 1]} : vector<8x1024xf32> to vector<8x256xf32>
    %484 = math.tanh %483 : vector<8x256xf32>
    %485 = vector.extract_strided_slice %473 {offsets = [0, 768], sizes = [8, 256], strides = [1, 1]} : vector<8x1024xf32> to vector<8x256xf32>
    %cst_163 = arith.constant 0.000000e+00 : f32
    %486 = vector.broadcast %cst_163 : f32 to vector<8x256xf32>
    %487 = arith.subf %486, %485 : vector<8x256xf32>
    %488 = math.exp %487 : vector<8x256xf32>
    %cst_164 = arith.constant 1.000000e+00 : f32
    %489 = vector.broadcast %cst_164 : f32 to vector<8x256xf32>
    %490 = arith.addf %489, %488 : vector<8x256xf32>
    %491 = tpu.reciprocal %490 {approx = true} : vector<8x256xf32> -> vector<8x256xf32>
    %492 = arith.mulf %482, %434 : vector<8x256xf32>
    %493 = arith.mulf %481, %484 : vector<8x256xf32>
    %494 = arith.addf %492, %493 : vector<8x256xf32>
    %495 = math.tanh %494 : vector<8x256xf32>
    %496 = arith.mulf %491, %495 : vector<8x256xf32>
    %497 = arith.truncf %496 : vector<8x256xf32> to vector<8x256xbf16>
    %c0_165 = arith.constant 0 : index
    %c0_166 = arith.constant 0 : index
    %498 = vector.load %arg8[%c0_165, %c0_166] : memref<256x128xbf16, #tpu.memory_space<vmem>>, vector<256x128xbf16>
    %cst_167 = arith.constant dense<0.000000e+00> : vector<8x128xf32>
    %499 = tpu.matmul %497, %498, %cst_167 {dimension_numbers = #tpu.dot_dimension_numbers<[1], [0], [0], [1], [0, 0, 1, 1], [], []>} : vector<8x256xbf16>, vector<256x128xbf16>, vector<8x128xf32> -> vector<8x128xf32>
    %c0_168 = arith.constant 0 : index
    %c0_169 = arith.constant 0 : index
    %500 = vector.load %arg9[%c0_168, %c0_169] : memref<1x128xf32, #tpu.memory_space<vmem>>, vector<1x128xf32>
    %501 = vector.broadcast %500 : vector<1x128xf32> to vector<8x128xf32>
    %502 = arith.addf %499, %501 : vector<8x128xf32>
    %503 = arith.negf %502 : vector<8x128xf32>
    %504 = math.exp %503 : vector<8x128xf32>
    %cst_170 = arith.constant 1.000000e+00 : f32
    %505 = vector.broadcast %cst_170 : f32 to vector<8x128xf32>
    %506 = arith.addf %505, %504 : vector<8x128xf32>
    %507 = arith.divf %505, %506 : vector<8x128xf32>
    %c0_171 = arith.constant 0 : index
    %c0_172 = arith.constant 0 : index
    %508 = vector.load %arg10[%c0_171, %c0_172] : memref<8x128xf32, #tpu.memory_space<vmem>>, vector<8x128xf32>
    tpu.vector_store %arg10[%c0_171, %c0_172], %507 {strides = array<i32>} : memref<8x128xf32, #tpu.memory_space<vmem>>, vector<8x128xf32>,
    %c0_173 = arith.constant 0 : index
    %c0_174 = arith.constant 0 : index
    %c0_175 = arith.constant 0 : index
    %509 = vector.load %arg11[%c0_173, %c0_174, %c0_175] : memref<2x8x256xf32, #tpu.memory_space<vmem>>, vector<1x8x256xf32>
    %510 = vector.shape_cast %509 : vector<1x8x256xf32> to vector<8x256xf32>
    %511 = vector.shape_cast %466 : vector<8x256xf32> to vector<1x8x256xf32>
    tpu.vector_store %arg11[%c0_173, %c0_174, %c0_175], %511 {strides = array<i32>} : memref<2x8x256xf32, #tpu.memory_space<vmem>>, vector<1x8x256xf32>,
    %c1_176 = arith.constant 1 : index
    %c0_177 = arith.constant 0 : index
    %c0_178 = arith.constant 0 : index
    %512 = vector.load %arg11[%c1_176, %c0_177, %c0_178] : memref<2x8x256xf32, #tpu.memory_space<vmem>>, vector<1x8x256xf32>
    %513 = vector.shape_cast %512 : vector<1x8x256xf32> to vector<8x256xf32>
    %514 = vector.shape_cast %496 : vector<8x256xf32> to vector<1x8x256xf32>
    tpu.vector_store %arg11[%c1_176, %c0_177, %c0_178], %514 {strides = array<i32>} : memref<2x8x256xf32, #tpu.memory_space<vmem>>, vector<1x8x256xf32>,
    %c0_179 = arith.constant 0 : index
    %c0_180 = arith.constant 0 : index
    %c0_181 = arith.constant 0 : index
    %515 = vector.load %arg12[%c0_179, %c0_180, %c0_181] : memref<2x8x256xf32, #tpu.memory_space<vmem>>, vector<1x8x256xf32>
    %516 = vector.shape_cast %515 : vector<1x8x256xf32> to vector<8x256xf32>
    %517 = vector.shape_cast %464 : vector<8x256xf32> to vector<1x8x256xf32>
    tpu.vector_store %arg12[%c0_179, %c0_180, %c0_181], %517 {strides = array<i32>} : memref<2x8x256xf32, #tpu.memory_space<vmem>>, vector<1x8x256xf32>,
    %c1_182 = arith.constant 1 : index
    %c0_183 = arith.constant 0 : index
    %c0_184 = arith.constant 0 : index
    %518 = vector.load %arg12[%c1_182, %c0_183, %c0_184] : memref<2x8x256xf32, #tpu.memory_space<vmem>>, vector<1x8x256xf32>
    %519 = vector.shape_cast %518 : vector<1x8x256xf32> to vector<8x256xf32>
    %520 = vector.shape_cast %494 : vector<8x256xf32> to vector<1x8x256xf32>
    tpu.vector_store %arg12[%c1_182, %c0_183, %c0_184], %520 {strides = array<i32>} : memref<2x8x256xf32, #tpu.memory_space<vmem>>, vector<1x8x256xf32>,
    return
  }
}

</mosaic_0001>

<llo_original>
// kernel: lstm_name_forward.1
$region0: #{lstm_name_forward.1}
  #allocation0 [shape = 'u32[]', space=smem, size = 0x4, offset = 0x4, fixed_abs, tag = 'smem constant byte address 0x4 - core index']
  #allocation1 [shape = 'u32[144,128]{1,0:T(1,128)}', space=vmem, size = 0x12000, scoped, tag = 'internal scratch']
  #allocation2 [shape = 'f32[8,8,1024]{2,1,0:T(8,128)}', space=vmem, size = 0x40000, scoped, tag = 'scratch operand']
  %s0 = inlined_call_operand.vmem [shape: f32[64,128], index: 0, kind: input, shape index: {}]
  %s1 = inlined_call_operand.vmem [shape: f32[2,8,256], index: 1, kind: input, shape index: {}]
  %s2 = inlined_call_operand.vmem [shape: f32[2,8,256], index: 2, kind: input, shape index: {}]
  %s3 = inlined_call_operand.hbm [shape: bf16[128,1024], index: 3, kind: input, shape index: {}]
  %s4 = inlined_call_operand.hbm [shape: bf16[256,1024], index: 4, kind: input, shape index: {}]
  %s5 = inlined_call_operand.vmem [shape: f32[1,1024], index: 5, kind: input, shape index: {}]
  %s6 = inlined_call_operand.hbm [shape: bf16[512,1024], index: 6, kind: input, shape index: {}]
  %s7 = inlined_call_operand.vmem [shape: f32[1,1024], index: 7, kind: input, shape index: {}]
  %s8 = inlined_call_operand.vmem [shape: bf16[256,128], index: 8, kind: input, shape index: {}]
  %s9 = inlined_call_operand.vmem [shape: f32[1,128], index: 9, kind: input, shape index: {}]
  %s10 = inlined_call_operand.vmem [shape: f32[8,128], index: 10, kind: output, shape index: {0}]
  %s11 = inlined_call_operand.vmem [shape: f32[2,8,256], index: 11, kind: output, shape index: {1}]
  %s12 = inlined_call_operand.vmem [shape: f32[2,8,256], index: 12, kind: output, shape index: {2}]
  %13 = xla_tuple %s10, %s11, %s12
  %s14 = sld [smem:[#allocation0]]
  $region78: #{lstm_name_forward.1} parent=0
    _
  %s16 = ssub.s32 1, %s14
  %s17 = scalar_select 0, %s16, %s14
  $region1: #{lstm_name_forward.1} parent=0
    #allocation3 [shape = 'u8[262144]{0}', space=vmem, size = 0x40000, scoped, tag = 'input window, operand 3, single buffered']
    #allocation4 [shape = 's32[1]{0}', space=sflag, size = 0x4, scoped, tag = 'scoped memory for lstm_name_forward.1']
    #allocation5 [shape = 'u8[524288]{0}', space=vmem, size = 0x80000, scoped, tag = 'input window, operand 4, single buffered']
    #allocation6 [shape = 's32[1]{0}', space=sflag, size = 0x4, scoped, tag = 'scoped memory for lstm_name_forward.1']
    #allocation7 [shape = 'u8[1048576]{0}', space=vmem, size = 0x100000, scoped, tag = 'input window, operand 6, single buffered']
    %18 = vsyncpa [#allocation4], 0
    %19 = vsyncpa [#allocation6], 0
    // Predicated region
    $region2: #{lstm_name_forward.1} parent=1 // pred_check
      _
    $region3: #{lstm_name_forward.1} parent=1 // pred_check_branch
      %21 = sbr.rel (0) target = $region5
    $region4: #{lstm_name_forward.1} parent=1 // pred_region
      _
    $region5: #{lstm_name_forward.1} parent=1 // pred_fallthru
      _
    // Predicated region
    $region6: #{lstm_name_forward.1} parent=1 // pred_check
      _
    $region7: #{lstm_name_forward.1} parent=1 // pred_check_branch
      %23 = sbr.rel (0) target = $region9
    $region8: #{lstm_name_forward.1} parent=1 // pred_region
      _
    $region9: #{lstm_name_forward.1} parent=1 // pred_fallthru
      _
    // Predicated region
    $region10: #{lstm_name_forward.1} parent=1 // pred_check
      _
    $region11: #{lstm_name_forward.1} parent=1 // pred_check_branch
      %25 = sbr.rel (0) target = $region13
    $region12: #{lstm_name_forward.1} parent=1 // pred_region
      _
    $region13: #{lstm_name_forward.1} parent=1 // pred_fallthru
      _
    // Predicated region
    $region14: #{lstm_name_forward.1} parent=1 // pred_check
      _
    $region15: #{lstm_name_forward.1} parent=1 // pred_check_branch
      %27 = sbr.rel (0) target = $region17
    $region16: #{lstm_name_forward.1} parent=1 // pred_region
      %s29 = ssub.s32 8192, 8192
      %30 = vsyncadd [#allocation4], %s29
      %s31 = sshll.u32 [#allocation3], 4
      %s32 = int_to_ptr.vmem [resolvable:$true] %s31
      %37 = dma.hbm_to_vmem [thread:$0]  %s3, 8192, %s32, [#allocation4], 512, 512, 32
    $region17: #{lstm_name_forward.1} parent=1 // pred_fallthru
      _
    // Predicated region
    $region18: #{lstm_name_forward.1} parent=1 // pred_check
      _
    $region19: #{lstm_name_forward.1} parent=1 // pred_check_branch
      %39 = sbr.rel (0) target = $region21
    $region20: #{lstm_name_forward.1} parent=1 // pred_region
      %s41 = ssub.s32 16384, 16384
      %42 = vsyncadd [#allocation6], %s41
      %s43 = sshll.u32 [#allocation5], 4
      %s44 = int_to_ptr.vmem [resolvable:$true] %s43
      %49 = dma.hbm_to_vmem [thread:$0]  %s4, 16384, %s44, [#allocation6], 512, 512, 32
    $region21: #{lstm_name_forward.1} parent=1 // pred_fallthru
      _
    // Predicated region
    $region22: #{lstm_name_forward.1} parent=1 // pred_check
      _
    $region23: #{lstm_name_forward.1} parent=1 // pred_check_branch
      %51 = sbr.rel (0) target = $region25
    $region24: #{lstm_name_forward.1} parent=1 // pred_region
      _
    $region25: #{lstm_name_forward.1} parent=1 // pred_fallthru
      _
    // Predicated region
    $region26: #{lstm_name_forward.1} parent=1 // pred_check
      _
    $region27: #{lstm_name_forward.1} parent=1 // pred_check_branch
      %53 = sbr.rel (0) target = $region29
    $region28: #{lstm_name_forward.1} parent=1 // pred_region
      %s55 = ssub.s32 32768, 32768
      %56 = vsyncadd [#allocation6], %s55
      %s57 = sshll.u32 [#allocation7], 4
      %s58 = int_to_ptr.vmem [resolvable:$true] %s57
      %63 = dma.hbm_to_vmem [thread:$0]  %s6, 32768, %s58, [#allocation6], 512, 512, 32
    $region29: #{lstm_name_forward.1} parent=1 // pred_fallthru
      _
    // Predicated region
    $region30: #{lstm_name_forward.1} parent=1 // pred_check
      _
    $region31: #{lstm_name_forward.1} parent=1 // pred_check_branch
      %65 = sbr.rel (0) target = $region33
    $region32: #{lstm_name_forward.1} parent=1 // pred_region
      _
    $region33: #{lstm_name_forward.1} parent=1 // pred_fallthru
      _
    // Predicated region
    $region34: #{lstm_name_forward.1} parent=1 // pred_check
      _
    $region35: #{lstm_name_forward.1} parent=1 // pred_check_branch
      %67 = sbr.rel (0) target = $region37
    $region36: #{lstm_name_forward.1} parent=1 // pred_region
      _
    $region37: #{lstm_name_forward.1} parent=1 // pred_fallthru
      _
    // Predicated region
    $region38: #{lstm_name_forward.1} parent=1 // pred_check
      _
    $region39: #{lstm_name_forward.1} parent=1 // pred_check_branch
      %69 = sbr.rel (0) target = $region41
    $region40: #{lstm_name_forward.1} parent=1 // pred_region
      _
    $region41: #{lstm_name_forward.1} parent=1 // pred_fallthru
      _
    // Predicated region
    $region42: #{lstm_name_forward.1} parent=1 // pred_check
      _
    $region43: #{lstm_name_forward.1} parent=1 // pred_check_branch
      %71 = sbr.rel (0) target = $region45
    $region44: #{lstm_name_forward.1} parent=1 // pred_region
      %72 = dma.done [#allocation4], 8192
    $region45: #{lstm_name_forward.1} parent=1 // pred_fallthru
      _
    // Predicated region
    $region46: #{lstm_name_forward.1} parent=1 // pred_check
      _
    $region47: #{lstm_name_forward.1} parent=1 // pred_check_branch
      %74 = sbr.rel (0) target = $region49
    $region48: #{lstm_name_forward.1} parent=1 // pred_region
      %75 = dma.done [#allocation6], 16384
    $region49: #{lstm_name_forward.1} parent=1 // pred_fallthru
      _
    // Predicated region
    $region50: #{lstm_name_forward.1} parent=1 // pred_check
      _
    $region51: #{lstm_name_forward.1} parent=1 // pred_check_branch
      %77 = sbr.rel (0) target = $region53
    $region52: #{lstm_name_forward.1} parent=1 // pred_region
      %78 = dma.done [#allocation6], 32768
    $region53: #{lstm_name_forward.1} parent=1 // pred_fallthru
      _
    %v80 = vld [vmem:[%s0] sm:$0xff]
    %v81 = vld [vmem:[%s0 + $0x8] sm:$0xff]
    %v82 = vld [vmem:[%s0 + $0x10] sm:$0xff]
    %v83 = vld [vmem:[%s0 + $0x18] sm:$0xff]
    %v84 = vld [vmem:[%s0 + $0x20] sm:$0xff]
    %v85 = vld [vmem:[%s0 + $0x28] sm:$0xff]
    %v86 = vld [vmem:[%s0 + $0x30] sm:$0xff]
    %v87 = vld [vmem:[%s0 + $0x38] sm:$0xff]
    %v88 = vpack.c.bf16 %v81, %v80
    %v89 = vpack.c.bf16 %v83, %v82
    %v90 = vpack.c.bf16 %v85, %v84
    %v91 = vpack.c.bf16 %v87, %v86
    %v92 = vld [vmem:[#allocation3] sm:$0xff]
    %v93 = vld [vmem:[#allocation3 + $0x8] sm:$0xff]
    %v94 = vld [vmem:[#allocation3 + $0x10] sm:$0xff]
    %v95 = vld [vmem:[#allocation3 + $0x18] sm:$0xff]
    %v96 = vld [vmem:[#allocation3 + $0x20] sm:$0xff]
    %v97 = vld [vmem:[#allocation3 + $0x28] sm:$0xff]
    %v98 = vld [vmem:[#allocation3 + $0x30] sm:$0xff]
    %v99 = vld [vmem:[#allocation3 + $0x38] sm:$0xff]
    %v100 = vld [vmem:[#allocation3 + $0x40] sm:$0xff]
    %v101 = vld [vmem:[#allocation3 + $0x48] sm:$0xff]
    %v102 = vld [vmem:[#allocation3 + $0x50] sm:$0xff]
    %v103 = vld [vmem:[#allocation3 + $0x58] sm:$0xff]
    %v104 = vld [vmem:[#allocation3 + $0x60] sm:$0xff]
    %v105 = vld [vmem:[#allocation3 + $0x68] sm:$0xff]
    %v106 = vld [vmem:[#allocation3 + $0x70] sm:$0xff]
    %v107 = vld [vmem:[#allocation3 + $0x78] sm:$0xff]
    %v108 = vld [vmem:[#allocation3 + $0x80] sm:$0xff]
    %v109 = vld [vmem:[#allocation3 + $0x88] sm:$0xff]
    %v110 = vld [vmem:[#allocation3 + $0x90] sm:$0xff]
    %v111 = vld [vmem:[#allocation3 + $0x98] sm:$0xff]
    %v112 = vld [vmem:[#allocation3 + $0xa0] sm:$0xff]
    %v113 = vld [vmem:[#allocation3 + $0xa8] sm:$0xff]
    %v114 = vld [vmem:[#allocation3 + $0xb0] sm:$0xff]
    %v115 = vld [vmem:[#allocation3 + $0xb8] sm:$0xff]
    %v116 = vld [vmem:[#allocation3 + $0xc0] sm:$0xff]
    %v117 = vld [vmem:[#allocation3 + $0xc8] sm:$0xff]
    %v118 = vld [vmem:[#allocation3 + $0xd0] sm:$0xff]
    %v119 = vld [vmem:[#allocation3 + $0xd8] sm:$0xff]
    %v120 = vld [vmem:[#allocation3 + $0xe0] sm:$0xff]
    %v121 = vld [vmem:[#allocation3 + $0xe8] sm:$0xff]
    %v122 = vld [vmem:[#allocation3 + $0xf0] sm:$0xff]
    %v123 = vld [vmem:[#allocation3 + $0xf8] sm:$0xff]
    %v124 = vld [vmem:[#allocation3 + $0x100] sm:$0xff]
    %v125 = vld [vmem:[#allocation3 + $0x108] sm:$0xff]
    %v126 = vld [vmem:[#allocation3 + $0x110] sm:$0xff]
    %v127 = vld [vmem:[#allocation3 + $0x118] sm:$0xff]
    %v128 = vld [vmem:[#allocation3 + $0x120] sm:$0xff]
    %v129 = vld [vmem:[#allocation3 + $0x128] sm:$0xff]
    %v130 = vld [vmem:[#allocation3 + $0x130] sm:$0xff]
    %v131 = vld [vmem:[#allocation3 + $0x138] sm:$0xff]
    %v132 = vld [vmem:[#allocation3 + $0x140] sm:$0xff]
    %v133 = vld [vmem:[#allocation3 + $0x148] sm:$0xff]
    %v134 = vld [vmem:[#allocation3 + $0x150] sm:$0xff]
    %v135 = vld [vmem:[#allocation3 + $0x158] sm:$0xff]
    %v136 = vld [vmem:[#allocation3 + $0x160] sm:$0xff]
    %v137 = vld [vmem:[#allocation3 + $0x168] sm:$0xff]
    %v138 = vld [vmem:[#allocation3 + $0x170] sm:$0xff]
    %v139 = vld [vmem:[#allocation3 + $0x178] sm:$0xff]
    %v140 = vld [vmem:[#allocation3 + $0x180] sm:$0xff]
    %v141 = vld [vmem:[#allocation3 + $0x188] sm:$0xff]
    %v142 = vld [vmem:[#allocation3 + $0x190] sm:$0xff]
    %v143 = vld [vmem:[#allocation3 + $0x198] sm:$0xff]
    %v144 = vld [vmem:[#allocation3 + $0x1a0] sm:$0xff]
    %v145 = vld [vmem:[#allocation3 + $0x1a8] sm:$0xff]
    %v146 = vld [vmem:[#allocation3 + $0x1b0] sm:$0xff]
    %v147 = vld [vmem:[#allocation3 + $0x1b8] sm:$0xff]
    %v148 = vld [vmem:[#allocation3 + $0x1c0] sm:$0xff]
    %v149 = vld [vmem:[#allocation3 + $0x1c8] sm:$0xff]
    %v150 = vld [vmem:[#allocation3 + $0x1d0] sm:$0xff]
    %v151 = vld [vmem:[#allocation3 + $0x1d8] sm:$0xff]
    %v152 = vld [vmem:[#allocation3 + $0x1e0] sm:$0xff]
    %v153 = vld [vmem:[#allocation3 + $0x1e8] sm:$0xff]
    %v154 = vld [vmem:[#allocation3 + $0x1f0] sm:$0xff]
    %v155 = vld [vmem:[#allocation3 + $0x1f8] sm:$0xff]
    %v220 = vunpack.c.l.b16 %v92
    %v221 = vunpack.c.h.b16 %v92
    %v222 = vunpack.c.l.b16 %v93
    %v223 = vunpack.c.h.b16 %v93
    %v224 = vunpack.c.l.b16 %v94
    %v225 = vunpack.c.h.b16 %v94
    %v226 = vunpack.c.l.b16 %v95
    %v227 = vunpack.c.h.b16 %v95
    %v228 = vunpack.c.l.b16 %v96
    %v229 = vunpack.c.h.b16 %v96
    %v230 = vunpack.c.l.b16 %v97
    %v231 = vunpack.c.h.b16 %v97
    %v232 = vunpack.c.l.b16 %v98
    %v233 = vunpack.c.h.b16 %v98
    %v234 = vunpack.c.l.b16 %v99
    %v235 = vunpack.c.h.b16 %v99
    %v236 = vunpack.c.l.b16 %v100
    %v237 = vunpack.c.h.b16 %v100
    %v238 = vunpack.c.l.b16 %v101
    %v239 = vunpack.c.h.b16 %v101
    %v240 = vunpack.c.l.b16 %v102
    %v241 = vunpack.c.h.b16 %v102
    %v242 = vunpack.c.l.b16 %v103
    %v243 = vunpack.c.h.b16 %v103
    %v244 = vunpack.c.l.b16 %v104
    %v245 = vunpack.c.h.b16 %v104
    %v246 = vunpack.c.l.b16 %v105
    %v247 = vunpack.c.h.b16 %v105
    %v248 = vunpack.c.l.b16 %v106
    %v249 = vunpack.c.h.b16 %v106
    %v250 = vunpack.c.l.b16 %v107
    %v251 = vunpack.c.h.b16 %v107
    %v252 = vunpack.c.l.b16 %v108
    %v253 = vunpack.c.h.b16 %v108
    %v254 = vunpack.c.l.b16 %v109
    %v255 = vunpack.c.h.b16 %v109
    %v256 = vunpack.c.l.b16 %v110
    %v257 = vunpack.c.h.b16 %v110
    %v258 = vunpack.c.l.b16 %v111
    %v259 = vunpack.c.h.b16 %v111
    %v260 = vunpack.c.l.b16 %v112
    %v261 = vunpack.c.h.b16 %v112
    %v262 = vunpack.c.l.b16 %v113
    %v263 = vunpack.c.h.b16 %v113
    %v264 = vunpack.c.l.b16 %v114
    %v265 = vunpack.c.h.b16 %v114
    %v266 = vunpack.c.l.b16 %v115
    %v267 = vunpack.c.h.b16 %v115
    %v268 = vunpack.c.l.b16 %v116
    %v269 = vunpack.c.h.b16 %v116
    %v270 = vunpack.c.l.b16 %v117
    %v271 = vunpack.c.h.b16 %v117
    %v272 = vunpack.c.l.b16 %v118
    %v273 = vunpack.c.h.b16 %v118
    %v274 = vunpack.c.l.b16 %v119
    %v275 = vunpack.c.h.b16 %v119
    %v276 = vunpack.c.l.b16 %v120
    %v277 = vunpack.c.h.b16 %v120
    %v278 = vunpack.c.l.b16 %v121
    %v279 = vunpack.c.h.b16 %v121
    %v280 = vunpack.c.l.b16 %v122
    %v281 = vunpack.c.h.b16 %v122
    %v282 = vunpack.c.l.b16 %v123
    %v283 = vunpack.c.h.b16 %v123
    %v284 = vunpack.c.l.b16 %v124
    %v285 = vunpack.c.h.b16 %v124
    %v286 = vunpack.c.l.b16 %v125
    %v287 = vunpack.c.h.b16 %v125
    %v288 = vunpack.c.l.b16 %v126
    %v289 = vunpack.c.h.b16 %v126
    %v290 = vunpack.c.l.b16 %v127
    %v291 = vunpack.c.h.b16 %v127
    %v292 = vunpack.c.l.b16 %v128
    %v293 = vunpack.c.h.b16 %v128
    %v294 = vunpack.c.l.b16 %v129
    %v295 = vunpack.c.h.b16 %v129
    %v296 = vunpack.c.l.b16 %v130
    %v297 = vunpack.c.h.b16 %v130
    %v298 = vunpack.c.l.b16 %v131
    %v299 = vunpack.c.h.b16 %v131
    %v300 = vunpack.c.l.b16 %v132
    %v301 = vunpack.c.h.b16 %v132
    %v302 = vunpack.c.l.b16 %v133
    %v303 = vunpack.c.h.b16 %v133
    %v304 = vunpack.c.l.b16 %v134
    %v305 = vunpack.c.h.b16 %v134
    %v306 = vunpack.c.l.b16 %v135
    %v307 = vunpack.c.h.b16 %v135
    %v308 = vunpack.c.l.b16 %v136
    %v309 = vunpack.c.h.b16 %v136
    %v310 = vunpack.c.l.b16 %v137
    %v311 = vunpack.c.h.b16 %v137
    %v312 = vunpack.c.l.b16 %v138
    %v313 = vunpack.c.h.b16 %v138
    %v314 = vunpack.c.l.b16 %v139
    %v315 = vunpack.c.h.b16 %v139
    %v316 = vunpack.c.l.b16 %v140
    %v317 = vunpack.c.h.b16 %v140
    %v318 = vunpack.c.l.b16 %v141
    %v319 = vunpack.c.h.b16 %v141
    %v320 = vunpack.c.l.b16 %v142
    %v321 = vunpack.c.h.b16 %v142
    %v322 = vunpack.c.l.b16 %v143
    %v323 = vunpack.c.h.b16 %v143
    %v324 = vunpack.c.l.b16 %v144
    %v325 = vunpack.c.h.b16 %v144
    %v326 = vunpack.c.l.b16 %v145
    %v327 = vunpack.c.h.b16 %v145
    %v328 = vunpack.c.l.b16 %v146
    %v329 = vunpack.c.h.b16 %v146
    %v330 = vunpack.c.l.b16 %v147
    %v331 = vunpack.c.h.b16 %v147
    %v332 = vunpack.c.l.b16 %v148
    %v333 = vunpack.c.h.b16 %v148
    %v334 = vunpack.c.l.b16 %v149
    %v335 = vunpack.c.h.b16 %v149
    %v336 = vunpack.c.l.b16 %v150
    %v337 = vunpack.c.h.b16 %v150
    %v338 = vunpack.c.l.b16 %v151
    %v339 = vunpack.c.h.b16 %v151
    %v340 = vunpack.c.l.b16 %v152
    %v341 = vunpack.c.h.b16 %v152
    %v342 = vunpack.c.l.b16 %v153
    %v343 = vunpack.c.h.b16 %v153
    %v344 = vunpack.c.l.b16 %v154
    %v345 = vunpack.c.h.b16 %v154
    %v346 = vunpack.c.l.b16 %v155
    %v347 = vunpack.c.h.b16 %v155
    %v348 = vpack.c.b16 %v228, %v220
    %v349 = vpack.c.b16 %v229, %v221
    %v350 = vpack.c.b16 %v230, %v222
    %v351 = vpack.c.b16 %v231, %v223
    %v352 = vpack.c.b16 %v232, %v224
    %v353 = vpack.c.b16 %v233, %v225
    %v354 = vpack.c.b16 %v234, %v226
    %v355 = vpack.c.b16 %v235, %v227
    %v356 = vpack.c.b16 %v244, %v236
    %v357 = vpack.c.b16 %v245, %v237
    %v358 = vpack.c.b16 %v246, %v238
    %v359 = vpack.c.b16 %v247, %v239
    %v360 = vpack.c.b16 %v248, %v240
    %v361 = vpack.c.b16 %v249, %v241
    %v362 = vpack.c.b16 %v250, %v242
    %v363 = vpack.c.b16 %v251, %v243
    %v364 = vpack.c.b16 %v260, %v252
    %v365 = vpack.c.b16 %v261, %v253
    %v366 = vpack.c.b16 %v262, %v254
    %v367 = vpack.c.b16 %v263, %v255
    %v368 = vpack.c.b16 %v264, %v256
    %v369 = vpack.c.b16 %v265, %v257
    %v370 = vpack.c.b16 %v266, %v258
    %v371 = vpack.c.b16 %v267, %v259
    %v372 = vpack.c.b16 %v276, %v268
    %v373 = vpack.c.b16 %v277, %v269
    %v374 = vpack.c.b16 %v278, %v270
    %v375 = vpack.c.b16 %v279, %v271
    %v376 = vpack.c.b16 %v280, %v272
    %v377 = vpack.c.b16 %v281, %v273
    %v378 = vpack.c.b16 %v282, %v274
    %v379 = vpack.c.b16 %v283, %v275
    %v380 = vpack.c.b16 %v292, %v284
    %v381 = vpack.c.b16 %v293, %v285
    %v382 = vpack.c.b16 %v294, %v286
    %v383 = vpack.c.b16 %v295, %v287
    %v384 = vpack.c.b16 %v296, %v288
    %v385 = vpack.c.b16 %v297, %v289
    %v386 = vpack.c.b16 %v298, %v290
    %v387 = vpack.c.b16 %v299, %v291
    %v388 = vpack.c.b16 %v308, %v300
    %v389 = vpack.c.b16 %v309, %v301
    %v390 = vpack.c.b16 %v310, %v302
    %v391 = vpack.c.b16 %v311, %v303
    %v392 = vpack.c.b16 %v312, %v304
    %v393 = vpack.c.b16 %v313, %v305
    %v394 = vpack.c.b16 %v314, %v306
    %v395 = vpack.c.b16 %v315, %v307
    %v396 = vpack.c.b16 %v324, %v316
    %v397 = vpack.c.b16 %v325, %v317
    %v398 = vpack.c.b16 %v326, %v318
    %v399 = vpack.c.b16 %v327, %v319
    %v400 = vpack.c.b16 %v328, %v320
    %v401 = vpack.c.b16 %v329, %v321
    %v402 = vpack.c.b16 %v330, %v322
    %v403 = vpack.c.b16 %v331, %v323
    %v404 = vpack.c.b16 %v340, %v332
    %v405 = vpack.c.b16 %v341, %v333
    %v406 = vpack.c.b16 %v342, %v334
    %v407 = vpack.c.b16 %v343, %v335
    %v408 = vpack.c.b16 %v344, %v336
    %v409 = vpack.c.b16 %v345, %v337
    %v410 = vpack.c.b16 %v346, %v338
    %v411 = vpack.c.b16 %v347, %v339
    %476 = vmatprep.subr.bf16.mxu0 %v349
    %477 = vmatpush1.bf16.msra.mxu0 %v348
    %478 = vmatprep.subr.bf16.mxu0 %v357
    %479 = vmatpush1.bf16.msra.mxu0 %v356
    %480 = vmatprep.subr.bf16.mxu0 %v365
    %481 = vmatpush1.bf16.msra.mxu0 %v364
    %482 = vmatprep.subr.bf16.mxu0 %v373
    %483 = vmatpush1.bf16.msra.mxu0 %v372
    %484 = vmatprep.subr.bf16.mxu0 %v381
    %485 = vmatpush1.bf16.msra.mxu0 %v380
    %486 = vmatprep.subr.bf16.mxu0 %v389
    %487 = vmatpush1.bf16.msra.mxu0 %v388
    %488 = vmatprep.subr.bf16.mxu0 %v397
    %489 = vmatpush1.bf16.msra.mxu0 %v396
    %490 = vmatprep.subr.bf16.mxu0 %v405
    %491 = vmatpush1.bf16.msra.mxu0 %v404
    %492 = vmatprep.subr.bf16.mxu0 0
    %493 = vmatpush1.bf16.msra.mxu0 0
    %494 = vmatprep.subr.bf16.mxu0 0
    %495 = vmatpush1.bf16.msra.mxu0 0
    %496 = vmatprep.subr.bf16.mxu0 0
    %497 = vmatpush1.bf16.msra.mxu0 0
    %498 = vmatprep.subr.bf16.mxu0 0
    %499 = vmatpush1.bf16.msra.mxu0 0
    %500 = vmatprep.subr.bf16.mxu0 0
    %501 = vmatpush1.bf16.msra.mxu0 0
    %502 = vmatprep.subr.bf16.mxu0 0
    %503 = vmatpush1.bf16.msra.mxu0 0
    %504 = vmatprep.subr.bf16.mxu0 0
    %505 = vmatpush1.bf16.msra.mxu0 0
    %506 = vmatprep.subr.bf16.mxu0 0
    %507 = vmatpush1.bf16.msra.mxu0 0
    %508 = vmatprep.mubr.bf16.mxu0 0
    %509 = vmatmul.mubr.bf16.gmra.mrb[0].mxu0 %v88
    %v510 = vpop.f32.mrb[0].mxu0
    %v511 = vadd.f32 0.0, %v510
    %v512 = vpop.f32.mrb[0].mxu0
    %v513 = vadd.f32 0.0, %v512
    %v514 = vpop.f32.mrb[0].mxu0
    %v515 = vadd.f32 0.0, %v514
    %v516 = vpop.f32.mrb[0].mxu0
    %v517 = vadd.f32 0.0, %v516
    %518 = vmatprep.mubr.bf16.mxu0 0
    %519 = vmatmul.mubr.bf16.gmra.mrb[0].mxu0 %v89
    %v520 = vpop.f32.mrb[0].mxu0
    %v521 = vadd.f32 0.0, %v520
    %v522 = vpop.f32.mrb[0].mxu0
    %v523 = vadd.f32 0.0, %v522
    %v524 = vpop.f32.mrb[0].mxu0
    %v525 = vadd.f32 0.0, %v524
    %v526 = vpop.f32.mrb[0].mxu0
    %v527 = vadd.f32 0.0, %v526
    %528 = vmatprep.mubr.bf16.mxu0 0
    %529 = vmatmul.mubr.bf16.gmra.mrb[0].mxu0 %v90
    %v530 = vpop.f32.mrb[0].mxu0
    %v531 = vadd.f32 0.0, %v530
    %v532 = vpop.f32.mrb[0].mxu0
    %v533 = vadd.f32 0.0, %v532
    %v534 = vpop.f32.mrb[0].mxu0
    %v535 = vadd.f32 0.0, %v534
    %v536 = vpop.f32.mrb[0].mxu0
    %v537 = vadd.f32 0.0, %v536
    %538 = vmatprep.mubr.bf16.mxu0 0
    %539 = vmatmul.mubr.bf16.gmra.mrb[0].mxu0 %v91
    %v540 = vpop.f32.mrb[0].mxu0
    %v541 = vadd.f32 0.0, %v540
    %v542 = vpop.f32.mrb[0].mxu0
    %v543 = vadd.f32 0.0, %v542
    %v544 = vpop.f32.mrb[0].mxu0
    %v545 = vadd.f32 0.0, %v544
    %v546 = vpop.f32.mrb[0].mxu0
    %v547 = vadd.f32 0.0, %v546
    %548 = vdwg.mxu0
    %549 = vmatprep.subr.bf16.mxu0 %v351
    %550 = vmatpush1.bf16.msra.mxu0 %v350
    %551 = vmatprep.subr.bf16.mxu0 %v359
    %552 = vmatpush1.bf16.msra.mxu0 %v358
    %553 = vmatprep.subr.bf16.mxu0 %v367
    %554 = vmatpush1.bf16.msra.mxu0 %v366
    %555 = vmatprep.subr.bf16.mxu0 %v375
    %556 = vmatpush1.bf16.msra.mxu0 %v374
    %557 = vmatprep.subr.bf16.mxu0 %v383
    %558 = vmatpush1.bf16.msra.mxu0 %v382
    %559 = vmatprep.subr.bf16.mxu0 %v391
    %560 = vmatpush1.bf16.msra.mxu0 %v390
    %561 = vmatprep.subr.bf16.mxu0 %v399
    %562 = vmatpush1.bf16.msra.mxu0 %v398
    %563 = vmatprep.subr.bf16.mxu0 %v407
    %564 = vmatpush1.bf16.msra.mxu0 %v406
    %565 = vmatprep.subr.bf16.mxu0 0
    %566 = vmatpush1.bf16.msra.mxu0 0
    %567 = vmatprep.subr.bf16.mxu0 0
    %568 = vmatpush1.bf16.msra.mxu0 0
    %569 = vmatprep.subr.bf16.mxu0 0
    %570 = vmatpush1.bf16.msra.mxu0 0
    %571 = vmatprep.subr.bf16.mxu0 0
    %572 = vmatpush1.bf16.msra.mxu0 0
    %573 = vmatprep.subr.bf16.mxu0 0
    %574 = vmatpush1.bf16.msra.mxu0 0
    %575 = vmatprep.subr.bf16.mxu0 0
    %576 = vmatpush1.bf16.msra.mxu0 0
    %577 = vmatprep.subr.bf16.mxu0 0
    %578 = vmatpush1.bf16.msra.mxu0 0
    %579 = vmatprep.subr.bf16.mxu0 0
    %580 = vmatpush1.bf16.msra.mxu0 0
    %581 = vmatprep.mubr.bf16.mxu0 0
    %582 = vmatmul.mubr.bf16.gmra.mrb[0].mxu0 %v88
    %v583 = vpop.f32.mrb[0].mxu0
    %v584 = vadd.f32 0.0, %v583
    %v585 = vpop.f32.mrb[0].mxu0
    %v586 = vadd.f32 0.0, %v585
    %v587 = vpop.f32.mrb[0].mxu0
    %v588 = vadd.f32 0.0, %v587
    %v589 = vpop.f32.mrb[0].mxu0
    %v590 = vadd.f32 0.0, %v589
    %591 = vmatprep.mubr.bf16.mxu0 0
    %592 = vmatmul.mubr.bf16.gmra.mrb[0].mxu0 %v89
    %v593 = vpop.f32.mrb[0].mxu0
    %v594 = vadd.f32 0.0, %v593
    %v595 = vpop.f32.mrb[0].mxu0
    %v596 = vadd.f32 0.0, %v595
    %v597 = vpop.f32.mrb[0].mxu0
    %v598 = vadd.f32 0.0, %v597
    %v599 = vpop.f32.mrb[0].mxu0
    %v600 = vadd.f32 0.0, %v599
    %601 = vmatprep.mubr.bf16.mxu0 0
    %602 = vmatmul.mubr.bf16.gmra.mrb[0].mxu0 %v90
    %v603 = vpop.f32.mrb[0].mxu0
    %v604 = vadd.f32 0.0, %v603
    %v605 = vpop.f32.mrb[0].mxu0
    %v606 = vadd.f32 0.0, %v605
    %v607 = vpop.f32.mrb[0].mxu0
    %v608 = vadd.f32 0.0, %v607
    %v609 = vpop.f32.mrb[0].mxu0
    %v610 = vadd.f32 0.0, %v609
    %611 = vmatprep.mubr.bf16.mxu0 0
    %612 = vmatmul.mubr.bf16.gmra.mrb[0].mxu0 %v91
    %v613 = vpop.f32.mrb[0].mxu0
    %v614 = vadd.f32 0.0, %v613
    %v615 = vpop.f32.mrb[0].mxu0
    %v616 = vadd.f32 0.0, %v615
    %v617 = vpop.f32.mrb[0].mxu0
    %v618 = vadd.f32 0.0, %v617
    %v619 = vpop.f32.mrb[0].mxu0
    %v620 = vadd.f32 0.0, %v619
    %621 = vdwg.mxu0
    %622 = vmatprep.subr.bf16.mxu0 %v353
    %623 = vmatpush1.bf16.msra.mxu0 %v352
    %624 = vmatprep.subr.bf16.mxu0 %v361
    %625 = vmatpush1.bf16.msra.mxu0 %v360
    %626 = vmatprep.subr.bf16.mxu0 %v369
    %627 = vmatpush1.bf16.msra.mxu0 %v368
    %628 = vmatprep.subr.bf16.mxu0 %v377
    %629 = vmatpush1.bf16.msra.mxu0 %v376
    %630 = vmatprep.subr.bf16.mxu0 %v385
    %631 = vmatpush1.bf16.msra.mxu0 %v384
    %632 = vmatprep.subr.bf16.mxu0 %v393
    %633 = vmatpush1.bf16.msra.mxu0 %v392
    %634 = vmatprep.subr.bf16.mxu0 %v401
    %635 = vmatpush1.bf16.msra.mxu0 %v400
    %636 = vmatprep.subr.bf16.mxu0 %v409
    %637 = vmatpush1.bf16.msra.mxu0 %v408
    %638 = vmatprep.subr.bf16.mxu0 0
    %639 = vmatpush1.bf16.msra.mxu0 0
    %640 = vmatprep.subr.bf16.mxu0 0
    %641 = vmatpush1.bf16.msra.mxu0 0
    %642 = vmatprep.subr.bf16.mxu0 0
    %643 = vmatpush1.bf16.msra.mxu0 0
    %644 = vmatprep.subr.bf16.mxu0 0
    %645 = vmatpush1.bf16.msra.mxu0 0
    %646 = vmatprep.subr.bf16.mxu0 0
    %647 = vmatpush1.bf16.msra.mxu0 0
    %648 = vmatprep.subr.bf16.mxu0 0
    %649 = vmatpush1.bf16.msra.mxu0 0
    %650 = vmatprep.subr.bf16.mxu0 0
    %651 = vmatpush1.bf16.msra.mxu0 0
    %652 = vmatprep.subr.bf16.mxu0 0
    %653 = vmatpush1.bf16.msra.mxu0 0
    %654 = vmatprep.mubr.bf16.mxu0 0
    %655 = vmatmul.mubr.bf16.gmra.mrb[0].mxu0 %v88
    %v656 = vpop.f32.mrb[0].mxu0
    %v657 = vadd.f32 0.0, %v656
    %v658 = vpop.f32.mrb[0].mxu0
    %v659 = vadd.f32 0.0, %v658
    %v660 = vpop.f32.mrb[0].mxu0
    %v661 = vadd.f32 0.0, %v660
    %v662 = vpop.f32.mrb[0].mxu0
    %v663 = vadd.f32 0.0, %v662
    %664 = vmatprep.mubr.bf16.mxu0 0
    %665 = vmatmul.mubr.bf16.gmra.mrb[0].mxu0 %v89
    %v666 = vpop.f32.mrb[0].mxu0
    %v667 = vadd.f32 0.0, %v666
    %v668 = vpop.f32.mrb[0].mxu0
    %v669 = vadd.f32 0.0, %v668
    %v670 = vpop.f32.mrb[0].mxu0
    %v671 = vadd.f32 0.0, %v670
    %v672 = vpop.f32.mrb[0].mxu0
    %v673 = vadd.f32 0.0, %v672
    %674 = vmatprep.mubr.bf16.mxu0 0
    %675 = vmatmul.mubr.bf16.gmra.mrb[0].mxu0 %v90
    %v676 = vpop.f32.mrb[0].mxu0
    %v677 = vadd.f32 0.0, %v676
    %v678 = vpop.f32.mrb[0].mxu0
    %v679 = vadd.f32 0.0, %v678
    %v680 = vpop.f32.mrb[0].mxu0
    %v681 = vadd.f32 0.0, %v680
    %v682 = vpop.f32.mrb[0].mxu0
    %v683 = vadd.f32 0.0, %v682
    %684 = vmatprep.mubr.bf16.mxu0 0
    %685 = vmatmul.mubr.bf16.gmra.mrb[0].mxu0 %v91
    %v686 = vpop.f32.mrb[0].mxu0
    %v687 = vadd.f32 0.0, %v686
    %v688 = vpop.f32.mrb[0].mxu0
    %v689 = vadd.f32 0.0, %v688
    %v690 = vpop.f32.mrb[0].mxu0
    %v691 = vadd.f32 0.0, %v690
    %v692 = vpop.f32.mrb[0].mxu0
    %v693 = vadd.f32 0.0, %v692
    %694 = vdwg.mxu0
    %695 = vmatprep.subr.bf16.mxu0 %v355
    %696 = vmatpush1.bf16.msra.mxu0 %v354
    %697 = vmatprep.subr.bf16.mxu0 %v363
    %698 = vmatpush1.bf16.msra.mxu0 %v362
    %699 = vmatprep.subr.bf16.mxu0 %v371
    %700 = vmatpush1.bf16.msra.mxu0 %v370
    %701 = vmatprep.subr.bf16.mxu0 %v379
    %702 = vmatpush1.bf16.msra.mxu0 %v378
    %703 = vmatprep.subr.bf16.mxu0 %v387
    %704 = vmatpush1.bf16.msra.mxu0 %v386
    %705 = vmatprep.subr.bf16.mxu0 %v395
    %706 = vmatpush1.bf16.msra.mxu0 %v394
    %707 = vmatprep.subr.bf16.mxu0 %v403
    %708 = vmatpush1.bf16.msra.mxu0 %v402
    %709 = vmatprep.subr.bf16.mxu0 %v411
    %710 = vmatpush1.bf16.msra.mxu0 %v410
    %711 = vmatprep.subr.bf16.mxu0 0
    %712 = vmatpush1.bf16.msra.mxu0 0
    %713 = vmatprep.subr.bf16.mxu0 0
    %714 = vmatpush1.bf16.msra.mxu0 0
    %715 = vmatprep.subr.bf16.mxu0 0
    %716 = vmatpush1.bf16.msra.mxu0 0
    %717 = vmatprep.subr.bf16.mxu0 0
    %718 = vmatpush1.bf16.msra.mxu0 0
    %719 = vmatprep.subr.bf16.mxu0 0
    %720 = vmatpush1.bf16.msra.mxu0 0
    %721 = vmatprep.subr.bf16.mxu0 0
    %722 = vmatpush1.bf16.msra.mxu0 0
    %723 = vmatprep.subr.bf16.mxu0 0
    %724 = vmatpush1.bf16.msra.mxu0 0
    %725 = vmatprep.subr.bf16.mxu0 0
    %726 = vmatpush1.bf16.msra.mxu0 0
    %727 = vmatprep.mubr.bf16.mxu0 0
    %728 = vmatmul.mubr.bf16.gmra.mrb[0].mxu0 %v88
    %v729 = vpop.f32.mrb[0].mxu0
    %v730 = vadd.f32 0.0, %v729
    %v731 = vpop.f32.mrb[0].mxu0
    %v732 = vadd.f32 0.0, %v731
    %v733 = vpop.f32.mrb[0].mxu0
    %v734 = vadd.f32 0.0, %v733
    %v735 = vpop.f32.mrb[0].mxu0
    %v736 = vadd.f32 0.0, %v735
    %737 = vmatprep.mubr.bf16.mxu0 0
    %738 = vmatmul.mubr.bf16.gmra.mrb[0].mxu0 %v89
    %v739 = vpop.f32.mrb[0].mxu0
    %v740 = vadd.f32 0.0, %v739
    %v741 = vpop.f32.mrb[0].mxu0
    %v742 = vadd.f32 0.0, %v741
    %v743 = vpop.f32.mrb[0].mxu0
    %v744 = vadd.f32 0.0, %v743
    %v745 = vpop.f32.mrb[0].mxu0
    %v746 = vadd.f32 0.0, %v745
    %747 = vmatprep.mubr.bf16.mxu0 0
    %748 = vmatmul.mubr.bf16.gmra.mrb[0].mxu0 %v90
    %v749 = vpop.f32.mrb[0].mxu0
    %v750 = vadd.f32 0.0, %v749
    %v751 = vpop.f32.mrb[0].mxu0
    %v752 = vadd.f32 0.0, %v751
    %v753 = vpop.f32.mrb[0].mxu0
    %v754 = vadd.f32 0.0, %v753
    %v755 = vpop.f32.mrb[0].mxu0
    %v756 = vadd.f32 0.0, %v755
    %757 = vmatprep.mubr.bf16.mxu0 0
    %758 = vmatmul.mubr.bf16.gmra.mrb[0].mxu0 %v91
    %v759 = vpop.f32.mrb[0].mxu0
    %v760 = vadd.f32 0.0, %v759
    %v761 = vpop.f32.mrb[0].mxu0
    %v762 = vadd.f32 0.0, %v761
    %v763 = vpop.f32.mrb[0].mxu0
    %v764 = vadd.f32 0.0, %v763
    %v765 = vpop.f32.mrb[0].mxu0
    %v766 = vadd.f32 0.0, %v765
    %767 = vdwg.mxu0
    %v768 = vld [vmem:[%s5] sm:$0xff]
    %v770 = vlaneseq
    %v771 = vshrl.u32 %v770, 7
    %v772 = vsub.s32 0, %v771
    %v773 = vrot.slane %v768, %v772
    %v774 = vlaneseq
    %v775 = vshrl.u32 %v774, 7
    %v776 = vsub.s32 1, %v775
    %v777 = vrot.slane %v768, %v776
    %v778 = vlaneseq
    %v779 = vshrl.u32 %v778, 7
    %v780 = vsub.s32 2, %v779
    %v781 = vrot.slane %v768, %v780
    %v782 = vlaneseq
    %v783 = vshrl.u32 %v782, 7
    %v784 = vsub.s32 3, %v783
    %v785 = vrot.slane %v768, %v784
    %v786 = vlaneseq
    %v787 = vshrl.u32 %v786, 7
    %v788 = vsub.s32 4, %v787
    %v789 = vrot.slane %v768, %v788
    %v790 = vlaneseq
    %v791 = vshrl.u32 %v790, 7
    %v792 = vsub.s32 5, %v791
    %v793 = vrot.slane %v768, %v792
    %v794 = vlaneseq
    %v795 = vshrl.u32 %v794, 7
    %v796 = vsub.s32 6, %v795
    %v797 = vrot.slane %v768, %v796
    %v798 = vlaneseq
    %v799 = vshrl.u32 %v798, 7
    %v800 = vsub.s32 7, %v799
    %v801 = vrot.slane %v768, %v800
    %v810 = vadd.f32 %v511, %v773
    %v811 = vadd.f32 %v513, %v777
    %v812 = vadd.f32 %v584, %v781
    %v813 = vadd.f32 %v586, %v785
    %v814 = vadd.f32 %v657, %v789
    %v815 = vadd.f32 %v659, %v793
    %v816 = vadd.f32 %v730, %v797
    %v817 = vadd.f32 %v732, %v801
    %v818 = vadd.f32 %v515, %v773
    %v819 = vadd.f32 %v517, %v777
    %v820 = vadd.f32 %v588, %v781
    %v821 = vadd.f32 %v590, %v785
    %v822 = vadd.f32 %v661, %v789
    %v823 = vadd.f32 %v663, %v793
    %v824 = vadd.f32 %v734, %v797
    %v825 = vadd.f32 %v736, %v801
    %v826 = vadd.f32 %v521, %v773
    %v827 = vadd.f32 %v523, %v777
    %v828 = vadd.f32 %v594, %v781
    %v829 = vadd.f32 %v596, %v785
    %v830 = vadd.f32 %v667, %v789
    %v831 = vadd.f32 %v669, %v793
    %v832 = vadd.f32 %v740, %v797
    %v833 = vadd.f32 %v742, %v801
    %v834 = vadd.f32 %v525, %v773
    %v835 = vadd.f32 %v527, %v777
    %v836 = vadd.f32 %v598, %v781
    %v837 = vadd.f32 %v600, %v785
    %v838 = vadd.f32 %v671, %v789
    %v839 = vadd.f32 %v673, %v793
    %v840 = vadd.f32 %v744, %v797
    %v841 = vadd.f32 %v746, %v801
    %v842 = vadd.f32 %v531, %v773
    %v843 = vadd.f32 %v533, %v777
    %v844 = vadd.f32 %v604, %v781
    %v845 = vadd.f32 %v606, %v785
    %v846 = vadd.f32 %v677, %v789
    %v847 = vadd.f32 %v679, %v793
    %v848 = vadd.f32 %v750, %v797
    %v849 = vadd.f32 %v752, %v801
    %v850 = vadd.f32 %v535, %v773
    %v851 = vadd.f32 %v537, %v777
    %v852 = vadd.f32 %v608, %v781
    %v853 = vadd.f32 %v610, %v785
    %v854 = vadd.f32 %v681, %v789
    %v855 = vadd.f32 %v683, %v793
    %v856 = vadd.f32 %v754, %v797
    %v857 = vadd.f32 %v756, %v801
    %v858 = vadd.f32 %v541, %v773
    %v859 = vadd.f32 %v543, %v777
    %v860 = vadd.f32 %v614, %v781
    %v861 = vadd.f32 %v616, %v785
    %v862 = vadd.f32 %v687, %v789
    %v863 = vadd.f32 %v689, %v793
    %v864 = vadd.f32 %v760, %v797
    %v865 = vadd.f32 %v762, %v801
    %v866 = vadd.f32 %v545, %v773
    %v867 = vadd.f32 %v547, %v777
    %v868 = vadd.f32 %v618, %v781
    %v869 = vadd.f32 %v620, %v785
    %v870 = vadd.f32 %v691, %v789
    %v871 = vadd.f32 %v693, %v793
    %v872 = vadd.f32 %v764, %v797
    %v873 = vadd.f32 %v766, %v801
    %874 = vst [vmem:[#allocation2] sm:$0xff] %v810
    %875 = vst [vmem:[#allocation2 + $0x8] sm:$0xff] %v811
    %876 = vst [vmem:[#allocation2 + $0x10] sm:$0xff] %v812
    %877 = vst [vmem:[#allocation2 + $0x18] sm:$0xff] %v813
    %878 = vst [vmem:[#allocation2 + $0x20] sm:$0xff] %v814
    %879 = vst [vmem:[#allocation2 + $0x28] sm:$0xff] %v815
    %880 = vst [vmem:[#allocation2 + $0x30] sm:$0xff] %v816
    %881 = vst [vmem:[#allocation2 + $0x38] sm:$0xff] %v817
    %882 = vst [vmem:[#allocation2 + $0x40] sm:$0xff] %v818
    %883 = vst [vmem:[#allocation2 + $0x48] sm:$0xff] %v819
    %884 = vst [vmem:[#allocation2 + $0x50] sm:$0xff] %v820
    %885 = vst [vmem:[#allocation2 + $0x58] sm:$0xff] %v821
    %886 = vst [vmem:[#allocation2 + $0x60] sm:$0xff] %v822
    %887 = vst [vmem:[#allocation2 + $0x68] sm:$0xff] %v823
    %888 = vst [vmem:[#allocation2 + $0x70] sm:$0xff] %v824
    %889 = vst [vmem:[#allocation2 + $0x78] sm:$0xff] %v825
    %890 = vst [vmem:[#allocation2 + $0x80] sm:$0xff] %v826
    %891 = vst [vmem:[#allocation2 + $0x88] sm:$0xff] %v827
    %892 = vst [vmem:[#allocation2 + $0x90] sm:$0xff] %v828
    %893 = vst [vmem:[#allocation2 + $0x98] sm:$0xff] %v829
    %894 = vst [vmem:[#allocation2 + $0xa0] sm:$0xff] %v830
    %895 = vst [vmem:[#allocation2 + $0xa8] sm:$0xff] %v831
    %896 = vst [vmem:[#allocation2 + $0xb0] sm:$0xff] %v832
    %897 = vst [vmem:[#allocation2 + $0xb8] sm:$0xff] %v833
    %898 = vst [vmem:[#allocation2 + $0xc0] sm:$0xff] %v834
    %899 = vst [vmem:[#allocation2 + $0xc8] sm:$0xff] %v835
    %900 = vst [vmem:[#allocation2 + $0xd0] sm:$0xff] %v836
    %901 = vst [vmem:[#allocation2 + $0xd8] sm:$0xff] %v837
    %902 = vst [vmem:[#allocation2 + $0xe0] sm:$0xff] %v838
    %903 = vst [vmem:[#allocation2 + $0xe8] sm:$0xff] %v839
    %904 = vst [vmem:[#allocation2 + $0xf0] sm:$0xff] %v840
    %905 = vst [vmem:[#allocation2 + $0xf8] sm:$0xff] %v841
    %906 = vst [vmem:[#allocation2 + $0x100] sm:$0xff] %v842
    %907 = vst [vmem:[#allocation2 + $0x108] sm:$0xff] %v843
    %908 = vst [vmem:[#allocation2 + $0x110] sm:$0xff] %v844
    %909 = vst [vmem:[#allocation2 + $0x118] sm:$0xff] %v845
    %910 = vst [vmem:[#allocation2 + $0x120] sm:$0xff] %v846
    %911 = vst [vmem:[#allocation2 + $0x128] sm:$0xff] %v847
    %912 = vst [vmem:[#allocation2 + $0x130] sm:$0xff] %v848
    %913 = vst [vmem:[#allocation2 + $0x138] sm:$0xff] %v849
    %914 = vst [vmem:[#allocation2 + $0x140] sm:$0xff] %v850
    %915 = vst [vmem:[#allocation2 + $0x148] sm:$0xff] %v851
    %916 = vst [vmem:[#allocation2 + $0x150] sm:$0xff] %v852
    %917 = vst [vmem:[#allocation2 + $0x158] sm:$0xff] %v853
    %918 = vst [vmem:[#allocation2 + $0x160] sm:$0xff] %v854
    %919 = vst [vmem:[#allocation2 + $0x168] sm:$0xff] %v855
    %920 = vst [vmem:[#allocation2 + $0x170] sm:$0xff] %v856
    %921 = vst [vmem:[#allocation2 + $0x178] sm:$0xff] %v857
    %922 = vst [vmem:[#allocation2 + $0x180] sm:$0xff] %v858
    %923 = vst [vmem:[#allocation2 + $0x188] sm:$0xff] %v859
    %924 = vst [vmem:[#allocation2 + $0x190] sm:$0xff] %v860
    %925 = vst [vmem:[#allocation2 + $0x198] sm:$0xff] %v861
    %926 = vst [vmem:[#allocation2 + $0x1a0] sm:$0xff] %v862
    %927 = vst [vmem:[#allocation2 + $0x1a8] sm:$0xff] %v863
    %928 = vst [vmem:[#allocation2 + $0x1b0] sm:$0xff] %v864
    %929 = vst [vmem:[#allocation2 + $0x1b8] sm:$0xff] %v865
    %930 = vst [vmem:[#allocation2 + $0x1c0] sm:$0xff] %v866
    %931 = vst [vmem:[#allocation2 + $0x1c8] sm:$0xff] %v867
    %932 = vst [vmem:[#allocation2 + $0x1d0] sm:$0xff] %v868
    %933 = vst [vmem:[#allocation2 + $0x1d8] sm:$0xff] %v869
    %934 = vst [vmem:[#allocation2 + $0x1e0] sm:$0xff] %v870
    %935 = vst [vmem:[#allocation2 + $0x1e8] sm:$0xff] %v871
    %936 = vst [vmem:[#allocation2 + $0x1f0] sm:$0xff] %v872
    %937 = vst [vmem:[#allocation2 + $0x1f8] sm:$0xff] %v873
    %v938 = vld [vmem:[%s1] sm:$0xff]
    %v939 = vld [vmem:[%s1 + $0x8] sm:$0xff]
    %v940 = vld [vmem:[%s2] sm:$0xff]
    %v941 = vld [vmem:[%s2 + $0x8] sm:$0xff]
    %v942 = vld [vmem:[#allocation2] sm:$0xff]
    %v943 = vld [vmem:[#allocation2 + $0x8] sm:$0xff]
    %v944 = vld [vmem:[#allocation2 + $0x10] sm:$0xff]
    %v945 = vld [vmem:[#allocation2 + $0x18] sm:$0xff]
    %v946 = vld [vmem:[#allocation2 + $0x20] sm:$0xff]
    %v947 = vld [vmem:[#allocation2 + $0x28] sm:$0xff]
    %v948 = vld [vmem:[#allocation2 + $0x30] sm:$0xff]
    %v949 = vld [vmem:[#allocation2 + $0x38] sm:$0xff]
    %v950 = vpack.c.bf16 %v938, %v938
    %v951 = vpack.c.bf16 %v939, %v939
    %v952 = vld [vmem:[#allocation5] sm:$0xff]
    %v953 = vld [vmem:[#allocation5 + $0x8] sm:$0xff]
    %v954 = vld [vmem:[#allocation5 + $0x10] sm:$0xff]
    %v955 = vld [vmem:[#allocation5 + $0x18] sm:$0xff]
    %v956 = vld [vmem:[#allocation5 + $0x20] sm:$0xff]
    %v957 = vld [vmem:[#allocation5 + $0x28] sm:$0xff]
    %v958 = vld [vmem:[#allocation5 + $0x30] sm:$0xff]
    %v959 = vld [vmem:[#allocation5 + $0x38] sm:$0xff]
    %v960 = vld [vmem:[#allocation5 + $0x40] sm:$0xff]
    %v961 = vld [vmem:[#allocation5 + $0x48] sm:$0xff]
    %v962 = vld [vmem:[#allocation5 + $0x50] sm:$0xff]
    %v963 = vld [vmem:[#allocation5 + $0x58] sm:$0xff]
    %v964 = vld [vmem:[#allocation5 + $0x60] sm:$0xff]
    %v965 = vld [vmem:[#allocation5 + $0x68] sm:$0xff]
    %v966 = vld [vmem:[#allocation5 + $0x70] sm:$0xff]
    %v967 = vld [vmem:[#allocation5 + $0x78] sm:$0xff]
    %v968 = vld [vmem:[#allocation5 + $0x80] sm:$0xff]
    %v969 = vld [vmem:[#allocation5 + $0x88] sm:$0xff]
    %v970 = vld [vmem:[#allocation5 + $0x90] sm:$0xff]
    %v971 = vld [vmem:[#allocation5 + $0x98] sm:$0xff]
    %v972 = vld [vmem:[#allocation5 + $0xa0] sm:$0xff]
    %v973 = vld [vmem:[#allocation5 + $0xa8] sm:$0xff]
    %v974 = vld [vmem:[#allocation5 + $0xb0] sm:$0xff]
    %v975 = vld [vmem:[#allocation5 + $0xb8] sm:$0xff]
    %v976 = vld [vmem:[#allocation5 + $0xc0] sm:$0xff]
    %v977 = vld [vmem:[#allocation5 + $0xc8] sm:$0xff]
    %v978 = vld [vmem:[#allocation5 + $0xd0] sm:$0xff]
    %v979 = vld [vmem:[#allocation5 + $0xd8] sm:$0xff]
    %v980 = vld [vmem:[#allocation5 + $0xe0] sm:$0xff]
    %v981 = vld [vmem:[#allocation5 + $0xe8] sm:$0xff]
    %v982 = vld [vmem:[#allocation5 + $0xf0] sm:$0xff]
    %v983 = vld [vmem:[#allocation5 + $0xf8] sm:$0xff]
    %v984 = vld [vmem:[#allocation5 + $0x100] sm:$0xff]
    %v985 = vld [vmem:[#allocation5 + $0x108] sm:$0xff]
    %v986 = vld [vmem:[#allocation5 + $0x110] sm:$0xff]
    %v987 = vld [vmem:[#allocation5 + $0x118] sm:$0xff]
    %v988 = vld [vmem:[#allocation5 + $0x120] sm:$0xff]
    %v989 = vld [vmem:[#allocation5 + $0x128] sm:$0xff]
    %v990 = vld [vmem:[#allocation5 + $0x130] sm:$0xff]
    %v991 = vld [vmem:[#allocation5 + $0x138] sm:$0xff]
    %v992 = vld [vmem:[#allocation5 + $0x140] sm:$0xff]
    %v993 = vld [vmem:[#allocation5 + $0x148] sm:$0xff]
    %v994 = vld [vmem:[#allocation5 + $0x150] sm:$0xff]
    %v995 = vld [vmem:[#allocation5 + $0x158] sm:$0xff]
    %v996 = vld [vmem:[#allocation5 + $0x160] sm:$0xff]
    %v997 = vld [vmem:[#allocation5 + $0x168] sm:$0xff]
    %v998 = vld [vmem:[#allocation5 + $0x170] sm:$0xff]
    %v999 = vld [vmem:[#allocation5 + $0x178] sm:$0xff]
    %v1000 = vld [vmem:[#allocation5 + $0x180] sm:$0xff]
    %v1001 = vld [vmem:[#allocation5 + $0x188] sm:$0xff]
    %v1002 = vld [vmem:[#allocation5 + $0x190] sm:$0xff]
    %v1003 = vld [vmem:[#allocation5 + $0x198] sm:$0xff]
    %v1004 = vld [vmem:[#allocation5 + $0x1a0] sm:$0xff]
    %v1005 = vld [vmem:[#allocation5 + $0x1a8] sm:$0xff]
    %v1006 = vld [vmem:[#allocation5 + $0x1b0] sm:$0xff]
    %v1007 = vld [vmem:[#allocation5 + $0x1b8] sm:$0xff]
    %v1008 = vld [vmem:[#allocation5 + $0x1c0] sm:$0xff]
    %v1009 = vld [vmem:[#allocation5 + $0x1c8] sm:$0xff]
    %v1010 = vld [vmem:[#allocation5 + $0x1d0] sm:$0xff]
    %v1011 = vld [vmem:[#allocation5 + $0x1d8] sm:$0xff]
    %v1012 = vld [vmem:[#allocation5 + $0x1e0] sm:$0xff]
    %v1013 = vld [vmem:[#allocation5 + $0x1e8] sm:$0xff]
    %v1014 = vld [vmem:[#allocation5 + $0x1f0] sm:$0xff]
    %v1015 = vld [vmem:[#allocation5 + $0x1f8] sm:$0xff]
    %v1016 = vld [vmem:[#allocation5 + $0x200] sm:$0xff]
    %v1017 = vld [vmem:[#allocation5 + $0x208] sm:$0xff]
    %v1018 = vld [vmem:[#allocation5 + $0x210] sm:$0xff]
    %v1019 = vld [vmem:[#allocation5 + $0x218] sm:$0xff]
    %v1020 = vld [vmem:[#allocation5 + $0x220] sm:$0xff]
    %v1021 = vld [vmem:[#allocation5 + $0x228] sm:$0xff]
    %v1022 = vld [vmem:[#allocation5 + $0x230] sm:$0xff]
    %v1023 = vld [vmem:[#allocation5 + $0x238] sm:$0xff]
    %v1024 = vld [vmem:[#allocation5 + $0x240] sm:$0xff]
    %v1025 = vld [vmem:[#allocation5 + $0x248] sm:$0xff]
    %v1026 = vld [vmem:[#allocation5 + $0x250] sm:$0xff]
    %v1027 = vld [vmem:[#allocation5 + $0x258] sm:$0xff]
    %v1028 = vld [vmem:[#allocation5 + $0x260] sm:$0xff]
    %v1029 = vld [vmem:[#allocation5 + $0x268] sm:$0xff]
    %v1030 = vld [vmem:[#allocation5 + $0x270] sm:$0xff]
    %v1031 = vld [vmem:[#allocation5 + $0x278] sm:$0xff]
    %v1032 = vld [vmem:[#allocation5 + $0x280] sm:$0xff]
    %v1033 = vld [vmem:[#allocation5 + $0x288] sm:$0xff]
    %v1034 = vld [vmem:[#allocation5 + $0x290] sm:$0xff]
    %v1035 = vld [vmem:[#allocation5 + $0x298] sm:$0xff]
    %v1036 = vld [vmem:[#allocation5 + $0x2a0] sm:$0xff]
    %v1037 = vld [vmem:[#allocation5 + $0x2a8] sm:$0xff]
    %v1038 = vld [vmem:[#allocation5 + $0x2b0] sm:$0xff]
    %v1039 = vld [vmem:[#allocation5 + $0x2b8] sm:$0xff]
    %v1040 = vld [vmem:[#allocation5 + $0x2c0] sm:$0xff]
    %v1041 = vld [vmem:[#allocation5 + $0x2c8] sm:$0xff]
    %v1042 = vld [vmem:[#allocation5 + $0x2d0] sm:$0xff]
    %v1043 = vld [vmem:[#allocation5 + $0x2d8] sm:$0xff]
    %v1044 = vld [vmem:[#allocation5 + $0x2e0] sm:$0xff]
    %v1045 = vld [vmem:[#allocation5 + $0x2e8] sm:$0xff]
    %v1046 = vld [vmem:[#allocation5 + $0x2f0] sm:$0xff]
    %v1047 = vld [vmem:[#allocation5 + $0x2f8] sm:$0xff]
    %v1048 = vld [vmem:[#allocation5 + $0x300] sm:$0xff]
    %v1049 = vld [vmem:[#allocation5 + $0x308] sm:$0xff]
    %v1050 = vld [vmem:[#allocation5 + $0x310] sm:$0xff]
    %v1051 = vld [vmem:[#allocation5 + $0x318] sm:$0xff]
    %v1052 = vld [vmem:[#allocation5 + $0x320] sm:$0xff]
    %v1053 = vld [vmem:[#allocation5 + $0x328] sm:$0xff]
    %v1054 = vld [vmem:[#allocation5 + $0x330] sm:$0xff]
    %v1055 = vld [vmem:[#allocation5 + $0x338] sm:$0xff]
    %v1056 = vld [vmem:[#allocation5 + $0x340] sm:$0xff]
    %v1057 = vld [vmem:[#allocation5 + $0x348] sm:$0xff]
    %v1058 = vld [vmem:[#allocation5 + $0x350] sm:$0xff]
    %v1059 = vld [vmem:[#allocation5 + $0x358] sm:$0xff]
    %v1060 = vld [vmem:[#allocation5 + $0x360] sm:$0xff]
    %v1061 = vld [vmem:[#allocation5 + $0x368] sm:$0xff]
    %v1062 = vld [vmem:[#allocation5 + $0x370] sm:$0xff]
    %v1063 = vld [vmem:[#allocation5 + $0x378] sm:$0xff]
    %v1064 = vld [vmem:[#allocation5 + $0x380] sm:$0xff]
    %v1065 = vld [vmem:[#allocation5 + $0x388] sm:$0xff]
    %v1066 = vld [vmem:[#allocation5 + $0x390] sm:$0xff]
    %v1067 = vld [vmem:[#allocation5 + $0x398] sm:$0xff]
    %v1068 = vld [vmem:[#allocation5 + $0x3a0] sm:$0xff]
    %v1069 = vld [vmem:[#allocation5 + $0x3a8] sm:$0xff]
    %v1070 = vld [vmem:[#allocation5 + $0x3b0] sm:$0xff]
    %v1071 = vld [vmem:[#allocation5 + $0x3b8] sm:$0xff]
    %v1072 = vld [vmem:[#allocation5 + $0x3c0] sm:$0xff]
    %v1073 = vld [vmem:[#allocation5 + $0x3c8] sm:$0xff]
    %v1074 = vld [vmem:[#allocation5 + $0x3d0] sm:$0xff]
    %v1075 = vld [vmem:[#allocation5 + $0x3d8] sm:$0xff]
    %v1076 = vld [vmem:[#allocation5 + $0x3e0] sm:$0xff]
    %v1077 = vld [vmem:[#allocation5 + $0x3e8] sm:$0xff]
    %v1078 = vld [vmem:[#allocation5 + $0x3f0] sm:$0xff]
    %v1079 = vld [vmem:[#allocation5 + $0x3f8] sm:$0xff]
    %v1208 = vunpack.c.l.b16 %v952
    %v1209 = vunpack.c.h.b16 %v952
    %v1210 = vunpack.c.l.b16 %v953
    %v1211 = vunpack.c.h.b16 %v953
    %v1212 = vunpack.c.l.b16 %v954
    %v1213 = vunpack.c.h.b16 %v954
    %v1214 = vunpack.c.l.b16 %v955
    %v1215 = vunpack.c.h.b16 %v955
    %v1216 = vunpack.c.l.b16 %v956
    %v1217 = vunpack.c.h.b16 %v956
    %v1218 = vunpack.c.l.b16 %v957
    %v1219 = vunpack.c.h.b16 %v957
    %v1220 = vunpack.c.l.b16 %v958
    %v1221 = vunpack.c.h.b16 %v958
    %v1222 = vunpack.c.l.b16 %v959
    %v1223 = vunpack.c.h.b16 %v959
    %v1224 = vunpack.c.l.b16 %v960
    %v1225 = vunpack.c.h.b16 %v960
    %v1226 = vunpack.c.l.b16 %v961
    %v1227 = vunpack.c.h.b16 %v961
    %v1228 = vunpack.c.l.b16 %v962
    %v1229 = vunpack.c.h.b16 %v962
    %v1230 = vunpack.c.l.b16 %v963
    %v1231 = vunpack.c.h.b16 %v963
    %v1232 = vunpack.c.l.b16 %v964
    %v1233 = vunpack.c.h.b16 %v964
    %v1234 = vunpack.c.l.b16 %v965
    %v1235 = vunpack.c.h.b16 %v965
    %v1236 = vunpack.c.l.b16 %v966
    %v1237 = vunpack.c.h.b16 %v966
    %v1238 = vunpack.c.l.b16 %v967
    %v1239 = vunpack.c.h.b16 %v967
    %v1240 = vunpack.c.l.b16 %v968
    %v1241 = vunpack.c.h.b16 %v968
    %v1242 = vunpack.c.l.b16 %v969
    %v1243 = vunpack.c.h.b16 %v969
    %v1244 = vunpack.c.l.b16 %v970
    %v1245 = vunpack.c.h.b16 %v970
    %v1246 = vunpack.c.l.b16 %v971
    %v1247 = vunpack.c.h.b16 %v971
    %v1248 = vunpack.c.l.b16 %v972
    %v1249 = vunpack.c.h.b16 %v972
    %v1250 = vunpack.c.l.b16 %v973
    %v1251 = vunpack.c.h.b16 %v973
    %v1252 = vunpack.c.l.b16 %v974
    %v1253 = vunpack.c.h.b16 %v974
    %v1254 = vunpack.c.l.b16 %v975
    %v1255 = vunpack.c.h.b16 %v975
    %v1256 = vunpack.c.l.b16 %v976
    %v1257 = vunpack.c.h.b16 %v976
    %v1258 = vunpack.c.l.b16 %v977
    %v1259 = vunpack.c.h.b16 %v977
    %v1260 = vunpack.c.l.b16 %v978
    %v1261 = vunpack.c.h.b16 %v978
    %v1262 = vunpack.c.l.b16 %v979
    %v1263 = vunpack.c.h.b16 %v979
    %v1264 = vunpack.c.l.b16 %v980
    %v1265 = vunpack.c.h.b16 %v980
    %v1266 = vunpack.c.l.b16 %v981
    %v1267 = vunpack.c.h.b16 %v981
    %v1268 = vunpack.c.l.b16 %v982
    %v1269 = vunpack.c.h.b16 %v982
    %v1270 = vunpack.c.l.b16 %v983
    %v1271 = vunpack.c.h.b16 %v983
    %v1272 = vunpack.c.l.b16 %v984
    %v1273 = vunpack.c.h.b16 %v984
    %v1274 = vunpack.c.l.b16 %v985
    %v1275 = vunpack.c.h.b16 %v985
    %v1276 = vunpack.c.l.b16 %v986
    %v1277 = vunpack.c.h.b16 %v986
    %v1278 = vunpack.c.l.b16 %v987
    %v1279 = vunpack.c.h.b16 %v987
    %v1280 = vunpack.c.l.b16 %v988
    %v1281 = vunpack.c.h.b16 %v988
    %v1282 = vunpack.c.l.b16 %v989
    %v1283 = vunpack.c.h.b16 %v989
    %v1284 = vunpack.c.l.b16 %v990
    %v1285 = vunpack.c.h.b16 %v990
    %v1286 = vunpack.c.l.b16 %v991
    %v1287 = vunpack.c.h.b16 %v991
    %v1288 = vunpack.c.l.b16 %v992
    %v1289 = vunpack.c.h.b16 %v992
    %v1290 = vunpack.c.l.b16 %v993
    %v1291 = vunpack.c.h.b16 %v993
    %v1292 = vunpack.c.l.b16 %v994
    %v1293 = vunpack.c.h.b16 %v994
    %v1294 = vunpack.c.l.b16 %v995
    %v1295 = vunpack.c.h.b16 %v995
    %v1296 = vunpack.c.l.b16 %v996
    %v1297 = vunpack.c.h.b16 %v996
    %v1298 = vunpack.c.l.b16 %v997
    %v1299 = vunpack.c.h.b16 %v997
    %v1300 = vunpack.c.l.b16 %v998
    %v1301 = vunpack.c.h.b16 %v998
    %v1302 = vunpack.c.l.b16 %v999
    %v1303 = vunpack.c.h.b16 %v999
    %v1304 = vunpack.c.l.b16 %v1000
    %v1305 = vunpack.c.h.b16 %v1000
    %v1306 = vunpack.c.l.b16 %v1001
    %v1307 = vunpack.c.h.b16 %v1001
    %v1308 = vunpack.c.l.b16 %v1002
    %v1309 = vunpack.c.h.b16 %v1002
    %v1310 = vunpack.c.l.b16 %v1003
    %v1311 = vunpack.c.h.b16 %v1003
    %v1312 = vunpack.c.l.b16 %v1004
    %v1313 = vunpack.c.h.b16 %v1004
    %v1314 = vunpack.c.l.b16 %v1005
    %v1315 = vunpack.c.h.b16 %v1005
    %v1316 = vunpack.c.l.b16 %v1006
    %v1317 = vunpack.c.h.b16 %v1006
    %v1318 = vunpack.c.l.b16 %v1007
    %v1319 = vunpack.c.h.b16 %v1007
    %v1320 = vunpack.c.l.b16 %v1008
    %v1321 = vunpack.c.h.b16 %v1008
    %v1322 = vunpack.c.l.b16 %v1009
    %v1323 = vunpack.c.h.b16 %v1009
    %v1324 = vunpack.c.l.b16 %v1010
    %v1325 = vunpack.c.h.b16 %v1010
    %v1326 = vunpack.c.l.b16 %v1011
    %v1327 = vunpack.c.h.b16 %v1011
    %v1328 = vunpack.c.l.b16 %v1012
    %v1329 = vunpack.c.h.b16 %v1012
    %v1330 = vunpack.c.l.b16 %v1013
    %v1331 = vunpack.c.h.b16 %v1013
    %v1332 = vunpack.c.l.b16 %v1014
    %v1333 = vunpack.c.h.b16 %v1014
    %v1334 = vunpack.c.l.b16 %v1015
    %v1335 = vunpack.c.h.b16 %v1015
    %v1336 = vunpack.c.l.b16 %v1016
    %v1337 = vunpack.c.h.b16 %v1016
    %v1338 = vunpack.c.l.b16 %v1017
    %v1339 = vunpack.c.h.b16 %v1017
    %v1340 = vunpack.c.l.b16 %v1018
    %v1341 = vunpack.c.h.b16 %v1018
    %v1342 = vunpack.c.l.b16 %v1019
    %v1343 = vunpack.c.h.b16 %v1019
    %v1344 = vunpack.c.l.b16 %v1020
    %v1345 = vunpack.c.h.b16 %v1020
    %v1346 = vunpack.c.l.b16 %v1021
    %v1347 = vunpack.c.h.b16 %v1021
    %v1348 = vunpack.c.l.b16 %v1022
    %v1349 = vunpack.c.h.b16 %v1022
    %v1350 = vunpack.c.l.b16 %v1023
    %v1351 = vunpack.c.h.b16 %v1023
    %v1352 = vunpack.c.l.b16 %v1024
    %v1353 = vunpack.c.h.b16 %v1024
    %v1354 = vunpack.c.l.b16 %v1025
    %v1355 = vunpack.c.h.b16 %v1025
    %v1356 = vunpack.c.l.b16 %v1026
    %v1357 = vunpack.c.h.b16 %v1026
    %v1358 = vunpack.c.l.b16 %v1027
    %v1359 = vunpack.c.h.b16 %v1027
    %v1360 = vunpack.c.l.b16 %v1028
    %v1361 = vunpack.c.h.b16 %v1028
    %v1362 = vunpack.c.l.b16 %v1029
    %v1363 = vunpack.c.h.b16 %v1029
    %v1364 = vunpack.c.l.b16 %v1030
    %v1365 = vunpack.c.h.b16 %v1030
    %v1366 = vunpack.c.l.b16 %v1031
    %v1367 = vunpack.c.h.b16 %v1031
    %v1368 = vunpack.c.l.b16 %v1032
    %v1369 = vunpack.c.h.b16 %v1032
    %v1370 = vunpack.c.l.b16 %v1033
    %v1371 = vunpack.c.h.b16 %v1033
    %v1372 = vunpack.c.l.b16 %v1034
    %v1373 = vunpack.c.h.b16 %v1034
    %v1374 = vunpack.c.l.b16 %v1035
    %v1375 = vunpack.c.h.b16 %v1035
    %v1376 = vunpack.c.l.b16 %v1036
    %v1377 = vunpack.c.h.b16 %v1036
    %v1378 = vunpack.c.l.b16 %v1037
    %v1379 = vunpack.c.h.b16 %v1037
    %v1380 = vunpack.c.l.b16 %v1038
    %v1381 = vunpack.c.h.b16 %v1038
    %v1382 = vunpack.c.l.b16 %v1039
    %v1383 = vunpack.c.h.b16 %v1039
    %v1384 = vunpack.c.l.b16 %v1040
    %v1385 = vunpack.c.h.b16 %v1040
    %v1386 = vunpack.c.l.b16 %v1041
    %v1387 = vunpack.c.h.b16 %v1041
    %v1388 = vunpack.c.l.b16 %v1042
    %v1389 = vunpack.c.h.b16 %v1042
    %v1390 = vunpack.c.l.b16 %v1043
    %v1391 = vunpack.c.h.b16 %v1043
    %v1392 = vunpack.c.l.b16 %v1044
    %v1393 = vunpack.c.h.b16 %v1044
    %v1394 = vunpack.c.l.b16 %v1045
    %v1395 = vunpack.c.h.b16 %v1045
    %v1396 = vunpack.c.l.b16 %v1046
    %v1397 = vunpack.c.h.b16 %v1046
    %v1398 = vunpack.c.l.b16 %v1047
    %v1399 = vunpack.c.h.b16 %v1047
    %v1400 = vunpack.c.l.b16 %v1048
    %v1401 = vunpack.c.h.b16 %v1048
    %v1402 = vunpack.c.l.b16 %v1049
    %v1403 = vunpack.c.h.b16 %v1049
    %v1404 = vunpack.c.l.b16 %v1050
    %v1405 = vunpack.c.h.b16 %v1050
    %v1406 = vunpack.c.l.b16 %v1051
    %v1407 = vunpack.c.h.b16 %v1051
    %v1408 = vunpack.c.l.b16 %v1052
    %v1409 = vunpack.c.h.b16 %v1052
    %v1410 = vunpack.c.l.b16 %v1053
    %v1411 = vunpack.c.h.b16 %v1053
    %v1412 = vunpack.c.l.b16 %v1054
    %v1413 = vunpack.c.h.b16 %v1054
    %v1414 = vunpack.c.l.b16 %v1055
    %v1415 = vunpack.c.h.b16 %v1055
    %v1416 = vunpack.c.l.b16 %v1056
    %v1417 = vunpack.c.h.b16 %v1056
    %v1418 = vunpack.c.l.b16 %v1057
    %v1419 = vunpack.c.h.b16 %v1057
    %v1420 = vunpack.c.l.b16 %v1058
    %v1421 = vunpack.c.h.b16 %v1058
    %v1422 = vunpack.c.l.b16 %v1059
    %v1423 = vunpack.c.h.b16 %v1059
    %v1424 = vunpack.c.l.b16 %v1060
    %v1425 = vunpack.c.h.b16 %v1060
    %v1426 = vunpack.c.l.b16 %v1061
    %v1427 = vunpack.c.h.b16 %v1061
    %v1428 = vunpack.c.l.b16 %v1062
    %v1429 = vunpack.c.h.b16 %v1062
    %v1430 = vunpack.c.l.b16 %v1063
    %v1431 = vunpack.c.h.b16 %v1063
    %v1432 = vunpack.c.l.b16 %v1064
    %v1433 = vunpack.c.h.b16 %v1064
    %v1434 = vunpack.c.l.b16 %v1065
    %v1435 = vunpack.c.h.b16 %v1065
    %v1436 = vunpack.c.l.b16 %v1066
    %v1437 = vunpack.c.h.b16 %v1066
    %v1438 = vunpack.c.l.b16 %v1067
    %v1439 = vunpack.c.h.b16 %v1067
    %v1440 = vunpack.c.l.b16 %v1068
    %v1441 = vunpack.c.h.b16 %v1068
    %v1442 = vunpack.c.l.b16 %v1069
    %v1443 = vunpack.c.h.b16 %v1069
    %v1444 = vunpack.c.l.b16 %v1070
    %v1445 = vunpack.c.h.b16 %v1070
    %v1446 = vunpack.c.l.b16 %v1071
    %v1447 = vunpack.c.h.b16 %v1071
    %v1448 = vunpack.c.l.b16 %v1072
    %v1449 = vunpack.c.h.b16 %v1072
    %v1450 = vunpack.c.l.b16 %v1073
    %v1451 = vunpack.c.h.b16 %v1073
    %v1452 = vunpack.c.l.b16 %v1074
    %v1453 = vunpack.c.h.b16 %v1074
    %v1454 = vunpack.c.l.b16 %v1075
    %v1455 = vunpack.c.h.b16 %v1075
    %v1456 = vunpack.c.l.b16 %v1076
    %v1457 = vunpack.c.h.b16 %v1076
    %v1458 = vunpack.c.l.b16 %v1077
    %v1459 = vunpack.c.h.b16 %v1077
    %v1460 = vunpack.c.l.b16 %v1078
    %v1461 = vunpack.c.h.b16 %v1078
    %v1462 = vunpack.c.l.b16 %v1079
    %v1463 = vunpack.c.h.b16 %v1079
    %v1464 = vpack.c.b16 %v1216, %v1208
    %v1465 = vpack.c.b16 %v1217, %v1209
    %v1466 = vpack.c.b16 %v1218, %v1210
    %v1467 = vpack.c.b16 %v1219, %v1211
    %v1468 = vpack.c.b16 %v1220, %v1212
    %v1469 = vpack.c.b16 %v1221, %v1213
    %v1470 = vpack.c.b16 %v1222, %v1214
    %v1471 = vpack.c.b16 %v1223, %v1215
    %v1472 = vpack.c.b16 %v1232, %v1224
    %v1473 = vpack.c.b16 %v1233, %v1225
    %v1474 = vpack.c.b16 %v1234, %v1226
    %v1475 = vpack.c.b16 %v1235, %v1227
    %v1476 = vpack.c.b16 %v1236, %v1228
    %v1477 = vpack.c.b16 %v1237, %v1229
    %v1478 = vpack.c.b16 %v1238, %v1230
    %v1479 = vpack.c.b16 %v1239, %v1231
    %v1480 = vpack.c.b16 %v1248, %v1240
    %v1481 = vpack.c.b16 %v1249, %v1241
    %v1482 = vpack.c.b16 %v1250, %v1242
    %v1483 = vpack.c.b16 %v1251, %v1243
    %v1484 = vpack.c.b16 %v1252, %v1244
    %v1485 = vpack.c.b16 %v1253, %v1245
    %v1486 = vpack.c.b16 %v1254, %v1246
    %v1487 = vpack.c.b16 %v1255, %v1247
    %v1488 = vpack.c.b16 %v1264, %v1256
    %v1489 = vpack.c.b16 %v1265, %v1257
    %v1490 = vpack.c.b16 %v1266, %v1258
    %v1491 = vpack.c.b16 %v1267, %v1259
    %v1492 = vpack.c.b16 %v1268, %v1260
    %v1493 = vpack.c.b16 %v1269, %v1261
    %v1494 = vpack.c.b16 %v1270, %v1262
    %v1495 = vpack.c.b16 %v1271, %v1263
    %v1496 = vpack.c.b16 %v1280, %v1272
    %v1497 = vpack.c.b16 %v1281, %v1273
    %v1498 = vpack.c.b16 %v1282, %v1274
    %v1499 = vpack.c.b16 %v1283, %v1275
    %v1500 = vpack.c.b16 %v1284, %v1276
    %v1501 = vpack.c.b16 %v1285, %v1277
    %v1502 = vpack.c.b16 %v1286, %v1278
    %v1503 = vpack.c.b16 %v1287, %v1279
    %v1504 = vpack.c.b16 %v1296, %v1288
    %v1505 = vpack.c.b16 %v1297, %v1289
    %v1506 = vpack.c.b16 %v1298, %v1290
    %v1507 = vpack.c.b16 %v1299, %v1291
    %v1508 = vpack.c.b16 %v1300, %v1292
    %v1509 = vpack.c.b16 %v1301, %v1293
    %v1510 = vpack.c.b16 %v1302, %v1294
    %v1511 = vpack.c.b16 %v1303, %v1295
    %v1512 = vpack.c.b16 %v1312, %v1304
    %v1513 = vpack.c.b16 %v1313, %v1305
    %v1514 = vpack.c.b16 %v1314, %v1306
    %v1515 = vpack.c.b16 %v1315, %v1307
    %v1516 = vpack.c.b16 %v1316, %v1308
    %v1517 = vpack.c.b16 %v1317, %v1309
    %v1518 = vpack.c.b16 %v1318, %v1310
    %v1519 = vpack.c.b16 %v1319, %v1311
    %v1520 = vpack.c.b16 %v1328, %v1320
    %v1521 = vpack.c.b16 %v1329, %v1321
    %v1522 = vpack.c.b16 %v1330, %v1322
    %v1523 = vpack.c.b16 %v1331, %v1323
    %v1524 = vpack.c.b16 %v1332, %v1324
    %v1525 = vpack.c.b16 %v1333, %v1325
    %v1526 = vpack.c.b16 %v1334, %v1326
    %v1527 = vpack.c.b16 %v1335, %v1327
    %v1528 = vpack.c.b16 %v1344, %v1336
    %v1529 = vpack.c.b16 %v1345, %v1337
    %v1530 = vpack.c.b16 %v1346, %v1338
    %v1531 = vpack.c.b16 %v1347, %v1339
    %v1532 = vpack.c.b16 %v1348, %v1340
    %v1533 = vpack.c.b16 %v1349, %v1341
    %v1534 = vpack.c.b16 %v1350, %v1342
    %v1535 = vpack.c.b16 %v1351, %v1343
    %v1536 = vpack.c.b16 %v1360, %v1352
    %v1537 = vpack.c.b16 %v1361, %v1353
    %v1538 = vpack.c.b16 %v1362, %v1354
    %v1539 = vpack.c.b16 %v1363, %v1355
    %v1540 = vpack.c.b16 %v1364, %v1356
    %v1541 = vpack.c.b16 %v1365, %v1357
    %v1542 = vpack.c.b16 %v1366, %v1358
    %v1543 = vpack.c.b16 %v1367, %v1359
    %v1544 = vpack.c.b16 %v1376, %v1368
    %v1545 = vpack.c.b16 %v1377, %v1369
    %v1546 = vpack.c.b16 %v1378, %v1370
    %v1547 = vpack.c.b16 %v1379, %v1371
    %v1548 = vpack.c.b16 %v1380, %v1372
    %v1549 = vpack.c.b16 %v1381, %v1373
    %v1550 = vpack.c.b16 %v1382, %v1374
    %v1551 = vpack.c.b16 %v1383, %v1375
    %v1552 = vpack.c.b16 %v1392, %v1384
    %v1553 = vpack.c.b16 %v1393, %v1385
    %v1554 = vpack.c.b16 %v1394, %v1386
    %v1555 = vpack.c.b16 %v1395, %v1387
    %v1556 = vpack.c.b16 %v1396, %v1388
    %v1557 = vpack.c.b16 %v1397, %v1389
    %v1558 = vpack.c.b16 %v1398, %v1390
    %v1559 = vpack.c.b16 %v1399, %v1391
    %v1560 = vpack.c.b16 %v1408, %v1400
    %v1561 = vpack.c.b16 %v1409, %v1401
    %v1562 = vpack.c.b16 %v1410, %v1402
    %v1563 = vpack.c.b16 %v1411, %v1403
    %v1564 = vpack.c.b16 %v1412, %v1404
    %v1565 = vpack.c.b16 %v1413, %v1405
    %v1566 = vpack.c.b16 %v1414, %v1406
    %v1567 = vpack.c.b16 %v1415, %v1407
    %v1568 = vpack.c.b16 %v1424, %v1416
    %v1569 = vpack.c.b16 %v1425, %v1417
    %v1570 = vpack.c.b16 %v1426, %v1418
    %v1571 = vpack.c.b16 %v1427, %v1419
    %v1572 = vpack.c.b16 %v1428, %v1420
    %v1573 = vpack.c.b16 %v1429, %v1421
    %v1574 = vpack.c.b16 %v1430, %v1422
    %v1575 = vpack.c.b16 %v1431, %v1423
    %v1576 = vpack.c.b16 %v1440, %v1432
    %v1577 = vpack.c.b16 %v1441, %v1433
    %v1578 = vpack.c.b16 %v1442, %v1434
    %v1579 = vpack.c.b16 %v1443, %v1435
    %v1580 = vpack.c.b16 %v1444, %v1436
    %v1581 = vpack.c.b16 %v1445, %v1437
    %v1582 = vpack.c.b16 %v1446, %v1438
    %v1583 = vpack.c.b16 %v1447, %v1439
    %v1584 = vpack.c.b16 %v1456, %v1448
    %v1585 = vpack.c.b16 %v1457, %v1449
    %v1586 = vpack.c.b16 %v1458, %v1450
    %v1587 = vpack.c.b16 %v1459, %v1451
    %v1588 = vpack.c.b16 %v1460, %v1452
    %v1589 = vpack.c.b16 %v1461, %v1453
    %v1590 = vpack.c.b16 %v1462, %v1454
    %v1591 = vpack.c.b16 %v1463, %v1455
    %1720 = vmatprep.subr.bf16.mxu0 %v1465
    %1721 = vmatpush1.bf16.msra.mxu0 %v1464
    %1722 = vmatprep.subr.bf16.mxu0 %v1473
    %1723 = vmatpush1.bf16.msra.mxu0 %v1472
    %1724 = vmatprep.subr.bf16.mxu0 %v1481
    %1725 = vmatpush1.bf16.msra.mxu0 %v1480
    %1726 = vmatprep.subr.bf16.mxu0 %v1489
    %1727 = vmatpush1.bf16.msra.mxu0 %v1488
    %1728 = vmatprep.subr.bf16.mxu0 %v1497
    %1729 = vmatpush1.bf16.msra.mxu0 %v1496
    %1730 = vmatprep.subr.bf16.mxu0 %v1505
    %1731 = vmatpush1.bf16.msra.mxu0 %v1504
    %1732 = vmatprep.subr.bf16.mxu0 %v1513
    %1733 = vmatpush1.bf16.msra.mxu0 %v1512
    %1734 = vmatprep.subr.bf16.mxu0 %v1521
    %1735 = vmatpush1.bf16.msra.mxu0 %v1520
    %1736 = vmatprep.subr.bf16.mxu0 %v1529
    %1737 = vmatpush1.bf16.msra.mxu0 %v1528
    %1738 = vmatprep.subr.bf16.mxu0 %v1537
    %1739 = vmatpush1.bf16.msra.mxu0 %v1536
    %1740 = vmatprep.subr.bf16.mxu0 %v1545
    %1741 = vmatpush1.bf16.msra.mxu0 %v1544
    %1742 = vmatprep.subr.bf16.mxu0 %v1553
    %1743 = vmatpush1.bf16.msra.mxu0 %v1552
    %1744 = vmatprep.subr.bf16.mxu0 %v1561
    %1745 = vmatpush1.bf16.msra.mxu0 %v1560
    %1746 = vmatprep.subr.bf16.mxu0 %v1569
    %1747 = vmatpush1.bf16.msra.mxu0 %v1568
    %1748 = vmatprep.subr.bf16.mxu0 %v1577
    %1749 = vmatpush1.bf16.msra.mxu0 %v1576
    %1750 = vmatprep.subr.bf16.mxu0 %v1585
    %1751 = vmatpush1.bf16.msra.mxu0 %v1584
    %1752 = vmatprep.mubr.bf16.mxu0 %v951
    %1753 = vmatmul.mubr.bf16.gmra.mrb[0].mxu0 %v950
    %v1754 = vpop.f32.mrb[0].mxu0
    %v1755 = vadd.f32 0.0, %v1754
    %v1756 = vpop.f32.mrb[0].mxu0
    %v1757 = vadd.f32 0.0, %v1756
    %v1758 = vpop.f32.mrb[0].mxu0
    %v1759 = vpop.f32.mrb[0].mxu0
    %1760 = vdwg.mxu0
    %1761 = vmatprep.subr.bf16.mxu0 %v1467
    %1762 = vmatpush1.bf16.msra.mxu0 %v1466
    %1763 = vmatprep.subr.bf16.mxu0 %v1475
    %1764 = vmatpush1.bf16.msra.mxu0 %v1474
    %1765 = vmatprep.subr.bf16.mxu0 %v1483
    %1766 = vmatpush1.bf16.msra.mxu0 %v1482
    %1767 = vmatprep.subr.bf16.mxu0 %v1491
    %1768 = vmatpush1.bf16.msra.mxu0 %v1490
    %1769 = vmatprep.subr.bf16.mxu0 %v1499
    %1770 = vmatpush1.bf16.msra.mxu0 %v1498
    %1771 = vmatprep.subr.bf16.mxu0 %v1507
    %1772 = vmatpush1.bf16.msra.mxu0 %v1506
    %1773 = vmatprep.subr.bf16.mxu0 %v1515
    %1774 = vmatpush1.bf16.msra.mxu0 %v1514
    %1775 = vmatprep.subr.bf16.mxu0 %v1523
    %1776 = vmatpush1.bf16.msra.mxu0 %v1522
    %1777 = vmatprep.subr.bf16.mxu0 %v1531
    %1778 = vmatpush1.bf16.msra.mxu0 %v1530
    %1779 = vmatprep.subr.bf16.mxu0 %v1539
    %1780 = vmatpush1.bf16.msra.mxu0 %v1538
    %1781 = vmatprep.subr.bf16.mxu0 %v1547
    %1782 = vmatpush1.bf16.msra.mxu0 %v1546
    %1783 = vmatprep.subr.bf16.mxu0 %v1555
    %1784 = vmatpush1.bf16.msra.mxu0 %v1554
    %1785 = vmatprep.subr.bf16.mxu0 %v1563
    %1786 = vmatpush1.bf16.msra.mxu0 %v1562
    %1787 = vmatprep.subr.bf16.mxu0 %v1571
    %1788 = vmatpush1.bf16.msra.mxu0 %v1570
    %1789 = vmatprep.subr.bf16.mxu0 %v1579
    %1790 = vmatpush1.bf16.msra.mxu0 %v1578
    %1791 = vmatprep.subr.bf16.mxu0 %v1587
    %1792 = vmatpush1.bf16.msra.mxu0 %v1586
    %1793 = vmatprep.mubr.bf16.mxu0 %v951
    %1794 = vmatmul.mubr.bf16.gmra.mrb[0].mxu0 %v950
    %v1795 = vpop.f32.mrb[0].mxu0
    %v1796 = vadd.f32 0.0, %v1795
    %v1797 = vpop.f32.mrb[0].mxu0
    %v1798 = vadd.f32 0.0, %v1797
    %v1799 = vpop.f32.mrb[0].mxu0
    %v1800 = vpop.f32.mrb[0].mxu0
    %1801 = vdwg.mxu0
    %1802 = vmatprep.subr.bf16.mxu0 %v1469
    %1803 = vmatpush1.bf16.msra.mxu0 %v1468
    %1804 = vmatprep.subr.bf16.mxu0 %v1477
    %1805 = vmatpush1.bf16.msra.mxu0 %v1476
    %1806 = vmatprep.subr.bf16.mxu0 %v1485
    %1807 = vmatpush1.bf16.msra.mxu0 %v1484
    %1808 = vmatprep.subr.bf16.mxu0 %v1493
    %1809 = vmatpush1.bf16.msra.mxu0 %v1492
    %1810 = vmatprep.subr.bf16.mxu0 %v1501
    %1811 = vmatpush1.bf16.msra.mxu0 %v1500
    %1812 = vmatprep.subr.bf16.mxu0 %v1509
    %1813 = vmatpush1.bf16.msra.mxu0 %v1508
    %1814 = vmatprep.subr.bf16.mxu0 %v1517
    %1815 = vmatpush1.bf16.msra.mxu0 %v1516
    %1816 = vmatprep.subr.bf16.mxu0 %v1525
    %1817 = vmatpush1.bf16.msra.mxu0 %v1524
    %1818 = vmatprep.subr.bf16.mxu0 %v1533
    %1819 = vmatpush1.bf16.msra.mxu0 %v1532
    %1820 = vmatprep.subr.bf16.mxu0 %v1541
    %1821 = vmatpush1.bf16.msra.mxu0 %v1540
    %1822 = vmatprep.subr.bf16.mxu0 %v1549
    %1823 = vmatpush1.bf16.msra.mxu0 %v1548
    %1824 = vmatprep.subr.bf16.mxu0 %v1557
    %1825 = vmatpush1.bf16.msra.mxu0 %v1556
    %1826 = vmatprep.subr.bf16.mxu0 %v1565
    %1827 = vmatpush1.bf16.msra.mxu0 %v1564
    %1828 = vmatprep.subr.bf16.mxu0 %v1573
    %1829 = vmatpush1.bf16.msra.mxu0 %v1572
    %1830 = vmatprep.subr.bf16.mxu0 %v1581
    %1831 = vmatpush1.bf16.msra.mxu0 %v1580
    %1832 = vmatprep.subr.bf16.mxu0 %v1589
    %1833 = vmatpush1.bf16.msra.mxu0 %v1588
    %1834 = vmatprep.mubr.bf16.mxu0 %v951
    %1835 = vmatmul.mubr.bf16.gmra.mrb[0].mxu0 %v950
    %v1836 = vpop.f32.mrb[0].mxu0
    %v1837 = vadd.f32 0.0, %v1836
    %v1838 = vpop.f32.mrb[0].mxu0
    %v1839 = vadd.f32 0.0, %v1838
    %v1840 = vpop.f32.mrb[0].mxu0
    %v1841 = vpop.f32.mrb[0].mxu0
    %1842 = vdwg.mxu0
    %1843 = vmatprep.subr.bf16.mxu0 %v1471
    %1844 = vmatpush1.bf16.msra.mxu0 %v1470
    %1845 = vmatprep.subr.bf16.mxu0 %v1479
    %1846 = vmatpush1.bf16.msra.mxu0 %v1478
    %1847 = vmatprep.subr.bf16.mxu0 %v1487
    %1848 = vmatpush1.bf16.msra.mxu0 %v1486
    %1849 = vmatprep.subr.bf16.mxu0 %v1495
    %1850 = vmatpush1.bf16.msra.mxu0 %v1494
    %1851 = vmatprep.subr.bf16.mxu0 %v1503
    %1852 = vmatpush1.bf16.msra.mxu0 %v1502
    %1853 = vmatprep.subr.bf16.mxu0 %v1511
    %1854 = vmatpush1.bf16.msra.mxu0 %v1510
    %1855 = vmatprep.subr.bf16.mxu0 %v1519
    %1856 = vmatpush1.bf16.msra.mxu0 %v1518
    %1857 = vmatprep.subr.bf16.mxu0 %v1527
    %1858 = vmatpush1.bf16.msra.mxu0 %v1526
    %1859 = vmatprep.subr.bf16.mxu0 %v1535
    %1860 = vmatpush1.bf16.msra.mxu0 %v1534
    %1861 = vmatprep.subr.bf16.mxu0 %v1543
    %1862 = vmatpush1.bf16.msra.mxu0 %v1542
    %1863 = vmatprep.subr.bf16.mxu0 %v1551
    %1864 = vmatpush1.bf16.msra.mxu0 %v1550
    %1865 = vmatprep.subr.bf16.mxu0 %v1559
    %1866 = vmatpush1.bf16.msra.mxu0 %v1558
    %1867 = vmatprep.subr.bf16.mxu0 %v1567
    %1868 = vmatpush1.bf16.msra.mxu0 %v1566
    %1869 = vmatprep.subr.bf16.mxu0 %v1575
    %1870 = vmatpush1.bf16.msra.mxu0 %v1574
    %1871 = vmatprep.subr.bf16.mxu0 %v1583
    %1872 = vmatpush1.bf16.msra.mxu0 %v1582
    %1873 = vmatprep.subr.bf16.mxu0 %v1591
    %1874 = vmatpush1.bf16.msra.mxu0 %v1590
    %1875 = vmatprep.mubr.bf16.mxu0 %v951
    %1876 = vmatmul.mubr.bf16.gmra.mrb[0].mxu0 %v950
    %v1877 = vpop.f32.mrb[0].mxu0
    %v1878 = vadd.f32 0.0, %v1877
    %v1879 = vpop.f32.mrb[0].mxu0
    %v1880 = vadd.f32 0.0, %v1879
    %v1881 = vpop.f32.mrb[0].mxu0
    %v1882 = vpop.f32.mrb[0].mxu0
    %1883 = vdwg.mxu0
    %v1884 = vadd.f32 %v942, %v1755
    %v1885 = vadd.f32 %v943, %v1757
    %v1886 = vadd.f32 %v944, %v1796
    %v1887 = vadd.f32 %v945, %v1798
    %v1888 = vadd.f32 %v946, %v1837
    %v1889 = vadd.f32 %v947, %v1839
    %v1890 = vadd.f32 %v948, %v1878
    %v1891 = vadd.f32 %v949, %v1880
    %v1892 = vsub.f32 0.0, %v1884
    %v1893 = vsub.f32 0.0, %v1885
    %v1894 = vsub.f32 0.0, %v1886
    %v1895 = vsub.f32 0.0, %v1887
    %v1896 = vmul.f32 %v1892, 1.442695
    %v1897 = vpow.pop %v1896
    %v1898 = vmul.f32 %v1893, 1.442695
    %v1899 = vpow.pop %v1898
    %v1900 = vmul.f32 %v1894, 1.442695
    %v1901 = vpow.pop %v1900
    %v1902 = vmul.f32 %v1895, 1.442695
    %v1903 = vpow.pop %v1902
    %v1904 = vadd.f32 %v1897, 1.0
    %v1905 = vadd.f32 %v1899, 1.0
    %v1906 = vadd.f32 %v1901, 1.0
    %v1907 = vadd.f32 %v1903, 1.0
    %v1908 = vrcp.pop %v1904
    %v1909 = vrcp.pop %v1905
    %v1910 = vrcp.pop %v1906
    %v1911 = vrcp.pop %v1907
    %v1912 = vtanh.pop %v1888
    %v1913 = vtanh.pop %v1889
    %v1914 = vsub.f32 0.0, %v1890
    %v1915 = vsub.f32 0.0, %v1891
    %v1916 = vmul.f32 %v1914, 1.442695
    %v1917 = vpow.pop %v1916
    %v1918 = vmul.f32 %v1915, 1.442695
    %v1919 = vpow.pop %v1918
    %v1920 = vadd.f32 %v1917, 1.0
    %v1921 = vadd.f32 %v1919, 1.0
    %v1922 = vrcp.pop %v1920
    %v1923 = vrcp.pop %v1921
    %v1924 = vmul.f32 %v1910, %v940
    %v1925 = vmul.f32 %v1911, %v941
    %v1926 = vmul.f32 %v1908, %v1912
    %v1927 = vmul.f32 %v1909, %v1913
    %v1928 = vadd.f32 %v1924, %v1926
    %v1929 = vadd.f32 %v1925, %v1927
    %v1930 = vtanh.pop %v1928
    %v1931 = vtanh.pop %v1929
    %v1932 = vmul.f32 %v1922, %v1930
    %v1933 = vmul.f32 %v1923, %v1931
    %s1934 = scalar_lea.vmem %s1, 16
    %v1935 = vld [vmem:[%s1934] sm:$0xff]
    %v1936 = vld [vmem:[%s1934 + $0x8] sm:$0xff]
    %s1937 = scalar_lea.vmem %s2, 16
    %v1938 = vld [vmem:[%s1937] sm:$0xff]
    %v1939 = vld [vmem:[%s1937 + $0x8] sm:$0xff]
    %v1940 = vpack.c.bf16 %v1932, %v1932
    %v1941 = vpack.c.bf16 %v1933, %v1933
    %v1942 = vpack.c.bf16 %v1935, %v1935
    %v1943 = vpack.c.bf16 %v1936, %v1936
    %v1944 = vld [vmem:[#allocation7] sm:$0xff]
    %v1945 = vld [vmem:[#allocation7 + $0x8] sm:$0xff]
    %v1946 = vld [vmem:[#allocation7 + $0x10] sm:$0xff]
    %v1947 = vld [vmem:[#allocation7 + $0x18] sm:$0xff]
    %v1948 = vld [vmem:[#allocation7 + $0x20] sm:$0xff]
    %v1949 = vld [vmem:[#allocation7 + $0x28] sm:$0xff]
    %v1950 = vld [vmem:[#allocation7 + $0x30] sm:$0xff]
    %v1951 = vld [vmem:[#allocation7 + $0x38] sm:$0xff]
    %v1952 = vld [vmem:[#allocation7 + $0x40] sm:$0xff]
    %v1953 = vld [vmem:[#allocation7 + $0x48] sm:$0xff]
    %v1954 = vld [vmem:[#allocation7 + $0x50] sm:$0xff]
    %v1955 = vld [vmem:[#allocation7 + $0x58] sm:$0xff]
    %v1956 = vld [vmem:[#allocation7 + $0x60] sm:$0xff]
    %v1957 = vld [vmem:[#allocation7 + $0x68] sm:$0xff]
    %v1958 = vld [vmem:[#allocation7 + $0x70] sm:$0xff]
    %v1959 = vld [vmem:[#allocation7 + $0x78] sm:$0xff]
    %v1960 = vld [vmem:[#allocation7 + $0x80] sm:$0xff]
    %v1961 = vld [vmem:[#allocation7 + $0x88] sm:$0xff]
    %v1962 = vld [vmem:[#allocation7 + $0x90] sm:$0xff]
    %v1963 = vld [vmem:[#allocation7 + $0x98] sm:$0xff]
    %v1964 = vld [vmem:[#allocation7 + $0xa0] sm:$0xff]
    %v1965 = vld [vmem:[#allocation7 + $0xa8] sm:$0xff]
    %v1966 = vld [vmem:[#allocation7 + $0xb0] sm:$0xff]
    %v1967 = vld [vmem:[#allocation7 + $0xb8] sm:$0xff]
    %v1968 = vld [vmem:[#allocation7 + $0xc0] sm:$0xff]
    %v1969 = vld [vmem:[#allocation7 + $0xc8] sm:$0xff]
    %v1970 = vld [vmem:[#allocation7 + $0xd0] sm:$0xff]
    %v1971 = vld [vmem:[#allocation7 + $0xd8] sm:$0xff]
    %v1972 = vld [vmem:[#allocation7 + $0xe0] sm:$0xff]
    %v1973 = vld [vmem:[#allocation7 + $0xe8] sm:$0xff]
    %v1974 = vld [vmem:[#allocation7 + $0xf0] sm:$0xff]
    %v1975 = vld [vmem:[#allocation7 + $0xf8] sm:$0xff]
    %v1976 = vld [vmem:[#allocation7 + $0x100] sm:$0xff]
    %v1977 = vld [vmem:[#allocation7 + $0x108] sm:$0xff]
    %v1978 = vld [vmem:[#allocation7 + $0x110] sm:$0xff]
    %v1979 = vld [vmem:[#allocation7 + $0x118] sm:$0xff]
    %v1980 = vld [vmem:[#allocation7 + $0x120] sm:$0xff]
    %v1981 = vld [vmem:[#allocation7 + $0x128] sm:$0xff]
    %v1982 = vld [vmem:[#allocation7 + $0x130] sm:$0xff]
    %v1983 = vld [vmem:[#allocation7 + $0x138] sm:$0xff]
    %v1984 = vld [vmem:[#allocation7 + $0x140] sm:$0xff]
    %v1985 = vld [vmem:[#allocation7 + $0x148] sm:$0xff]
    %v1986 = vld [vmem:[#allocation7 + $0x150] sm:$0xff]
    %v1987 = vld [vmem:[#allocation7 + $0x158] sm:$0xff]
    %v1988 = vld [vmem:[#allocation7 + $0x160] sm:$0xff]
    %v1989 = vld [vmem:[#allocation7 + $0x168] sm:$0xff]
    %v1990 = vld [vmem:[#allocation7 + $0x170] sm:$0xff]
    %v1991 = vld [vmem:[#allocation7 + $0x178] sm:$0xff]
    %v1992 = vld [vmem:[#allocation7 + $0x180] sm:$0xff]
    %v1993 = vld [vmem:[#allocation7 + $0x188] sm:$0xff]
    %v1994 = vld [vmem:[#allocation7 + $0x190] sm:$0xff]
    %v1995 = vld [vmem:[#allocation7 + $0x198] sm:$0xff]
    %v1996 = vld [vmem:[#allocation7 + $0x1a0] sm:$0xff]
    %v1997 = vld [vmem:[#allocation7 + $0x1a8] sm:$0xff]
    %v1998 = vld [vmem:[#allocation7 + $0x1b0] sm:$0xff]
    %v1999 = vld [vmem:[#allocation7 + $0x1b8] sm:$0xff]
    %v2000 = vld [vmem:[#allocation7 + $0x1c0] sm:$0xff]
    %v2001 = vld [vmem:[#allocation7 + $0x1c8] sm:$0xff]
    %v2002 = vld [vmem:[#allocation7 + $0x1d0] sm:$0xff]
    %v2003 = vld [vmem:[#allocation7 + $0x1d8] sm:$0xff]
    %v2004 = vld [vmem:[#allocation7 + $0x1e0] sm:$0xff]
    %v2005 = vld [vmem:[#allocation7 + $0x1e8] sm:$0xff]
    %v2006 = vld [vmem:[#allocation7 + $0x1f0] sm:$0xff]
    %v2007 = vld [vmem:[#allocation7 + $0x1f8] sm:$0xff]
    %v2008 = vld [vmem:[#allocation7 + $0x200] sm:$0xff]
    %v2009 = vld [vmem:[#allocation7 + $0x208] sm:$0xff]
    %v2010 = vld [vmem:[#allocation7 + $0x210] sm:$0xff]
    %v2011 = vld [vmem:[#allocation7 + $0x218] sm:$0xff]
    %v2012 = vld [vmem:[#allocation7 + $0x220] sm:$0xff]
    %v2013 = vld [vmem:[#allocation7 + $0x228] sm:$0xff]
    %v2014 = vld [vmem:[#allocation7 + $0x230] sm:$0xff]
    %v2015 = vld [vmem:[#allocation7 + $0x238] sm:$0xff]
    %v2016 = vld [vmem:[#allocation7 + $0x240] sm:$0xff]
    %v2017 = vld [vmem:[#allocation7 + $0x248] sm:$0xff]
    %v2018 = vld [vmem:[#allocation7 + $0x250] sm:$0xff]
    %v2019 = vld [vmem:[#allocation7 + $0x258] sm:$0xff]
    %v2020 = vld [vmem:[#allocation7 + $0x260] sm:$0xff]
    %v2021 = vld [vmem:[#allocation7 + $0x268] sm:$0xff]
    %v2022 = vld [vmem:[#allocation7 + $0x270] sm:$0xff]
    %v2023 = vld [vmem:[#allocation7 + $0x278] sm:$0xff]
    %v2024 = vld [vmem:[#allocation7 + $0x280] sm:$0xff]
    %v2025 = vld [vmem:[#allocation7 + $0x288] sm:$0xff]
    %v2026 = vld [vmem:[#allocation7 + $0x290] sm:$0xff]
    %v2027 = vld [vmem:[#allocation7 + $0x298] sm:$0xff]
    %v2028 = vld [vmem:[#allocation7 + $0x2a0] sm:$0xff]
    %v2029 = vld [vmem:[#allocation7 + $0x2a8] sm:$0xff]
    %v2030 = vld [vmem:[#allocation7 + $0x2b0] sm:$0xff]
    %v2031 = vld [vmem:[#allocation7 + $0x2b8] sm:$0xff]
    %v2032 = vld [vmem:[#allocation7 + $0x2c0] sm:$0xff]
    %v2033 = vld [vmem:[#allocation7 + $0x2c8] sm:$0xff]
    %v2034 = vld [vmem:[#allocation7 + $0x2d0] sm:$0xff]
    %v2035 = vld [vmem:[#allocation7 + $0x2d8] sm:$0xff]
    %v2036 = vld [vmem:[#allocation7 + $0x2e0] sm:$0xff]
    %v2037 = vld [vmem:[#allocation7 + $0x2e8] sm:$0xff]
    %v2038 = vld [vmem:[#allocation7 + $0x2f0] sm:$0xff]
    %v2039 = vld [vmem:[#allocation7 + $0x2f8] sm:$0xff]
    %v2040 = vld [vmem:[#allocation7 + $0x300] sm:$0xff]
    %v2041 = vld [vmem:[#allocation7 + $0x308] sm:$0xff]
    %v2042 = vld [vmem:[#allocation7 + $0x310] sm:$0xff]
    %v2043 = vld [vmem:[#allocation7 + $0x318] sm:$0xff]
    %v2044 = vld [vmem:[#allocation7 + $0x320] sm:$0xff]
    %v2045 = vld [vmem:[#allocation7 + $0x328] sm:$0xff]
    %v2046 = vld [vmem:[#allocation7 + $0x330] sm:$0xff]
    %v2047 = vld [vmem:[#allocation7 + $0x338] sm:$0xff]
    %v2048 = vld [vmem:[#allocation7 + $0x340] sm:$0xff]
    %v2049 = vld [vmem:[#allocation7 + $0x348] sm:$0xff]
    %v2050 = vld [vmem:[#allocation7 + $0x350] sm:$0xff]
    %v2051 = vld [vmem:[#allocation7 + $0x358] sm:$0xff]
    %v2052 = vld [vmem:[#allocation7 + $0x360] sm:$0xff]
    %v2053 = vld [vmem:[#allocation7 + $0x368] sm:$0xff]
    %v2054 = vld [vmem:[#allocation7 + $0x370] sm:$0xff]
    %v2055 = vld [vmem:[#allocation7 + $0x378] sm:$0xff]
    %v2056 = vld [vmem:[#allocation7 + $0x380] sm:$0xff]
    %v2057 = vld [vmem:[#allocation7 + $0x388] sm:$0xff]
    %v2058 = vld [vmem:[#allocation7 + $0x390] sm:$0xff]
    %v2059 = vld [vmem:[#allocation7 + $0x398] sm:$0xff]
    %v2060 = vld [vmem:[#allocation7 + $0x3a0] sm:$0xff]
    %v2061 = vld [vmem:[#allocation7 + $0x3a8] sm:$0xff]
    %v2062 = vld [vmem:[#allocation7 + $0x3b0] sm:$0xff]
    %v2063 = vld [vmem:[#allocation7 + $0x3b8] sm:$0xff]
    %v2064 = vld [vmem:[#allocation7 + $0x3c0] sm:$0xff]
    %v2065 = vld [vmem:[#allocation7 + $0x3c8] sm:$0xff]
    %v2066 = vld [vmem:[#allocation7 + $0x3d0] sm:$0xff]
    %v2067 = vld [vmem:[#allocation7 + $0x3d8] sm:$0xff]
    %v2068 = vld [vmem:[#allocation7 + $0x3e0] sm:$0xff]
    %v2069 = vld [vmem:[#allocation7 + $0x3e8] sm:$0xff]
    %v2070 = vld [vmem:[#allocation7 + $0x3f0] sm:$0xff]
    %v2071 = vld [vmem:[#allocation7 + $0x3f8] sm:$0xff]
    %v2072 = vld [vmem:[#allocation7 + $0x400] sm:$0xff]
    %v2073 = vld [vmem:[#allocation7 + $0x408] sm:$0xff]
    %v2074 = vld [vmem:[#allocation7 + $0x410] sm:$0xff]
    %v2075 = vld [vmem:[#allocation7 + $0x418] sm:$0xff]
    %v2076 = vld [vmem:[#allocation7 + $0x420] sm:$0xff]
    %v2077 = vld [vmem:[#allocation7 + $0x428] sm:$0xff]
    %v2078 = vld [vmem:[#allocation7 + $0x430] sm:$0xff]
    %v2079 = vld [vmem:[#allocation7 + $0x438] sm:$0xff]
    %v2080 = vld [vmem:[#allocation7 + $0x440] sm:$0xff]
    %v2081 = vld [vmem:[#allocation7 + $0x448] sm:$0xff]
    %v2082 = vld [vmem:[#allocation7 + $0x450] sm:$0xff]
    %v2083 = vld [vmem:[#allocation7 + $0x458] sm:$0xff]
    %v2084 = vld [vmem:[#allocation7 + $0x460] sm:$0xff]
    %v2085 = vld [vmem:[#allocation7 + $0x468] sm:$0xff]
    %v2086 = vld [vmem:[#allocation7 + $0x470] sm:$0xff]
    %v2087 = vld [vmem:[#allocation7 + $0x478] sm:$0xff]
    %v2088 = vld [vmem:[#allocation7 + $0x480] sm:$0xff]
    %v2089 = vld [vmem:[#allocation7 + $0x488] sm:$0xff]
    %v2090 = vld [vmem:[#allocation7 + $0x490] sm:$0xff]
    %v2091 = vld [vmem:[#allocation7 + $0x498] sm:$0xff]
    %v2092 = vld [vmem:[#allocation7 + $0x4a0] sm:$0xff]
    %v2093 = vld [vmem:[#allocation7 + $0x4a8] sm:$0xff]
    %v2094 = vld [vmem:[#allocation7 + $0x4b0] sm:$0xff]
    %v2095 = vld [vmem:[#allocation7 + $0x4b8] sm:$0xff]
    %v2096 = vld [vmem:[#allocation7 + $0x4c0] sm:$0xff]
    %v2097 = vld [vmem:[#allocation7 + $0x4c8] sm:$0xff]
    %v2098 = vld [vmem:[#allocation7 + $0x4d0] sm:$0xff]
    %v2099 = vld [vmem:[#allocation7 + $0x4d8] sm:$0xff]
    %v2100 = vld [vmem:[#allocation7 + $0x4e0] sm:$0xff]
    %v2101 = vld [vmem:[#allocation7 + $0x4e8] sm:$0xff]
    %v2102 = vld [vmem:[#allocation7 + $0x4f0] sm:$0xff]
    %v2103 = vld [vmem:[#allocation7 + $0x4f8] sm:$0xff]
    %v2104 = vld [vmem:[#allocation7 + $0x500] sm:$0xff]
    %v2105 = vld [vmem:[#allocation7 + $0x508] sm:$0xff]
    %v2106 = vld [vmem:[#allocation7 + $0x510] sm:$0xff]
    %v2107 = vld [vmem:[#allocation7 + $0x518] sm:$0xff]
    %v2108 = vld [vmem:[#allocation7 + $0x520] sm:$0xff]
    %v2109 = vld [vmem:[#allocation7 + $0x528] sm:$0xff]
    %v2110 = vld [vmem:[#allocation7 + $0x530] sm:$0xff]
    %v2111 = vld [vmem:[#allocation7 + $0x538] sm:$0xff]
    %v2112 = vld [vmem:[#allocation7 + $0x540] sm:$0xff]
    %v2113 = vld [vmem:[#allocation7 + $0x548] sm:$0xff]
    %v2114 = vld [vmem:[#allocation7 + $0x550] sm:$0xff]
    %v2115 = vld [vmem:[#allocation7 + $0x558] sm:$0xff]
    %v2116 = vld [vmem:[#allocation7 + $0x560] sm:$0xff]
    %v2117 = vld [vmem:[#allocation7 + $0x568] sm:$0xff]
    %v2118 = vld [vmem:[#allocation7 + $0x570] sm:$0xff]
    %v2119 = vld [vmem:[#allocation7 + $0x578] sm:$0xff]
    %v2120 = vld [vmem:[#allocation7 + $0x580] sm:$0xff]
    %v2121 = vld [vmem:[#allocation7 + $0x588] sm:$0xff]
    %v2122 = vld [vmem:[#allocation7 + $0x590] sm:$0xff]
    %v2123 = vld [vmem:[#allocation7 + $0x598] sm:$0xff]
    %v2124 = vld [vmem:[#allocation7 + $0x5a0] sm:$0xff]
    %v2125 = vld [vmem:[#allocation7 + $0x5a8] sm:$0xff]
    %v2126 = vld [vmem:[#allocation7 + $0x5b0] sm:$0xff]
    %v2127 = vld [vmem:[#allocation7 + $0x5b8] sm:$0xff]
    %v2128 = vld [vmem:[#allocation7 + $0x5c0] sm:$0xff]
    %v2129 = vld [vmem:[#allocation7 + $0x5c8] sm:$0xff]
    %v2130 = vld [vmem:[#allocation7 + $0x5d0] sm:$0xff]
    %v2131 = vld [vmem:[#allocation7 + $0x5d8] sm:$0xff]
    %v2132 = vld [vmem:[#allocation7 + $0x5e0] sm:$0xff]
    %v2133 = vld [vmem:[#allocation7 + $0x5e8] sm:$0xff]
    %v2134 = vld [vmem:[#allocation7 + $0x5f0] sm:$0xff]
    %v2135 = vld [vmem:[#allocation7 + $0x5f8] sm:$0xff]
    %v2136 = vld [vmem:[#allocation7 + $0x600] sm:$0xff]
    %v2137 = vld [vmem:[#allocation7 + $0x608] sm:$0xff]
    %v2138 = vld [vmem:[#allocation7 + $0x610] sm:$0xff]
    %v2139 = vld [vmem:[#allocation7 + $0x618] sm:$0xff]
    %v2140 = vld [vmem:[#allocation7 + $0x620] sm:$0xff]
    %v2141 = vld [vmem:[#allocation7 + $0x628] sm:$0xff]
    %v2142 = vld [vmem:[#allocation7 + $0x630] sm:$0xff]
    %v2143 = vld [vmem:[#allocation7 + $0x638] sm:$0xff]
    %v2144 = vld [vmem:[#allocation7 + $0x640] sm:$0xff]
    %v2145 = vld [vmem:[#allocation7 + $0x648] sm:$0xff]
    %v2146 = vld [vmem:[#allocation7 + $0x650] sm:$0xff]
    %v2147 = vld [vmem:[#allocation7 + $0x658] sm:$0xff]
    %v2148 = vld [vmem:[#allocation7 + $0x660] sm:$0xff]
    %v2149 = vld [vmem:[#allocation7 + $0x668] sm:$0xff]
    %v2150 = vld [vmem:[#allocation7 + $0x670] sm:$0xff]
    %v2151 = vld [vmem:[#allocation7 + $0x678] sm:$0xff]
    %v2152 = vld [vmem:[#allocation7 + $0x680] sm:$0xff]
    %v2153 = vld [vmem:[#allocation7 + $0x688] sm:$0xff]
    %v2154 = vld [vmem:[#allocation7 + $0x690] sm:$0xff]
    %v2155 = vld [vmem:[#allocation7 + $0x698] sm:$0xff]
    %v2156 = vld [vmem:[#allocation7 + $0x6a0] sm:$0xff]
    %v2157 = vld [vmem:[#allocation7 + $0x6a8] sm:$0xff]
    %v2158 = vld [vmem:[#allocation7 + $0x6b0] sm:$0xff]
    %v2159 = vld [vmem:[#allocation7 + $0x6b8] sm:$0xff]
    %v2160 = vld [vmem:[#allocation7 + $0x6c0] sm:$0xff]
    %v2161 = vld [vmem:[#allocation7 + $0x6c8] sm:$0xff]
    %v2162 = vld [vmem:[#allocation7 + $0x6d0] sm:$0xff]
    %v2163 = vld [vmem:[#allocation7 + $0x6d8] sm:$0xff]
    %v2164 = vld [vmem:[#allocation7 + $0x6e0] sm:$0xff]
    %v2165 = vld [vmem:[#allocation7 + $0x6e8] sm:$0xff]
    %v2166 = vld [vmem:[#allocation7 + $0x6f0] sm:$0xff]
    %v2167 = vld [vmem:[#allocation7 + $0x6f8] sm:$0xff]
    %v2168 = vld [vmem:[#allocation7 + $0x700] sm:$0xff]
    %v2169 = vld [vmem:[#allocation7 + $0x708] sm:$0xff]
    %v2170 = vld [vmem:[#allocation7 + $0x710] sm:$0xff]
    %v2171 = vld [vmem:[#allocation7 + $0x718] sm:$0xff]
    %v2172 = vld [vmem:[#allocation7 + $0x720] sm:$0xff]
    %v2173 = vld [vmem:[#allocation7 + $0x728] sm:$0xff]
    %v2174 = vld [vmem:[#allocation7 + $0x730] sm:$0xff]
    %v2175 = vld [vmem:[#allocation7 + $0x738] sm:$0xff]
    %v2176 = vld [vmem:[#allocation7 + $0x740] sm:$0xff]
    %v2177 = vld [vmem:[#allocation7 + $0x748] sm:$0xff]
    %v2178 = vld [vmem:[#allocation7 + $0x750] sm:$0xff]
    %v2179 = vld [vmem:[#allocation7 + $0x758] sm:$0xff]
    %v2180 = vld [vmem:[#allocation7 + $0x760] sm:$0xff]
    %v2181 = vld [vmem:[#allocation7 + $0x768] sm:$0xff]
    %v2182 = vld [vmem:[#allocation7 + $0x770] sm:$0xff]
    %v2183 = vld [vmem:[#allocation7 + $0x778] sm:$0xff]
    %v2184 = vld [vmem:[#allocation7 + $0x780] sm:$0xff]
    %v2185 = vld [vmem:[#allocation7 + $0x788] sm:$0xff]
    %v2186 = vld [vmem:[#allocation7 + $0x790] sm:$0xff]
    %v2187 = vld [vmem:[#allocation7 + $0x798] sm:$0xff]
    %v2188 = vld [vmem:[#allocation7 + $0x7a0] sm:$0xff]
    %v2189 = vld [vmem:[#allocation7 + $0x7a8] sm:$0xff]
    %v2190 = vld [vmem:[#allocation7 + $0x7b0] sm:$0xff]
    %v2191 = vld [vmem:[#allocation7 + $0x7b8] sm:$0xff]
    %v2192 = vld [vmem:[#allocation7 + $0x7c0] sm:$0xff]
    %v2193 = vld [vmem:[#allocation7 + $0x7c8] sm:$0xff]
    %v2194 = vld [vmem:[#allocation7 + $0x7d0] sm:$0xff]
    %v2195 = vld [vmem:[#allocation7 + $0x7d8] sm:$0xff]
    %v2196 = vld [vmem:[#allocation7 + $0x7e0] sm:$0xff]
    %v2197 = vld [vmem:[#allocation7 + $0x7e8] sm:$0xff]
    %v2198 = vld [vmem:[#allocation7 + $0x7f0] sm:$0xff]
    %v2199 = vld [vmem:[#allocation7 + $0x7f8] sm:$0xff]
    %v2200 = vld [vmem:[%s7] sm:$0xff]
    %v2202 = vlaneseq
    %v2203 = vshrl.u32 %v2202, 7
    %v2204 = vsub.s32 0, %v2203
    %v2205 = vrot.slane %v2200, %v2204
    %v2206 = vlaneseq
    %v2207 = vshrl.u32 %v2206, 7
    %v2208 = vsub.s32 1, %v2207
    %v2209 = vrot.slane %v2200, %v2208
    %v2210 = vlaneseq
    %v2211 = vshrl.u32 %v2210, 7
    %v2212 = vsub.s32 2, %v2211
    %v2213 = vrot.slane %v2200, %v2212
    %v2214 = vlaneseq
    %v2215 = vshrl.u32 %v2214, 7
    %v2216 = vsub.s32 3, %v2215
    %v2217 = vrot.slane %v2200, %v2216
    %v2218 = vlaneseq
    %v2219 = vshrl.u32 %v2218, 7
    %v2220 = vsub.s32 4, %v2219
    %v2221 = vrot.slane %v2200, %v2220
    %v2222 = vlaneseq
    %v2223 = vshrl.u32 %v2222, 7
    %v2224 = vsub.s32 5, %v2223
    %v2225 = vrot.slane %v2200, %v2224
    %v2226 = vlaneseq
    %v2227 = vshrl.u32 %v2226, 7
    %v2228 = vsub.s32 6, %v2227
    %v2229 = vrot.slane %v2200, %v2228
    %v2230 = vlaneseq
    %v2231 = vshrl.u32 %v2230, 7
    %v2232 = vsub.s32 7, %v2231
    %v2233 = vrot.slane %v2200, %v2232
    %v2498 = vunpack.c.l.b16 %v1944
    %v2499 = vunpack.c.h.b16 %v1944
    %v2500 = vunpack.c.l.b16 %v1945
    %v2501 = vunpack.c.h.b16 %v1945
    %v2502 = vunpack.c.l.b16 %v1946
    %v2503 = vunpack.c.h.b16 %v1946
    %v2504 = vunpack.c.l.b16 %v1947
    %v2505 = vunpack.c.h.b16 %v1947
    %v2506 = vunpack.c.l.b16 %v1948
    %v2507 = vunpack.c.h.b16 %v1948
    %v2508 = vunpack.c.l.b16 %v1949
    %v2509 = vunpack.c.h.b16 %v1949
    %v2510 = vunpack.c.l.b16 %v1950
    %v2511 = vunpack.c.h.b16 %v1950
    %v2512 = vunpack.c.l.b16 %v1951
    %v2513 = vunpack.c.h.b16 %v1951
    %v2514 = vunpack.c.l.b16 %v1952
    %v2515 = vunpack.c.h.b16 %v1952
    %v2516 = vunpack.c.l.b16 %v1953
    %v2517 = vunpack.c.h.b16 %v1953
    %v2518 = vunpack.c.l.b16 %v1954
    %v2519 = vunpack.c.h.b16 %v1954
    %v2520 = vunpack.c.l.b16 %v1955
    %v2521 = vunpack.c.h.b16 %v1955
    %v2522 = vunpack.c.l.b16 %v1956
    %v2523 = vunpack.c.h.b16 %v1956
    %v2524 = vunpack.c.l.b16 %v1957
    %v2525 = vunpack.c.h.b16 %v1957
    %v2526 = vunpack.c.l.b16 %v1958
    %v2527 = vunpack.c.h.b16 %v1958
    %v2528 = vunpack.c.l.b16 %v1959
    %v2529 = vunpack.c.h.b16 %v1959
    %v2530 = vunpack.c.l.b16 %v1960
    %v2531 = vunpack.c.h.b16 %v1960
    %v2532 = vunpack.c.l.b16 %v1961
    %v2533 = vunpack.c.h.b16 %v1961
    %v2534 = vunpack.c.l.b16 %v1962
    %v2535 = vunpack.c.h.b16 %v1962
    %v2536 = vunpack.c.l.b16 %v1963
    %v2537 = vunpack.c.h.b16 %v1963
    %v2538 = vunpack.c.l.b16 %v1964
    %v2539 = vunpack.c.h.b16 %v1964
    %v2540 = vunpack.c.l.b16 %v1965
    %v2541 = vunpack.c.h.b16 %v1965
    %v2542 = vunpack.c.l.b16 %v1966
    %v2543 = vunpack.c.h.b16 %v1966
    %v2544 = vunpack.c.l.b16 %v1967
    %v2545 = vunpack.c.h.b16 %v1967
    %v2546 = vunpack.c.l.b16 %v1968
    %v2547 = vunpack.c.h.b16 %v1968
    %v2548 = vunpack.c.l.b16 %v1969
    %v2549 = vunpack.c.h.b16 %v1969
    %v2550 = vunpack.c.l.b16 %v1970
    %v2551 = vunpack.c.h.b16 %v1970
    %v2552 = vunpack.c.l.b16 %v1971
    %v2553 = vunpack.c.h.b16 %v1971
    %v2554 = vunpack.c.l.b16 %v1972
    %v2555 = vunpack.c.h.b16 %v1972
    %v2556 = vunpack.c.l.b16 %v1973
    %v2557 = vunpack.c.h.b16 %v1973
    %v2558 = vunpack.c.l.b16 %v1974
    %v2559 = vunpack.c.h.b16 %v1974
    %v2560 = vunpack.c.l.b16 %v1975
    %v2561 = vunpack.c.h.b16 %v1975
    %v2562 = vunpack.c.l.b16 %v1976
    %v2563 = vunpack.c.h.b16 %v1976
    %v2564 = vunpack.c.l.b16 %v1977
    %v2565 = vunpack.c.h.b16 %v1977
    %v2566 = vunpack.c.l.b16 %v1978
    %v2567 = vunpack.c.h.b16 %v1978
    %v2568 = vunpack.c.l.b16 %v1979
    %v2569 = vunpack.c.h.b16 %v1979
    %v2570 = vunpack.c.l.b16 %v1980
    %v2571 = vunpack.c.h.b16 %v1980
    %v2572 = vunpack.c.l.b16 %v1981
    %v2573 = vunpack.c.h.b16 %v1981
    %v2574 = vunpack.c.l.b16 %v1982
    %v2575 = vunpack.c.h.b16 %v1982
    %v2576 = vunpack.c.l.b16 %v1983
    %v2577 = vunpack.c.h.b16 %v1983
    %v2578 = vunpack.c.l.b16 %v1984
    %v2579 = vunpack.c.h.b16 %v1984
    %v2580 = vunpack.c.l.b16 %v1985
    %v2581 = vunpack.c.h.b16 %v1985
    %v2582 = vunpack.c.l.b16 %v1986
    %v2583 = vunpack.c.h.b16 %v1986
    %v2584 = vunpack.c.l.b16 %v1987
    %v2585 = vunpack.c.h.b16 %v1987
    %v2586 = vunpack.c.l.b16 %v1988
    %v2587 = vunpack.c.h.b16 %v1988
    %v2588 = vunpack.c.l.b16 %v1989
    %v2589 = vunpack.c.h.b16 %v1989
    %v2590 = vunpack.c.l.b16 %v1990
    %v2591 = vunpack.c.h.b16 %v1990
    %v2592 = vunpack.c.l.b16 %v1991
    %v2593 = vunpack.c.h.b16 %v1991
    %v2594 = vunpack.c.l.b16 %v1992
    %v2595 = vunpack.c.h.b16 %v1992
    %v2596 = vunpack.c.l.b16 %v1993
    %v2597 = vunpack.c.h.b16 %v1993
    %v2598 = vunpack.c.l.b16 %v1994
    %v2599 = vunpack.c.h.b16 %v1994
    %v2600 = vunpack.c.l.b16 %v1995
    %v2601 = vunpack.c.h.b16 %v1995
    %v2602 = vunpack.c.l.b16 %v1996
    %v2603 = vunpack.c.h.b16 %v1996
    %v2604 = vunpack.c.l.b16 %v1997
    %v2605 = vunpack.c.h.b16 %v1997
    %v2606 = vunpack.c.l.b16 %v1998
    %v2607 = vunpack.c.h.b16 %v1998
    %v2608 = vunpack.c.l.b16 %v1999
    %v2609 = vunpack.c.h.b16 %v1999
    %v2610 = vunpack.c.l.b16 %v2000
    %v2611 = vunpack.c.h.b16 %v2000
    %v2612 = vunpack.c.l.b16 %v2001
    %v2613 = vunpack.c.h.b16 %v2001
    %v2614 = vunpack.c.l.b16 %v2002
    %v2615 = vunpack.c.h.b16 %v2002
    %v2616 = vunpack.c.l.b16 %v2003
    %v2617 = vunpack.c.h.b16 %v2003
    %v2618 = vunpack.c.l.b16 %v2004
    %v2619 = vunpack.c.h.b16 %v2004
    %v2620 = vunpack.c.l.b16 %v2005
    %v2621 = vunpack.c.h.b16 %v2005
    %v2622 = vunpack.c.l.b16 %v2006
    %v2623 = vunpack.c.h.b16 %v2006
    %v2624 = vunpack.c.l.b16 %v2007
    %v2625 = vunpack.c.h.b16 %v2007
    %v2626 = vunpack.c.l.b16 %v2008
    %v2627 = vunpack.c.h.b16 %v2008
    %v2628 = vunpack.c.l.b16 %v2009
    %v2629 = vunpack.c.h.b16 %v2009
    %v2630 = vunpack.c.l.b16 %v2010
    %v2631 = vunpack.c.h.b16 %v2010
    %v2632 = vunpack.c.l.b16 %v2011
    %v2633 = vunpack.c.h.b16 %v2011
    %v2634 = vunpack.c.l.b16 %v2012
    %v2635 = vunpack.c.h.b16 %v2012
    %v2636 = vunpack.c.l.b16 %v2013
    %v2637 = vunpack.c.h.b16 %v2013
    %v2638 = vunpack.c.l.b16 %v2014
    %v2639 = vunpack.c.h.b16 %v2014
    %v2640 = vunpack.c.l.b16 %v2015
    %v2641 = vunpack.c.h.b16 %v2015
    %v2642 = vunpack.c.l.b16 %v2016
    %v2643 = vunpack.c.h.b16 %v2016
    %v2644 = vunpack.c.l.b16 %v2017
    %v2645 = vunpack.c.h.b16 %v2017
    %v2646 = vunpack.c.l.b16 %v2018
    %v2647 = vunpack.c.h.b16 %v2018
    %v2648 = vunpack.c.l.b16 %v2019
    %v2649 = vunpack.c.h.b16 %v2019
    %v2650 = vunpack.c.l.b16 %v2020
    %v2651 = vunpack.c.h.b16 %v2020
    %v2652 = vunpack.c.l.b16 %v2021
    %v2653 = vunpack.c.h.b16 %v2021
    %v2654 = vunpack.c.l.b16 %v2022
    %v2655 = vunpack.c.h.b16 %v2022
    %v2656 = vunpack.c.l.b16 %v2023
    %v2657 = vunpack.c.h.b16 %v2023
    %v2658 = vunpack.c.l.b16 %v2024
    %v2659 = vunpack.c.h.b16 %v2024
    %v2660 = vunpack.c.l.b16 %v2025
    %v2661 = vunpack.c.h.b16 %v2025
    %v2662 = vunpack.c.l.b16 %v2026
    %v2663 = vunpack.c.h.b16 %v2026
    %v2664 = vunpack.c.l.b16 %v2027
    %v2665 = vunpack.c.h.b16 %v2027
    %v2666 = vunpack.c.l.b16 %v2028
    %v2667 = vunpack.c.h.b16 %v2028
    %v2668 = vunpack.c.l.b16 %v2029
    %v2669 = vunpack.c.h.b16 %v2029
    %v2670 = vunpack.c.l.b16 %v2030
    %v2671 = vunpack.c.h.b16 %v2030
    %v2672 = vunpack.c.l.b16 %v2031
    %v2673 = vunpack.c.h.b16 %v2031
    %v2674 = vunpack.c.l.b16 %v2032
    %v2675 = vunpack.c.h.b16 %v2032
    %v2676 = vunpack.c.l.b16 %v2033
    %v2677 = vunpack.c.h.b16 %v2033
    %v2678 = vunpack.c.l.b16 %v2034
    %v2679 = vunpack.c.h.b16 %v2034
    %v2680 = vunpack.c.l.b16 %v2035
    %v2681 = vunpack.c.h.b16 %v2035
    %v2682 = vunpack.c.l.b16 %v2036
    %v2683 = vunpack.c.h.b16 %v2036
    %v2684 = vunpack.c.l.b16 %v2037
    %v2685 = vunpack.c.h.b16 %v2037
    %v2686 = vunpack.c.l.b16 %v2038
    %v2687 = vunpack.c.h.b16 %v2038
    %v2688 = vunpack.c.l.b16 %v2039
    %v2689 = vunpack.c.h.b16 %v2039
    %v2690 = vunpack.c.l.b16 %v2040
    %v2691 = vunpack.c.h.b16 %v2040
    %v2692 = vunpack.c.l.b16 %v2041
    %v2693 = vunpack.c.h.b16 %v2041
    %v2694 = vunpack.c.l.b16 %v2042
    %v2695 = vunpack.c.h.b16 %v2042
    %v2696 = vunpack.c.l.b16 %v2043
    %v2697 = vunpack.c.h.b16 %v2043
    %v2698 = vunpack.c.l.b16 %v2044
    %v2699 = vunpack.c.h.b16 %v2044
    %v2700 = vunpack.c.l.b16 %v2045
    %v2701 = vunpack.c.h.b16 %v2045
    %v2702 = vunpack.c.l.b16 %v2046
    %v2703 = vunpack.c.h.b16 %v2046
    %v2704 = vunpack.c.l.b16 %v2047
    %v2705 = vunpack.c.h.b16 %v2047
    %v2706 = vunpack.c.l.b16 %v2048
    %v2707 = vunpack.c.h.b16 %v2048
    %v2708 = vunpack.c.l.b16 %v2049
    %v2709 = vunpack.c.h.b16 %v2049
    %v2710 = vunpack.c.l.b16 %v2050
    %v2711 = vunpack.c.h.b16 %v2050
    %v2712 = vunpack.c.l.b16 %v2051
    %v2713 = vunpack.c.h.b16 %v2051
    %v2714 = vunpack.c.l.b16 %v2052
    %v2715 = vunpack.c.h.b16 %v2052
    %v2716 = vunpack.c.l.b16 %v2053
    %v2717 = vunpack.c.h.b16 %v2053
    %v2718 = vunpack.c.l.b16 %v2054
    %v2719 = vunpack.c.h.b16 %v2054
    %v2720 = vunpack.c.l.b16 %v2055
    %v2721 = vunpack.c.h.b16 %v2055
    %v2722 = vunpack.c.l.b16 %v2056
    %v2723 = vunpack.c.h.b16 %v2056
    %v2724 = vunpack.c.l.b16 %v2057
    %v2725 = vunpack.c.h.b16 %v2057
    %v2726 = vunpack.c.l.b16 %v2058
    %v2727 = vunpack.c.h.b16 %v2058
    %v2728 = vunpack.c.l.b16 %v2059
    %v2729 = vunpack.c.h.b16 %v2059
    %v2730 = vunpack.c.l.b16 %v2060
    %v2731 = vunpack.c.h.b16 %v2060
    %v2732 = vunpack.c.l.b16 %v2061
    %v2733 = vunpack.c.h.b16 %v2061
    %v2734 = vunpack.c.l.b16 %v2062
    %v2735 = vunpack.c.h.b16 %v2062
    %v2736 = vunpack.c.l.b16 %v2063
    %v2737 = vunpack.c.h.b16 %v2063
    %v2738 = vunpack.c.l.b16 %v2064
    %v2739 = vunpack.c.h.b16 %v2064
    %v2740 = vunpack.c.l.b16 %v2065
    %v2741 = vunpack.c.h.b16 %v2065
    %v2742 = vunpack.c.l.b16 %v2066
    %v2743 = vunpack.c.h.b16 %v2066
    %v2744 = vunpack.c.l.b16 %v2067
    %v2745 = vunpack.c.h.b16 %v2067
    %v2746 = vunpack.c.l.b16 %v2068
    %v2747 = vunpack.c.h.b16 %v2068
    %v2748 = vunpack.c.l.b16 %v2069
    %v2749 = vunpack.c.h.b16 %v2069
    %v2750 = vunpack.c.l.b16 %v2070
    %v2751 = vunpack.c.h.b16 %v2070
    %v2752 = vunpack.c.l.b16 %v2071
    %v2753 = vunpack.c.h.b16 %v2071
    %v2754 = vunpack.c.l.b16 %v2072
    %v2755 = vunpack.c.h.b16 %v2072
    %v2756 = vunpack.c.l.b16 %v2073
    %v2757 = vunpack.c.h.b16 %v2073
    %v2758 = vunpack.c.l.b16 %v2074
    %v2759 = vunpack.c.h.b16 %v2074
    %v2760 = vunpack.c.l.b16 %v2075
    %v2761 = vunpack.c.h.b16 %v2075
    %v2762 = vunpack.c.l.b16 %v2076
    %v2763 = vunpack.c.h.b16 %v2076
    %v2764 = vunpack.c.l.b16 %v2077
    %v2765 = vunpack.c.h.b16 %v2077
    %v2766 = vunpack.c.l.b16 %v2078
    %v2767 = vunpack.c.h.b16 %v2078
    %v2768 = vunpack.c.l.b16 %v2079
    %v2769 = vunpack.c.h.b16 %v2079
    %v2770 = vunpack.c.l.b16 %v2080
    %v2771 = vunpack.c.h.b16 %v2080
    %v2772 = vunpack.c.l.b16 %v2081
    %v2773 = vunpack.c.h.b16 %v2081
    %v2774 = vunpack.c.l.b16 %v2082
    %v2775 = vunpack.c.h.b16 %v2082
    %v2776 = vunpack.c.l.b16 %v2083
    %v2777 = vunpack.c.h.b16 %v2083
    %v2778 = vunpack.c.l.b16 %v2084
    %v2779 = vunpack.c.h.b16 %v2084
    %v2780 = vunpack.c.l.b16 %v2085
    %v2781 = vunpack.c.h.b16 %v2085
    %v2782 = vunpack.c.l.b16 %v2086
    %v2783 = vunpack.c.h.b16 %v2086
    %v2784 = vunpack.c.l.b16 %v2087
    %v2785 = vunpack.c.h.b16 %v2087
    %v2786 = vunpack.c.l.b16 %v2088
    %v2787 = vunpack.c.h.b16 %v2088
    %v2788 = vunpack.c.l.b16 %v2089
    %v2789 = vunpack.c.h.b16 %v2089
    %v2790 = vunpack.c.l.b16 %v2090
    %v2791 = vunpack.c.h.b16 %v2090
    %v2792 = vunpack.c.l.b16 %v2091
    %v2793 = vunpack.c.h.b16 %v2091
    %v2794 = vunpack.c.l.b16 %v2092
    %v2795 = vunpack.c.h.b16 %v2092
    %v2796 = vunpack.c.l.b16 %v2093
    %v2797 = vunpack.c.h.b16 %v2093
    %v2798 = vunpack.c.l.b16 %v2094
    %v2799 = vunpack.c.h.b16 %v2094
    %v2800 = vunpack.c.l.b16 %v2095
    %v2801 = vunpack.c.h.b16 %v2095
    %v2802 = vunpack.c.l.b16 %v2096
    %v2803 = vunpack.c.h.b16 %v2096
    %v2804 = vunpack.c.l.b16 %v2097
    %v2805 = vunpack.c.h.b16 %v2097
    %v2806 = vunpack.c.l.b16 %v2098
    %v2807 = vunpack.c.h.b16 %v2098
    %v2808 = vunpack.c.l.b16 %v2099
    %v2809 = vunpack.c.h.b16 %v2099
    %v2810 = vunpack.c.l.b16 %v2100
    %v2811 = vunpack.c.h.b16 %v2100
    %v2812 = vunpack.c.l.b16 %v2101
    %v2813 = vunpack.c.h.b16 %v2101
    %v2814 = vunpack.c.l.b16 %v2102
    %v2815 = vunpack.c.h.b16 %v2102
    %v2816 = vunpack.c.l.b16 %v2103
    %v2817 = vunpack.c.h.b16 %v2103
    %v2818 = vunpack.c.l.b16 %v2104
    %v2819 = vunpack.c.h.b16 %v2104
    %v2820 = vunpack.c.l.b16 %v2105
    %v2821 = vunpack.c.h.b16 %v2105
    %v2822 = vunpack.c.l.b16 %v2106
    %v2823 = vunpack.c.h.b16 %v2106
    %v2824 = vunpack.c.l.b16 %v2107
    %v2825 = vunpack.c.h.b16 %v2107
    %v2826 = vunpack.c.l.b16 %v2108
    %v2827 = vunpack.c.h.b16 %v2108
    %v2828 = vunpack.c.l.b16 %v2109
    %v2829 = vunpack.c.h.b16 %v2109
    %v2830 = vunpack.c.l.b16 %v2110
    %v2831 = vunpack.c.h.b16 %v2110
    %v2832 = vunpack.c.l.b16 %v2111
    %v2833 = vunpack.c.h.b16 %v2111
    %v2834 = vunpack.c.l.b16 %v2112
    %v2835 = vunpack.c.h.b16 %v2112
    %v2836 = vunpack.c.l.b16 %v2113
    %v2837 = vunpack.c.h.b16 %v2113
    %v2838 = vunpack.c.l.b16 %v2114
    %v2839 = vunpack.c.h.b16 %v2114
    %v2840 = vunpack.c.l.b16 %v2115
    %v2841 = vunpack.c.h.b16 %v2115
    %v2842 = vunpack.c.l.b16 %v2116
    %v2843 = vunpack.c.h.b16 %v2116
    %v2844 = vunpack.c.l.b16 %v2117
    %v2845 = vunpack.c.h.b16 %v2117
    %v2846 = vunpack.c.l.b16 %v2118
    %v2847 = vunpack.c.h.b16 %v2118
    %v2848 = vunpack.c.l.b16 %v2119
    %v2849 = vunpack.c.h.b16 %v2119
    %v2850 = vunpack.c.l.b16 %v2120
    %v2851 = vunpack.c.h.b16 %v2120
    %v2852 = vunpack.c.l.b16 %v2121
    %v2853 = vunpack.c.h.b16 %v2121
    %v2854 = vunpack.c.l.b16 %v2122
    %v2855 = vunpack.c.h.b16 %v2122
    %v2856 = vunpack.c.l.b16 %v2123
    %v2857 = vunpack.c.h.b16 %v2123
    %v2858 = vunpack.c.l.b16 %v2124
    %v2859 = vunpack.c.h.b16 %v2124
    %v2860 = vunpack.c.l.b16 %v2125
    %v2861 = vunpack.c.h.b16 %v2125
    %v2862 = vunpack.c.l.b16 %v2126
    %v2863 = vunpack.c.h.b16 %v2126
    %v2864 = vunpack.c.l.b16 %v2127
    %v2865 = vunpack.c.h.b16 %v2127
    %v2866 = vunpack.c.l.b16 %v2128
    %v2867 = vunpack.c.h.b16 %v2128
    %v2868 = vunpack.c.l.b16 %v2129
    %v2869 = vunpack.c.h.b16 %v2129
    %v2870 = vunpack.c.l.b16 %v2130
    %v2871 = vunpack.c.h.b16 %v2130
    %v2872 = vunpack.c.l.b16 %v2131
    %v2873 = vunpack.c.h.b16 %v2131
    %v2874 = vunpack.c.l.b16 %v2132
    %v2875 = vunpack.c.h.b16 %v2132
    %v2876 = vunpack.c.l.b16 %v2133
    %v2877 = vunpack.c.h.b16 %v2133
    %v2878 = vunpack.c.l.b16 %v2134
    %v2879 = vunpack.c.h.b16 %v2134
    %v2880 = vunpack.c.l.b16 %v2135
    %v2881 = vunpack.c.h.b16 %v2135
    %v2882 = vunpack.c.l.b16 %v2136
    %v2883 = vunpack.c.h.b16 %v2136
    %v2884 = vunpack.c.l.b16 %v2137
    %v2885 = vunpack.c.h.b16 %v2137
    %v2886 = vunpack.c.l.b16 %v2138
    %v2887 = vunpack.c.h.b16 %v2138
    %v2888 = vunpack.c.l.b16 %v2139
    %v2889 = vunpack.c.h.b16 %v2139
    %v2890 = vunpack.c.l.b16 %v2140
    %v2891 = vunpack.c.h.b16 %v2140
    %v2892 = vunpack.c.l.b16 %v2141
    %v2893 = vunpack.c.h.b16 %v2141
    %v2894 = vunpack.c.l.b16 %v2142
    %v2895 = vunpack.c.h.b16 %v2142
    %v2896 = vunpack.c.l.b16 %v2143
    %v2897 = vunpack.c.h.b16 %v2143
    %v2898 = vunpack.c.l.b16 %v2144
    %v2899 = vunpack.c.h.b16 %v2144
    %v2900 = vunpack.c.l.b16 %v2145
    %v2901 = vunpack.c.h.b16 %v2145
    %v2902 = vunpack.c.l.b16 %v2146
    %v2903 = vunpack.c.h.b16 %v2146
    %v2904 = vunpack.c.l.b16 %v2147
    %v2905 = vunpack.c.h.b16 %v2147
    %v2906 = vunpack.c.l.b16 %v2148
    %v2907 = vunpack.c.h.b16 %v2148
    %v2908 = vunpack.c.l.b16 %v2149
    %v2909 = vunpack.c.h.b16 %v2149
    %v2910 = vunpack.c.l.b16 %v2150
    %v2911 = vunpack.c.h.b16 %v2150
    %v2912 = vunpack.c.l.b16 %v2151
    %v2913 = vunpack.c.h.b16 %v2151
    %v2914 = vunpack.c.l.b16 %v2152
    %v2915 = vunpack.c.h.b16 %v2152
    %v2916 = vunpack.c.l.b16 %v2153
    %v2917 = vunpack.c.h.b16 %v2153
    %v2918 = vunpack.c.l.b16 %v2154
    %v2919 = vunpack.c.h.b16 %v2154
    %v2920 = vunpack.c.l.b16 %v2155
    %v2921 = vunpack.c.h.b16 %v2155
    %v2922 = vunpack.c.l.b16 %v2156
    %v2923 = vunpack.c.h.b16 %v2156
    %v2924 = vunpack.c.l.b16 %v2157
    %v2925 = vunpack.c.h.b16 %v2157
    %v2926 = vunpack.c.l.b16 %v2158
    %v2927 = vunpack.c.h.b16 %v2158
    %v2928 = vunpack.c.l.b16 %v2159
    %v2929 = vunpack.c.h.b16 %v2159
    %v2930 = vunpack.c.l.b16 %v2160
    %v2931 = vunpack.c.h.b16 %v2160
    %v2932 = vunpack.c.l.b16 %v2161
    %v2933 = vunpack.c.h.b16 %v2161
    %v2934 = vunpack.c.l.b16 %v2162
    %v2935 = vunpack.c.h.b16 %v2162
    %v2936 = vunpack.c.l.b16 %v2163
    %v2937 = vunpack.c.h.b16 %v2163
    %v2938 = vunpack.c.l.b16 %v2164
    %v2939 = vunpack.c.h.b16 %v2164
    %v2940 = vunpack.c.l.b16 %v2165
    %v2941 = vunpack.c.h.b16 %v2165
    %v2942 = vunpack.c.l.b16 %v2166
    %v2943 = vunpack.c.h.b16 %v2166
    %v2944 = vunpack.c.l.b16 %v2167
    %v2945 = vunpack.c.h.b16 %v2167
    %v2946 = vunpack.c.l.b16 %v2168
    %v2947 = vunpack.c.h.b16 %v2168
    %v2948 = vunpack.c.l.b16 %v2169
    %v2949 = vunpack.c.h.b16 %v2169
    %v2950 = vunpack.c.l.b16 %v2170
    %v2951 = vunpack.c.h.b16 %v2170
    %v2952 = vunpack.c.l.b16 %v2171
    %v2953 = vunpack.c.h.b16 %v2171
    %v2954 = vunpack.c.l.b16 %v2172
    %v2955 = vunpack.c.h.b16 %v2172
    %v2956 = vunpack.c.l.b16 %v2173
    %v2957 = vunpack.c.h.b16 %v2173
    %v2958 = vunpack.c.l.b16 %v2174
    %v2959 = vunpack.c.h.b16 %v2174
    %v2960 = vunpack.c.l.b16 %v2175
    %v2961 = vunpack.c.h.b16 %v2175
    %v2962 = vunpack.c.l.b16 %v2176
    %v2963 = vunpack.c.h.b16 %v2176
    %v2964 = vunpack.c.l.b16 %v2177
    %v2965 = vunpack.c.h.b16 %v2177
    %v2966 = vunpack.c.l.b16 %v2178
    %v2967 = vunpack.c.h.b16 %v2178
    %v2968 = vunpack.c.l.b16 %v2179
    %v2969 = vunpack.c.h.b16 %v2179
    %v2970 = vunpack.c.l.b16 %v2180
    %v2971 = vunpack.c.h.b16 %v2180
    %v2972 = vunpack.c.l.b16 %v2181
    %v2973 = vunpack.c.h.b16 %v2181
    %v2974 = vunpack.c.l.b16 %v2182
    %v2975 = vunpack.c.h.b16 %v2182
    %v2976 = vunpack.c.l.b16 %v2183
    %v2977 = vunpack.c.h.b16 %v2183
    %v2978 = vunpack.c.l.b16 %v2184
    %v2979 = vunpack.c.h.b16 %v2184
    %v2980 = vunpack.c.l.b16 %v2185
    %v2981 = vunpack.c.h.b16 %v2185
    %v2982 = vunpack.c.l.b16 %v2186
    %v2983 = vunpack.c.h.b16 %v2186
    %v2984 = vunpack.c.l.b16 %v2187
    %v2985 = vunpack.c.h.b16 %v2187
    %v2986 = vunpack.c.l.b16 %v2188
    %v2987 = vunpack.c.h.b16 %v2188
    %v2988 = vunpack.c.l.b16 %v2189
    %v2989 = vunpack.c.h.b16 %v2189
    %v2990 = vunpack.c.l.b16 %v2190
    %v2991 = vunpack.c.h.b16 %v2190
    %v2992 = vunpack.c.l.b16 %v2191
    %v2993 = vunpack.c.h.b16 %v2191
    %v2994 = vunpack.c.l.b16 %v2192
    %v2995 = vunpack.c.h.b16 %v2192
    %v2996 = vunpack.c.l.b16 %v2193
    %v2997 = vunpack.c.h.b16 %v2193
    %v2998 = vunpack.c.l.b16 %v2194
    %v2999 = vunpack.c.h.b16 %v2194
    %v3000 = vunpack.c.l.b16 %v2195
    %v3001 = vunpack.c.h.b16 %v2195
    %v3002 = vunpack.c.l.b16 %v2196
    %v3003 = vunpack.c.h.b16 %v2196
    %v3004 = vunpack.c.l.b16 %v2197
    %v3005 = vunpack.c.h.b16 %v2197
    %v3006 = vunpack.c.l.b16 %v2198
    %v3007 = vunpack.c.h.b16 %v2198
    %v3008 = vunpack.c.l.b16 %v2199
    %v3009 = vunpack.c.h.b16 %v2199
    %v3010 = vpack.c.b16 %v2506, %v2498
    %v3011 = vpack.c.b16 %v2507, %v2499
    %v3012 = vpack.c.b16 %v2508, %v2500
    %v3013 = vpack.c.b16 %v2509, %v2501
    %v3014 = vpack.c.b16 %v2510, %v2502
    %v3015 = vpack.c.b16 %v2511, %v2503
    %v3016 = vpack.c.b16 %v2512, %v2504
    %v3017 = vpack.c.b16 %v2513, %v2505
    %v3018 = vpack.c.b16 %v2522, %v2514
    %v3019 = vpack.c.b16 %v2523, %v2515
    %v3020 = vpack.c.b16 %v2524, %v2516
    %v3021 = vpack.c.b16 %v2525, %v2517
    %v3022 = vpack.c.b16 %v2526, %v2518
    %v3023 = vpack.c.b16 %v2527, %v2519
    %v3024 = vpack.c.b16 %v2528, %v2520
    %v3025 = vpack.c.b16 %v2529, %v2521
    %v3026 = vpack.c.b16 %v2538, %v2530
    %v3027 = vpack.c.b16 %v2539, %v2531
    %v3028 = vpack.c.b16 %v2540, %v2532
    %v3029 = vpack.c.b16 %v2541, %v2533
    %v3030 = vpack.c.b16 %v2542, %v2534
    %v3031 = vpack.c.b16 %v2543, %v2535
    %v3032 = vpack.c.b16 %v2544, %v2536
    %v3033 = vpack.c.b16 %v2545, %v2537
    %v3034 = vpack.c.b16 %v2554, %v2546
    %v3035 = vpack.c.b16 %v2555, %v2547
    %v3036 = vpack.c.b16 %v2556, %v2548
    %v3037 = vpack.c.b16 %v2557, %v2549
    %v3038 = vpack.c.b16 %v2558, %v2550
    %v3039 = vpack.c.b16 %v2559, %v2551
    %v3040 = vpack.c.b16 %v2560, %v2552
    %v3041 = vpack.c.b16 %v2561, %v2553
    %v3042 = vpack.c.b16 %v2570, %v2562
    %v3043 = vpack.c.b16 %v2571, %v2563
    %v3044 = vpack.c.b16 %v2572, %v2564
    %v3045 = vpack.c.b16 %v2573, %v2565
    %v3046 = vpack.c.b16 %v2574, %v2566
    %v3047 = vpack.c.b16 %v2575, %v2567
    %v3048 = vpack.c.b16 %v2576, %v2568
    %v3049 = vpack.c.b16 %v2577, %v2569
    %v3050 = vpack.c.b16 %v2586, %v2578
    %v3051 = vpack.c.b16 %v2587, %v2579
    %v3052 = vpack.c.b16 %v2588, %v2580
    %v3053 = vpack.c.b16 %v2589, %v2581
    %v3054 = vpack.c.b16 %v2590, %v2582
    %v3055 = vpack.c.b16 %v2591, %v2583
    %v3056 = vpack.c.b16 %v2592, %v2584
    %v3057 = vpack.c.b16 %v2593, %v2585
    %v3058 = vpack.c.b16 %v2602, %v2594
    %v3059 = vpack.c.b16 %v2603, %v2595
    %v3060 = vpack.c.b16 %v2604, %v2596
    %v3061 = vpack.c.b16 %v2605, %v2597
    %v3062 = vpack.c.b16 %v2606, %v2598
    %v3063 = vpack.c.b16 %v2607, %v2599
    %v3064 = vpack.c.b16 %v2608, %v2600
    %v3065 = vpack.c.b16 %v2609, %v2601
    %v3066 = vpack.c.b16 %v2618, %v2610
    %v3067 = vpack.c.b16 %v2619, %v2611
    %v3068 = vpack.c.b16 %v2620, %v2612
    %v3069 = vpack.c.b16 %v2621, %v2613
    %v3070 = vpack.c.b16 %v2622, %v2614
    %v3071 = vpack.c.b16 %v2623, %v2615
    %v3072 = vpack.c.b16 %v2624, %v2616
    %v3073 = vpack.c.b16 %v2625, %v2617
    %v3074 = vpack.c.b16 %v2634, %v2626
    %v3075 = vpack.c.b16 %v2635, %v2627
    %v3076 = vpack.c.b16 %v2636, %v2628
    %v3077 = vpack.c.b16 %v2637, %v2629
    %v3078 = vpack.c.b16 %v2638, %v2630
    %v3079 = vpack.c.b16 %v2639, %v2631
    %v3080 = vpack.c.b16 %v2640, %v2632
    %v3081 = vpack.c.b16 %v2641, %v2633
    %v3082 = vpack.c.b16 %v2650, %v2642
    %v3083 = vpack.c.b16 %v2651, %v2643
    %v3084 = vpack.c.b16 %v2652, %v2644
    %v3085 = vpack.c.b16 %v2653, %v2645
    %v3086 = vpack.c.b16 %v2654, %v2646
    %v3087 = vpack.c.b16 %v2655, %v2647
    %v3088 = vpack.c.b16 %v2656, %v2648
    %v3089 = vpack.c.b16 %v2657, %v2649
    %v3090 = vpack.c.b16 %v2666, %v2658
    %v3091 = vpack.c.b16 %v2667, %v2659
    %v3092 = vpack.c.b16 %v2668, %v2660
    %v3093 = vpack.c.b16 %v2669, %v2661
    %v3094 = vpack.c.b16 %v2670, %v2662
    %v3095 = vpack.c.b16 %v2671, %v2663
    %v3096 = vpack.c.b16 %v2672, %v2664
    %v3097 = vpack.c.b16 %v2673, %v2665
    %v3098 = vpack.c.b16 %v2682, %v2674
    %v3099 = vpack.c.b16 %v2683, %v2675
    %v3100 = vpack.c.b16 %v2684, %v2676
    %v3101 = vpack.c.b16 %v2685, %v2677
    %v3102 = vpack.c.b16 %v2686, %v2678
    %v3103 = vpack.c.b16 %v2687, %v2679
    %v3104 = vpack.c.b16 %v2688, %v2680
    %v3105 = vpack.c.b16 %v2689, %v2681
    %v3106 = vpack.c.b16 %v2698, %v2690
    %v3107 = vpack.c.b16 %v2699, %v2691
    %v3108 = vpack.c.b16 %v2700, %v2692
    %v3109 = vpack.c.b16 %v2701, %v2693
    %v3110 = vpack.c.b16 %v2702, %v2694
    %v3111 = vpack.c.b16 %v2703, %v2695
    %v3112 = vpack.c.b16 %v2704, %v2696
    %v3113 = vpack.c.b16 %v2705, %v2697
    %v3114 = vpack.c.b16 %v2714, %v2706
    %v3115 = vpack.c.b16 %v2715, %v2707
    %v3116 = vpack.c.b16 %v2716, %v2708
    %v3117 = vpack.c.b16 %v2717, %v2709
    %v3118 = vpack.c.b16 %v2718, %v2710
    %v3119 = vpack.c.b16 %v2719, %v2711
    %v3120 = vpack.c.b16 %v2720, %v2712
    %v3121 = vpack.c.b16 %v2721, %v2713
    %v3122 = vpack.c.b16 %v2730, %v2722
    %v3123 = vpack.c.b16 %v2731, %v2723
    %v3124 = vpack.c.b16 %v2732, %v2724
    %v3125 = vpack.c.b16 %v2733, %v2725
    %v3126 = vpack.c.b16 %v2734, %v2726
    %v3127 = vpack.c.b16 %v2735, %v2727
    %v3128 = vpack.c.b16 %v2736, %v2728
    %v3129 = vpack.c.b16 %v2737, %v2729
    %v3130 = vpack.c.b16 %v2746, %v2738
    %v3131 = vpack.c.b16 %v2747, %v2739
    %v3132 = vpack.c.b16 %v2748, %v2740
    %v3133 = vpack.c.b16 %v2749, %v2741
    %v3134 = vpack.c.b16 %v2750, %v2742
    %v3135 = vpack.c.b16 %v2751, %v2743
    %v3136 = vpack.c.b16 %v2752, %v2744
    %v3137 = vpack.c.b16 %v2753, %v2745
    %v3138 = vpack.c.b16 %v2762, %v2754
    %v3139 = vpack.c.b16 %v2763, %v2755
    %v3140 = vpack.c.b16 %v2764, %v2756
    %v3141 = vpack.c.b16 %v2765, %v2757
    %v3142 = vpack.c.b16 %v2766, %v2758
    %v3143 = vpack.c.b16 %v2767, %v2759
    %v3144 = vpack.c.b16 %v2768, %v2760
    %v3145 = vpack.c.b16 %v2769, %v2761
    %v3146 = vpack.c.b16 %v2778, %v2770
    %v3147 = vpack.c.b16 %v2779, %v2771
    %v3148 = vpack.c.b16 %v2780, %v2772
    %v3149 = vpack.c.b16 %v2781, %v2773
    %v3150 = vpack.c.b16 %v2782, %v2774
    %v3151 = vpack.c.b16 %v2783, %v2775
    %v3152 = vpack.c.b16 %v2784, %v2776
    %v3153 = vpack.c.b16 %v2785, %v2777
    %v3154 = vpack.c.b16 %v2794, %v2786
    %v3155 = vpack.c.b16 %v2795, %v2787
    %v3156 = vpack.c.b16 %v2796, %v2788
    %v3157 = vpack.c.b16 %v2797, %v2789
    %v3158 = vpack.c.b16 %v2798, %v2790
    %v3159 = vpack.c.b16 %v2799, %v2791
    %v3160 = vpack.c.b16 %v2800, %v2792
    %v3161 = vpack.c.b16 %v2801, %v2793
    %v3162 = vpack.c.b16 %v2810, %v2802
    %v3163 = vpack.c.b16 %v2811, %v2803
    %v3164 = vpack.c.b16 %v2812, %v2804
    %v3165 = vpack.c.b16 %v2813, %v2805
    %v3166 = vpack.c.b16 %v2814, %v2806
    %v3167 = vpack.c.b16 %v2815, %v2807
    %v3168 = vpack.c.b16 %v2816, %v2808
    %v3169 = vpack.c.b16 %v2817, %v2809
    %v3170 = vpack.c.b16 %v2826, %v2818
    %v3171 = vpack.c.b16 %v2827, %v2819
    %v3172 = vpack.c.b16 %v2828, %v2820
    %v3173 = vpack.c.b16 %v2829, %v2821
    %v3174 = vpack.c.b16 %v2830, %v2822
    %v3175 = vpack.c.b16 %v2831, %v2823
    %v3176 = vpack.c.b16 %v2832, %v2824
    %v3177 = vpack.c.b16 %v2833, %v2825
    %v3178 = vpack.c.b16 %v2842, %v2834
    %v3179 = vpack.c.b16 %v2843, %v2835
    %v3180 = vpack.c.b16 %v2844, %v2836
    %v3181 = vpack.c.b16 %v2845, %v2837
    %v3182 = vpack.c.b16 %v2846, %v2838
    %v3183 = vpack.c.b16 %v2847, %v2839
    %v3184 = vpack.c.b16 %v2848, %v2840
    %v3185 = vpack.c.b16 %v2849, %v2841
    %v3186 = vpack.c.b16 %v2858, %v2850
    %v3187 = vpack.c.b16 %v2859, %v2851
    %v3188 = vpack.c.b16 %v2860, %v2852
    %v3189 = vpack.c.b16 %v2861, %v2853
    %v3190 = vpack.c.b16 %v2862, %v2854
    %v3191 = vpack.c.b16 %v2863, %v2855
    %v3192 = vpack.c.b16 %v2864, %v2856
    %v3193 = vpack.c.b16 %v2865, %v2857
    %v3194 = vpack.c.b16 %v2874, %v2866
    %v3195 = vpack.c.b16 %v2875, %v2867
    %v3196 = vpack.c.b16 %v2876, %v2868
    %v3197 = vpack.c.b16 %v2877, %v2869
    %v3198 = vpack.c.b16 %v2878, %v2870
    %v3199 = vpack.c.b16 %v2879, %v2871
    %v3200 = vpack.c.b16 %v2880, %v2872
    %v3201 = vpack.c.b16 %v2881, %v2873
    %v3202 = vpack.c.b16 %v2890, %v2882
    %v3203 = vpack.c.b16 %v2891, %v2883
    %v3204 = vpack.c.b16 %v2892, %v2884
    %v3205 = vpack.c.b16 %v2893, %v2885
    %v3206 = vpack.c.b16 %v2894, %v2886
    %v3207 = vpack.c.b16 %v2895, %v2887
    %v3208 = vpack.c.b16 %v2896, %v2888
    %v3209 = vpack.c.b16 %v2897, %v2889
    %v3210 = vpack.c.b16 %v2906, %v2898
    %v3211 = vpack.c.b16 %v2907, %v2899
    %v3212 = vpack.c.b16 %v2908, %v2900
    %v3213 = vpack.c.b16 %v2909, %v2901
    %v3214 = vpack.c.b16 %v2910, %v2902
    %v3215 = vpack.c.b16 %v2911, %v2903
    %v3216 = vpack.c.b16 %v2912, %v2904
    %v3217 = vpack.c.b16 %v2913, %v2905
    %v3218 = vpack.c.b16 %v2922, %v2914
    %v3219 = vpack.c.b16 %v2923, %v2915
    %v3220 = vpack.c.b16 %v2924, %v2916
    %v3221 = vpack.c.b16 %v2925, %v2917
    %v3222 = vpack.c.b16 %v2926, %v2918
    %v3223 = vpack.c.b16 %v2927, %v2919
    %v3224 = vpack.c.b16 %v2928, %v2920
    %v3225 = vpack.c.b16 %v2929, %v2921
    %v3226 = vpack.c.b16 %v2938, %v2930
    %v3227 = vpack.c.b16 %v2939, %v2931
    %v3228 = vpack.c.b16 %v2940, %v2932
    %v3229 = vpack.c.b16 %v2941, %v2933
    %v3230 = vpack.c.b16 %v2942, %v2934
    %v3231 = vpack.c.b16 %v2943, %v2935
    %v3232 = vpack.c.b16 %v2944, %v2936
    %v3233 = vpack.c.b16 %v2945, %v2937
    %v3234 = vpack.c.b16 %v2954, %v2946
    %v3235 = vpack.c.b16 %v2955, %v2947
    %v3236 = vpack.c.b16 %v2956, %v2948
    %v3237 = vpack.c.b16 %v2957, %v2949
    %v3238 = vpack.c.b16 %v2958, %v2950
    %v3239 = vpack.c.b16 %v2959, %v2951
    %v3240 = vpack.c.b16 %v2960, %v2952
    %v3241 = vpack.c.b16 %v2961, %v2953
    %v3242 = vpack.c.b16 %v2970, %v2962
    %v3243 = vpack.c.b16 %v2971, %v2963
    %v3244 = vpack.c.b16 %v2972, %v2964
    %v3245 = vpack.c.b16 %v2973, %v2965
    %v3246 = vpack.c.b16 %v2974, %v2966
    %v3247 = vpack.c.b16 %v2975, %v2967
    %v3248 = vpack.c.b16 %v2976, %v2968
    %v3249 = vpack.c.b16 %v2977, %v2969
    %v3250 = vpack.c.b16 %v2986, %v2978
    %v3251 = vpack.c.b16 %v2987, %v2979
    %v3252 = vpack.c.b16 %v2988, %v2980
    %v3253 = vpack.c.b16 %v2989, %v2981
    %v3254 = vpack.c.b16 %v2990, %v2982
    %v3255 = vpack.c.b16 %v2991, %v2983
    %v3256 = vpack.c.b16 %v2992, %v2984
    %v3257 = vpack.c.b16 %v2993, %v2985
    %v3258 = vpack.c.b16 %v3002, %v2994
    %v3259 = vpack.c.b16 %v3003, %v2995
    %v3260 = vpack.c.b16 %v3004, %v2996
    %v3261 = vpack.c.b16 %v3005, %v2997
    %v3262 = vpack.c.b16 %v3006, %v2998
    %v3263 = vpack.c.b16 %v3007, %v2999
    %v3264 = vpack.c.b16 %v3008, %v3000
    %v3265 = vpack.c.b16 %v3009, %v3001
    %3522 = vmatprep.subr.bf16.mxu0 %v3011
    %3523 = vmatpush1.bf16.msra.mxu0 %v3010
    %3524 = vmatprep.subr.bf16.mxu0 %v3019
    %3525 = vmatpush1.bf16.msra.mxu0 %v3018
    %3526 = vmatprep.subr.bf16.mxu0 %v3027
    %3527 = vmatpush1.bf16.msra.mxu0 %v3026
    %3528 = vmatprep.subr.bf16.mxu0 %v3035
    %3529 = vmatpush1.bf16.msra.mxu0 %v3034
    %3530 = vmatprep.subr.bf16.mxu0 %v3043
    %3531 = vmatpush1.bf16.msra.mxu0 %v3042
    %3532 = vmatprep.subr.bf16.mxu0 %v3051
    %3533 = vmatpush1.bf16.msra.mxu0 %v3050
    %3534 = vmatprep.subr.bf16.mxu0 %v3059
    %3535 = vmatpush1.bf16.msra.mxu0 %v3058
    %3536 = vmatprep.subr.bf16.mxu0 %v3067
    %3537 = vmatpush1.bf16.msra.mxu0 %v3066
    %3538 = vmatprep.subr.bf16.mxu0 %v3075
    %3539 = vmatpush1.bf16.msra.mxu0 %v3074
    %3540 = vmatprep.subr.bf16.mxu0 %v3083
    %3541 = vmatpush1.bf16.msra.mxu0 %v3082
    %3542 = vmatprep.subr.bf16.mxu0 %v3091
    %3543 = vmatpush1.bf16.msra.mxu0 %v3090
    %3544 = vmatprep.subr.bf16.mxu0 %v3099
    %3545 = vmatpush1.bf16.msra.mxu0 %v3098
    %3546 = vmatprep.subr.bf16.mxu0 %v3107
    %3547 = vmatpush1.bf16.msra.mxu0 %v3106
    %3548 = vmatprep.subr.bf16.mxu0 %v3115
    %3549 = vmatpush1.bf16.msra.mxu0 %v3114
    %3550 = vmatprep.subr.bf16.mxu0 %v3123
    %3551 = vmatpush1.bf16.msra.mxu0 %v3122
    %3552 = vmatprep.subr.bf16.mxu0 %v3131
    %3553 = vmatpush1.bf16.msra.mxu0 %v3130
    %3554 = vmatprep.mubr.bf16.mxu0 %v1941
    %3555 = vmatmul.mubr.bf16.gmra.mrb[0].mxu0 %v1940
    %v3556 = vpop.f32.mrb[0].mxu0
    %v3557 = vadd.f32 %v2205, %v3556
    %v3558 = vpop.f32.mrb[0].mxu0
    %v3559 = vadd.f32 %v2209, %v3558
    %v3560 = vpop.f32.mrb[0].mxu0
    %v3561 = vpop.f32.mrb[0].mxu0
    %3562 = vdwg.mxu0
    %3563 = vmatprep.subr.bf16.mxu0 %v3139
    %3564 = vmatpush1.bf16.msra.mxu0 %v3138
    %3565 = vmatprep.subr.bf16.mxu0 %v3147
    %3566 = vmatpush1.bf16.msra.mxu0 %v3146
    %3567 = vmatprep.subr.bf16.mxu0 %v3155
    %3568 = vmatpush1.bf16.msra.mxu0 %v3154
    %3569 = vmatprep.subr.bf16.mxu0 %v3163
    %3570 = vmatpush1.bf16.msra.mxu0 %v3162
    %3571 = vmatprep.subr.bf16.mxu0 %v3171
    %3572 = vmatpush1.bf16.msra.mxu0 %v3170
    %3573 = vmatprep.subr.bf16.mxu0 %v3179
    %3574 = vmatpush1.bf16.msra.mxu0 %v3178
    %3575 = vmatprep.subr.bf16.mxu0 %v3187
    %3576 = vmatpush1.bf16.msra.mxu0 %v3186
    %3577 = vmatprep.subr.bf16.mxu0 %v3195
    %3578 = vmatpush1.bf16.msra.mxu0 %v3194
    %3579 = vmatprep.subr.bf16.mxu0 %v3203
    %3580 = vmatpush1.bf16.msra.mxu0 %v3202
    %3581 = vmatprep.subr.bf16.mxu0 %v3211
    %3582 = vmatpush1.bf16.msra.mxu0 %v3210
    %3583 = vmatprep.subr.bf16.mxu0 %v3219
    %3584 = vmatpush1.bf16.msra.mxu0 %v3218
    %3585 = vmatprep.subr.bf16.mxu0 %v3227
    %3586 = vmatpush1.bf16.msra.mxu0 %v3226
    %3587 = vmatprep.subr.bf16.mxu0 %v3235
    %3588 = vmatpush1.bf16.msra.mxu0 %v3234
    %3589 = vmatprep.subr.bf16.mxu0 %v3243
    %3590 = vmatpush1.bf16.msra.mxu0 %v3242
    %3591 = vmatprep.subr.bf16.mxu0 %v3251
    %3592 = vmatpush1.bf16.msra.mxu0 %v3250
    %3593 = vmatprep.subr.bf16.mxu0 %v3259
    %3594 = vmatpush1.bf16.msra.mxu0 %v3258
    %3595 = vmatprep.mubr.bf16.mxu0 %v1943
    %3596 = vmatmul.mubr.bf16.gmra.mrb[0].mxu0 %v1942
    %v3597 = vpop.f32.mrb[0].mxu0
    %v3598 = vadd.f32 %v3557, %v3597
    %v3599 = vpop.f32.mrb[0].mxu0
    %v3600 = vadd.f32 %v3559, %v3599
    %v3601 = vpop.f32.mrb[0].mxu0
    %v3602 = vpop.f32.mrb[0].mxu0
    %3603 = vdwg.mxu0
    %3604 = vmatprep.subr.bf16.mxu0 %v3013
    %3605 = vmatpush1.bf16.msra.mxu0 %v3012
    %3606 = vmatprep.subr.bf16.mxu0 %v3021
    %3607 = vmatpush1.bf16.msra.mxu0 %v3020
    %3608 = vmatprep.subr.bf16.mxu0 %v3029
    %3609 = vmatpush1.bf16.msra.mxu0 %v3028
    %3610 = vmatprep.subr.bf16.mxu0 %v3037
    %3611 = vmatpush1.bf16.msra.mxu0 %v3036
    %3612 = vmatprep.subr.bf16.mxu0 %v3045
    %3613 = vmatpush1.bf16.msra.mxu0 %v3044
    %3614 = vmatprep.subr.bf16.mxu0 %v3053
    %3615 = vmatpush1.bf16.msra.mxu0 %v3052
    %3616 = vmatprep.subr.bf16.mxu0 %v3061
    %3617 = vmatpush1.bf16.msra.mxu0 %v3060
    %3618 = vmatprep.subr.bf16.mxu0 %v3069
    %3619 = vmatpush1.bf16.msra.mxu0 %v3068
    %3620 = vmatprep.subr.bf16.mxu0 %v3077
    %3621 = vmatpush1.bf16.msra.mxu0 %v3076
    %3622 = vmatprep.subr.bf16.mxu0 %v3085
    %3623 = vmatpush1.bf16.msra.mxu0 %v3084
    %3624 = vmatprep.subr.bf16.mxu0 %v3093
    %3625 = vmatpush1.bf16.msra.mxu0 %v3092
    %3626 = vmatprep.subr.bf16.mxu0 %v3101
    %3627 = vmatpush1.bf16.msra.mxu0 %v3100
    %3628 = vmatprep.subr.bf16.mxu0 %v3109
    %3629 = vmatpush1.bf16.msra.mxu0 %v3108
    %3630 = vmatprep.subr.bf16.mxu0 %v3117
    %3631 = vmatpush1.bf16.msra.mxu0 %v3116
    %3632 = vmatprep.subr.bf16.mxu0 %v3125
    %3633 = vmatpush1.bf16.msra.mxu0 %v3124
    %3634 = vmatprep.subr.bf16.mxu0 %v3133
    %3635 = vmatpush1.bf16.msra.mxu0 %v3132
    %3636 = vmatprep.mubr.bf16.mxu0 %v1941
    %3637 = vmatmul.mubr.bf16.gmra.mrb[0].mxu0 %v1940
    %v3638 = vpop.f32.mrb[0].mxu0
    %v3639 = vadd.f32 %v2213, %v3638
    %v3640 = vpop.f32.mrb[0].mxu0
    %v3641 = vadd.f32 %v2217, %v3640
    %v3642 = vpop.f32.mrb[0].mxu0
    %v3643 = vpop.f32.mrb[0].mxu0
    %3644 = vdwg.mxu0
    %3645 = vmatprep.subr.bf16.mxu0 %v3141
    %3646 = vmatpush1.bf16.msra.mxu0 %v3140
    %3647 = vmatprep.subr.bf16.mxu0 %v3149
    %3648 = vmatpush1.bf16.msra.mxu0 %v3148
    %3649 = vmatprep.subr.bf16.mxu0 %v3157
    %3650 = vmatpush1.bf16.msra.mxu0 %v3156
    %3651 = vmatprep.subr.bf16.mxu0 %v3165
    %3652 = vmatpush1.bf16.msra.mxu0 %v3164
    %3653 = vmatprep.subr.bf16.mxu0 %v3173
    %3654 = vmatpush1.bf16.msra.mxu0 %v3172
    %3655 = vmatprep.subr.bf16.mxu0 %v3181
    %3656 = vmatpush1.bf16.msra.mxu0 %v3180
    %3657 = vmatprep.subr.bf16.mxu0 %v3189
    %3658 = vmatpush1.bf16.msra.mxu0 %v3188
    %3659 = vmatprep.subr.bf16.mxu0 %v3197
    %3660 = vmatpush1.bf16.msra.mxu0 %v3196
    %3661 = vmatprep.subr.bf16.mxu0 %v3205
    %3662 = vmatpush1.bf16.msra.mxu0 %v3204
    %3663 = vmatprep.subr.bf16.mxu0 %v3213
    %3664 = vmatpush1.bf16.msra.mxu0 %v3212
    %3665 = vmatprep.subr.bf16.mxu0 %v3221
    %3666 = vmatpush1.bf16.msra.mxu0 %v3220
    %3667 = vmatprep.subr.bf16.mxu0 %v3229
    %3668 = vmatpush1.bf16.msra.mxu0 %v3228
    %3669 = vmatprep.subr.bf16.mxu0 %v3237
    %3670 = vmatpush1.bf16.msra.mxu0 %v3236
    %3671 = vmatprep.subr.bf16.mxu0 %v3245
    %3672 = vmatpush1.bf16.msra.mxu0 %v3244
    %3673 = vmatprep.subr.bf16.mxu0 %v3253
    %3674 = vmatpush1.bf16.msra.mxu0 %v3252
    %3675 = vmatprep.subr.bf16.mxu0 %v3261
    %3676 = vmatpush1.bf16.msra.mxu0 %v3260
    %3677 = vmatprep.mubr.bf16.mxu0 %v1943
    %3678 = vmatmul.mubr.bf16.gmra.mrb[0].mxu0 %v1942
    %v3679 = vpop.f32.mrb[0].mxu0
    %v3680 = vadd.f32 %v3639, %v3679
    %v3681 = vpop.f32.mrb[0].mxu0
    %v3682 = vadd.f32 %v3641, %v3681
    %v3683 = vpop.f32.mrb[0].mxu0
    %v3684 = vpop.f32.mrb[0].mxu0
    %3685 = vdwg.mxu0
    %3686 = vmatprep.subr.bf16.mxu0 %v3015
    %3687 = vmatpush1.bf16.msra.mxu0 %v3014
    %3688 = vmatprep.subr.bf16.mxu0 %v3023
    %3689 = vmatpush1.bf16.msra.mxu0 %v3022
    %3690 = vmatprep.subr.bf16.mxu0 %v3031
    %3691 = vmatpush1.bf16.msra.mxu0 %v3030
    %3692 = vmatprep.subr.bf16.mxu0 %v3039
    %3693 = vmatpush1.bf16.msra.mxu0 %v3038
    %3694 = vmatprep.subr.bf16.mxu0 %v3047
    %3695 = vmatpush1.bf16.msra.mxu0 %v3046
    %3696 = vmatprep.subr.bf16.mxu0 %v3055
    %3697 = vmatpush1.bf16.msra.mxu0 %v3054
    %3698 = vmatprep.subr.bf16.mxu0 %v3063
    %3699 = vmatpush1.bf16.msra.mxu0 %v3062
    %3700 = vmatprep.subr.bf16.mxu0 %v3071
    %3701 = vmatpush1.bf16.msra.mxu0 %v3070
    %3702 = vmatprep.subr.bf16.mxu0 %v3079
    %3703 = vmatpush1.bf16.msra.mxu0 %v3078
    %3704 = vmatprep.subr.bf16.mxu0 %v3087
    %3705 = vmatpush1.bf16.msra.mxu0 %v3086
    %3706 = vmatprep.subr.bf16.mxu0 %v3095
    %3707 = vmatpush1.bf16.msra.mxu0 %v3094
    %3708 = vmatprep.subr.bf16.mxu0 %v3103
    %3709 = vmatpush1.bf16.msra.mxu0 %v3102
    %3710 = vmatprep.subr.bf16.mxu0 %v3111
    %3711 = vmatpush1.bf16.msra.mxu0 %v3110
    %3712 = vmatprep.subr.bf16.mxu0 %v3119
    %3713 = vmatpush1.bf16.msra.mxu0 %v3118
    %3714 = vmatprep.subr.bf16.mxu0 %v3127
    %3715 = vmatpush1.bf16.msra.mxu0 %v3126
    %3716 = vmatprep.subr.bf16.mxu0 %v3135
    %3717 = vmatpush1.bf16.msra.mxu0 %v3134
    %3718 = vmatprep.mubr.bf16.mxu0 %v1941
    %3719 = vmatmul.mubr.bf16.gmra.mrb[0].mxu0 %v1940
    %v3720 = vpop.f32.mrb[0].mxu0
    %v3721 = vadd.f32 %v2221, %v3720
    %v3722 = vpop.f32.mrb[0].mxu0
    %v3723 = vadd.f32 %v2225, %v3722
    %v3724 = vpop.f32.mrb[0].mxu0
    %v3725 = vpop.f32.mrb[0].mxu0
    %3726 = vdwg.mxu0
    %3727 = vmatprep.subr.bf16.mxu0 %v3143
    %3728 = vmatpush1.bf16.msra.mxu0 %v3142
    %3729 = vmatprep.subr.bf16.mxu0 %v3151
    %3730 = vmatpush1.bf16.msra.mxu0 %v3150
    %3731 = vmatprep.subr.bf16.mxu0 %v3159
    %3732 = vmatpush1.bf16.msra.mxu0 %v3158
    %3733 = vmatprep.subr.bf16.mxu0 %v3167
    %3734 = vmatpush1.bf16.msra.mxu0 %v3166
    %3735 = vmatprep.subr.bf16.mxu0 %v3175
    %3736 = vmatpush1.bf16.msra.mxu0 %v3174
    %3737 = vmatprep.subr.bf16.mxu0 %v3183
    %3738 = vmatpush1.bf16.msra.mxu0 %v3182
    %3739 = vmatprep.subr.bf16.mxu0 %v3191
    %3740 = vmatpush1.bf16.msra.mxu0 %v3190
    %3741 = vmatprep.subr.bf16.mxu0 %v3199
    %3742 = vmatpush1.bf16.msra.mxu0 %v3198
    %3743 = vmatprep.subr.bf16.mxu0 %v3207
    %3744 = vmatpush1.bf16.msra.mxu0 %v3206
    %3745 = vmatprep.subr.bf16.mxu0 %v3215
    %3746 = vmatpush1.bf16.msra.mxu0 %v3214
    %3747 = vmatprep.subr.bf16.mxu0 %v3223
    %3748 = vmatpush1.bf16.msra.mxu0 %v3222
    %3749 = vmatprep.subr.bf16.mxu0 %v3231
    %3750 = vmatpush1.bf16.msra.mxu0 %v3230
    %3751 = vmatprep.subr.bf16.mxu0 %v3239
    %3752 = vmatpush1.bf16.msra.mxu0 %v3238
    %3753 = vmatprep.subr.bf16.mxu0 %v3247
    %3754 = vmatpush1.bf16.msra.mxu0 %v3246
    %3755 = vmatprep.subr.bf16.mxu0 %v3255
    %3756 = vmatpush1.bf16.msra.mxu0 %v3254
    %3757 = vmatprep.subr.bf16.mxu0 %v3263
    %3758 = vmatpush1.bf16.msra.mxu0 %v3262
    %3759 = vmatprep.mubr.bf16.mxu0 %v1943
    %3760 = vmatmul.mubr.bf16.gmra.mrb[0].mxu0 %v1942
    %v3761 = vpop.f32.mrb[0].mxu0
    %v3762 = vadd.f32 %v3721, %v3761
    %v3763 = vpop.f32.mrb[0].mxu0
    %v3764 = vadd.f32 %v3723, %v3763
    %v3765 = vpop.f32.mrb[0].mxu0
    %v3766 = vpop.f32.mrb[0].mxu0
    %3767 = vdwg.mxu0
    %3768 = vmatprep.subr.bf16.mxu0 %v3017
    %3769 = vmatpush1.bf16.msra.mxu0 %v3016
    %3770 = vmatprep.subr.bf16.mxu0 %v3025
    %3771 = vmatpush1.bf16.msra.mxu0 %v3024
    %3772 = vmatprep.subr.bf16.mxu0 %v3033
    %3773 = vmatpush1.bf16.msra.mxu0 %v3032
    %3774 = vmatprep.subr.bf16.mxu0 %v3041
    %3775 = vmatpush1.bf16.msra.mxu0 %v3040
    %3776 = vmatprep.subr.bf16.mxu0 %v3049
    %3777 = vmatpush1.bf16.msra.mxu0 %v3048
    %3778 = vmatprep.subr.bf16.mxu0 %v3057
    %3779 = vmatpush1.bf16.msra.mxu0 %v3056
    %3780 = vmatprep.subr.bf16.mxu0 %v3065
    %3781 = vmatpush1.bf16.msra.mxu0 %v3064
    %3782 = vmatprep.subr.bf16.mxu0 %v3073
    %3783 = vmatpush1.bf16.msra.mxu0 %v3072
    %3784 = vmatprep.subr.bf16.mxu0 %v3081
    %3785 = vmatpush1.bf16.msra.mxu0 %v3080
    %3786 = vmatprep.subr.bf16.mxu0 %v3089
    %3787 = vmatpush1.bf16.msra.mxu0 %v3088
    %3788 = vmatprep.subr.bf16.mxu0 %v3097
    %3789 = vmatpush1.bf16.msra.mxu0 %v3096
    %3790 = vmatprep.subr.bf16.mxu0 %v3105
    %3791 = vmatpush1.bf16.msra.mxu0 %v3104
    %3792 = vmatprep.subr.bf16.mxu0 %v3113
    %3793 = vmatpush1.bf16.msra.mxu0 %v3112
    %3794 = vmatprep.subr.bf16.mxu0 %v3121
    %3795 = vmatpush1.bf16.msra.mxu0 %v3120
    %3796 = vmatprep.subr.bf16.mxu0 %v3129
    %3797 = vmatpush1.bf16.msra.mxu0 %v3128
    %3798 = vmatprep.subr.bf16.mxu0 %v3137
    %3799 = vmatpush1.bf16.msra.mxu0 %v3136
    %3800 = vmatprep.mubr.bf16.mxu0 %v1941
    %3801 = vmatmul.mubr.bf16.gmra.mrb[0].mxu0 %v1940
    %v3802 = vpop.f32.mrb[0].mxu0
    %v3803 = vadd.f32 %v2229, %v3802
    %v3804 = vpop.f32.mrb[0].mxu0
    %v3805 = vadd.f32 %v2233, %v3804
    %v3806 = vpop.f32.mrb[0].mxu0
    %v3807 = vpop.f32.mrb[0].mxu0
    %3808 = vdwg.mxu0
    %3809 = vmatprep.subr.bf16.mxu0 %v3145
    %3810 = vmatpush1.bf16.msra.mxu0 %v3144
    %3811 = vmatprep.subr.bf16.mxu0 %v3153
    %3812 = vmatpush1.bf16.msra.mxu0 %v3152
    %3813 = vmatprep.subr.bf16.mxu0 %v3161
    %3814 = vmatpush1.bf16.msra.mxu0 %v3160
    %3815 = vmatprep.subr.bf16.mxu0 %v3169
    %3816 = vmatpush1.bf16.msra.mxu0 %v3168
    %3817 = vmatprep.subr.bf16.mxu0 %v3177
    %3818 = vmatpush1.bf16.msra.mxu0 %v3176
    %3819 = vmatprep.subr.bf16.mxu0 %v3185
    %3820 = vmatpush1.bf16.msra.mxu0 %v3184
    %3821 = vmatprep.subr.bf16.mxu0 %v3193
    %3822 = vmatpush1.bf16.msra.mxu0 %v3192
    %3823 = vmatprep.subr.bf16.mxu0 %v3201
    %3824 = vmatpush1.bf16.msra.mxu0 %v3200
    %3825 = vmatprep.subr.bf16.mxu0 %v3209
    %3826 = vmatpush1.bf16.msra.mxu0 %v3208
    %3827 = vmatprep.subr.bf16.mxu0 %v3217
    %3828 = vmatpush1.bf16.msra.mxu0 %v3216
    %3829 = vmatprep.subr.bf16.mxu0 %v3225
    %3830 = vmatpush1.bf16.msra.mxu0 %v3224
    %3831 = vmatprep.subr.bf16.mxu0 %v3233
    %3832 = vmatpush1.bf16.msra.mxu0 %v3232
    %3833 = vmatprep.subr.bf16.mxu0 %v3241
    %3834 = vmatpush1.bf16.msra.mxu0 %v3240
    %3835 = vmatprep.subr.bf16.mxu0 %v3249
    %3836 = vmatpush1.bf16.msra.mxu0 %v3248
    %3837 = vmatprep.subr.bf16.mxu0 %v3257
    %3838 = vmatpush1.bf16.msra.mxu0 %v3256
    %3839 = vmatprep.subr.bf16.mxu0 %v3265
    %3840 = vmatpush1.bf16.msra.mxu0 %v3264
    %3841 = vmatprep.mubr.bf16.mxu0 %v1943
    %3842 = vmatmul.mubr.bf16.gmra.mrb[0].mxu0 %v1942
    %v3843 = vpop.f32.mrb[0].mxu0
    %v3844 = vadd.f32 %v3803, %v3843
    %v3845 = vpop.f32.mrb[0].mxu0
    %v3846 = vadd.f32 %v3805, %v3845
    %v3847 = vpop.f32.mrb[0].mxu0
    %v3848 = vpop.f32.mrb[0].mxu0
    %3849 = vdwg.mxu0
    %v3850 = vsub.f32 0.0, %v3598
    %v3851 = vsub.f32 0.0, %v3600
    %v3852 = vsub.f32 0.0, %v3680
    %v3853 = vsub.f32 0.0, %v3682
    %v3854 = vmul.f32 %v3850, 1.442695
    %v3855 = vpow.pop %v3854
    %v3856 = vmul.f32 %v3851, 1.442695
    %v3857 = vpow.pop %v3856
    %v3858 = vmul.f32 %v3852, 1.442695
    %v3859 = vpow.pop %v3858
    %v3860 = vmul.f32 %v3853, 1.442695
    %v3861 = vpow.pop %v3860
    %v3862 = vadd.f32 %v3855, 1.0
    %v3863 = vadd.f32 %v3857, 1.0
    %v3864 = vadd.f32 %v3859, 1.0
    %v3865 = vadd.f32 %v3861, 1.0
    %v3866 = vrcp.pop %v3862
    %v3867 = vrcp.pop %v3863
    %v3868 = vrcp.pop %v3864
    %v3869 = vrcp.pop %v3865
    %v3870 = vtanh.pop %v3762
    %v3871 = vtanh.pop %v3764
    %v3872 = vsub.f32 0.0, %v3844
    %v3873 = vsub.f32 0.0, %v3846
    %v3874 = vmul.f32 %v3872, 1.442695
    %v3875 = vpow.pop %v3874
    %v3876 = vmul.f32 %v3873, 1.442695
    %v3877 = vpow.pop %v3876
    %v3878 = vadd.f32 %v3875, 1.0
    %v3879 = vadd.f32 %v3877, 1.0
    %v3880 = vrcp.pop %v3878
    %v3881 = vrcp.pop %v3879
    %v3882 = vmul.f32 %v3868, %v1938
    %v3883 = vmul.f32 %v3869, %v1939
    %v3884 = vmul.f32 %v3866, %v3870
    %v3885 = vmul.f32 %v3867, %v3871
    %v3886 = vadd.f32 %v3882, %v3884
    %v3887 = vadd.f32 %v3883, %v3885
    %v3888 = vtanh.pop %v3886
    %v3889 = vtanh.pop %v3887
    %v3890 = vmul.f32 %v3880, %v3888
    %v3891 = vmul.f32 %v3881, %v3889
    %s3892 = scalar_lea.vmem [#allocation2], 64
    %v3893 = vld [vmem:[%s3892] sm:$0xff]
    %v3894 = vld [vmem:[%s3892 + $0x8] sm:$0xff]
    %v3895 = vld [vmem:[%s3892 + $0x10] sm:$0xff]
    %v3896 = vld [vmem:[%s3892 + $0x18] sm:$0xff]
    %v3897 = vld [vmem:[%s3892 + $0x20] sm:$0xff]
    %v3898 = vld [vmem:[%s3892 + $0x28] sm:$0xff]
    %v3899 = vld [vmem:[%s3892 + $0x30] sm:$0xff]
    %v3900 = vld [vmem:[%s3892 + $0x38] sm:$0xff]
    %3901 = vmatprep.subr.bf16.mxu0 %v1465
    %3902 = vmatpush1.bf16.msra.mxu0 %v1464
    %3903 = vmatprep.subr.bf16.mxu0 %v1473
    %3904 = vmatpush1.bf16.msra.mxu0 %v1472
    %3905 = vmatprep.subr.bf16.mxu0 %v1481
    %3906 = vmatpush1.bf16.msra.mxu0 %v1480
    %3907 = vmatprep.subr.bf16.mxu0 %v1489
    %3908 = vmatpush1.bf16.msra.mxu0 %v1488
    %3909 = vmatprep.subr.bf16.mxu0 %v1497
    %3910 = vmatpush1.bf16.msra.mxu0 %v1496
    %3911 = vmatprep.subr.bf16.mxu0 %v1505
    %3912 = vmatpush1.bf16.msra.mxu0 %v1504
    %3913 = vmatprep.subr.bf16.mxu0 %v1513
    %3914 = vmatpush1.bf16.msra.mxu0 %v1512
    %3915 = vmatprep.subr.bf16.mxu0 %v1521
    %3916 = vmatpush1.bf16.msra.mxu0 %v1520
    %3917 = vmatprep.subr.bf16.mxu0 %v1529
    %3918 = vmatpush1.bf16.msra.mxu0 %v1528
    %3919 = vmatprep.subr.bf16.mxu0 %v1537
    %3920 = vmatpush1.bf16.msra.mxu0 %v1536
    %3921 = vmatprep.subr.bf16.mxu0 %v1545
    %3922 = vmatpush1.bf16.msra.mxu0 %v1544
    %3923 = vmatprep.subr.bf16.mxu0 %v1553
    %3924 = vmatpush1.bf16.msra.mxu0 %v1552
    %3925 = vmatprep.subr.bf16.mxu0 %v1561
    %3926 = vmatpush1.bf16.msra.mxu0 %v1560
    %3927 = vmatprep.subr.bf16.mxu0 %v1569
    %3928 = vmatpush1.bf16.msra.mxu0 %v1568
    %3929 = vmatprep.subr.bf16.mxu0 %v1577
    %3930 = vmatpush1.bf16.msra.mxu0 %v1576
    %3931 = vmatprep.subr.bf16.mxu0 %v1585
    %3932 = vmatpush1.bf16.msra.mxu0 %v1584
    %3933 = vmatprep.mubr.bf16.mxu0 %v1941
    %3934 = vmatmul.mubr.bf16.gmra.mrb[0].mxu0 %v1940
    %v3935 = vpop.f32.mrb[0].mxu0
    %v3936 = vadd.f32 0.0, %v3935
    %v3937 = vpop.f32.mrb[0].mxu0
    %v3938 = vadd.f32 0.0, %v3937
    %v3939 = vpop.f32.mrb[0].mxu0
    %v3940 = vpop.f32.mrb[0].mxu0
    %3941 = vdwg.mxu0
    %3942 = vmatprep.subr.bf16.mxu0 %v1467
    %3943 = vmatpush1.bf16.msra.mxu0 %v1466
    %3944 = vmatprep.subr.bf16.mxu0 %v1475
    %3945 = vmatpush1.bf16.msra.mxu0 %v1474
    %3946 = vmatprep.subr.bf16.mxu0 %v1483
    %3947 = vmatpush1.bf16.msra.mxu0 %v1482
    %3948 = vmatprep.subr.bf16.mxu0 %v1491
    %3949 = vmatpush1.bf16.msra.mxu0 %v1490
    %3950 = vmatprep.subr.bf16.mxu0 %v1499
    %3951 = vmatpush1.bf16.msra.mxu0 %v1498
    %3952 = vmatprep.subr.bf16.mxu0 %v1507
    %3953 = vmatpush1.bf16.msra.mxu0 %v1506
    %3954 = vmatprep.subr.bf16.mxu0 %v1515
    %3955 = vmatpush1.bf16.msra.mxu0 %v1514
    %3956 = vmatprep.subr.bf16.mxu0 %v1523
    %3957 = vmatpush1.bf16.msra.mxu0 %v1522
    %3958 = vmatprep.subr.bf16.mxu0 %v1531
    %3959 = vmatpush1.bf16.msra.mxu0 %v1530
    %3960 = vmatprep.subr.bf16.mxu0 %v1539
    %3961 = vmatpush1.bf16.msra.mxu0 %v1538
    %3962 = vmatprep.subr.bf16.mxu0 %v1547
    %3963 = vmatpush1.bf16.msra.mxu0 %v1546
    %3964 = vmatprep.subr.bf16.mxu0 %v1555
    %3965 = vmatpush1.bf16.msra.mxu0 %v1554
    %3966 = vmatprep.subr.bf16.mxu0 %v1563
    %3967 = vmatpush1.bf16.msra.mxu0 %v1562
    %3968 = vmatprep.subr.bf16.mxu0 %v1571
    %3969 = vmatpush1.bf16.msra.mxu0 %v1570
    %3970 = vmatprep.subr.bf16.mxu0 %v1579
    %3971 = vmatpush1.bf16.msra.mxu0 %v1578
    %3972 = vmatprep.subr.bf16.mxu0 %v1587
    %3973 = vmatpush1.bf16.msra.mxu0 %v1586
    %3974 = vmatprep.mubr.bf16.mxu0 %v1941
    %3975 = vmatmul.mubr.bf16.gmra.mrb[0].mxu0 %v1940
    %v3976 = vpop.f32.mrb[0].mxu0
    %v3977 = vadd.f32 0.0, %v3976
    %v3978 = vpop.f32.mrb[0].mxu0
    %v3979 = vadd.f32 0.0, %v3978
    %v3980 = vpop.f32.mrb[0].mxu0
    %v3981 = vpop.f32.mrb[0].mxu0
    %3982 = vdwg.mxu0
    %3983 = vmatprep.subr.bf16.mxu0 %v1469
    %3984 = vmatpush1.bf16.msra.mxu0 %v1468
    %3985 = vmatprep.subr.bf16.mxu0 %v1477
    %3986 = vmatpush1.bf16.msra.mxu0 %v1476
    %3987 = vmatprep.subr.bf16.mxu0 %v1485
    %3988 = vmatpush1.bf16.msra.mxu0 %v1484
    %3989 = vmatprep.subr.bf16.mxu0 %v1493
    %3990 = vmatpush1.bf16.msra.mxu0 %v1492
    %3991 = vmatprep.subr.bf16.mxu0 %v1501
    %3992 = vmatpush1.bf16.msra.mxu0 %v1500
    %3993 = vmatprep.subr.bf16.mxu0 %v1509
    %3994 = vmatpush1.bf16.msra.mxu0 %v1508
    %3995 = vmatprep.subr.bf16.mxu0 %v1517
    %3996 = vmatpush1.bf16.msra.mxu0 %v1516
    %3997 = vmatprep.subr.bf16.mxu0 %v1525
    %3998 = vmatpush1.bf16.msra.mxu0 %v1524
    %3999 = vmatprep.subr.bf16.mxu0 %v1533
    %4000 = vmatpush1.bf16.msra.mxu0 %v1532
    %4001 = vmatprep.subr.bf16.mxu0 %v1541
    %4002 = vmatpush1.bf16.msra.mxu0 %v1540
    %4003 = vmatprep.subr.bf16.mxu0 %v1549
    %4004 = vmatpush1.bf16.msra.mxu0 %v1548
    %4005 = vmatprep.subr.bf16.mxu0 %v1557
    %4006 = vmatpush1.bf16.msra.mxu0 %v1556
    %4007 = vmatprep.subr.bf16.mxu0 %v1565
    %4008 = vmatpush1.bf16.msra.mxu0 %v1564
    %4009 = vmatprep.subr.bf16.mxu0 %v1573
    %4010 = vmatpush1.bf16.msra.mxu0 %v1572
    %4011 = vmatprep.subr.bf16.mxu0 %v1581
    %4012 = vmatpush1.bf16.msra.mxu0 %v1580
    %4013 = vmatprep.subr.bf16.mxu0 %v1589
    %4014 = vmatpush1.bf16.msra.mxu0 %v1588
    %4015 = vmatprep.mubr.bf16.mxu0 %v1941
    %4016 = vmatmul.mubr.bf16.gmra.mrb[0].mxu0 %v1940
    %v4017 = vpop.f32.mrb[0].mxu0
    %v4018 = vadd.f32 0.0, %v4017
    %v4019 = vpop.f32.mrb[0].mxu0
    %v4020 = vadd.f32 0.0, %v4019
    %v4021 = vpop.f32.mrb[0].mxu0
    %v4022 = vpop.f32.mrb[0].mxu0
    %4023 = vdwg.mxu0
    %4024 = vmatprep.subr.bf16.mxu0 %v1471
    %4025 = vmatpush1.bf16.msra.mxu0 %v1470
    %4026 = vmatprep.subr.bf16.mxu0 %v1479
    %4027 = vmatpush1.bf16.msra.mxu0 %v1478
    %4028 = vmatprep.subr.bf16.mxu0 %v1487
    %4029 = vmatpush1.bf16.msra.mxu0 %v1486
    %4030 = vmatprep.subr.bf16.mxu0 %v1495
    %4031 = vmatpush1.bf16.msra.mxu0 %v1494
    %4032 = vmatprep.subr.bf16.mxu0 %v1503
    %4033 = vmatpush1.bf16.msra.mxu0 %v1502
    %4034 = vmatprep.subr.bf16.mxu0 %v1511
    %4035 = vmatpush1.bf16.msra.mxu0 %v1510
    %4036 = vmatprep.subr.bf16.mxu0 %v1519
    %4037 = vmatpush1.bf16.msra.mxu0 %v1518
    %4038 = vmatprep.subr.bf16.mxu0 %v1527
    %4039 = vmatpush1.bf16.msra.mxu0 %v1526
    %4040 = vmatprep.subr.bf16.mxu0 %v1535
    %4041 = vmatpush1.bf16.msra.mxu0 %v1534
    %4042 = vmatprep.subr.bf16.mxu0 %v1543
    %4043 = vmatpush1.bf16.msra.mxu0 %v1542
    %4044 = vmatprep.subr.bf16.mxu0 %v1551
    %4045 = vmatpush1.bf16.msra.mxu0 %v1550
    %4046 = vmatprep.subr.bf16.mxu0 %v1559
    %4047 = vmatpush1.bf16.msra.mxu0 %v1558
    %4048 = vmatprep.subr.bf16.mxu0 %v1567
    %4049 = vmatpush1.bf16.msra.mxu0 %v1566
    %4050 = vmatprep.subr.bf16.mxu0 %v1575
    %4051 = vmatpush1.bf16.msra.mxu0 %v1574
    %4052 = vmatprep.subr.bf16.mxu0 %v1583
    %4053 = vmatpush1.bf16.msra.mxu0 %v1582
    %4054 = vmatprep.subr.bf16.mxu0 %v1591
    %4055 = vmatpush1.bf16.msra.mxu0 %v1590
    %4056 = vmatprep.mubr.bf16.mxu0 %v1941
    %4057 = vmatmul.mubr.bf16.gmra.mrb[0].mxu0 %v1940
    %v4058 = vpop.f32.mrb[0].mxu0
    %v4059 = vadd.f32 0.0, %v4058
    %v4060 = vpop.f32.mrb[0].mxu0
    %v4061 = vadd.f32 0.0, %v4060
    %v4062 = vpop.f32.mrb[0].mxu0
    %v4063 = vpop.f32.mrb[0].mxu0
    %4064 = vdwg.mxu0
    %v4065 = vadd.f32 %v3893, %v3936
    %v4066 = vadd.f32 %v3894, %v3938
    %v4067 = vadd.f32 %v3895, %v3977
    %v4068 = vadd.f32 %v3896, %v3979
    %v4069 = vadd.f32 %v3897, %v4018
    %v4070 = vadd.f32 %v3898, %v4020
    %v4071 = vadd.f32 %v3899, %v4059
    %v4072 = vadd.f32 %v3900, %v4061
    %v4073 = vsub.f32 0.0, %v4065
    %v4074 = vsub.f32 0.0, %v4066
    %v4075 = vsub.f32 0.0, %v4067
    %v4076 = vsub.f32 0.0, %v4068
    %v4077 = vmul.f32 %v4073, 1.442695
    %v4078 = vpow.pop %v4077
    %v4079 = vmul.f32 %v4074, 1.442695
    %v4080 = vpow.pop %v4079
    %v4081 = vmul.f32 %v4075, 1.442695
    %v4082 = vpow.pop %v4081
    %v4083 = vmul.f32 %v4076, 1.442695
    %v4084 = vpow.pop %v4083
    %v4085 = vadd.f32 %v4078, 1.0
    %v4086 = vadd.f32 %v4080, 1.0
    %v4087 = vadd.f32 %v4082, 1.0
    %v4088 = vadd.f32 %v4084, 1.0
    %v4089 = vrcp.pop %v4085
    %v4090 = vrcp.pop %v4086
    %v4091 = vrcp.pop %v4087
    %v4092 = vrcp.pop %v4088
    %v4093 = vtanh.pop %v4069
    %v4094 = vtanh.pop %v4070
    %v4095 = vsub.f32 0.0, %v4071
    %v4096 = vsub.f32 0.0, %v4072
    %v4097 = vmul.f32 %v4095, 1.442695
    %v4098 = vpow.pop %v4097
    %v4099 = vmul.f32 %v4096, 1.442695
    %v4100 = vpow.pop %v4099
    %v4101 = vadd.f32 %v4098, 1.0
    %v4102 = vadd.f32 %v4100, 1.0
    %v4103 = vrcp.pop %v4101
    %v4104 = vrcp.pop %v4102
    %v4105 = vmul.f32 %v4091, %v1928
    %v4106 = vmul.f32 %v4092, %v1929
    %v4107 = vmul.f32 %v4089, %v4093
    %v4108 = vmul.f32 %v4090, %v4094
    %v4109 = vadd.f32 %v4105, %v4107
    %v4110 = vadd.f32 %v4106, %v4108
    %v4111 = vtanh.pop %v4109
    %v4112 = vtanh.pop %v4110
    %v4113 = vmul.f32 %v4103, %v4111
    %v4114 = vmul.f32 %v4104, %v4112
    %v4115 = vpack.c.bf16 %v4113, %v4113
    %v4116 = vpack.c.bf16 %v4114, %v4114
    %v4117 = vpack.c.bf16 %v3890, %v3890
    %v4118 = vpack.c.bf16 %v3891, %v3891
    %4119 = vmatprep.subr.bf16.mxu0 %v3011
    %4120 = vmatpush1.bf16.msra.mxu0 %v3010
    %4121 = vmatprep.subr.bf16.mxu0 %v3019
    %4122 = vmatpush1.bf16.msra.mxu0 %v3018
    %4123 = vmatprep.subr.bf16.mxu0 %v3027
    %4124 = vmatpush1.bf16.msra.mxu0 %v3026
    %4125 = vmatprep.subr.bf16.mxu0 %v3035
    %4126 = vmatpush1.bf16.msra.mxu0 %v3034
    %4127 = vmatprep.subr.bf16.mxu0 %v3043
    %4128 = vmatpush1.bf16.msra.mxu0 %v3042
    %4129 = vmatprep.subr.bf16.mxu0 %v3051
    %4130 = vmatpush1.bf16.msra.mxu0 %v3050
    %4131 = vmatprep.subr.bf16.mxu0 %v3059
    %4132 = vmatpush1.bf16.msra.mxu0 %v3058
    %4133 = vmatprep.subr.bf16.mxu0 %v3067
    %4134 = vmatpush1.bf16.msra.mxu0 %v3066
    %4135 = vmatprep.subr.bf16.mxu0 %v3075
    %4136 = vmatpush1.bf16.msra.mxu0 %v3074
    %4137 = vmatprep.subr.bf16.mxu0 %v3083
    %4138 = vmatpush1.bf16.msra.mxu0 %v3082
    %4139 = vmatprep.subr.bf16.mxu0 %v3091
    %4140 = vmatpush1.bf16.msra.mxu0 %v3090
    %4141 = vmatprep.subr.bf16.mxu0 %v3099
    %4142 = vmatpush1.bf16.msra.mxu0 %v3098
    %4143 = vmatprep.subr.bf16.mxu0 %v3107
    %4144 = vmatpush1.bf16.msra.mxu0 %v3106
    %4145 = vmatprep.subr.bf16.mxu0 %v3115
    %4146 = vmatpush1.bf16.msra.mxu0 %v3114
    %4147 = vmatprep.subr.bf16.mxu0 %v3123
    %4148 = vmatpush1.bf16.msra.mxu0 %v3122
    %4149 = vmatprep.subr.bf16.mxu0 %v3131
    %4150 = vmatpush1.bf16.msra.mxu0 %v3130
    %4151 = vmatprep.mubr.bf16.mxu0 %v4116
    %4152 = vmatmul.mubr.bf16.gmra.mrb[0].mxu0 %v4115
    %v4153 = vpop.f32.mrb[0].mxu0
    %v4154 = vadd.f32 %v2205, %v4153
    %v4155 = vpop.f32.mrb[0].mxu0
    %v4156 = vadd.f32 %v2209, %v4155
    %v4157 = vpop.f32.mrb[0].mxu0
    %v4158 = vpop.f32.mrb[0].mxu0
    %4159 = vdwg.mxu0
    %4160 = vmatprep.subr.bf16.mxu0 %v3139
    %4161 = vmatpush1.bf16.msra.mxu0 %v3138
    %4162 = vmatprep.subr.bf16.mxu0 %v3147
    %4163 = vmatpush1.bf16.msra.mxu0 %v3146
    %4164 = vmatprep.subr.bf16.mxu0 %v3155
    %4165 = vmatpush1.bf16.msra.mxu0 %v3154
    %4166 = vmatprep.subr.bf16.mxu0 %v3163
    %4167 = vmatpush1.bf16.msra.mxu0 %v3162
    %4168 = vmatprep.subr.bf16.mxu0 %v3171
    %4169 = vmatpush1.bf16.msra.mxu0 %v3170
    %4170 = vmatprep.subr.bf16.mxu0 %v3179
    %4171 = vmatpush1.bf16.msra.mxu0 %v3178
    %4172 = vmatprep.subr.bf16.mxu0 %v3187
    %4173 = vmatpush1.bf16.msra.mxu0 %v3186
    %4174 = vmatprep.subr.bf16.mxu0 %v3195
    %4175 = vmatpush1.bf16.msra.mxu0 %v3194
    %4176 = vmatprep.subr.bf16.mxu0 %v3203
    %4177 = vmatpush1.bf16.msra.mxu0 %v3202
    %4178 = vmatprep.subr.bf16.mxu0 %v3211
    %4179 = vmatpush1.bf16.msra.mxu0 %v3210
    %4180 = vmatprep.subr.bf16.mxu0 %v3219
    %4181 = vmatpush1.bf16.msra.mxu0 %v3218
    %4182 = vmatprep.subr.bf16.mxu0 %v3227
    %4183 = vmatpush1.bf16.msra.mxu0 %v3226
    %4184 = vmatprep.subr.bf16.mxu0 %v3235
    %4185 = vmatpush1.bf16.msra.mxu0 %v3234
    %4186 = vmatprep.subr.bf16.mxu0 %v3243
    %4187 = vmatpush1.bf16.msra.mxu0 %v3242
    %4188 = vmatprep.subr.bf16.mxu0 %v3251
    %4189 = vmatpush1.bf16.msra.mxu0 %v3250
    %4190 = vmatprep.subr.bf16.mxu0 %v3259
    %4191 = vmatpush1.bf16.msra.mxu0 %v3258
    %4192 = vmatprep.mubr.bf16.mxu0 %v4118
    %4193 = vmatmul.mubr.bf16.gmra.mrb[0].mxu0 %v4117
    %v4194 = vpop.f32.mrb[0].mxu0
    %v4195 = vadd.f32 %v4154, %v4194
    %v4196 = vpop.f32.mrb[0].mxu0
    %v4197 = vadd.f32 %v4156, %v4196
    %v4198 = vpop.f32.mrb[0].mxu0
    %v4199 = vpop.f32.mrb[0].mxu0
    %4200 = vdwg.mxu0
    %4201 = vmatprep.subr.bf16.mxu0 %v3013
    %4202 = vmatpush1.bf16.msra.mxu0 %v3012
    %4203 = vmatprep.subr.bf16.mxu0 %v3021
    %4204 = vmatpush1.bf16.msra.mxu0 %v3020
    %4205 = vmatprep.subr.bf16.mxu0 %v3029
    %4206 = vmatpush1.bf16.msra.mxu0 %v3028
    %4207 = vmatprep.subr.bf16.mxu0 %v3037
    %4208 = vmatpush1.bf16.msra.mxu0 %v3036
    %4209 = vmatprep.subr.bf16.mxu0 %v3045
    %4210 = vmatpush1.bf16.msra.mxu0 %v3044
    %4211 = vmatprep.subr.bf16.mxu0 %v3053
    %4212 = vmatpush1.bf16.msra.mxu0 %v3052
    %4213 = vmatprep.subr.bf16.mxu0 %v3061
    %4214 = vmatpush1.bf16.msra.mxu0 %v3060
    %4215 = vmatprep.subr.bf16.mxu0 %v3069
    %4216 = vmatpush1.bf16.msra.mxu0 %v3068
    %4217 = vmatprep.subr.bf16.mxu0 %v3077
    %4218 = vmatpush1.bf16.msra.mxu0 %v3076
    %4219 = vmatprep.subr.bf16.mxu0 %v3085
    %4220 = vmatpush1.bf16.msra.mxu0 %v3084
    %4221 = vmatprep.subr.bf16.mxu0 %v3093
    %4222 = vmatpush1.bf16.msra.mxu0 %v3092
    %4223 = vmatprep.subr.bf16.mxu0 %v3101
    %4224 = vmatpush1.bf16.msra.mxu0 %v3100
    %4225 = vmatprep.subr.bf16.mxu0 %v3109
    %4226 = vmatpush1.bf16.msra.mxu0 %v3108
    %4227 = vmatprep.subr.bf16.mxu0 %v3117
    %4228 = vmatpush1.bf16.msra.mxu0 %v3116
    %4229 = vmatprep.subr.bf16.mxu0 %v3125
    %4230 = vmatpush1.bf16.msra.mxu0 %v3124
    %4231 = vmatprep.subr.bf16.mxu0 %v3133
    %4232 = vmatpush1.bf16.msra.mxu0 %v3132
    %4233 = vmatprep.mubr.bf16.mxu0 %v4116
    %4234 = vmatmul.mubr.bf16.gmra.mrb[0].mxu0 %v4115
    %v4235 = vpop.f32.mrb[0].mxu0
    %v4236 = vadd.f32 %v2213, %v4235
    %v4237 = vpop.f32.mrb[0].mxu0
    %v4238 = vadd.f32 %v2217, %v4237
    %v4239 = vpop.f32.mrb[0].mxu0
    %v4240 = vpop.f32.mrb[0].mxu0
    %4241 = vdwg.mxu0
    %4242 = vmatprep.subr.bf16.mxu0 %v3141
    %4243 = vmatpush1.bf16.msra.mxu0 %v3140
    %4244 = vmatprep.subr.bf16.mxu0 %v3149
    %4245 = vmatpush1.bf16.msra.mxu0 %v3148
    %4246 = vmatprep.subr.bf16.mxu0 %v3157
    %4247 = vmatpush1.bf16.msra.mxu0 %v3156
    %4248 = vmatprep.subr.bf16.mxu0 %v3165
    %4249 = vmatpush1.bf16.msra.mxu0 %v3164
    %4250 = vmatprep.subr.bf16.mxu0 %v3173
    %4251 = vmatpush1.bf16.msra.mxu0 %v3172
    %4252 = vmatprep.subr.bf16.mxu0 %v3181
    %4253 = vmatpush1.bf16.msra.mxu0 %v3180
    %4254 = vmatprep.subr.bf16.mxu0 %v3189
    %4255 = vmatpush1.bf16.msra.mxu0 %v3188
    %4256 = vmatprep.subr.bf16.mxu0 %v3197
    %4257 = vmatpush1.bf16.msra.mxu0 %v3196
    %4258 = vmatprep.subr.bf16.mxu0 %v3205
    %4259 = vmatpush1.bf16.msra.mxu0 %v3204
    %4260 = vmatprep.subr.bf16.mxu0 %v3213
    %4261 = vmatpush1.bf16.msra.mxu0 %v3212
    %4262 = vmatprep.subr.bf16.mxu0 %v3221
    %4263 = vmatpush1.bf16.msra.mxu0 %v3220
    %4264 = vmatprep.subr.bf16.mxu0 %v3229
    %4265 = vmatpush1.bf16.msra.mxu0 %v3228
    %4266 = vmatprep.subr.bf16.mxu0 %v3237
    %4267 = vmatpush1.bf16.msra.mxu0 %v3236
    %4268 = vmatprep.subr.bf16.mxu0 %v3245
    %4269 = vmatpush1.bf16.msra.mxu0 %v3244
    %4270 = vmatprep.subr.bf16.mxu0 %v3253
    %4271 = vmatpush1.bf16.msra.mxu0 %v3252
    %4272 = vmatprep.subr.bf16.mxu0 %v3261
    %4273 = vmatpush1.bf16.msra.mxu0 %v3260
    %4274 = vmatprep.mubr.bf16.mxu0 %v4118
    %4275 = vmatmul.mubr.bf16.gmra.mrb[0].mxu0 %v4117
    %v4276 = vpop.f32.mrb[0].mxu0
    %v4277 = vadd.f32 %v4236, %v4276
    %v4278 = vpop.f32.mrb[0].mxu0
    %v4279 = vadd.f32 %v4238, %v4278
    %v4280 = vpop.f32.mrb[0].mxu0
    %v4281 = vpop.f32.mrb[0].mxu0
    %4282 = vdwg.mxu0
    %4283 = vmatprep.subr.bf16.mxu0 %v3015
    %4284 = vmatpush1.bf16.msra.mxu0 %v3014
    %4285 = vmatprep.subr.bf16.mxu0 %v3023
    %4286 = vmatpush1.bf16.msra.mxu0 %v3022
    %4287 = vmatprep.subr.bf16.mxu0 %v3031
    %4288 = vmatpush1.bf16.msra.mxu0 %v3030
    %4289 = vmatprep.subr.bf16.mxu0 %v3039
    %4290 = vmatpush1.bf16.msra.mxu0 %v3038
    %4291 = vmatprep.subr.bf16.mxu0 %v3047
    %4292 = vmatpush1.bf16.msra.mxu0 %v3046
    %4293 = vmatprep.subr.bf16.mxu0 %v3055
    %4294 = vmatpush1.bf16.msra.mxu0 %v3054
    %4295 = vmatprep.subr.bf16.mxu0 %v3063
    %4296 = vmatpush1.bf16.msra.mxu0 %v3062
    %4297 = vmatprep.subr.bf16.mxu0 %v3071
    %4298 = vmatpush1.bf16.msra.mxu0 %v3070
    %4299 = vmatprep.subr.bf16.mxu0 %v3079
    %4300 = vmatpush1.bf16.msra.mxu0 %v3078
    %4301 = vmatprep.subr.bf16.mxu0 %v3087
    %4302 = vmatpush1.bf16.msra.mxu0 %v3086
    %4303 = vmatprep.subr.bf16.mxu0 %v3095
    %4304 = vmatpush1.bf16.msra.mxu0 %v3094
    %4305 = vmatprep.subr.bf16.mxu0 %v3103
    %4306 = vmatpush1.bf16.msra.mxu0 %v3102
    %4307 = vmatprep.subr.bf16.mxu0 %v3111
    %4308 = vmatpush1.bf16.msra.mxu0 %v3110
    %4309 = vmatprep.subr.bf16.mxu0 %v3119
    %4310 = vmatpush1.bf16.msra.mxu0 %v3118
    %4311 = vmatprep.subr.bf16.mxu0 %v3127
    %4312 = vmatpush1.bf16.msra.mxu0 %v3126
    %4313 = vmatprep.subr.bf16.mxu0 %v3135
    %4314 = vmatpush1.bf16.msra.mxu0 %v3134
    %4315 = vmatprep.mubr.bf16.mxu0 %v4116
    %4316 = vmatmul.mubr.bf16.gmra.mrb[0].mxu0 %v4115
    %v4317 = vpop.f32.mrb[0].mxu0
    %v4318 = vadd.f32 %v2221, %v4317
    %v4319 = vpop.f32.mrb[0].mxu0
    %v4320 = vadd.f32 %v2225, %v4319
    %v4321 = vpop.f32.mrb[0].mxu0
    %v4322 = vpop.f32.mrb[0].mxu0
    %4323 = vdwg.mxu0
    %4324 = vmatprep.subr.bf16.mxu0 %v3143
    %4325 = vmatpush1.bf16.msra.mxu0 %v3142
    %4326 = vmatprep.subr.bf16.mxu0 %v3151
    %4327 = vmatpush1.bf16.msra.mxu0 %v3150
    %4328 = vmatprep.subr.bf16.mxu0 %v3159
    %4329 = vmatpush1.bf16.msra.mxu0 %v3158
    %4330 = vmatprep.subr.bf16.mxu0 %v3167
    %4331 = vmatpush1.bf16.msra.mxu0 %v3166
    %4332 = vmatprep.subr.bf16.mxu0 %v3175
    %4333 = vmatpush1.bf16.msra.mxu0 %v3174
    %4334 = vmatprep.subr.bf16.mxu0 %v3183
    %4335 = vmatpush1.bf16.msra.mxu0 %v3182
    %4336 = vmatprep.subr.bf16.mxu0 %v3191
    %4337 = vmatpush1.bf16.msra.mxu0 %v3190
    %4338 = vmatprep.subr.bf16.mxu0 %v3199
    %4339 = vmatpush1.bf16.msra.mxu0 %v3198
    %4340 = vmatprep.subr.bf16.mxu0 %v3207
    %4341 = vmatpush1.bf16.msra.mxu0 %v3206
    %4342 = vmatprep.subr.bf16.mxu0 %v3215
    %4343 = vmatpush1.bf16.msra.mxu0 %v3214
    %4344 = vmatprep.subr.bf16.mxu0 %v3223
    %4345 = vmatpush1.bf16.msra.mxu0 %v3222
    %4346 = vmatprep.subr.bf16.mxu0 %v3231
    %4347 = vmatpush1.bf16.msra.mxu0 %v3230
    %4348 = vmatprep.subr.bf16.mxu0 %v3239
    %4349 = vmatpush1.bf16.msra.mxu0 %v3238
    %4350 = vmatprep.subr.bf16.mxu0 %v3247
    %4351 = vmatpush1.bf16.msra.mxu0 %v3246
    %4352 = vmatprep.subr.bf16.mxu0 %v3255
    %4353 = vmatpush1.bf16.msra.mxu0 %v3254
    %4354 = vmatprep.subr.bf16.mxu0 %v3263
    %4355 = vmatpush1.bf16.msra.mxu0 %v3262
    %4356 = vmatprep.mubr.bf16.mxu0 %v4118
    %4357 = vmatmul.mubr.bf16.gmra.mrb[0].mxu0 %v4117
    %v4358 = vpop.f32.mrb[0].mxu0
    %v4359 = vadd.f32 %v4318, %v4358
    %v4360 = vpop.f32.mrb[0].mxu0
    %v4361 = vadd.f32 %v4320, %v4360
    %v4362 = vpop.f32.mrb[0].mxu0
    %v4363 = vpop.f32.mrb[0].mxu0
    %4364 = vdwg.mxu0
    %4365 = vmatprep.subr.bf16.mxu0 %v3017
    %4366 = vmatpush1.bf16.msra.mxu0 %v3016
    %4367 = vmatprep.subr.bf16.mxu0 %v3025
    %4368 = vmatpush1.bf16.msra.mxu0 %v3024
    %4369 = vmatprep.subr.bf16.mxu0 %v3033
    %4370 = vmatpush1.bf16.msra.mxu0 %v3032
    %4371 = vmatprep.subr.bf16.mxu0 %v3041
    %4372 = vmatpush1.bf16.msra.mxu0 %v3040
    %4373 = vmatprep.subr.bf16.mxu0 %v3049
    %4374 = vmatpush1.bf16.msra.mxu0 %v3048
    %4375 = vmatprep.subr.bf16.mxu0 %v3057
    %4376 = vmatpush1.bf16.msra.mxu0 %v3056
    %4377 = vmatprep.subr.bf16.mxu0 %v3065
    %4378 = vmatpush1.bf16.msra.mxu0 %v3064
    %4379 = vmatprep.subr.bf16.mxu0 %v3073
    %4380 = vmatpush1.bf16.msra.mxu0 %v3072
    %4381 = vmatprep.subr.bf16.mxu0 %v3081
    %4382 = vmatpush1.bf16.msra.mxu0 %v3080
    %4383 = vmatprep.subr.bf16.mxu0 %v3089
    %4384 = vmatpush1.bf16.msra.mxu0 %v3088
    %4385 = vmatprep.subr.bf16.mxu0 %v3097
    %4386 = vmatpush1.bf16.msra.mxu0 %v3096
    %4387 = vmatprep.subr.bf16.mxu0 %v3105
    %4388 = vmatpush1.bf16.msra.mxu0 %v3104
    %4389 = vmatprep.subr.bf16.mxu0 %v3113
    %4390 = vmatpush1.bf16.msra.mxu0 %v3112
    %4391 = vmatprep.subr.bf16.mxu0 %v3121
    %4392 = vmatpush1.bf16.msra.mxu0 %v3120
    %4393 = vmatprep.subr.bf16.mxu0 %v3129
    %4394 = vmatpush1.bf16.msra.mxu0 %v3128
    %4395 = vmatprep.subr.bf16.mxu0 %v3137
    %4396 = vmatpush1.bf16.msra.mxu0 %v3136
    %4397 = vmatprep.mubr.bf16.mxu0 %v4116
    %4398 = vmatmul.mubr.bf16.gmra.mrb[0].mxu0 %v4115
    %v4399 = vpop.f32.mrb[0].mxu0
    %v4400 = vadd.f32 %v2229, %v4399
    %v4401 = vpop.f32.mrb[0].mxu0
    %v4402 = vadd.f32 %v2233, %v4401
    %v4403 = vpop.f32.mrb[0].mxu0
    %v4404 = vpop.f32.mrb[0].mxu0
    %4405 = vdwg.mxu0
    %4406 = vmatprep.subr.bf16.mxu0 %v3145
    %4407 = vmatpush1.bf16.msra.mxu0 %v3144
    %4408 = vmatprep.subr.bf16.mxu0 %v3153
    %4409 = vmatpush1.bf16.msra.mxu0 %v3152
    %4410 = vmatprep.subr.bf16.mxu0 %v3161
    %4411 = vmatpush1.bf16.msra.mxu0 %v3160
    %4412 = vmatprep.subr.bf16.mxu0 %v3169
    %4413 = vmatpush1.bf16.msra.mxu0 %v3168
    %4414 = vmatprep.subr.bf16.mxu0 %v3177
    %4415 = vmatpush1.bf16.msra.mxu0 %v3176
    %4416 = vmatprep.subr.bf16.mxu0 %v3185
    %4417 = vmatpush1.bf16.msra.mxu0 %v3184
    %4418 = vmatprep.subr.bf16.mxu0 %v3193
    %4419 = vmatpush1.bf16.msra.mxu0 %v3192
    %4420 = vmatprep.subr.bf16.mxu0 %v3201
    %4421 = vmatpush1.bf16.msra.mxu0 %v3200
    %4422 = vmatprep.subr.bf16.mxu0 %v3209
    %4423 = vmatpush1.bf16.msra.mxu0 %v3208
    %4424 = vmatprep.subr.bf16.mxu0 %v3217
    %4425 = vmatpush1.bf16.msra.mxu0 %v3216
    %4426 = vmatprep.subr.bf16.mxu0 %v3225
    %4427 = vmatpush1.bf16.msra.mxu0 %v3224
    %4428 = vmatprep.subr.bf16.mxu0 %v3233
    %4429 = vmatpush1.bf16.msra.mxu0 %v3232
    %4430 = vmatprep.subr.bf16.mxu0 %v3241
    %4431 = vmatpush1.bf16.msra.mxu0 %v3240
    %4432 = vmatprep.subr.bf16.mxu0 %v3249
    %4433 = vmatpush1.bf16.msra.mxu0 %v3248
    %4434 = vmatprep.subr.bf16.mxu0 %v3257
    %4435 = vmatpush1.bf16.msra.mxu0 %v3256
    %4436 = vmatprep.subr.bf16.mxu0 %v3265
    %4437 = vmatpush1.bf16.msra.mxu0 %v3264
    %4438 = vmatprep.mubr.bf16.mxu0 %v4118
    %4439 = vmatmul.mubr.bf16.gmra.mrb[0].mxu0 %v4117
    %v4440 = vpop.f32.mrb[0].mxu0
    %v4441 = vadd.f32 %v4400, %v4440
    %v4442 = vpop.f32.mrb[0].mxu0
    %v4443 = vadd.f32 %v4402, %v4442
    %v4444 = vpop.f32.mrb[0].mxu0
    %v4445 = vpop.f32.mrb[0].mxu0
    %4446 = vdwg.mxu0
    %v4447 = vsub.f32 0.0, %v4195
    %v4448 = vsub.f32 0.0, %v4197
    %v4449 = vsub.f32 0.0, %v4277
    %v4450 = vsub.f32 0.0, %v4279
    %v4451 = vmul.f32 %v4447, 1.442695
    %v4452 = vpow.pop %v4451
    %v4453 = vmul.f32 %v4448, 1.442695
    %v4454 = vpow.pop %v4453
    %v4455 = vmul.f32 %v4449, 1.442695
    %v4456 = vpow.pop %v4455
    %v4457 = vmul.f32 %v4450, 1.442695
    %v4458 = vpow.pop %v4457
    %v4459 = vadd.f32 %v4452, 1.0
    %v4460 = vadd.f32 %v4454, 1.0
    %v4461 = vadd.f32 %v4456, 1.0
    %v4462 = vadd.f32 %v4458, 1.0
    %v4463 = vrcp.pop %v4459
    %v4464 = vrcp.pop %v4460
    %v4465 = vrcp.pop %v4461
    %v4466 = vrcp.pop %v4462
    %v4467 = vtanh.pop %v4359
    %v4468 = vtanh.pop %v4361
    %v4469 = vsub.f32 0.0, %v4441
    %v4470 = vsub.f32 0.0, %v4443
    %v4471 = vmul.f32 %v4469, 1.442695
    %v4472 = vpow.pop %v4471
    %v4473 = vmul.f32 %v4470, 1.442695
    %v4474 = vpow.pop %v4473
    %v4475 = vadd.f32 %v4472, 1.0
    %v4476 = vadd.f32 %v4474, 1.0
    %v4477 = vrcp.pop %v4475
    %v4478 = vrcp.pop %v4476
    %v4479 = vmul.f32 %v4465, %v3886
    %v4480 = vmul.f32 %v4466, %v3887
    %v4481 = vmul.f32 %v4463, %v4467
    %v4482 = vmul.f32 %v4464, %v4468
    %v4483 = vadd.f32 %v4479, %v4481
    %v4484 = vadd.f32 %v4480, %v4482
    %v4485 = vtanh.pop %v4483
    %v4486 = vtanh.pop %v4484
    %v4487 = vmul.f32 %v4477, %v4485
    %v4488 = vmul.f32 %v4478, %v4486
    %s4489 = scalar_lea.vmem [#allocation2], 128
    %v4490 = vld [vmem:[%s4489] sm:$0xff]
    %v4491 = vld [vmem:[%s4489 + $0x8] sm:$0xff]
    %v4492 = vld [vmem:[%s4489 + $0x10] sm:$0xff]
    %v4493 = vld [vmem:[%s4489 + $0x18] sm:$0xff]
    %v4494 = vld [vmem:[%s4489 + $0x20] sm:$0xff]
    %v4495 = vld [vmem:[%s4489 + $0x28] sm:$0xff]
    %v4496 = vld [vmem:[%s4489 + $0x30] sm:$0xff]
    %v4497 = vld [vmem:[%s4489 + $0x38] sm:$0xff]
    %4498 = vmatprep.subr.bf16.mxu0 %v1465
    %4499 = vmatpush1.bf16.msra.mxu0 %v1464
    %4500 = vmatprep.subr.bf16.mxu0 %v1473
    %4501 = vmatpush1.bf16.msra.mxu0 %v1472
    %4502 = vmatprep.subr.bf16.mxu0 %v1481
    %4503 = vmatpush1.bf16.msra.mxu0 %v1480
    %4504 = vmatprep.subr.bf16.mxu0 %v1489
    %4505 = vmatpush1.bf16.msra.mxu0 %v1488
    %4506 = vmatprep.subr.bf16.mxu0 %v1497
    %4507 = vmatpush1.bf16.msra.mxu0 %v1496
    %4508 = vmatprep.subr.bf16.mxu0 %v1505
    %4509 = vmatpush1.bf16.msra.mxu0 %v1504
    %4510 = vmatprep.subr.bf16.mxu0 %v1513
    %4511 = vmatpush1.bf16.msra.mxu0 %v1512
    %4512 = vmatprep.subr.bf16.mxu0 %v1521
    %4513 = vmatpush1.bf16.msra.mxu0 %v1520
    %4514 = vmatprep.subr.bf16.mxu0 %v1529
    %4515 = vmatpush1.bf16.msra.mxu0 %v1528
    %4516 = vmatprep.subr.bf16.mxu0 %v1537
    %4517 = vmatpush1.bf16.msra.mxu0 %v1536
    %4518 = vmatprep.subr.bf16.mxu0 %v1545
    %4519 = vmatpush1.bf16.msra.mxu0 %v1544
    %4520 = vmatprep.subr.bf16.mxu0 %v1553
    %4521 = vmatpush1.bf16.msra.mxu0 %v1552
    %4522 = vmatprep.subr.bf16.mxu0 %v1561
    %4523 = vmatpush1.bf16.msra.mxu0 %v1560
    %4524 = vmatprep.subr.bf16.mxu0 %v1569
    %4525 = vmatpush1.bf16.msra.mxu0 %v1568
    %4526 = vmatprep.subr.bf16.mxu0 %v1577
    %4527 = vmatpush1.bf16.msra.mxu0 %v1576
    %4528 = vmatprep.subr.bf16.mxu0 %v1585
    %4529 = vmatpush1.bf16.msra.mxu0 %v1584
    %4530 = vmatprep.mubr.bf16.mxu0 %v4116
    %4531 = vmatmul.mubr.bf16.gmra.mrb[0].mxu0 %v4115
    %v4532 = vpop.f32.mrb[0].mxu0
    %v4533 = vadd.f32 0.0, %v4532
    %v4534 = vpop.f32.mrb[0].mxu0
    %v4535 = vadd.f32 0.0, %v4534
    %v4536 = vpop.f32.mrb[0].mxu0
    %v4537 = vpop.f32.mrb[0].mxu0
    %4538 = vdwg.mxu0
    %4539 = vmatprep.subr.bf16.mxu0 %v1467
    %4540 = vmatpush1.bf16.msra.mxu0 %v1466
    %4541 = vmatprep.subr.bf16.mxu0 %v1475
    %4542 = vmatpush1.bf16.msra.mxu0 %v1474
    %4543 = vmatprep.subr.bf16.mxu0 %v1483
    %4544 = vmatpush1.bf16.msra.mxu0 %v1482
    %4545 = vmatprep.subr.bf16.mxu0 %v1491
    %4546 = vmatpush1.bf16.msra.mxu0 %v1490
    %4547 = vmatprep.subr.bf16.mxu0 %v1499
    %4548 = vmatpush1.bf16.msra.mxu0 %v1498
    %4549 = vmatprep.subr.bf16.mxu0 %v1507
    %4550 = vmatpush1.bf16.msra.mxu0 %v1506
    %4551 = vmatprep.subr.bf16.mxu0 %v1515
    %4552 = vmatpush1.bf16.msra.mxu0 %v1514
    %4553 = vmatprep.subr.bf16.mxu0 %v1523
    %4554 = vmatpush1.bf16.msra.mxu0 %v1522
    %4555 = vmatprep.subr.bf16.mxu0 %v1531
    %4556 = vmatpush1.bf16.msra.mxu0 %v1530
    %4557 = vmatprep.subr.bf16.mxu0 %v1539
    %4558 = vmatpush1.bf16.msra.mxu0 %v1538
    %4559 = vmatprep.subr.bf16.mxu0 %v1547
    %4560 = vmatpush1.bf16.msra.mxu0 %v1546
    %4561 = vmatprep.subr.bf16.mxu0 %v1555
    %4562 = vmatpush1.bf16.msra.mxu0 %v1554
    %4563 = vmatprep.subr.bf16.mxu0 %v1563
    %4564 = vmatpush1.bf16.msra.mxu0 %v1562
    %4565 = vmatprep.subr.bf16.mxu0 %v1571
    %4566 = vmatpush1.bf16.msra.mxu0 %v1570
    %4567 = vmatprep.subr.bf16.mxu0 %v1579
    %4568 = vmatpush1.bf16.msra.mxu0 %v1578
    %4569 = vmatprep.subr.bf16.mxu0 %v1587
    %4570 = vmatpush1.bf16.msra.mxu0 %v1586
    %4571 = vmatprep.mubr.bf16.mxu0 %v4116
    %4572 = vmatmul.mubr.bf16.gmra.mrb[0].mxu0 %v4115
    %v4573 = vpop.f32.mrb[0].mxu0
    %v4574 = vadd.f32 0.0, %v4573
    %v4575 = vpop.f32.mrb[0].mxu0
    %v4576 = vadd.f32 0.0, %v4575
    %v4577 = vpop.f32.mrb[0].mxu0
    %v4578 = vpop.f32.mrb[0].mxu0
    %4579 = vdwg.mxu0
    %4580 = vmatprep.subr.bf16.mxu0 %v1469
    %4581 = vmatpush1.bf16.msra.mxu0 %v1468
    %4582 = vmatprep.subr.bf16.mxu0 %v1477
    %4583 = vmatpush1.bf16.msra.mxu0 %v1476
    %4584 = vmatprep.subr.bf16.mxu0 %v1485
    %4585 = vmatpush1.bf16.msra.mxu0 %v1484
    %4586 = vmatprep.subr.bf16.mxu0 %v1493
    %4587 = vmatpush1.bf16.msra.mxu0 %v1492
    %4588 = vmatprep.subr.bf16.mxu0 %v1501
    %4589 = vmatpush1.bf16.msra.mxu0 %v1500
    %4590 = vmatprep.subr.bf16.mxu0 %v1509
    %4591 = vmatpush1.bf16.msra.mxu0 %v1508
    %4592 = vmatprep.subr.bf16.mxu0 %v1517
    %4593 = vmatpush1.bf16.msra.mxu0 %v1516
    %4594 = vmatprep.subr.bf16.mxu0 %v1525
    %4595 = vmatpush1.bf16.msra.mxu0 %v1524
    %4596 = vmatprep.subr.bf16.mxu0 %v1533
    %4597 = vmatpush1.bf16.msra.mxu0 %v1532
    %4598 = vmatprep.subr.bf16.mxu0 %v1541
    %4599 = vmatpush1.bf16.msra.mxu0 %v1540
    %4600 = vmatprep.subr.bf16.mxu0 %v1549
    %4601 = vmatpush1.bf16.msra.mxu0 %v1548
    %4602 = vmatprep.subr.bf16.mxu0 %v1557
    %4603 = vmatpush1.bf16.msra.mxu0 %v1556
    %4604 = vmatprep.subr.bf16.mxu0 %v1565
    %4605 = vmatpush1.bf16.msra.mxu0 %v1564
    %4606 = vmatprep.subr.bf16.mxu0 %v1573
    %4607 = vmatpush1.bf16.msra.mxu0 %v1572
    %4608 = vmatprep.subr.bf16.mxu0 %v1581
    %4609 = vmatpush1.bf16.msra.mxu0 %v1580
    %4610 = vmatprep.subr.bf16.mxu0 %v1589
    %4611 = vmatpush1.bf16.msra.mxu0 %v1588
    %4612 = vmatprep.mubr.bf16.mxu0 %v4116
    %4613 = vmatmul.mubr.bf16.gmra.mrb[0].mxu0 %v4115
    %v4614 = vpop.f32.mrb[0].mxu0
    %v4615 = vadd.f32 0.0, %v4614
    %v4616 = vpop.f32.mrb[0].mxu0
    %v4617 = vadd.f32 0.0, %v4616
    %v4618 = vpop.f32.mrb[0].mxu0
    %v4619 = vpop.f32.mrb[0].mxu0
    %4620 = vdwg.mxu0
    %4621 = vmatprep.subr.bf16.mxu0 %v1471
    %4622 = vmatpush1.bf16.msra.mxu0 %v1470
    %4623 = vmatprep.subr.bf16.mxu0 %v1479
    %4624 = vmatpush1.bf16.msra.mxu0 %v1478
    %4625 = vmatprep.subr.bf16.mxu0 %v1487
    %4626 = vmatpush1.bf16.msra.mxu0 %v1486
    %4627 = vmatprep.subr.bf16.mxu0 %v1495
    %4628 = vmatpush1.bf16.msra.mxu0 %v1494
    %4629 = vmatprep.subr.bf16.mxu0 %v1503
    %4630 = vmatpush1.bf16.msra.mxu0 %v1502
    %4631 = vmatprep.subr.bf16.mxu0 %v1511
    %4632 = vmatpush1.bf16.msra.mxu0 %v1510
    %4633 = vmatprep.subr.bf16.mxu0 %v1519
    %4634 = vmatpush1.bf16.msra.mxu0 %v1518
    %4635 = vmatprep.subr.bf16.mxu0 %v1527
    %4636 = vmatpush1.bf16.msra.mxu0 %v1526
    %4637 = vmatprep.subr.bf16.mxu0 %v1535
    %4638 = vmatpush1.bf16.msra.mxu0 %v1534
    %4639 = vmatprep.subr.bf16.mxu0 %v1543
    %4640 = vmatpush1.bf16.msra.mxu0 %v1542
    %4641 = vmatprep.subr.bf16.mxu0 %v1551
    %4642 = vmatpush1.bf16.msra.mxu0 %v1550
    %4643 = vmatprep.subr.bf16.mxu0 %v1559
    %4644 = vmatpush1.bf16.msra.mxu0 %v1558
    %4645 = vmatprep.subr.bf16.mxu0 %v1567
    %4646 = vmatpush1.bf16.msra.mxu0 %v1566
    %4647 = vmatprep.subr.bf16.mxu0 %v1575
    %4648 = vmatpush1.bf16.msra.mxu0 %v1574
    %4649 = vmatprep.subr.bf16.mxu0 %v1583
    %4650 = vmatpush1.bf16.msra.mxu0 %v1582
    %4651 = vmatprep.subr.bf16.mxu0 %v1591
    %4652 = vmatpush1.bf16.msra.mxu0 %v1590
    %4653 = vmatprep.mubr.bf16.mxu0 %v4116
    %4654 = vmatmul.mubr.bf16.gmra.mrb[0].mxu0 %v4115
    %v4655 = vpop.f32.mrb[0].mxu0
    %v4656 = vadd.f32 0.0, %v4655
    %v4657 = vpop.f32.mrb[0].mxu0
    %v4658 = vadd.f32 0.0, %v4657
    %v4659 = vpop.f32.mrb[0].mxu0
    %v4660 = vpop.f32.mrb[0].mxu0
    %4661 = vdwg.mxu0
    %v4662 = vadd.f32 %v4490, %v4533
    %v4663 = vadd.f32 %v4491, %v4535
    %v4664 = vadd.f32 %v4492, %v4574
    %v4665 = vadd.f32 %v4493, %v4576
    %v4666 = vadd.f32 %v4494, %v4615
    %v4667 = vadd.f32 %v4495, %v4617
    %v4668 = vadd.f32 %v4496, %v4656
    %v4669 = vadd.f32 %v4497, %v4658
    %v4670 = vsub.f32 0.0, %v4662
    %v4671 = vsub.f32 0.0, %v4663
    %v4672 = vsub.f32 0.0, %v4664
    %v4673 = vsub.f32 0.0, %v4665
    %v4674 = vmul.f32 %v4670, 1.442695
    %v4675 = vpow.pop %v4674
    %v4676 = vmul.f32 %v4671, 1.442695
    %v4677 = vpow.pop %v4676
    %v4678 = vmul.f32 %v4672, 1.442695
    %v4679 = vpow.pop %v4678
    %v4680 = vmul.f32 %v4673, 1.442695
    %v4681 = vpow.pop %v4680
    %v4682 = vadd.f32 %v4675, 1.0
    %v4683 = vadd.f32 %v4677, 1.0
    %v4684 = vadd.f32 %v4679, 1.0
    %v4685 = vadd.f32 %v4681, 1.0
    %v4686 = vrcp.pop %v4682
    %v4687 = vrcp.pop %v4683
    %v4688 = vrcp.pop %v4684
    %v4689 = vrcp.pop %v4685
    %v4690 = vtanh.pop %v4666
    %v4691 = vtanh.pop %v4667
    %v4692 = vsub.f32 0.0, %v4668
    %v4693 = vsub.f32 0.0, %v4669
    %v4694 = vmul.f32 %v4692, 1.442695
    %v4695 = vpow.pop %v4694
    %v4696 = vmul.f32 %v4693, 1.442695
    %v4697 = vpow.pop %v4696
    %v4698 = vadd.f32 %v4695, 1.0
    %v4699 = vadd.f32 %v4697, 1.0
    %v4700 = vrcp.pop %v4698
    %v4701 = vrcp.pop %v4699
    %v4702 = vmul.f32 %v4688, %v4109
    %v4703 = vmul.f32 %v4689, %v4110
    %v4704 = vmul.f32 %v4686, %v4690
    %v4705 = vmul.f32 %v4687, %v4691
    %v4706 = vadd.f32 %v4702, %v4704
    %v4707 = vadd.f32 %v4703, %v4705
    %v4708 = vtanh.pop %v4706
    %v4709 = vtanh.pop %v4707
    %v4710 = vmul.f32 %v4700, %v4708
    %v4711 = vmul.f32 %v4701, %v4709
    %v4712 = vpack.c.bf16 %v4710, %v4710
    %v4713 = vpack.c.bf16 %v4711, %v4711
    %v4714 = vpack.c.bf16 %v4487, %v4487
    %v4715 = vpack.c.bf16 %v4488, %v4488
    %4716 = vmatprep.subr.bf16.mxu0 %v3011
    %4717 = vmatpush1.bf16.msra.mxu0 %v3010
    %4718 = vmatprep.subr.bf16.mxu0 %v3019
    %4719 = vmatpush1.bf16.msra.mxu0 %v3018
    %4720 = vmatprep.subr.bf16.mxu0 %v3027
    %4721 = vmatpush1.bf16.msra.mxu0 %v3026
    %4722 = vmatprep.subr.bf16.mxu0 %v3035
    %4723 = vmatpush1.bf16.msra.mxu0 %v3034
    %4724 = vmatprep.subr.bf16.mxu0 %v3043
    %4725 = vmatpush1.bf16.msra.mxu0 %v3042
    %4726 = vmatprep.subr.bf16.mxu0 %v3051
    %4727 = vmatpush1.bf16.msra.mxu0 %v3050
    %4728 = vmatprep.subr.bf16.mxu0 %v3059
    %4729 = vmatpush1.bf16.msra.mxu0 %v3058
    %4730 = vmatprep.subr.bf16.mxu0 %v3067
    %4731 = vmatpush1.bf16.msra.mxu0 %v3066
    %4732 = vmatprep.subr.bf16.mxu0 %v3075
    %4733 = vmatpush1.bf16.msra.mxu0 %v3074
    %4734 = vmatprep.subr.bf16.mxu0 %v3083
    %4735 = vmatpush1.bf16.msra.mxu0 %v3082
    %4736 = vmatprep.subr.bf16.mxu0 %v3091
    %4737 = vmatpush1.bf16.msra.mxu0 %v3090
    %4738 = vmatprep.subr.bf16.mxu0 %v3099
    %4739 = vmatpush1.bf16.msra.mxu0 %v3098
    %4740 = vmatprep.subr.bf16.mxu0 %v3107
    %4741 = vmatpush1.bf16.msra.mxu0 %v3106
    %4742 = vmatprep.subr.bf16.mxu0 %v3115
    %4743 = vmatpush1.bf16.msra.mxu0 %v3114
    %4744 = vmatprep.subr.bf16.mxu0 %v3123
    %4745 = vmatpush1.bf16.msra.mxu0 %v3122
    %4746 = vmatprep.subr.bf16.mxu0 %v3131
    %4747 = vmatpush1.bf16.msra.mxu0 %v3130
    %4748 = vmatprep.mubr.bf16.mxu0 %v4713
    %4749 = vmatmul.mubr.bf16.gmra.mrb[0].mxu0 %v4712
    %v4750 = vpop.f32.mrb[0].mxu0
    %v4751 = vadd.f32 %v2205, %v4750
    %v4752 = vpop.f32.mrb[0].mxu0
    %v4753 = vadd.f32 %v2209, %v4752
    %v4754 = vpop.f32.mrb[0].mxu0
    %v4755 = vpop.f32.mrb[0].mxu0
    %4756 = vdwg.mxu0
    %4757 = vmatprep.subr.bf16.mxu0 %v3139
    %4758 = vmatpush1.bf16.msra.mxu0 %v3138
    %4759 = vmatprep.subr.bf16.mxu0 %v3147
    %4760 = vmatpush1.bf16.msra.mxu0 %v3146
    %4761 = vmatprep.subr.bf16.mxu0 %v3155
    %4762 = vmatpush1.bf16.msra.mxu0 %v3154
    %4763 = vmatprep.subr.bf16.mxu0 %v3163
    %4764 = vmatpush1.bf16.msra.mxu0 %v3162
    %4765 = vmatprep.subr.bf16.mxu0 %v3171
    %4766 = vmatpush1.bf16.msra.mxu0 %v3170
    %4767 = vmatprep.subr.bf16.mxu0 %v3179
    %4768 = vmatpush1.bf16.msra.mxu0 %v3178
    %4769 = vmatprep.subr.bf16.mxu0 %v3187
    %4770 = vmatpush1.bf16.msra.mxu0 %v3186
    %4771 = vmatprep.subr.bf16.mxu0 %v3195
    %4772 = vmatpush1.bf16.msra.mxu0 %v3194
    %4773 = vmatprep.subr.bf16.mxu0 %v3203
    %4774 = vmatpush1.bf16.msra.mxu0 %v3202
    %4775 = vmatprep.subr.bf16.mxu0 %v3211
    %4776 = vmatpush1.bf16.msra.mxu0 %v3210
    %4777 = vmatprep.subr.bf16.mxu0 %v3219
    %4778 = vmatpush1.bf16.msra.mxu0 %v3218
    %4779 = vmatprep.subr.bf16.mxu0 %v3227
    %4780 = vmatpush1.bf16.msra.mxu0 %v3226
    %4781 = vmatprep.subr.bf16.mxu0 %v3235
    %4782 = vmatpush1.bf16.msra.mxu0 %v3234
    %4783 = vmatprep.subr.bf16.mxu0 %v3243
    %4784 = vmatpush1.bf16.msra.mxu0 %v3242
    %4785 = vmatprep.subr.bf16.mxu0 %v3251
    %4786 = vmatpush1.bf16.msra.mxu0 %v3250
    %4787 = vmatprep.subr.bf16.mxu0 %v3259
    %4788 = vmatpush1.bf16.msra.mxu0 %v3258
    %4789 = vmatprep.mubr.bf16.mxu0 %v4715
    %4790 = vmatmul.mubr.bf16.gmra.mrb[0].mxu0 %v4714
    %v4791 = vpop.f32.mrb[0].mxu0
    %v4792 = vadd.f32 %v4751, %v4791
    %v4793 = vpop.f32.mrb[0].mxu0
    %v4794 = vadd.f32 %v4753, %v4793
    %v4795 = vpop.f32.mrb[0].mxu0
    %v4796 = vpop.f32.mrb[0].mxu0
    %4797 = vdwg.mxu0
    %4798 = vmatprep.subr.bf16.mxu0 %v3013
    %4799 = vmatpush1.bf16.msra.mxu0 %v3012
    %4800 = vmatprep.subr.bf16.mxu0 %v3021
    %4801 = vmatpush1.bf16.msra.mxu0 %v3020
    %4802 = vmatprep.subr.bf16.mxu0 %v3029
    %4803 = vmatpush1.bf16.msra.mxu0 %v3028
    %4804 = vmatprep.subr.bf16.mxu0 %v3037
    %4805 = vmatpush1.bf16.msra.mxu0 %v3036
    %4806 = vmatprep.subr.bf16.mxu0 %v3045
    %4807 = vmatpush1.bf16.msra.mxu0 %v3044
    %4808 = vmatprep.subr.bf16.mxu0 %v3053
    %4809 = vmatpush1.bf16.msra.mxu0 %v3052
    %4810 = vmatprep.subr.bf16.mxu0 %v3061
    %4811 = vmatpush1.bf16.msra.mxu0 %v3060
    %4812 = vmatprep.subr.bf16.mxu0 %v3069
    %4813 = vmatpush1.bf16.msra.mxu0 %v3068
    %4814 = vmatprep.subr.bf16.mxu0 %v3077
    %4815 = vmatpush1.bf16.msra.mxu0 %v3076
    %4816 = vmatprep.subr.bf16.mxu0 %v3085
    %4817 = vmatpush1.bf16.msra.mxu0 %v3084
    %4818 = vmatprep.subr.bf16.mxu0 %v3093
    %4819 = vmatpush1.bf16.msra.mxu0 %v3092
    %4820 = vmatprep.subr.bf16.mxu0 %v3101
    %4821 = vmatpush1.bf16.msra.mxu0 %v3100
    %4822 = vmatprep.subr.bf16.mxu0 %v3109
    %4823 = vmatpush1.bf16.msra.mxu0 %v3108
    %4824 = vmatprep.subr.bf16.mxu0 %v3117
    %4825 = vmatpush1.bf16.msra.mxu0 %v3116
    %4826 = vmatprep.subr.bf16.mxu0 %v3125
    %4827 = vmatpush1.bf16.msra.mxu0 %v3124
    %4828 = vmatprep.subr.bf16.mxu0 %v3133
    %4829 = vmatpush1.bf16.msra.mxu0 %v3132
    %4830 = vmatprep.mubr.bf16.mxu0 %v4713
    %4831 = vmatmul.mubr.bf16.gmra.mrb[0].mxu0 %v4712
    %v4832 = vpop.f32.mrb[0].mxu0
    %v4833 = vadd.f32 %v2213, %v4832
    %v4834 = vpop.f32.mrb[0].mxu0
    %v4835 = vadd.f32 %v2217, %v4834
    %v4836 = vpop.f32.mrb[0].mxu0
    %v4837 = vpop.f32.mrb[0].mxu0
    %4838 = vdwg.mxu0
    %4839 = vmatprep.subr.bf16.mxu0 %v3141
    %4840 = vmatpush1.bf16.msra.mxu0 %v3140
    %4841 = vmatprep.subr.bf16.mxu0 %v3149
    %4842 = vmatpush1.bf16.msra.mxu0 %v3148
    %4843 = vmatprep.subr.bf16.mxu0 %v3157
    %4844 = vmatpush1.bf16.msra.mxu0 %v3156
    %4845 = vmatprep.subr.bf16.mxu0 %v3165
    %4846 = vmatpush1.bf16.msra.mxu0 %v3164
    %4847 = vmatprep.subr.bf16.mxu0 %v3173
    %4848 = vmatpush1.bf16.msra.mxu0 %v3172
    %4849 = vmatprep.subr.bf16.mxu0 %v3181
    %4850 = vmatpush1.bf16.msra.mxu0 %v3180
    %4851 = vmatprep.subr.bf16.mxu0 %v3189
    %4852 = vmatpush1.bf16.msra.mxu0 %v3188
    %4853 = vmatprep.subr.bf16.mxu0 %v3197
    %4854 = vmatpush1.bf16.msra.mxu0 %v3196
    %4855 = vmatprep.subr.bf16.mxu0 %v3205
    %4856 = vmatpush1.bf16.msra.mxu0 %v3204
    %4857 = vmatprep.subr.bf16.mxu0 %v3213
    %4858 = vmatpush1.bf16.msra.mxu0 %v3212
    %4859 = vmatprep.subr.bf16.mxu0 %v3221
    %4860 = vmatpush1.bf16.msra.mxu0 %v3220
    %4861 = vmatprep.subr.bf16.mxu0 %v3229
    %4862 = vmatpush1.bf16.msra.mxu0 %v3228
    %4863 = vmatprep.subr.bf16.mxu0 %v3237
    %4864 = vmatpush1.bf16.msra.mxu0 %v3236
    %4865 = vmatprep.subr.bf16.mxu0 %v3245
    %4866 = vmatpush1.bf16.msra.mxu0 %v3244
    %4867 = vmatprep.subr.bf16.mxu0 %v3253
    %4868 = vmatpush1.bf16.msra.mxu0 %v3252
    %4869 = vmatprep.subr.bf16.mxu0 %v3261
    %4870 = vmatpush1.bf16.msra.mxu0 %v3260
    %4871 = vmatprep.mubr.bf16.mxu0 %v4715
    %4872 = vmatmul.mubr.bf16.gmra.mrb[0].mxu0 %v4714
    %v4873 = vpop.f32.mrb[0].mxu0
    %v4874 = vadd.f32 %v4833, %v4873
    %v4875 = vpop.f32.mrb[0].mxu0
    %v4876 = vadd.f32 %v4835, %v4875
    %v4877 = vpop.f32.mrb[0].mxu0
    %v4878 = vpop.f32.mrb[0].mxu0
    %4879 = vdwg.mxu0
    %4880 = vmatprep.subr.bf16.mxu0 %v3015
    %4881 = vmatpush1.bf16.msra.mxu0 %v3014
    %4882 = vmatprep.subr.bf16.mxu0 %v3023
    %4883 = vmatpush1.bf16.msra.mxu0 %v3022
    %4884 = vmatprep.subr.bf16.mxu0 %v3031
    %4885 = vmatpush1.bf16.msra.mxu0 %v3030
    %4886 = vmatprep.subr.bf16.mxu0 %v3039
    %4887 = vmatpush1.bf16.msra.mxu0 %v3038
    %4888 = vmatprep.subr.bf16.mxu0 %v3047
    %4889 = vmatpush1.bf16.msra.mxu0 %v3046
    %4890 = vmatprep.subr.bf16.mxu0 %v3055
    %4891 = vmatpush1.bf16.msra.mxu0 %v3054
    %4892 = vmatprep.subr.bf16.mxu0 %v3063
    %4893 = vmatpush1.bf16.msra.mxu0 %v3062
    %4894 = vmatprep.subr.bf16.mxu0 %v3071
    %4895 = vmatpush1.bf16.msra.mxu0 %v3070
    %4896 = vmatprep.subr.bf16.mxu0 %v3079
    %4897 = vmatpush1.bf16.msra.mxu0 %v3078
    %4898 = vmatprep.subr.bf16.mxu0 %v3087
    %4899 = vmatpush1.bf16.msra.mxu0 %v3086
    %4900 = vmatprep.subr.bf16.mxu0 %v3095
    %4901 = vmatpush1.bf16.msra.mxu0 %v3094
    %4902 = vmatprep.subr.bf16.mxu0 %v3103
    %4903 = vmatpush1.bf16.msra.mxu0 %v3102
    %4904 = vmatprep.subr.bf16.mxu0 %v3111
    %4905 = vmatpush1.bf16.msra.mxu0 %v3110
    %4906 = vmatprep.subr.bf16.mxu0 %v3119
    %4907 = vmatpush1.bf16.msra.mxu0 %v3118
    %4908 = vmatprep.subr.bf16.mxu0 %v3127
    %4909 = vmatpush1.bf16.msra.mxu0 %v3126
    %4910 = vmatprep.subr.bf16.mxu0 %v3135
    %4911 = vmatpush1.bf16.msra.mxu0 %v3134
    %4912 = vmatprep.mubr.bf16.mxu0 %v4713
    %4913 = vmatmul.mubr.bf16.gmra.mrb[0].mxu0 %v4712
    %v4914 = vpop.f32.mrb[0].mxu0
    %v4915 = vadd.f32 %v2221, %v4914
    %v4916 = vpop.f32.mrb[0].mxu0
    %v4917 = vadd.f32 %v2225, %v4916
    %v4918 = vpop.f32.mrb[0].mxu0
    %v4919 = vpop.f32.mrb[0].mxu0
    %4920 = vdwg.mxu0
    %4921 = vmatprep.subr.bf16.mxu0 %v3143
    %4922 = vmatpush1.bf16.msra.mxu0 %v3142
    %4923 = vmatprep.subr.bf16.mxu0 %v3151
    %4924 = vmatpush1.bf16.msra.mxu0 %v3150
    %4925 = vmatprep.subr.bf16.mxu0 %v3159
    %4926 = vmatpush1.bf16.msra.mxu0 %v3158
    %4927 = vmatprep.subr.bf16.mxu0 %v3167
    %4928 = vmatpush1.bf16.msra.mxu0 %v3166
    %4929 = vmatprep.subr.bf16.mxu0 %v3175
    %4930 = vmatpush1.bf16.msra.mxu0 %v3174
    %4931 = vmatprep.subr.bf16.mxu0 %v3183
    %4932 = vmatpush1.bf16.msra.mxu0 %v3182
    %4933 = vmatprep.subr.bf16.mxu0 %v3191
    %4934 = vmatpush1.bf16.msra.mxu0 %v3190
    %4935 = vmatprep.subr.bf16.mxu0 %v3199
    %4936 = vmatpush1.bf16.msra.mxu0 %v3198
    %4937 = vmatprep.subr.bf16.mxu0 %v3207
    %4938 = vmatpush1.bf16.msra.mxu0 %v3206
    %4939 = vmatprep.subr.bf16.mxu0 %v3215
    %4940 = vmatpush1.bf16.msra.mxu0 %v3214
    %4941 = vmatprep.subr.bf16.mxu0 %v3223
    %4942 = vmatpush1.bf16.msra.mxu0 %v3222
    %4943 = vmatprep.subr.bf16.mxu0 %v3231
    %4944 = vmatpush1.bf16.msra.mxu0 %v3230
    %4945 = vmatprep.subr.bf16.mxu0 %v3239
    %4946 = vmatpush1.bf16.msra.mxu0 %v3238
    %4947 = vmatprep.subr.bf16.mxu0 %v3247
    %4948 = vmatpush1.bf16.msra.mxu0 %v3246
    %4949 = vmatprep.subr.bf16.mxu0 %v3255
    %4950 = vmatpush1.bf16.msra.mxu0 %v3254
    %4951 = vmatprep.subr.bf16.mxu0 %v3263
    %4952 = vmatpush1.bf16.msra.mxu0 %v3262
    %4953 = vmatprep.mubr.bf16.mxu0 %v4715
    %4954 = vmatmul.mubr.bf16.gmra.mrb[0].mxu0 %v4714
    %v4955 = vpop.f32.mrb[0].mxu0
    %v4956 = vadd.f32 %v4915, %v4955
    %v4957 = vpop.f32.mrb[0].mxu0
    %v4958 = vadd.f32 %v4917, %v4957
    %v4959 = vpop.f32.mrb[0].mxu0
    %v4960 = vpop.f32.mrb[0].mxu0
    %4961 = vdwg.mxu0
    %4962 = vmatprep.subr.bf16.mxu0 %v3017
    %4963 = vmatpush1.bf16.msra.mxu0 %v3016
    %4964 = vmatprep.subr.bf16.mxu0 %v3025
    %4965 = vmatpush1.bf16.msra.mxu0 %v3024
    %4966 = vmatprep.subr.bf16.mxu0 %v3033
    %4967 = vmatpush1.bf16.msra.mxu0 %v3032
    %4968 = vmatprep.subr.bf16.mxu0 %v3041
    %4969 = vmatpush1.bf16.msra.mxu0 %v3040
    %4970 = vmatprep.subr.bf16.mxu0 %v3049
    %4971 = vmatpush1.bf16.msra.mxu0 %v3048
    %4972 = vmatprep.subr.bf16.mxu0 %v3057
    %4973 = vmatpush1.bf16.msra.mxu0 %v3056
    %4974 = vmatprep.subr.bf16.mxu0 %v3065
    %4975 = vmatpush1.bf16.msra.mxu0 %v3064
    %4976 = vmatprep.subr.bf16.mxu0 %v3073
    %4977 = vmatpush1.bf16.msra.mxu0 %v3072
    %4978 = vmatprep.subr.bf16.mxu0 %v3081
    %4979 = vmatpush1.bf16.msra.mxu0 %v3080
    %4980 = vmatprep.subr.bf16.mxu0 %v3089
    %4981 = vmatpush1.bf16.msra.mxu0 %v3088
    %4982 = vmatprep.subr.bf16.mxu0 %v3097
    %4983 = vmatpush1.bf16.msra.mxu0 %v3096
    %4984 = vmatprep.subr.bf16.mxu0 %v3105
    %4985 = vmatpush1.bf16.msra.mxu0 %v3104
    %4986 = vmatprep.subr.bf16.mxu0 %v3113
    %4987 = vmatpush1.bf16.msra.mxu0 %v3112
    %4988 = vmatprep.subr.bf16.mxu0 %v3121
    %4989 = vmatpush1.bf16.msra.mxu0 %v3120
    %4990 = vmatprep.subr.bf16.mxu0 %v3129
    %4991 = vmatpush1.bf16.msra.mxu0 %v3128
    %4992 = vmatprep.subr.bf16.mxu0 %v3137
    %4993 = vmatpush1.bf16.msra.mxu0 %v3136
    %4994 = vmatprep.mubr.bf16.mxu0 %v4713
    %4995 = vmatmul.mubr.bf16.gmra.mrb[0].mxu0 %v4712
    %v4996 = vpop.f32.mrb[0].mxu0
    %v4997 = vadd.f32 %v2229, %v4996
    %v4998 = vpop.f32.mrb[0].mxu0
    %v4999 = vadd.f32 %v2233, %v4998
    %v5000 = vpop.f32.mrb[0].mxu0
    %v5001 = vpop.f32.mrb[0].mxu0
    %5002 = vdwg.mxu0
    %5003 = vmatprep.subr.bf16.mxu0 %v3145
    %5004 = vmatpush1.bf16.msra.mxu0 %v3144
    %5005 = vmatprep.subr.bf16.mxu0 %v3153
    %5006 = vmatpush1.bf16.msra.mxu0 %v3152
    %5007 = vmatprep.subr.bf16.mxu0 %v3161
    %5008 = vmatpush1.bf16.msra.mxu0 %v3160
    %5009 = vmatprep.subr.bf16.mxu0 %v3169
    %5010 = vmatpush1.bf16.msra.mxu0 %v3168
    %5011 = vmatprep.subr.bf16.mxu0 %v3177
    %5012 = vmatpush1.bf16.msra.mxu0 %v3176
    %5013 = vmatprep.subr.bf16.mxu0 %v3185
    %5014 = vmatpush1.bf16.msra.mxu0 %v3184
    %5015 = vmatprep.subr.bf16.mxu0 %v3193
    %5016 = vmatpush1.bf16.msra.mxu0 %v3192
    %5017 = vmatprep.subr.bf16.mxu0 %v3201
    %5018 = vmatpush1.bf16.msra.mxu0 %v3200
    %5019 = vmatprep.subr.bf16.mxu0 %v3209
    %5020 = vmatpush1.bf16.msra.mxu0 %v3208
    %5021 = vmatprep.subr.bf16.mxu0 %v3217
    %5022 = vmatpush1.bf16.msra.mxu0 %v3216
    %5023 = vmatprep.subr.bf16.mxu0 %v3225
    %5024 = vmatpush1.bf16.msra.mxu0 %v3224
    %5025 = vmatprep.subr.bf16.mxu0 %v3233
    %5026 = vmatpush1.bf16.msra.mxu0 %v3232
    %5027 = vmatprep.subr.bf16.mxu0 %v3241
    %5028 = vmatpush1.bf16.msra.mxu0 %v3240
    %5029 = vmatprep.subr.bf16.mxu0 %v3249
    %5030 = vmatpush1.bf16.msra.mxu0 %v3248
    %5031 = vmatprep.subr.bf16.mxu0 %v3257
    %5032 = vmatpush1.bf16.msra.mxu0 %v3256
    %5033 = vmatprep.subr.bf16.mxu0 %v3265
    %5034 = vmatpush1.bf16.msra.mxu0 %v3264
    %5035 = vmatprep.mubr.bf16.mxu0 %v4715
    %5036 = vmatmul.mubr.bf16.gmra.mrb[0].mxu0 %v4714
    %v5037 = vpop.f32.mrb[0].mxu0
    %v5038 = vadd.f32 %v4997, %v5037
    %v5039 = vpop.f32.mrb[0].mxu0
    %v5040 = vadd.f32 %v4999, %v5039
    %v5041 = vpop.f32.mrb[0].mxu0
    %v5042 = vpop.f32.mrb[0].mxu0
    %5043 = vdwg.mxu0
    %v5044 = vsub.f32 0.0, %v4792
    %v5045 = vsub.f32 0.0, %v4794
    %v5046 = vsub.f32 0.0, %v4874
    %v5047 = vsub.f32 0.0, %v4876
    %v5048 = vmul.f32 %v5044, 1.442695
    %v5049 = vpow.pop %v5048
    %v5050 = vmul.f32 %v5045, 1.442695
    %v5051 = vpow.pop %v5050
    %v5052 = vmul.f32 %v5046, 1.442695
    %v5053 = vpow.pop %v5052
    %v5054 = vmul.f32 %v5047, 1.442695
    %v5055 = vpow.pop %v5054
    %v5056 = vadd.f32 %v5049, 1.0
    %v5057 = vadd.f32 %v5051, 1.0
    %v5058 = vadd.f32 %v5053, 1.0
    %v5059 = vadd.f32 %v5055, 1.0
    %v5060 = vrcp.pop %v5056
    %v5061 = vrcp.pop %v5057
    %v5062 = vrcp.pop %v5058
    %v5063 = vrcp.pop %v5059
    %v5064 = vtanh.pop %v4956
    %v5065 = vtanh.pop %v4958
    %v5066 = vsub.f32 0.0, %v5038
    %v5067 = vsub.f32 0.0, %v5040
    %v5068 = vmul.f32 %v5066, 1.442695
    %v5069 = vpow.pop %v5068
    %v5070 = vmul.f32 %v5067, 1.442695
    %v5071 = vpow.pop %v5070
    %v5072 = vadd.f32 %v5069, 1.0
    %v5073 = vadd.f32 %v5071, 1.0
    %v5074 = vrcp.pop %v5072
    %v5075 = vrcp.pop %v5073
    %v5076 = vmul.f32 %v5062, %v4483
    %v5077 = vmul.f32 %v5063, %v4484
    %v5078 = vmul.f32 %v5060, %v5064
    %v5079 = vmul.f32 %v5061, %v5065
    %v5080 = vadd.f32 %v5076, %v5078
    %v5081 = vadd.f32 %v5077, %v5079
    %v5082 = vtanh.pop %v5080
    %v5083 = vtanh.pop %v5081
    %v5084 = vmul.f32 %v5074, %v5082
    %v5085 = vmul.f32 %v5075, %v5083
    %s5086 = scalar_lea.vmem [#allocation2], 192
    %v5087 = vld [vmem:[%s5086] sm:$0xff]
    %v5088 = vld [vmem:[%s5086 + $0x8] sm:$0xff]
    %v5089 = vld [vmem:[%s5086 + $0x10] sm:$0xff]
    %v5090 = vld [vmem:[%s5086 + $0x18] sm:$0xff]
    %v5091 = vld [vmem:[%s5086 + $0x20] sm:$0xff]
    %v5092 = vld [vmem:[%s5086 + $0x28] sm:$0xff]
    %v5093 = vld [vmem:[%s5086 + $0x30] sm:$0xff]
    %v5094 = vld [vmem:[%s5086 + $0x38] sm:$0xff]
    %5095 = vmatprep.subr.bf16.mxu0 %v1465
    %5096 = vmatpush1.bf16.msra.mxu0 %v1464
    %5097 = vmatprep.subr.bf16.mxu0 %v1473
    %5098 = vmatpush1.bf16.msra.mxu0 %v1472
    %5099 = vmatprep.subr.bf16.mxu0 %v1481
    %5100 = vmatpush1.bf16.msra.mxu0 %v1480
    %5101 = vmatprep.subr.bf16.mxu0 %v1489
    %5102 = vmatpush1.bf16.msra.mxu0 %v1488
    %5103 = vmatprep.subr.bf16.mxu0 %v1497
    %5104 = vmatpush1.bf16.msra.mxu0 %v1496
    %5105 = vmatprep.subr.bf16.mxu0 %v1505
    %5106 = vmatpush1.bf16.msra.mxu0 %v1504
    %5107 = vmatprep.subr.bf16.mxu0 %v1513
    %5108 = vmatpush1.bf16.msra.mxu0 %v1512
    %5109 = vmatprep.subr.bf16.mxu0 %v1521
    %5110 = vmatpush1.bf16.msra.mxu0 %v1520
    %5111 = vmatprep.subr.bf16.mxu0 %v1529
    %5112 = vmatpush1.bf16.msra.mxu0 %v1528
    %5113 = vmatprep.subr.bf16.mxu0 %v1537
    %5114 = vmatpush1.bf16.msra.mxu0 %v1536
    %5115 = vmatprep.subr.bf16.mxu0 %v1545
    %5116 = vmatpush1.bf16.msra.mxu0 %v1544
    %5117 = vmatprep.subr.bf16.mxu0 %v1553
    %5118 = vmatpush1.bf16.msra.mxu0 %v1552
    %5119 = vmatprep.subr.bf16.mxu0 %v1561
    %5120 = vmatpush1.bf16.msra.mxu0 %v1560
    %5121 = vmatprep.subr.bf16.mxu0 %v1569
    %5122 = vmatpush1.bf16.msra.mxu0 %v1568
    %5123 = vmatprep.subr.bf16.mxu0 %v1577
    %5124 = vmatpush1.bf16.msra.mxu0 %v1576
    %5125 = vmatprep.subr.bf16.mxu0 %v1585
    %5126 = vmatpush1.bf16.msra.mxu0 %v1584
    %5127 = vmatprep.mubr.bf16.mxu0 %v4713
    %5128 = vmatmul.mubr.bf16.gmra.mrb[0].mxu0 %v4712
    %v5129 = vpop.f32.mrb[0].mxu0
    %v5130 = vadd.f32 0.0, %v5129
    %v5131 = vpop.f32.mrb[0].mxu0
    %v5132 = vadd.f32 0.0, %v5131
    %v5133 = vpop.f32.mrb[0].mxu0
    %v5134 = vpop.f32.mrb[0].mxu0
    %5135 = vdwg.mxu0
    %5136 = vmatprep.subr.bf16.mxu0 %v1467
    %5137 = vmatpush1.bf16.msra.mxu0 %v1466
    %5138 = vmatprep.subr.bf16.mxu0 %v1475
    %5139 = vmatpush1.bf16.msra.mxu0 %v1474
    %5140 = vmatprep.subr.bf16.mxu0 %v1483
    %5141 = vmatpush1.bf16.msra.mxu0 %v1482
    %5142 = vmatprep.subr.bf16.mxu0 %v1491
    %5143 = vmatpush1.bf16.msra.mxu0 %v1490
    %5144 = vmatprep.subr.bf16.mxu0 %v1499
    %5145 = vmatpush1.bf16.msra.mxu0 %v1498
    %5146 = vmatprep.subr.bf16.mxu0 %v1507
    %5147 = vmatpush1.bf16.msra.mxu0 %v1506
    %5148 = vmatprep.subr.bf16.mxu0 %v1515
    %5149 = vmatpush1.bf16.msra.mxu0 %v1514
    %5150 = vmatprep.subr.bf16.mxu0 %v1523
    %5151 = vmatpush1.bf16.msra.mxu0 %v1522
    %5152 = vmatprep.subr.bf16.mxu0 %v1531
    %5153 = vmatpush1.bf16.msra.mxu0 %v1530
    %5154 = vmatprep.subr.bf16.mxu0 %v1539
    %5155 = vmatpush1.bf16.msra.mxu0 %v1538
    %5156 = vmatprep.subr.bf16.mxu0 %v1547
    %5157 = vmatpush1.bf16.msra.mxu0 %v1546
    %5158 = vmatprep.subr.bf16.mxu0 %v1555
    %5159 = vmatpush1.bf16.msra.mxu0 %v1554
    %5160 = vmatprep.subr.bf16.mxu0 %v1563
    %5161 = vmatpush1.bf16.msra.mxu0 %v1562
    %5162 = vmatprep.subr.bf16.mxu0 %v1571
    %5163 = vmatpush1.bf16.msra.mxu0 %v1570
    %5164 = vmatprep.subr.bf16.mxu0 %v1579
    %5165 = vmatpush1.bf16.msra.mxu0 %v1578
    %5166 = vmatprep.subr.bf16.mxu0 %v1587
    %5167 = vmatpush1.bf16.msra.mxu0 %v1586
    %5168 = vmatprep.mubr.bf16.mxu0 %v4713
    %5169 = vmatmul.mubr.bf16.gmra.mrb[0].mxu0 %v4712
    %v5170 = vpop.f32.mrb[0].mxu0
    %v5171 = vadd.f32 0.0, %v5170
    %v5172 = vpop.f32.mrb[0].mxu0
    %v5173 = vadd.f32 0.0, %v5172
    %v5174 = vpop.f32.mrb[0].mxu0
    %v5175 = vpop.f32.mrb[0].mxu0
    %5176 = vdwg.mxu0
    %5177 = vmatprep.subr.bf16.mxu0 %v1469
    %5178 = vmatpush1.bf16.msra.mxu0 %v1468
    %5179 = vmatprep.subr.bf16.mxu0 %v1477
    %5180 = vmatpush1.bf16.msra.mxu0 %v1476
    %5181 = vmatprep.subr.bf16.mxu0 %v1485
    %5182 = vmatpush1.bf16.msra.mxu0 %v1484
    %5183 = vmatprep.subr.bf16.mxu0 %v1493
    %5184 = vmatpush1.bf16.msra.mxu0 %v1492
    %5185 = vmatprep.subr.bf16.mxu0 %v1501
    %5186 = vmatpush1.bf16.msra.mxu0 %v1500
    %5187 = vmatprep.subr.bf16.mxu0 %v1509
    %5188 = vmatpush1.bf16.msra.mxu0 %v1508
    %5189 = vmatprep.subr.bf16.mxu0 %v1517
    %5190 = vmatpush1.bf16.msra.mxu0 %v1516
    %5191 = vmatprep.subr.bf16.mxu0 %v1525
    %5192 = vmatpush1.bf16.msra.mxu0 %v1524
    %5193 = vmatprep.subr.bf16.mxu0 %v1533
    %5194 = vmatpush1.bf16.msra.mxu0 %v1532
    %5195 = vmatprep.subr.bf16.mxu0 %v1541
    %5196 = vmatpush1.bf16.msra.mxu0 %v1540
    %5197 = vmatprep.subr.bf16.mxu0 %v1549
    %5198 = vmatpush1.bf16.msra.mxu0 %v1548
    %5199 = vmatprep.subr.bf16.mxu0 %v1557
    %5200 = vmatpush1.bf16.msra.mxu0 %v1556
    %5201 = vmatprep.subr.bf16.mxu0 %v1565
    %5202 = vmatpush1.bf16.msra.mxu0 %v1564
    %5203 = vmatprep.subr.bf16.mxu0 %v1573
    %5204 = vmatpush1.bf16.msra.mxu0 %v1572
    %5205 = vmatprep.subr.bf16.mxu0 %v1581
    %5206 = vmatpush1.bf16.msra.mxu0 %v1580
    %5207 = vmatprep.subr.bf16.mxu0 %v1589
    %5208 = vmatpush1.bf16.msra.mxu0 %v1588
    %5209 = vmatprep.mubr.bf16.mxu0 %v4713
    %5210 = vmatmul.mubr.bf16.gmra.mrb[0].mxu0 %v4712
    %v5211 = vpop.f32.mrb[0].mxu0
    %v5212 = vadd.f32 0.0, %v5211
    %v5213 = vpop.f32.mrb[0].mxu0
    %v5214 = vadd.f32 0.0, %v5213
    %v5215 = vpop.f32.mrb[0].mxu0
    %v5216 = vpop.f32.mrb[0].mxu0
    %5217 = vdwg.mxu0
    %5218 = vmatprep.subr.bf16.mxu0 %v1471
    %5219 = vmatpush1.bf16.msra.mxu0 %v1470
    %5220 = vmatprep.subr.bf16.mxu0 %v1479
    %5221 = vmatpush1.bf16.msra.mxu0 %v1478
    %5222 = vmatprep.subr.bf16.mxu0 %v1487
    %5223 = vmatpush1.bf16.msra.mxu0 %v1486
    %5224 = vmatprep.subr.bf16.mxu0 %v1495
    %5225 = vmatpush1.bf16.msra.mxu0 %v1494
    %5226 = vmatprep.subr.bf16.mxu0 %v1503
    %5227 = vmatpush1.bf16.msra.mxu0 %v1502
    %5228 = vmatprep.subr.bf16.mxu0 %v1511
    %5229 = vmatpush1.bf16.msra.mxu0 %v1510
    %5230 = vmatprep.subr.bf16.mxu0 %v1519
    %5231 = vmatpush1.bf16.msra.mxu0 %v1518
    %5232 = vmatprep.subr.bf16.mxu0 %v1527
    %5233 = vmatpush1.bf16.msra.mxu0 %v1526
    %5234 = vmatprep.subr.bf16.mxu0 %v1535
    %5235 = vmatpush1.bf16.msra.mxu0 %v1534
    %5236 = vmatprep.subr.bf16.mxu0 %v1543
    %5237 = vmatpush1.bf16.msra.mxu0 %v1542
    %5238 = vmatprep.subr.bf16.mxu0 %v1551
    %5239 = vmatpush1.bf16.msra.mxu0 %v1550
    %5240 = vmatprep.subr.bf16.mxu0 %v1559
    %5241 = vmatpush1.bf16.msra.mxu0 %v1558
    %5242 = vmatprep.subr.bf16.mxu0 %v1567
    %5243 = vmatpush1.bf16.msra.mxu0 %v1566
    %5244 = vmatprep.subr.bf16.mxu0 %v1575
    %5245 = vmatpush1.bf16.msra.mxu0 %v1574
    %5246 = vmatprep.subr.bf16.mxu0 %v1583
    %5247 = vmatpush1.bf16.msra.mxu0 %v1582
    %5248 = vmatprep.subr.bf16.mxu0 %v1591
    %5249 = vmatpush1.bf16.msra.mxu0 %v1590
    %5250 = vmatprep.mubr.bf16.mxu0 %v4713
    %5251 = vmatmul.mubr.bf16.gmra.mrb[0].mxu0 %v4712
    %v5252 = vpop.f32.mrb[0].mxu0
    %v5253 = vadd.f32 0.0, %v5252
    %v5254 = vpop.f32.mrb[0].mxu0
    %v5255 = vadd.f32 0.0, %v5254
    %v5256 = vpop.f32.mrb[0].mxu0
    %v5257 = vpop.f32.mrb[0].mxu0
    %5258 = vdwg.mxu0
    %v5259 = vadd.f32 %v5087, %v5130
    %v5260 = vadd.f32 %v5088, %v5132
    %v5261 = vadd.f32 %v5089, %v5171
    %v5262 = vadd.f32 %v5090, %v5173
    %v5263 = vadd.f32 %v5091, %v5212
    %v5264 = vadd.f32 %v5092, %v5214
    %v5265 = vadd.f32 %v5093, %v5253
    %v5266 = vadd.f32 %v5094, %v5255
    %v5267 = vsub.f32 0.0, %v5259
    %v5268 = vsub.f32 0.0, %v5260
    %v5269 = vsub.f32 0.0, %v5261
    %v5270 = vsub.f32 0.0, %v5262
    %v5271 = vmul.f32 %v5267, 1.442695
    %v5272 = vpow.pop %v5271
    %v5273 = vmul.f32 %v5268, 1.442695
    %v5274 = vpow.pop %v5273
    %v5275 = vmul.f32 %v5269, 1.442695
    %v5276 = vpow.pop %v5275
    %v5277 = vmul.f32 %v5270, 1.442695
    %v5278 = vpow.pop %v5277
    %v5279 = vadd.f32 %v5272, 1.0
    %v5280 = vadd.f32 %v5274, 1.0
    %v5281 = vadd.f32 %v5276, 1.0
    %v5282 = vadd.f32 %v5278, 1.0
    %v5283 = vrcp.pop %v5279
    %v5284 = vrcp.pop %v5280
    %v5285 = vrcp.pop %v5281
    %v5286 = vrcp.pop %v5282
    %v5287 = vtanh.pop %v5263
    %v5288 = vtanh.pop %v5264
    %v5289 = vsub.f32 0.0, %v5265
    %v5290 = vsub.f32 0.0, %v5266
    %v5291 = vmul.f32 %v5289, 1.442695
    %v5292 = vpow.pop %v5291
    %v5293 = vmul.f32 %v5290, 1.442695
    %v5294 = vpow.pop %v5293
    %v5295 = vadd.f32 %v5292, 1.0
    %v5296 = vadd.f32 %v5294, 1.0
    %v5297 = vrcp.pop %v5295
    %v5298 = vrcp.pop %v5296
    %v5299 = vmul.f32 %v5285, %v4706
    %v5300 = vmul.f32 %v5286, %v4707
    %v5301 = vmul.f32 %v5283, %v5287
    %v5302 = vmul.f32 %v5284, %v5288
    %v5303 = vadd.f32 %v5299, %v5301
    %v5304 = vadd.f32 %v5300, %v5302
    %v5305 = vtanh.pop %v5303
    %v5306 = vtanh.pop %v5304
    %v5307 = vmul.f32 %v5297, %v5305
    %v5308 = vmul.f32 %v5298, %v5306
    %v5309 = vpack.c.bf16 %v5307, %v5307
    %v5310 = vpack.c.bf16 %v5308, %v5308
    %v5311 = vpack.c.bf16 %v5084, %v5084
    %v5312 = vpack.c.bf16 %v5085, %v5085
    %5313 = vmatprep.subr.bf16.mxu0 %v3011
    %5314 = vmatpush1.bf16.msra.mxu0 %v3010
    %5315 = vmatprep.subr.bf16.mxu0 %v3019
    %5316 = vmatpush1.bf16.msra.mxu0 %v3018
    %5317 = vmatprep.subr.bf16.mxu0 %v3027
    %5318 = vmatpush1.bf16.msra.mxu0 %v3026
    %5319 = vmatprep.subr.bf16.mxu0 %v3035
    %5320 = vmatpush1.bf16.msra.mxu0 %v3034
    %5321 = vmatprep.subr.bf16.mxu0 %v3043
    %5322 = vmatpush1.bf16.msra.mxu0 %v3042
    %5323 = vmatprep.subr.bf16.mxu0 %v3051
    %5324 = vmatpush1.bf16.msra.mxu0 %v3050
    %5325 = vmatprep.subr.bf16.mxu0 %v3059
    %5326 = vmatpush1.bf16.msra.mxu0 %v3058
    %5327 = vmatprep.subr.bf16.mxu0 %v3067
    %5328 = vmatpush1.bf16.msra.mxu0 %v3066
    %5329 = vmatprep.subr.bf16.mxu0 %v3075
    %5330 = vmatpush1.bf16.msra.mxu0 %v3074
    %5331 = vmatprep.subr.bf16.mxu0 %v3083
    %5332 = vmatpush1.bf16.msra.mxu0 %v3082
    %5333 = vmatprep.subr.bf16.mxu0 %v3091
    %5334 = vmatpush1.bf16.msra.mxu0 %v3090
    %5335 = vmatprep.subr.bf16.mxu0 %v3099
    %5336 = vmatpush1.bf16.msra.mxu0 %v3098
    %5337 = vmatprep.subr.bf16.mxu0 %v3107
    %5338 = vmatpush1.bf16.msra.mxu0 %v3106
    %5339 = vmatprep.subr.bf16.mxu0 %v3115
    %5340 = vmatpush1.bf16.msra.mxu0 %v3114
    %5341 = vmatprep.subr.bf16.mxu0 %v3123
    %5342 = vmatpush1.bf16.msra.mxu0 %v3122
    %5343 = vmatprep.subr.bf16.mxu0 %v3131
    %5344 = vmatpush1.bf16.msra.mxu0 %v3130
    %5345 = vmatprep.mubr.bf16.mxu0 %v5310
    %5346 = vmatmul.mubr.bf16.gmra.mrb[0].mxu0 %v5309
    %v5347 = vpop.f32.mrb[0].mxu0
    %v5348 = vadd.f32 %v2205, %v5347
    %v5349 = vpop.f32.mrb[0].mxu0
    %v5350 = vadd.f32 %v2209, %v5349
    %v5351 = vpop.f32.mrb[0].mxu0
    %v5352 = vpop.f32.mrb[0].mxu0
    %5353 = vdwg.mxu0
    %5354 = vmatprep.subr.bf16.mxu0 %v3139
    %5355 = vmatpush1.bf16.msra.mxu0 %v3138
    %5356 = vmatprep.subr.bf16.mxu0 %v3147
    %5357 = vmatpush1.bf16.msra.mxu0 %v3146
    %5358 = vmatprep.subr.bf16.mxu0 %v3155
    %5359 = vmatpush1.bf16.msra.mxu0 %v3154
    %5360 = vmatprep.subr.bf16.mxu0 %v3163
    %5361 = vmatpush1.bf16.msra.mxu0 %v3162
    %5362 = vmatprep.subr.bf16.mxu0 %v3171
    %5363 = vmatpush1.bf16.msra.mxu0 %v3170
    %5364 = vmatprep.subr.bf16.mxu0 %v3179
    %5365 = vmatpush1.bf16.msra.mxu0 %v3178
    %5366 = vmatprep.subr.bf16.mxu0 %v3187
    %5367 = vmatpush1.bf16.msra.mxu0 %v3186
    %5368 = vmatprep.subr.bf16.mxu0 %v3195
    %5369 = vmatpush1.bf16.msra.mxu0 %v3194
    %5370 = vmatprep.subr.bf16.mxu0 %v3203
    %5371 = vmatpush1.bf16.msra.mxu0 %v3202
    %5372 = vmatprep.subr.bf16.mxu0 %v3211
    %5373 = vmatpush1.bf16.msra.mxu0 %v3210
    %5374 = vmatprep.subr.bf16.mxu0 %v3219
    %5375 = vmatpush1.bf16.msra.mxu0 %v3218
    %5376 = vmatprep.subr.bf16.mxu0 %v3227
    %5377 = vmatpush1.bf16.msra.mxu0 %v3226
    %5378 = vmatprep.subr.bf16.mxu0 %v3235
    %5379 = vmatpush1.bf16.msra.mxu0 %v3234
    %5380 = vmatprep.subr.bf16.mxu0 %v3243
    %5381 = vmatpush1.bf16.msra.mxu0 %v3242
    %5382 = vmatprep.subr.bf16.mxu0 %v3251
    %5383 = vmatpush1.bf16.msra.mxu0 %v3250
    %5384 = vmatprep.subr.bf16.mxu0 %v3259
    %5385 = vmatpush1.bf16.msra.mxu0 %v3258
    %5386 = vmatprep.mubr.bf16.mxu0 %v5312
    %5387 = vmatmul.mubr.bf16.gmra.mrb[0].mxu0 %v5311
    %v5388 = vpop.f32.mrb[0].mxu0
    %v5389 = vadd.f32 %v5348, %v5388
    %v5390 = vpop.f32.mrb[0].mxu0
    %v5391 = vadd.f32 %v5350, %v5390
    %v5392 = vpop.f32.mrb[0].mxu0
    %v5393 = vpop.f32.mrb[0].mxu0
    %5394 = vdwg.mxu0
    %5395 = vmatprep.subr.bf16.mxu0 %v3013
    %5396 = vmatpush1.bf16.msra.mxu0 %v3012
    %5397 = vmatprep.subr.bf16.mxu0 %v3021
    %5398 = vmatpush1.bf16.msra.mxu0 %v3020
    %5399 = vmatprep.subr.bf16.mxu0 %v3029
    %5400 = vmatpush1.bf16.msra.mxu0 %v3028
    %5401 = vmatprep.subr.bf16.mxu0 %v3037
    %5402 = vmatpush1.bf16.msra.mxu0 %v3036
    %5403 = vmatprep.subr.bf16.mxu0 %v3045
    %5404 = vmatpush1.bf16.msra.mxu0 %v3044
    %5405 = vmatprep.subr.bf16.mxu0 %v3053
    %5406 = vmatpush1.bf16.msra.mxu0 %v3052
    %5407 = vmatprep.subr.bf16.mxu0 %v3061
    %5408 = vmatpush1.bf16.msra.mxu0 %v3060
    %5409 = vmatprep.subr.bf16.mxu0 %v3069
    %5410 = vmatpush1.bf16.msra.mxu0 %v3068
    %5411 = vmatprep.subr.bf16.mxu0 %v3077
    %5412 = vmatpush1.bf16.msra.mxu0 %v3076
    %5413 = vmatprep.subr.bf16.mxu0 %v3085
    %5414 = vmatpush1.bf16.msra.mxu0 %v3084
    %5415 = vmatprep.subr.bf16.mxu0 %v3093
    %5416 = vmatpush1.bf16.msra.mxu0 %v3092
    %5417 = vmatprep.subr.bf16.mxu0 %v3101
    %5418 = vmatpush1.bf16.msra.mxu0 %v3100
    %5419 = vmatprep.subr.bf16.mxu0 %v3109
    %5420 = vmatpush1.bf16.msra.mxu0 %v3108
    %5421 = vmatprep.subr.bf16.mxu0 %v3117
    %5422 = vmatpush1.bf16.msra.mxu0 %v3116
    %5423 = vmatprep.subr.bf16.mxu0 %v3125
    %5424 = vmatpush1.bf16.msra.mxu0 %v3124
    %5425 = vmatprep.subr.bf16.mxu0 %v3133
    %5426 = vmatpush1.bf16.msra.mxu0 %v3132
    %5427 = vmatprep.mubr.bf16.mxu0 %v5310
    %5428 = vmatmul.mubr.bf16.gmra.mrb[0].mxu0 %v5309
    %v5429 = vpop.f32.mrb[0].mxu0
    %v5430 = vadd.f32 %v2213, %v5429
    %v5431 = vpop.f32.mrb[0].mxu0
    %v5432 = vadd.f32 %v2217, %v5431
    %v5433 = vpop.f32.mrb[0].mxu0
    %v5434 = vpop.f32.mrb[0].mxu0
    %5435 = vdwg.mxu0
    %5436 = vmatprep.subr.bf16.mxu0 %v3141
    %5437 = vmatpush1.bf16.msra.mxu0 %v3140
    %5438 = vmatprep.subr.bf16.mxu0 %v3149
    %5439 = vmatpush1.bf16.msra.mxu0 %v3148
    %5440 = vmatprep.subr.bf16.mxu0 %v3157
    %5441 = vmatpush1.bf16.msra.mxu0 %v3156
    %5442 = vmatprep.subr.bf16.mxu0 %v3165
    %5443 = vmatpush1.bf16.msra.mxu0 %v3164
    %5444 = vmatprep.subr.bf16.mxu0 %v3173
    %5445 = vmatpush1.bf16.msra.mxu0 %v3172
    %5446 = vmatprep.subr.bf16.mxu0 %v3181
    %5447 = vmatpush1.bf16.msra.mxu0 %v3180
    %5448 = vmatprep.subr.bf16.mxu0 %v3189
    %5449 = vmatpush1.bf16.msra.mxu0 %v3188
    %5450 = vmatprep.subr.bf16.mxu0 %v3197
    %5451 = vmatpush1.bf16.msra.mxu0 %v3196
    %5452 = vmatprep.subr.bf16.mxu0 %v3205
    %5453 = vmatpush1.bf16.msra.mxu0 %v3204
    %5454 = vmatprep.subr.bf16.mxu0 %v3213
    %5455 = vmatpush1.bf16.msra.mxu0 %v3212
    %5456 = vmatprep.subr.bf16.mxu0 %v3221
    %5457 = vmatpush1.bf16.msra.mxu0 %v3220
    %5458 = vmatprep.subr.bf16.mxu0 %v3229
    %5459 = vmatpush1.bf16.msra.mxu0 %v3228
    %5460 = vmatprep.subr.bf16.mxu0 %v3237
    %5461 = vmatpush1.bf16.msra.mxu0 %v3236
    %5462 = vmatprep.subr.bf16.mxu0 %v3245
    %5463 = vmatpush1.bf16.msra.mxu0 %v3244
    %5464 = vmatprep.subr.bf16.mxu0 %v3253
    %5465 = vmatpush1.bf16.msra.mxu0 %v3252
    %5466 = vmatprep.subr.bf16.mxu0 %v3261
    %5467 = vmatpush1.bf16.msra.mxu0 %v3260
    %5468 = vmatprep.mubr.bf16.mxu0 %v5312
    %5469 = vmatmul.mubr.bf16.gmra.mrb[0].mxu0 %v5311
    %v5470 = vpop.f32.mrb[0].mxu0
    %v5471 = vadd.f32 %v5430, %v5470
    %v5472 = vpop.f32.mrb[0].mxu0
    %v5473 = vadd.f32 %v5432, %v5472
    %v5474 = vpop.f32.mrb[0].mxu0
    %v5475 = vpop.f32.mrb[0].mxu0
    %5476 = vdwg.mxu0
    %5477 = vmatprep.subr.bf16.mxu0 %v3015
    %5478 = vmatpush1.bf16.msra.mxu0 %v3014
    %5479 = vmatprep.subr.bf16.mxu0 %v3023
    %5480 = vmatpush1.bf16.msra.mxu0 %v3022
    %5481 = vmatprep.subr.bf16.mxu0 %v3031
    %5482 = vmatpush1.bf16.msra.mxu0 %v3030
    %5483 = vmatprep.subr.bf16.mxu0 %v3039
    %5484 = vmatpush1.bf16.msra.mxu0 %v3038
    %5485 = vmatprep.subr.bf16.mxu0 %v3047
    %5486 = vmatpush1.bf16.msra.mxu0 %v3046
    %5487 = vmatprep.subr.bf16.mxu0 %v3055
    %5488 = vmatpush1.bf16.msra.mxu0 %v3054
    %5489 = vmatprep.subr.bf16.mxu0 %v3063
    %5490 = vmatpush1.bf16.msra.mxu0 %v3062
    %5491 = vmatprep.subr.bf16.mxu0 %v3071
    %5492 = vmatpush1.bf16.msra.mxu0 %v3070
    %5493 = vmatprep.subr.bf16.mxu0 %v3079
    %5494 = vmatpush1.bf16.msra.mxu0 %v3078
    %5495 = vmatprep.subr.bf16.mxu0 %v3087
    %5496 = vmatpush1.bf16.msra.mxu0 %v3086
    %5497 = vmatprep.subr.bf16.mxu0 %v3095
    %5498 = vmatpush1.bf16.msra.mxu0 %v3094
    %5499 = vmatprep.subr.bf16.mxu0 %v3103
    %5500 = vmatpush1.bf16.msra.mxu0 %v3102
    %5501 = vmatprep.subr.bf16.mxu0 %v3111
    %5502 = vmatpush1.bf16.msra.mxu0 %v3110
    %5503 = vmatprep.subr.bf16.mxu0 %v3119
    %5504 = vmatpush1.bf16.msra.mxu0 %v3118
    %5505 = vmatprep.subr.bf16.mxu0 %v3127
    %5506 = vmatpush1.bf16.msra.mxu0 %v3126
    %5507 = vmatprep.subr.bf16.mxu0 %v3135
    %5508 = vmatpush1.bf16.msra.mxu0 %v3134
    %5509 = vmatprep.mubr.bf16.mxu0 %v5310
    %5510 = vmatmul.mubr.bf16.gmra.mrb[0].mxu0 %v5309
    %v5511 = vpop.f32.mrb[0].mxu0
    %v5512 = vadd.f32 %v2221, %v5511
    %v5513 = vpop.f32.mrb[0].mxu0
    %v5514 = vadd.f32 %v2225, %v5513
    %v5515 = vpop.f32.mrb[0].mxu0
    %v5516 = vpop.f32.mrb[0].mxu0
    %5517 = vdwg.mxu0
    %5518 = vmatprep.subr.bf16.mxu0 %v3143
    %5519 = vmatpush1.bf16.msra.mxu0 %v3142
    %5520 = vmatprep.subr.bf16.mxu0 %v3151
    %5521 = vmatpush1.bf16.msra.mxu0 %v3150
    %5522 = vmatprep.subr.bf16.mxu0 %v3159
    %5523 = vmatpush1.bf16.msra.mxu0 %v3158
    %5524 = vmatprep.subr.bf16.mxu0 %v3167
    %5525 = vmatpush1.bf16.msra.mxu0 %v3166
    %5526 = vmatprep.subr.bf16.mxu0 %v3175
    %5527 = vmatpush1.bf16.msra.mxu0 %v3174
    %5528 = vmatprep.subr.bf16.mxu0 %v3183
    %5529 = vmatpush1.bf16.msra.mxu0 %v3182
    %5530 = vmatprep.subr.bf16.mxu0 %v3191
    %5531 = vmatpush1.bf16.msra.mxu0 %v3190
    %5532 = vmatprep.subr.bf16.mxu0 %v3199
    %5533 = vmatpush1.bf16.msra.mxu0 %v3198
    %5534 = vmatprep.subr.bf16.mxu0 %v3207
    %5535 = vmatpush1.bf16.msra.mxu0 %v3206
    %5536 = vmatprep.subr.bf16.mxu0 %v3215
    %5537 = vmatpush1.bf16.msra.mxu0 %v3214
    %5538 = vmatprep.subr.bf16.mxu0 %v3223
    %5539 = vmatpush1.bf16.msra.mxu0 %v3222
    %5540 = vmatprep.subr.bf16.mxu0 %v3231
    %5541 = vmatpush1.bf16.msra.mxu0 %v3230
    %5542 = vmatprep.subr.bf16.mxu0 %v3239
    %5543 = vmatpush1.bf16.msra.mxu0 %v3238
    %5544 = vmatprep.subr.bf16.mxu0 %v3247
    %5545 = vmatpush1.bf16.msra.mxu0 %v3246
    %5546 = vmatprep.subr.bf16.mxu0 %v3255
    %5547 = vmatpush1.bf16.msra.mxu0 %v3254
    %5548 = vmatprep.subr.bf16.mxu0 %v3263
    %5549 = vmatpush1.bf16.msra.mxu0 %v3262
    %5550 = vmatprep.mubr.bf16.mxu0 %v5312
    %5551 = vmatmul.mubr.bf16.gmra.mrb[0].mxu0 %v5311
    %v5552 = vpop.f32.mrb[0].mxu0
    %v5553 = vadd.f32 %v5512, %v5552
    %v5554 = vpop.f32.mrb[0].mxu0
    %v5555 = vadd.f32 %v5514, %v5554
    %v5556 = vpop.f32.mrb[0].mxu0
    %v5557 = vpop.f32.mrb[0].mxu0
    %5558 = vdwg.mxu0
    %5559 = vmatprep.subr.bf16.mxu0 %v3017
    %5560 = vmatpush1.bf16.msra.mxu0 %v3016
    %5561 = vmatprep.subr.bf16.mxu0 %v3025
    %5562 = vmatpush1.bf16.msra.mxu0 %v3024
    %5563 = vmatprep.subr.bf16.mxu0 %v3033
    %5564 = vmatpush1.bf16.msra.mxu0 %v3032
    %5565 = vmatprep.subr.bf16.mxu0 %v3041
    %5566 = vmatpush1.bf16.msra.mxu0 %v3040
    %5567 = vmatprep.subr.bf16.mxu0 %v3049
    %5568 = vmatpush1.bf16.msra.mxu0 %v3048
    %5569 = vmatprep.subr.bf16.mxu0 %v3057
    %5570 = vmatpush1.bf16.msra.mxu0 %v3056
    %5571 = vmatprep.subr.bf16.mxu0 %v3065
    %5572 = vmatpush1.bf16.msra.mxu0 %v3064
    %5573 = vmatprep.subr.bf16.mxu0 %v3073
    %5574 = vmatpush1.bf16.msra.mxu0 %v3072
    %5575 = vmatprep.subr.bf16.mxu0 %v3081
    %5576 = vmatpush1.bf16.msra.mxu0 %v3080
    %5577 = vmatprep.subr.bf16.mxu0 %v3089
    %5578 = vmatpush1.bf16.msra.mxu0 %v3088
    %5579 = vmatprep.subr.bf16.mxu0 %v3097
    %5580 = vmatpush1.bf16.msra.mxu0 %v3096
    %5581 = vmatprep.subr.bf16.mxu0 %v3105
    %5582 = vmatpush1.bf16.msra.mxu0 %v3104
    %5583 = vmatprep.subr.bf16.mxu0 %v3113
    %5584 = vmatpush1.bf16.msra.mxu0 %v3112
    %5585 = vmatprep.subr.bf16.mxu0 %v3121
    %5586 = vmatpush1.bf16.msra.mxu0 %v3120
    %5587 = vmatprep.subr.bf16.mxu0 %v3129
    %5588 = vmatpush1.bf16.msra.mxu0 %v3128
    %5589 = vmatprep.subr.bf16.mxu0 %v3137
    %5590 = vmatpush1.bf16.msra.mxu0 %v3136
    %5591 = vmatprep.mubr.bf16.mxu0 %v5310
    %5592 = vmatmul.mubr.bf16.gmra.mrb[0].mxu0 %v5309
    %v5593 = vpop.f32.mrb[0].mxu0
    %v5594 = vadd.f32 %v2229, %v5593
    %v5595 = vpop.f32.mrb[0].mxu0
    %v5596 = vadd.f32 %v2233, %v5595
    %v5597 = vpop.f32.mrb[0].mxu0
    %v5598 = vpop.f32.mrb[0].mxu0
    %5599 = vdwg.mxu0
    %5600 = vmatprep.subr.bf16.mxu0 %v3145
    %5601 = vmatpush1.bf16.msra.mxu0 %v3144
    %5602 = vmatprep.subr.bf16.mxu0 %v3153
    %5603 = vmatpush1.bf16.msra.mxu0 %v3152
    %5604 = vmatprep.subr.bf16.mxu0 %v3161
    %5605 = vmatpush1.bf16.msra.mxu0 %v3160
    %5606 = vmatprep.subr.bf16.mxu0 %v3169
    %5607 = vmatpush1.bf16.msra.mxu0 %v3168
    %5608 = vmatprep.subr.bf16.mxu0 %v3177
    %5609 = vmatpush1.bf16.msra.mxu0 %v3176
    %5610 = vmatprep.subr.bf16.mxu0 %v3185
    %5611 = vmatpush1.bf16.msra.mxu0 %v3184
    %5612 = vmatprep.subr.bf16.mxu0 %v3193
    %5613 = vmatpush1.bf16.msra.mxu0 %v3192
    %5614 = vmatprep.subr.bf16.mxu0 %v3201
    %5615 = vmatpush1.bf16.msra.mxu0 %v3200
    %5616 = vmatprep.subr.bf16.mxu0 %v3209
    %5617 = vmatpush1.bf16.msra.mxu0 %v3208
    %5618 = vmatprep.subr.bf16.mxu0 %v3217
    %5619 = vmatpush1.bf16.msra.mxu0 %v3216
    %5620 = vmatprep.subr.bf16.mxu0 %v3225
    %5621 = vmatpush1.bf16.msra.mxu0 %v3224
    %5622 = vmatprep.subr.bf16.mxu0 %v3233
    %5623 = vmatpush1.bf16.msra.mxu0 %v3232
    %5624 = vmatprep.subr.bf16.mxu0 %v3241
    %5625 = vmatpush1.bf16.msra.mxu0 %v3240
    %5626 = vmatprep.subr.bf16.mxu0 %v3249
    %5627 = vmatpush1.bf16.msra.mxu0 %v3248
    %5628 = vmatprep.subr.bf16.mxu0 %v3257
    %5629 = vmatpush1.bf16.msra.mxu0 %v3256
    %5630 = vmatprep.subr.bf16.mxu0 %v3265
    %5631 = vmatpush1.bf16.msra.mxu0 %v3264
    %5632 = vmatprep.mubr.bf16.mxu0 %v5312
    %5633 = vmatmul.mubr.bf16.gmra.mrb[0].mxu0 %v5311
    %v5634 = vpop.f32.mrb[0].mxu0
    %v5635 = vadd.f32 %v5594, %v5634
    %v5636 = vpop.f32.mrb[0].mxu0
    %v5637 = vadd.f32 %v5596, %v5636
    %v5638 = vpop.f32.mrb[0].mxu0
    %v5639 = vpop.f32.mrb[0].mxu0
    %5640 = vdwg.mxu0
    %v5641 = vsub.f32 0.0, %v5389
    %v5642 = vsub.f32 0.0, %v5391
    %v5643 = vsub.f32 0.0, %v5471
    %v5644 = vsub.f32 0.0, %v5473
    %v5645 = vmul.f32 %v5641, 1.442695
    %v5646 = vpow.pop %v5645
    %v5647 = vmul.f32 %v5642, 1.442695
    %v5648 = vpow.pop %v5647
    %v5649 = vmul.f32 %v5643, 1.442695
    %v5650 = vpow.pop %v5649
    %v5651 = vmul.f32 %v5644, 1.442695
    %v5652 = vpow.pop %v5651
    %v5653 = vadd.f32 %v5646, 1.0
    %v5654 = vadd.f32 %v5648, 1.0
    %v5655 = vadd.f32 %v5650, 1.0
    %v5656 = vadd.f32 %v5652, 1.0
    %v5657 = vrcp.pop %v5653
    %v5658 = vrcp.pop %v5654
    %v5659 = vrcp.pop %v5655
    %v5660 = vrcp.pop %v5656
    %v5661 = vtanh.pop %v5553
    %v5662 = vtanh.pop %v5555
    %v5663 = vsub.f32 0.0, %v5635
    %v5664 = vsub.f32 0.0, %v5637
    %v5665 = vmul.f32 %v5663, 1.442695
    %v5666 = vpow.pop %v5665
    %v5667 = vmul.f32 %v5664, 1.442695
    %v5668 = vpow.pop %v5667
    %v5669 = vadd.f32 %v5666, 1.0
    %v5670 = vadd.f32 %v5668, 1.0
    %v5671 = vrcp.pop %v5669
    %v5672 = vrcp.pop %v5670
    %v5673 = vmul.f32 %v5659, %v5080
    %v5674 = vmul.f32 %v5660, %v5081
    %v5675 = vmul.f32 %v5657, %v5661
    %v5676 = vmul.f32 %v5658, %v5662
    %v5677 = vadd.f32 %v5673, %v5675
    %v5678 = vadd.f32 %v5674, %v5676
    %v5679 = vtanh.pop %v5677
    %v5680 = vtanh.pop %v5678
    %v5681 = vmul.f32 %v5671, %v5679
    %v5682 = vmul.f32 %v5672, %v5680
    %s5683 = scalar_lea.vmem [#allocation2], 256
    %v5684 = vld [vmem:[%s5683] sm:$0xff]
    %v5685 = vld [vmem:[%s5683 + $0x8] sm:$0xff]
    %v5686 = vld [vmem:[%s5683 + $0x10] sm:$0xff]
    %v5687 = vld [vmem:[%s5683 + $0x18] sm:$0xff]
    %v5688 = vld [vmem:[%s5683 + $0x20] sm:$0xff]
    %v5689 = vld [vmem:[%s5683 + $0x28] sm:$0xff]
    %v5690 = vld [vmem:[%s5683 + $0x30] sm:$0xff]
    %v5691 = vld [vmem:[%s5683 + $0x38] sm:$0xff]
    %5692 = vmatprep.subr.bf16.mxu0 %v1465
    %5693 = vmatpush1.bf16.msra.mxu0 %v1464
    %5694 = vmatprep.subr.bf16.mxu0 %v1473
    %5695 = vmatpush1.bf16.msra.mxu0 %v1472
    %5696 = vmatprep.subr.bf16.mxu0 %v1481
    %5697 = vmatpush1.bf16.msra.mxu0 %v1480
    %5698 = vmatprep.subr.bf16.mxu0 %v1489
    %5699 = vmatpush1.bf16.msra.mxu0 %v1488
    %5700 = vmatprep.subr.bf16.mxu0 %v1497
    %5701 = vmatpush1.bf16.msra.mxu0 %v1496
    %5702 = vmatprep.subr.bf16.mxu0 %v1505
    %5703 = vmatpush1.bf16.msra.mxu0 %v1504
    %5704 = vmatprep.subr.bf16.mxu0 %v1513
    %5705 = vmatpush1.bf16.msra.mxu0 %v1512
    %5706 = vmatprep.subr.bf16.mxu0 %v1521
    %5707 = vmatpush1.bf16.msra.mxu0 %v1520
    %5708 = vmatprep.subr.bf16.mxu0 %v1529
    %5709 = vmatpush1.bf16.msra.mxu0 %v1528
    %5710 = vmatprep.subr.bf16.mxu0 %v1537
    %5711 = vmatpush1.bf16.msra.mxu0 %v1536
    %5712 = vmatprep.subr.bf16.mxu0 %v1545
    %5713 = vmatpush1.bf16.msra.mxu0 %v1544
    %5714 = vmatprep.subr.bf16.mxu0 %v1553
    %5715 = vmatpush1.bf16.msra.mxu0 %v1552
    %5716 = vmatprep.subr.bf16.mxu0 %v1561
    %5717 = vmatpush1.bf16.msra.mxu0 %v1560
    %5718 = vmatprep.subr.bf16.mxu0 %v1569
    %5719 = vmatpush1.bf16.msra.mxu0 %v1568
    %5720 = vmatprep.subr.bf16.mxu0 %v1577
    %5721 = vmatpush1.bf16.msra.mxu0 %v1576
    %5722 = vmatprep.subr.bf16.mxu0 %v1585
    %5723 = vmatpush1.bf16.msra.mxu0 %v1584
    %5724 = vmatprep.mubr.bf16.mxu0 %v5310
    %5725 = vmatmul.mubr.bf16.gmra.mrb[0].mxu0 %v5309
    %v5726 = vpop.f32.mrb[0].mxu0
    %v5727 = vadd.f32 0.0, %v5726
    %v5728 = vpop.f32.mrb[0].mxu0
    %v5729 = vadd.f32 0.0, %v5728
    %v5730 = vpop.f32.mrb[0].mxu0
    %v5731 = vpop.f32.mrb[0].mxu0
    %5732 = vdwg.mxu0
    %5733 = vmatprep.subr.bf16.mxu0 %v1467
    %5734 = vmatpush1.bf16.msra.mxu0 %v1466
    %5735 = vmatprep.subr.bf16.mxu0 %v1475
    %5736 = vmatpush1.bf16.msra.mxu0 %v1474
    %5737 = vmatprep.subr.bf16.mxu0 %v1483
    %5738 = vmatpush1.bf16.msra.mxu0 %v1482
    %5739 = vmatprep.subr.bf16.mxu0 %v1491
    %5740 = vmatpush1.bf16.msra.mxu0 %v1490
    %5741 = vmatprep.subr.bf16.mxu0 %v1499
    %5742 = vmatpush1.bf16.msra.mxu0 %v1498
    %5743 = vmatprep.subr.bf16.mxu0 %v1507
    %5744 = vmatpush1.bf16.msra.mxu0 %v1506
    %5745 = vmatprep.subr.bf16.mxu0 %v1515
    %5746 = vmatpush1.bf16.msra.mxu0 %v1514
    %5747 = vmatprep.subr.bf16.mxu0 %v1523
    %5748 = vmatpush1.bf16.msra.mxu0 %v1522
    %5749 = vmatprep.subr.bf16.mxu0 %v1531
    %5750 = vmatpush1.bf16.msra.mxu0 %v1530
    %5751 = vmatprep.subr.bf16.mxu0 %v1539
    %5752 = vmatpush1.bf16.msra.mxu0 %v1538
    %5753 = vmatprep.subr.bf16.mxu0 %v1547
    %5754 = vmatpush1.bf16.msra.mxu0 %v1546
    %5755 = vmatprep.subr.bf16.mxu0 %v1555
    %5756 = vmatpush1.bf16.msra.mxu0 %v1554
    %5757 = vmatprep.subr.bf16.mxu0 %v1563
    %5758 = vmatpush1.bf16.msra.mxu0 %v1562
    %5759 = vmatprep.subr.bf16.mxu0 %v1571
    %5760 = vmatpush1.bf16.msra.mxu0 %v1570
    %5761 = vmatprep.subr.bf16.mxu0 %v1579
    %5762 = vmatpush1.bf16.msra.mxu0 %v1578
    %5763 = vmatprep.subr.bf16.mxu0 %v1587
    %5764 = vmatpush1.bf16.msra.mxu0 %v1586
    %5765 = vmatprep.mubr.bf16.mxu0 %v5310
    %5766 = vmatmul.mubr.bf16.gmra.mrb[0].mxu0 %v5309
    %v5767 = vpop.f32.mrb[0].mxu0
    %v5768 = vadd.f32 0.0, %v5767
    %v5769 = vpop.f32.mrb[0].mxu0
    %v5770 = vadd.f32 0.0, %v5769
    %v5771 = vpop.f32.mrb[0].mxu0
    %v5772 = vpop.f32.mrb[0].mxu0
    %5773 = vdwg.mxu0
    %5774 = vmatprep.subr.bf16.mxu0 %v1469
    %5775 = vmatpush1.bf16.msra.mxu0 %v1468
    %5776 = vmatprep.subr.bf16.mxu0 %v1477
    %5777 = vmatpush1.bf16.msra.mxu0 %v1476
    %5778 = vmatprep.subr.bf16.mxu0 %v1485
    %5779 = vmatpush1.bf16.msra.mxu0 %v1484
    %5780 = vmatprep.subr.bf16.mxu0 %v1493
    %5781 = vmatpush1.bf16.msra.mxu0 %v1492
    %5782 = vmatprep.subr.bf16.mxu0 %v1501
    %5783 = vmatpush1.bf16.msra.mxu0 %v1500
    %5784 = vmatprep.subr.bf16.mxu0 %v1509
    %5785 = vmatpush1.bf16.msra.mxu0 %v1508
    %5786 = vmatprep.subr.bf16.mxu0 %v1517
    %5787 = vmatpush1.bf16.msra.mxu0 %v1516
    %5788 = vmatprep.subr.bf16.mxu0 %v1525
    %5789 = vmatpush1.bf16.msra.mxu0 %v1524
    %5790 = vmatprep.subr.bf16.mxu0 %v1533
    %5791 = vmatpush1.bf16.msra.mxu0 %v1532
    %5792 = vmatprep.subr.bf16.mxu0 %v1541
    %5793 = vmatpush1.bf16.msra.mxu0 %v1540
    %5794 = vmatprep.subr.bf16.mxu0 %v1549
    %5795 = vmatpush1.bf16.msra.mxu0 %v1548
    %5796 = vmatprep.subr.bf16.mxu0 %v1557
    %5797 = vmatpush1.bf16.msra.mxu0 %v1556
    %5798 = vmatprep.subr.bf16.mxu0 %v1565
    %5799 = vmatpush1.bf16.msra.mxu0 %v1564
    %5800 = vmatprep.subr.bf16.mxu0 %v1573
    %5801 = vmatpush1.bf16.msra.mxu0 %v1572
    %5802 = vmatprep.subr.bf16.mxu0 %v1581
    %5803 = vmatpush1.bf16.msra.mxu0 %v1580
    %5804 = vmatprep.subr.bf16.mxu0 %v1589
    %5805 = vmatpush1.bf16.msra.mxu0 %v1588
    %5806 = vmatprep.mubr.bf16.mxu0 %v5310
    %5807 = vmatmul.mubr.bf16.gmra.mrb[0].mxu0 %v5309
    %v5808 = vpop.f32.mrb[0].mxu0
    %v5809 = vadd.f32 0.0, %v5808
    %v5810 = vpop.f32.mrb[0].mxu0
    %v5811 = vadd.f32 0.0, %v5810
    %v5812 = vpop.f32.mrb[0].mxu0
    %v5813 = vpop.f32.mrb[0].mxu0
    %5814 = vdwg.mxu0
    %5815 = vmatprep.subr.bf16.mxu0 %v1471
    %5816 = vmatpush1.bf16.msra.mxu0 %v1470
    %5817 = vmatprep.subr.bf16.mxu0 %v1479
    %5818 = vmatpush1.bf16.msra.mxu0 %v1478
    %5819 = vmatprep.subr.bf16.mxu0 %v1487
    %5820 = vmatpush1.bf16.msra.mxu0 %v1486
    %5821 = vmatprep.subr.bf16.mxu0 %v1495
    %5822 = vmatpush1.bf16.msra.mxu0 %v1494
    %5823 = vmatprep.subr.bf16.mxu0 %v1503
    %5824 = vmatpush1.bf16.msra.mxu0 %v1502
    %5825 = vmatprep.subr.bf16.mxu0 %v1511
    %5826 = vmatpush1.bf16.msra.mxu0 %v1510
    %5827 = vmatprep.subr.bf16.mxu0 %v1519
    %5828 = vmatpush1.bf16.msra.mxu0 %v1518
    %5829 = vmatprep.subr.bf16.mxu0 %v1527
    %5830 = vmatpush1.bf16.msra.mxu0 %v1526
    %5831 = vmatprep.subr.bf16.mxu0 %v1535
    %5832 = vmatpush1.bf16.msra.mxu0 %v1534
    %5833 = vmatprep.subr.bf16.mxu0 %v1543
    %5834 = vmatpush1.bf16.msra.mxu0 %v1542
    %5835 = vmatprep.subr.bf16.mxu0 %v1551
    %5836 = vmatpush1.bf16.msra.mxu0 %v1550
    %5837 = vmatprep.subr.bf16.mxu0 %v1559
    %5838 = vmatpush1.bf16.msra.mxu0 %v1558
    %5839 = vmatprep.subr.bf16.mxu0 %v1567
    %5840 = vmatpush1.bf16.msra.mxu0 %v1566
    %5841 = vmatprep.subr.bf16.mxu0 %v1575
    %5842 = vmatpush1.bf16.msra.mxu0 %v1574
    %5843 = vmatprep.subr.bf16.mxu0 %v1583
    %5844 = vmatpush1.bf16.msra.mxu0 %v1582
    %5845 = vmatprep.subr.bf16.mxu0 %v1591
    %5846 = vmatpush1.bf16.msra.mxu0 %v1590
    %5847 = vmatprep.mubr.bf16.mxu0 %v5310
    %5848 = vmatmul.mubr.bf16.gmra.mrb[0].mxu0 %v5309
    %v5849 = vpop.f32.mrb[0].mxu0
    %v5850 = vadd.f32 0.0, %v5849
    %v5851 = vpop.f32.mrb[0].mxu0
    %v5852 = vadd.f32 0.0, %v5851
    %v5853 = vpop.f32.mrb[0].mxu0
    %v5854 = vpop.f32.mrb[0].mxu0
    %5855 = vdwg.mxu0
    %v5856 = vadd.f32 %v5684, %v5727
    %v5857 = vadd.f32 %v5685, %v5729
    %v5858 = vadd.f32 %v5686, %v5768
    %v5859 = vadd.f32 %v5687, %v5770
    %v5860 = vadd.f32 %v5688, %v5809
    %v5861 = vadd.f32 %v5689, %v5811
    %v5862 = vadd.f32 %v5690, %v5850
    %v5863 = vadd.f32 %v5691, %v5852
    %v5864 = vsub.f32 0.0, %v5856
    %v5865 = vsub.f32 0.0, %v5857
    %v5866 = vsub.f32 0.0, %v5858
    %v5867 = vsub.f32 0.0, %v5859
    %v5868 = vmul.f32 %v5864, 1.442695
    %v5869 = vpow.pop %v5868
    %v5870 = vmul.f32 %v5865, 1.442695
    %v5871 = vpow.pop %v5870
    %v5872 = vmul.f32 %v5866, 1.442695
    %v5873 = vpow.pop %v5872
    %v5874 = vmul.f32 %v5867, 1.442695
    %v5875 = vpow.pop %v5874
    %v5876 = vadd.f32 %v5869, 1.0
    %v5877 = vadd.f32 %v5871, 1.0
    %v5878 = vadd.f32 %v5873, 1.0
    %v5879 = vadd.f32 %v5875, 1.0
    %v5880 = vrcp.pop %v5876
    %v5881 = vrcp.pop %v5877
    %v5882 = vrcp.pop %v5878
    %v5883 = vrcp.pop %v5879
    %v5884 = vtanh.pop %v5860
    %v5885 = vtanh.pop %v5861
    %v5886 = vsub.f32 0.0, %v5862
    %v5887 = vsub.f32 0.0, %v5863
    %v5888 = vmul.f32 %v5886, 1.442695
    %v5889 = vpow.pop %v5888
    %v5890 = vmul.f32 %v5887, 1.442695
    %v5891 = vpow.pop %v5890
    %v5892 = vadd.f32 %v5889, 1.0
    %v5893 = vadd.f32 %v5891, 1.0
    %v5894 = vrcp.pop %v5892
    %v5895 = vrcp.pop %v5893
    %v5896 = vmul.f32 %v5882, %v5303
    %v5897 = vmul.f32 %v5883, %v5304
    %v5898 = vmul.f32 %v5880, %v5884
    %v5899 = vmul.f32 %v5881, %v5885
    %v5900 = vadd.f32 %v5896, %v5898
    %v5901 = vadd.f32 %v5897, %v5899
    %v5902 = vtanh.pop %v5900
    %v5903 = vtanh.pop %v5901
    %v5904 = vmul.f32 %v5894, %v5902
    %v5905 = vmul.f32 %v5895, %v5903
    %v5906 = vpack.c.bf16 %v5904, %v5904
    %v5907 = vpack.c.bf16 %v5905, %v5905
    %v5908 = vpack.c.bf16 %v5681, %v5681
    %v5909 = vpack.c.bf16 %v5682, %v5682
    %5910 = vmatprep.subr.bf16.mxu0 %v3011
    %5911 = vmatpush1.bf16.msra.mxu0 %v3010
    %5912 = vmatprep.subr.bf16.mxu0 %v3019
    %5913 = vmatpush1.bf16.msra.mxu0 %v3018
    %5914 = vmatprep.subr.bf16.mxu0 %v3027
    %5915 = vmatpush1.bf16.msra.mxu0 %v3026
    %5916 = vmatprep.subr.bf16.mxu0 %v3035
    %5917 = vmatpush1.bf16.msra.mxu0 %v3034
    %5918 = vmatprep.subr.bf16.mxu0 %v3043
    %5919 = vmatpush1.bf16.msra.mxu0 %v3042
    %5920 = vmatprep.subr.bf16.mxu0 %v3051
    %5921 = vmatpush1.bf16.msra.mxu0 %v3050
    %5922 = vmatprep.subr.bf16.mxu0 %v3059
    %5923 = vmatpush1.bf16.msra.mxu0 %v3058
    %5924 = vmatprep.subr.bf16.mxu0 %v3067
    %5925 = vmatpush1.bf16.msra.mxu0 %v3066
    %5926 = vmatprep.subr.bf16.mxu0 %v3075
    %5927 = vmatpush1.bf16.msra.mxu0 %v3074
    %5928 = vmatprep.subr.bf16.mxu0 %v3083
    %5929 = vmatpush1.bf16.msra.mxu0 %v3082
    %5930 = vmatprep.subr.bf16.mxu0 %v3091
    %5931 = vmatpush1.bf16.msra.mxu0 %v3090
    %5932 = vmatprep.subr.bf16.mxu0 %v3099
    %5933 = vmatpush1.bf16.msra.mxu0 %v3098
    %5934 = vmatprep.subr.bf16.mxu0 %v3107
    %5935 = vmatpush1.bf16.msra.mxu0 %v3106
    %5936 = vmatprep.subr.bf16.mxu0 %v3115
    %5937 = vmatpush1.bf16.msra.mxu0 %v3114
    %5938 = vmatprep.subr.bf16.mxu0 %v3123
    %5939 = vmatpush1.bf16.msra.mxu0 %v3122
    %5940 = vmatprep.subr.bf16.mxu0 %v3131
    %5941 = vmatpush1.bf16.msra.mxu0 %v3130
    %5942 = vmatprep.mubr.bf16.mxu0 %v5907
    %5943 = vmatmul.mubr.bf16.gmra.mrb[0].mxu0 %v5906
    %v5944 = vpop.f32.mrb[0].mxu0
    %v5945 = vadd.f32 %v2205, %v5944
    %v5946 = vpop.f32.mrb[0].mxu0
    %v5947 = vadd.f32 %v2209, %v5946
    %v5948 = vpop.f32.mrb[0].mxu0
    %v5949 = vpop.f32.mrb[0].mxu0
    %5950 = vdwg.mxu0
    %5951 = vmatprep.subr.bf16.mxu0 %v3139
    %5952 = vmatpush1.bf16.msra.mxu0 %v3138
    %5953 = vmatprep.subr.bf16.mxu0 %v3147
    %5954 = vmatpush1.bf16.msra.mxu0 %v3146
    %5955 = vmatprep.subr.bf16.mxu0 %v3155
    %5956 = vmatpush1.bf16.msra.mxu0 %v3154
    %5957 = vmatprep.subr.bf16.mxu0 %v3163
    %5958 = vmatpush1.bf16.msra.mxu0 %v3162
    %5959 = vmatprep.subr.bf16.mxu0 %v3171
    %5960 = vmatpush1.bf16.msra.mxu0 %v3170
    %5961 = vmatprep.subr.bf16.mxu0 %v3179
    %5962 = vmatpush1.bf16.msra.mxu0 %v3178
    %5963 = vmatprep.subr.bf16.mxu0 %v3187
    %5964 = vmatpush1.bf16.msra.mxu0 %v3186
    %5965 = vmatprep.subr.bf16.mxu0 %v3195
    %5966 = vmatpush1.bf16.msra.mxu0 %v3194
    %5967 = vmatprep.subr.bf16.mxu0 %v3203
    %5968 = vmatpush1.bf16.msra.mxu0 %v3202
    %5969 = vmatprep.subr.bf16.mxu0 %v3211
    %5970 = vmatpush1.bf16.msra.mxu0 %v3210
    %5971 = vmatprep.subr.bf16.mxu0 %v3219
    %5972 = vmatpush1.bf16.msra.mxu0 %v3218
    %5973 = vmatprep.subr.bf16.mxu0 %v3227
    %5974 = vmatpush1.bf16.msra.mxu0 %v3226
    %5975 = vmatprep.subr.bf16.mxu0 %v3235
    %5976 = vmatpush1.bf16.msra.mxu0 %v3234
    %5977 = vmatprep.subr.bf16.mxu0 %v3243
    %5978 = vmatpush1.bf16.msra.mxu0 %v3242
    %5979 = vmatprep.subr.bf16.mxu0 %v3251
    %5980 = vmatpush1.bf16.msra.mxu0 %v3250
    %5981 = vmatprep.subr.bf16.mxu0 %v3259
    %5982 = vmatpush1.bf16.msra.mxu0 %v3258
    %5983 = vmatprep.mubr.bf16.mxu0 %v5909
    %5984 = vmatmul.mubr.bf16.gmra.mrb[0].mxu0 %v5908
    %v5985 = vpop.f32.mrb[0].mxu0
    %v5986 = vadd.f32 %v5945, %v5985
    %v5987 = vpop.f32.mrb[0].mxu0
    %v5988 = vadd.f32 %v5947, %v5987
    %v5989 = vpop.f32.mrb[0].mxu0
    %v5990 = vpop.f32.mrb[0].mxu0
    %5991 = vdwg.mxu0
    %5992 = vmatprep.subr.bf16.mxu0 %v3013
    %5993 = vmatpush1.bf16.msra.mxu0 %v3012
    %5994 = vmatprep.subr.bf16.mxu0 %v3021
    %5995 = vmatpush1.bf16.msra.mxu0 %v3020
    %5996 = vmatprep.subr.bf16.mxu0 %v3029
    %5997 = vmatpush1.bf16.msra.mxu0 %v3028
    %5998 = vmatprep.subr.bf16.mxu0 %v3037
    %5999 = vmatpush1.bf16.msra.mxu0 %v3036
    %6000 = vmatprep.subr.bf16.mxu0 %v3045
    %6001 = vmatpush1.bf16.msra.mxu0 %v3044
    %6002 = vmatprep.subr.bf16.mxu0 %v3053
    %6003 = vmatpush1.bf16.msra.mxu0 %v3052
    %6004 = vmatprep.subr.bf16.mxu0 %v3061
    %6005 = vmatpush1.bf16.msra.mxu0 %v3060
    %6006 = vmatprep.subr.bf16.mxu0 %v3069
    %6007 = vmatpush1.bf16.msra.mxu0 %v3068
    %6008 = vmatprep.subr.bf16.mxu0 %v3077
    %6009 = vmatpush1.bf16.msra.mxu0 %v3076
    %6010 = vmatprep.subr.bf16.mxu0 %v3085
    %6011 = vmatpush1.bf16.msra.mxu0 %v3084
    %6012 = vmatprep.subr.bf16.mxu0 %v3093
    %6013 = vmatpush1.bf16.msra.mxu0 %v3092
    %6014 = vmatprep.subr.bf16.mxu0 %v3101
    %6015 = vmatpush1.bf16.msra.mxu0 %v3100
    %6016 = vmatprep.subr.bf16.mxu0 %v3109
    %6017 = vmatpush1.bf16.msra.mxu0 %v3108
    %6018 = vmatprep.subr.bf16.mxu0 %v3117
    %6019 = vmatpush1.bf16.msra.mxu0 %v3116
    %6020 = vmatprep.subr.bf16.mxu0 %v3125
    %6021 = vmatpush1.bf16.msra.mxu0 %v3124
    %6022 = vmatprep.subr.bf16.mxu0 %v3133
    %6023 = vmatpush1.bf16.msra.mxu0 %v3132
    %6024 = vmatprep.mubr.bf16.mxu0 %v5907
    %6025 = vmatmul.mubr.bf16.gmra.mrb[0].mxu0 %v5906
    %v6026 = vpop.f32.mrb[0].mxu0
    %v6027 = vadd.f32 %v2213, %v6026
    %v6028 = vpop.f32.mrb[0].mxu0
    %v6029 = vadd.f32 %v2217, %v6028
    %v6030 = vpop.f32.mrb[0].mxu0
    %v6031 = vpop.f32.mrb[0].mxu0
    %6032 = vdwg.mxu0
    %6033 = vmatprep.subr.bf16.mxu0 %v3141
    %6034 = vmatpush1.bf16.msra.mxu0 %v3140
    %6035 = vmatprep.subr.bf16.mxu0 %v3149
    %6036 = vmatpush1.bf16.msra.mxu0 %v3148
    %6037 = vmatprep.subr.bf16.mxu0 %v3157
    %6038 = vmatpush1.bf16.msra.mxu0 %v3156
    %6039 = vmatprep.subr.bf16.mxu0 %v3165
    %6040 = vmatpush1.bf16.msra.mxu0 %v3164
    %6041 = vmatprep.subr.bf16.mxu0 %v3173
    %6042 = vmatpush1.bf16.msra.mxu0 %v3172
    %6043 = vmatprep.subr.bf16.mxu0 %v3181
    %6044 = vmatpush1.bf16.msra.mxu0 %v3180
    %6045 = vmatprep.subr.bf16.mxu0 %v3189
    %6046 = vmatpush1.bf16.msra.mxu0 %v3188
    %6047 = vmatprep.subr.bf16.mxu0 %v3197
    %6048 = vmatpush1.bf16.msra.mxu0 %v3196
    %6049 = vmatprep.subr.bf16.mxu0 %v3205
    %6050 = vmatpush1.bf16.msra.mxu0 %v3204
    %6051 = vmatprep.subr.bf16.mxu0 %v3213
    %6052 = vmatpush1.bf16.msra.mxu0 %v3212
    %6053 = vmatprep.subr.bf16.mxu0 %v3221
    %6054 = vmatpush1.bf16.msra.mxu0 %v3220
    %6055 = vmatprep.subr.bf16.mxu0 %v3229
    %6056 = vmatpush1.bf16.msra.mxu0 %v3228
    %6057 = vmatprep.subr.bf16.mxu0 %v3237
    %6058 = vmatpush1.bf16.msra.mxu0 %v3236
    %6059 = vmatprep.subr.bf16.mxu0 %v3245
    %6060 = vmatpush1.bf16.msra.mxu0 %v3244
    %6061 = vmatprep.subr.bf16.mxu0 %v3253
    %6062 = vmatpush1.bf16.msra.mxu0 %v3252
    %6063 = vmatprep.subr.bf16.mxu0 %v3261
    %6064 = vmatpush1.bf16.msra.mxu0 %v3260
    %6065 = vmatprep.mubr.bf16.mxu0 %v5909
    %6066 = vmatmul.mubr.bf16.gmra.mrb[0].mxu0 %v5908
    %v6067 = vpop.f32.mrb[0].mxu0
    %v6068 = vadd.f32 %v6027, %v6067
    %v6069 = vpop.f32.mrb[0].mxu0
    %v6070 = vadd.f32 %v6029, %v6069
    %v6071 = vpop.f32.mrb[0].mxu0
    %v6072 = vpop.f32.mrb[0].mxu0
    %6073 = vdwg.mxu0
    %6074 = vmatprep.subr.bf16.mxu0 %v3015
    %6075 = vmatpush1.bf16.msra.mxu0 %v3014
    %6076 = vmatprep.subr.bf16.mxu0 %v3023
    %6077 = vmatpush1.bf16.msra.mxu0 %v3022
    %6078 = vmatprep.subr.bf16.mxu0 %v3031
    %6079 = vmatpush1.bf16.msra.mxu0 %v3030
    %6080 = vmatprep.subr.bf16.mxu0 %v3039
    %6081 = vmatpush1.bf16.msra.mxu0 %v3038
    %6082 = vmatprep.subr.bf16.mxu0 %v3047
    %6083 = vmatpush1.bf16.msra.mxu0 %v3046
    %6084 = vmatprep.subr.bf16.mxu0 %v3055
    %6085 = vmatpush1.bf16.msra.mxu0 %v3054
    %6086 = vmatprep.subr.bf16.mxu0 %v3063
    %6087 = vmatpush1.bf16.msra.mxu0 %v3062
    %6088 = vmatprep.subr.bf16.mxu0 %v3071
    %6089 = vmatpush1.bf16.msra.mxu0 %v3070
    %6090 = vmatprep.subr.bf16.mxu0 %v3079
    %6091 = vmatpush1.bf16.msra.mxu0 %v3078
    %6092 = vmatprep.subr.bf16.mxu0 %v3087
    %6093 = vmatpush1.bf16.msra.mxu0 %v3086
    %6094 = vmatprep.subr.bf16.mxu0 %v3095
    %6095 = vmatpush1.bf16.msra.mxu0 %v3094
    %6096 = vmatprep.subr.bf16.mxu0 %v3103
    %6097 = vmatpush1.bf16.msra.mxu0 %v3102
    %6098 = vmatprep.subr.bf16.mxu0 %v3111
    %6099 = vmatpush1.bf16.msra.mxu0 %v3110
    %6100 = vmatprep.subr.bf16.mxu0 %v3119
    %6101 = vmatpush1.bf16.msra.mxu0 %v3118
    %6102 = vmatprep.subr.bf16.mxu0 %v3127
    %6103 = vmatpush1.bf16.msra.mxu0 %v3126
    %6104 = vmatprep.subr.bf16.mxu0 %v3135
    %6105 = vmatpush1.bf16.msra.mxu0 %v3134
    %6106 = vmatprep.mubr.bf16.mxu0 %v5907
    %6107 = vmatmul.mubr.bf16.gmra.mrb[0].mxu0 %v5906
    %v6108 = vpop.f32.mrb[0].mxu0
    %v6109 = vadd.f32 %v2221, %v6108
    %v6110 = vpop.f32.mrb[0].mxu0
    %v6111 = vadd.f32 %v2225, %v6110
    %v6112 = vpop.f32.mrb[0].mxu0
    %v6113 = vpop.f32.mrb[0].mxu0
    %6114 = vdwg.mxu0
    %6115 = vmatprep.subr.bf16.mxu0 %v3143
    %6116 = vmatpush1.bf16.msra.mxu0 %v3142
    %6117 = vmatprep.subr.bf16.mxu0 %v3151
    %6118 = vmatpush1.bf16.msra.mxu0 %v3150
    %6119 = vmatprep.subr.bf16.mxu0 %v3159
    %6120 = vmatpush1.bf16.msra.mxu0 %v3158
    %6121 = vmatprep.subr.bf16.mxu0 %v3167
    %6122 = vmatpush1.bf16.msra.mxu0 %v3166
    %6123 = vmatprep.subr.bf16.mxu0 %v3175
    %6124 = vmatpush1.bf16.msra.mxu0 %v3174
    %6125 = vmatprep.subr.bf16.mxu0 %v3183
    %6126 = vmatpush1.bf16.msra.mxu0 %v3182
    %6127 = vmatprep.subr.bf16.mxu0 %v3191
    %6128 = vmatpush1.bf16.msra.mxu0 %v3190
    %6129 = vmatprep.subr.bf16.mxu0 %v3199
    %6130 = vmatpush1.bf16.msra.mxu0 %v3198
    %6131 = vmatprep.subr.bf16.mxu0 %v3207
    %6132 = vmatpush1.bf16.msra.mxu0 %v3206
    %6133 = vmatprep.subr.bf16.mxu0 %v3215
    %6134 = vmatpush1.bf16.msra.mxu0 %v3214
    %6135 = vmatprep.subr.bf16.mxu0 %v3223
    %6136 = vmatpush1.bf16.msra.mxu0 %v3222
    %6137 = vmatprep.subr.bf16.mxu0 %v3231
    %6138 = vmatpush1.bf16.msra.mxu0 %v3230
    %6139 = vmatprep.subr.bf16.mxu0 %v3239
    %6140 = vmatpush1.bf16.msra.mxu0 %v3238
    %6141 = vmatprep.subr.bf16.mxu0 %v3247
    %6142 = vmatpush1.bf16.msra.mxu0 %v3246
    %6143 = vmatprep.subr.bf16.mxu0 %v3255
    %6144 = vmatpush1.bf16.msra.mxu0 %v3254
    %6145 = vmatprep.subr.bf16.mxu0 %v3263
    %6146 = vmatpush1.bf16.msra.mxu0 %v3262
    %6147 = vmatprep.mubr.bf16.mxu0 %v5909
    %6148 = vmatmul.mubr.bf16.gmra.mrb[0].mxu0 %v5908
    %v6149 = vpop.f32.mrb[0].mxu0
    %v6150 = vadd.f32 %v6109, %v6149
    %v6151 = vpop.f32.mrb[0].mxu0
    %v6152 = vadd.f32 %v6111, %v6151
    %v6153 = vpop.f32.mrb[0].mxu0
    %v6154 = vpop.f32.mrb[0].mxu0
    %6155 = vdwg.mxu0
    %6156 = vmatprep.subr.bf16.mxu0 %v3017
    %6157 = vmatpush1.bf16.msra.mxu0 %v3016
    %6158 = vmatprep.subr.bf16.mxu0 %v3025
    %6159 = vmatpush1.bf16.msra.mxu0 %v3024
    %6160 = vmatprep.subr.bf16.mxu0 %v3033
    %6161 = vmatpush1.bf16.msra.mxu0 %v3032
    %6162 = vmatprep.subr.bf16.mxu0 %v3041
    %6163 = vmatpush1.bf16.msra.mxu0 %v3040
    %6164 = vmatprep.subr.bf16.mxu0 %v3049
    %6165 = vmatpush1.bf16.msra.mxu0 %v3048
    %6166 = vmatprep.subr.bf16.mxu0 %v3057
    %6167 = vmatpush1.bf16.msra.mxu0 %v3056
    %6168 = vmatprep.subr.bf16.mxu0 %v3065
    %6169 = vmatpush1.bf16.msra.mxu0 %v3064
    %6170 = vmatprep.subr.bf16.mxu0 %v3073
    %6171 = vmatpush1.bf16.msra.mxu0 %v3072
    %6172 = vmatprep.subr.bf16.mxu0 %v3081
    %6173 = vmatpush1.bf16.msra.mxu0 %v3080
    %6174 = vmatprep.subr.bf16.mxu0 %v3089
    %6175 = vmatpush1.bf16.msra.mxu0 %v3088
    %6176 = vmatprep.subr.bf16.mxu0 %v3097
    %6177 = vmatpush1.bf16.msra.mxu0 %v3096
    %6178 = vmatprep.subr.bf16.mxu0 %v3105
    %6179 = vmatpush1.bf16.msra.mxu0 %v3104
    %6180 = vmatprep.subr.bf16.mxu0 %v3113
    %6181 = vmatpush1.bf16.msra.mxu0 %v3112
    %6182 = vmatprep.subr.bf16.mxu0 %v3121
    %6183 = vmatpush1.bf16.msra.mxu0 %v3120
    %6184 = vmatprep.subr.bf16.mxu0 %v3129
    %6185 = vmatpush1.bf16.msra.mxu0 %v3128
    %6186 = vmatprep.subr.bf16.mxu0 %v3137
    %6187 = vmatpush1.bf16.msra.mxu0 %v3136
    %6188 = vmatprep.mubr.bf16.mxu0 %v5907
    %6189 = vmatmul.mubr.bf16.gmra.mrb[0].mxu0 %v5906
    %v6190 = vpop.f32.mrb[0].mxu0
    %v6191 = vadd.f32 %v2229, %v6190
    %v6192 = vpop.f32.mrb[0].mxu0
    %v6193 = vadd.f32 %v2233, %v6192
    %v6194 = vpop.f32.mrb[0].mxu0
    %v6195 = vpop.f32.mrb[0].mxu0
    %6196 = vdwg.mxu0
    %6197 = vmatprep.subr.bf16.mxu0 %v3145
    %6198 = vmatpush1.bf16.msra.mxu0 %v3144
    %6199 = vmatprep.subr.bf16.mxu0 %v3153
    %6200 = vmatpush1.bf16.msra.mxu0 %v3152
    %6201 = vmatprep.subr.bf16.mxu0 %v3161
    %6202 = vmatpush1.bf16.msra.mxu0 %v3160
    %6203 = vmatprep.subr.bf16.mxu0 %v3169
    %6204 = vmatpush1.bf16.msra.mxu0 %v3168
    %6205 = vmatprep.subr.bf16.mxu0 %v3177
    %6206 = vmatpush1.bf16.msra.mxu0 %v3176
    %6207 = vmatprep.subr.bf16.mxu0 %v3185
    %6208 = vmatpush1.bf16.msra.mxu0 %v3184
    %6209 = vmatprep.subr.bf16.mxu0 %v3193
    %6210 = vmatpush1.bf16.msra.mxu0 %v3192
    %6211 = vmatprep.subr.bf16.mxu0 %v3201
    %6212 = vmatpush1.bf16.msra.mxu0 %v3200
    %6213 = vmatprep.subr.bf16.mxu0 %v3209
    %6214 = vmatpush1.bf16.msra.mxu0 %v3208
    %6215 = vmatprep.subr.bf16.mxu0 %v3217
    %6216 = vmatpush1.bf16.msra.mxu0 %v3216
    %6217 = vmatprep.subr.bf16.mxu0 %v3225
    %6218 = vmatpush1.bf16.msra.mxu0 %v3224
    %6219 = vmatprep.subr.bf16.mxu0 %v3233
    %6220 = vmatpush1.bf16.msra.mxu0 %v3232
    %6221 = vmatprep.subr.bf16.mxu0 %v3241
    %6222 = vmatpush1.bf16.msra.mxu0 %v3240
    %6223 = vmatprep.subr.bf16.mxu0 %v3249
    %6224 = vmatpush1.bf16.msra.mxu0 %v3248
    %6225 = vmatprep.subr.bf16.mxu0 %v3257
    %6226 = vmatpush1.bf16.msra.mxu0 %v3256
    %6227 = vmatprep.subr.bf16.mxu0 %v3265
    %6228 = vmatpush1.bf16.msra.mxu0 %v3264
    %6229 = vmatprep.mubr.bf16.mxu0 %v5909
    %6230 = vmatmul.mubr.bf16.gmra.mrb[0].mxu0 %v5908
    %v6231 = vpop.f32.mrb[0].mxu0
    %v6232 = vadd.f32 %v6191, %v6231
    %v6233 = vpop.f32.mrb[0].mxu0
    %v6234 = vadd.f32 %v6193, %v6233
    %v6235 = vpop.f32.mrb[0].mxu0
    %v6236 = vpop.f32.mrb[0].mxu0
    %6237 = vdwg.mxu0
    %v6238 = vsub.f32 0.0, %v5986
    %v6239 = vsub.f32 0.0, %v5988
    %v6240 = vsub.f32 0.0, %v6068
    %v6241 = vsub.f32 0.0, %v6070
    %v6242 = vmul.f32 %v6238, 1.442695
    %v6243 = vpow.pop %v6242
    %v6244 = vmul.f32 %v6239, 1.442695
    %v6245 = vpow.pop %v6244
    %v6246 = vmul.f32 %v6240, 1.442695
    %v6247 = vpow.pop %v6246
    %v6248 = vmul.f32 %v6241, 1.442695
    %v6249 = vpow.pop %v6248
    %v6250 = vadd.f32 %v6243, 1.0
    %v6251 = vadd.f32 %v6245, 1.0
    %v6252 = vadd.f32 %v6247, 1.0
    %v6253 = vadd.f32 %v6249, 1.0
    %v6254 = vrcp.pop %v6250
    %v6255 = vrcp.pop %v6251
    %v6256 = vrcp.pop %v6252
    %v6257 = vrcp.pop %v6253
    %v6258 = vtanh.pop %v6150
    %v6259 = vtanh.pop %v6152
    %v6260 = vsub.f32 0.0, %v6232
    %v6261 = vsub.f32 0.0, %v6234
    %v6262 = vmul.f32 %v6260, 1.442695
    %v6263 = vpow.pop %v6262
    %v6264 = vmul.f32 %v6261, 1.442695
    %v6265 = vpow.pop %v6264
    %v6266 = vadd.f32 %v6263, 1.0
    %v6267 = vadd.f32 %v6265, 1.0
    %v6268 = vrcp.pop %v6266
    %v6269 = vrcp.pop %v6267
    %v6270 = vmul.f32 %v6256, %v5677
    %v6271 = vmul.f32 %v6257, %v5678
    %v6272 = vmul.f32 %v6254, %v6258
    %v6273 = vmul.f32 %v6255, %v6259
    %v6274 = vadd.f32 %v6270, %v6272
    %v6275 = vadd.f32 %v6271, %v6273
    %v6276 = vtanh.pop %v6274
    %v6277 = vtanh.pop %v6275
    %v6278 = vmul.f32 %v6268, %v6276
    %v6279 = vmul.f32 %v6269, %v6277
    %s6280 = scalar_lea.vmem [#allocation2], 320
    %v6281 = vld [vmem:[%s6280] sm:$0xff]
    %v6282 = vld [vmem:[%s6280 + $0x8] sm:$0xff]
    %v6283 = vld [vmem:[%s6280 + $0x10] sm:$0xff]
    %v6284 = vld [vmem:[%s6280 + $0x18] sm:$0xff]
    %v6285 = vld [vmem:[%s6280 + $0x20] sm:$0xff]
    %v6286 = vld [vmem:[%s6280 + $0x28] sm:$0xff]
    %v6287 = vld [vmem:[%s6280 + $0x30] sm:$0xff]
    %v6288 = vld [vmem:[%s6280 + $0x38] sm:$0xff]
    %6289 = vmatprep.subr.bf16.mxu0 %v1465
    %6290 = vmatpush1.bf16.msra.mxu0 %v1464
    %6291 = vmatprep.subr.bf16.mxu0 %v1473
    %6292 = vmatpush1.bf16.msra.mxu0 %v1472
    %6293 = vmatprep.subr.bf16.mxu0 %v1481
    %6294 = vmatpush1.bf16.msra.mxu0 %v1480
    %6295 = vmatprep.subr.bf16.mxu0 %v1489
    %6296 = vmatpush1.bf16.msra.mxu0 %v1488
    %6297 = vmatprep.subr.bf16.mxu0 %v1497
    %6298 = vmatpush1.bf16.msra.mxu0 %v1496
    %6299 = vmatprep.subr.bf16.mxu0 %v1505
    %6300 = vmatpush1.bf16.msra.mxu0 %v1504
    %6301 = vmatprep.subr.bf16.mxu0 %v1513
    %6302 = vmatpush1.bf16.msra.mxu0 %v1512
    %6303 = vmatprep.subr.bf16.mxu0 %v1521
    %6304 = vmatpush1.bf16.msra.mxu0 %v1520
    %6305 = vmatprep.subr.bf16.mxu0 %v1529
    %6306 = vmatpush1.bf16.msra.mxu0 %v1528
    %6307 = vmatprep.subr.bf16.mxu0 %v1537
    %6308 = vmatpush1.bf16.msra.mxu0 %v1536
    %6309 = vmatprep.subr.bf16.mxu0 %v1545
    %6310 = vmatpush1.bf16.msra.mxu0 %v1544
    %6311 = vmatprep.subr.bf16.mxu0 %v1553
    %6312 = vmatpush1.bf16.msra.mxu0 %v1552
    %6313 = vmatprep.subr.bf16.mxu0 %v1561
    %6314 = vmatpush1.bf16.msra.mxu0 %v1560
    %6315 = vmatprep.subr.bf16.mxu0 %v1569
    %6316 = vmatpush1.bf16.msra.mxu0 %v1568
    %6317 = vmatprep.subr.bf16.mxu0 %v1577
    %6318 = vmatpush1.bf16.msra.mxu0 %v1576
    %6319 = vmatprep.subr.bf16.mxu0 %v1585
    %6320 = vmatpush1.bf16.msra.mxu0 %v1584
    %6321 = vmatprep.mubr.bf16.mxu0 %v5907
    %6322 = vmatmul.mubr.bf16.gmra.mrb[0].mxu0 %v5906
    %v6323 = vpop.f32.mrb[0].mxu0
    %v6324 = vadd.f32 0.0, %v6323
    %v6325 = vpop.f32.mrb[0].mxu0
    %v6326 = vadd.f32 0.0, %v6325
    %v6327 = vpop.f32.mrb[0].mxu0
    %v6328 = vpop.f32.mrb[0].mxu0
    %6329 = vdwg.mxu0
    %6330 = vmatprep.subr.bf16.mxu0 %v1467
    %6331 = vmatpush1.bf16.msra.mxu0 %v1466
    %6332 = vmatprep.subr.bf16.mxu0 %v1475
    %6333 = vmatpush1.bf16.msra.mxu0 %v1474
    %6334 = vmatprep.subr.bf16.mxu0 %v1483
    %6335 = vmatpush1.bf16.msra.mxu0 %v1482
    %6336 = vmatprep.subr.bf16.mxu0 %v1491
    %6337 = vmatpush1.bf16.msra.mxu0 %v1490
    %6338 = vmatprep.subr.bf16.mxu0 %v1499
    %6339 = vmatpush1.bf16.msra.mxu0 %v1498
    %6340 = vmatprep.subr.bf16.mxu0 %v1507
    %6341 = vmatpush1.bf16.msra.mxu0 %v1506
    %6342 = vmatprep.subr.bf16.mxu0 %v1515
    %6343 = vmatpush1.bf16.msra.mxu0 %v1514
    %6344 = vmatprep.subr.bf16.mxu0 %v1523
    %6345 = vmatpush1.bf16.msra.mxu0 %v1522
    %6346 = vmatprep.subr.bf16.mxu0 %v1531
    %6347 = vmatpush1.bf16.msra.mxu0 %v1530
    %6348 = vmatprep.subr.bf16.mxu0 %v1539
    %6349 = vmatpush1.bf16.msra.mxu0 %v1538
    %6350 = vmatprep.subr.bf16.mxu0 %v1547
    %6351 = vmatpush1.bf16.msra.mxu0 %v1546
    %6352 = vmatprep.subr.bf16.mxu0 %v1555
    %6353 = vmatpush1.bf16.msra.mxu0 %v1554
    %6354 = vmatprep.subr.bf16.mxu0 %v1563
    %6355 = vmatpush1.bf16.msra.mxu0 %v1562
    %6356 = vmatprep.subr.bf16.mxu0 %v1571
    %6357 = vmatpush1.bf16.msra.mxu0 %v1570
    %6358 = vmatprep.subr.bf16.mxu0 %v1579
    %6359 = vmatpush1.bf16.msra.mxu0 %v1578
    %6360 = vmatprep.subr.bf16.mxu0 %v1587
    %6361 = vmatpush1.bf16.msra.mxu0 %v1586
    %6362 = vmatprep.mubr.bf16.mxu0 %v5907
    %6363 = vmatmul.mubr.bf16.gmra.mrb[0].mxu0 %v5906
    %v6364 = vpop.f32.mrb[0].mxu0
    %v6365 = vadd.f32 0.0, %v6364
    %v6366 = vpop.f32.mrb[0].mxu0
    %v6367 = vadd.f32 0.0, %v6366
    %v6368 = vpop.f32.mrb[0].mxu0
    %v6369 = vpop.f32.mrb[0].mxu0
    %6370 = vdwg.mxu0
    %6371 = vmatprep.subr.bf16.mxu0 %v1469
    %6372 = vmatpush1.bf16.msra.mxu0 %v1468
    %6373 = vmatprep.subr.bf16.mxu0 %v1477
    %6374 = vmatpush1.bf16.msra.mxu0 %v1476
    %6375 = vmatprep.subr.bf16.mxu0 %v1485
    %6376 = vmatpush1.bf16.msra.mxu0 %v1484
    %6377 = vmatprep.subr.bf16.mxu0 %v1493
    %6378 = vmatpush1.bf16.msra.mxu0 %v1492
    %6379 = vmatprep.subr.bf16.mxu0 %v1501
    %6380 = vmatpush1.bf16.msra.mxu0 %v1500
    %6381 = vmatprep.subr.bf16.mxu0 %v1509
    %6382 = vmatpush1.bf16.msra.mxu0 %v1508
    %6383 = vmatprep.subr.bf16.mxu0 %v1517
    %6384 = vmatpush1.bf16.msra.mxu0 %v1516
    %6385 = vmatprep.subr.bf16.mxu0 %v1525
    %6386 = vmatpush1.bf16.msra.mxu0 %v1524
    %6387 = vmatprep.subr.bf16.mxu0 %v1533
    %6388 = vmatpush1.bf16.msra.mxu0 %v1532
    %6389 = vmatprep.subr.bf16.mxu0 %v1541
    %6390 = vmatpush1.bf16.msra.mxu0 %v1540
    %6391 = vmatprep.subr.bf16.mxu0 %v1549
    %6392 = vmatpush1.bf16.msra.mxu0 %v1548
    %6393 = vmatprep.subr.bf16.mxu0 %v1557
    %6394 = vmatpush1.bf16.msra.mxu0 %v1556
    %6395 = vmatprep.subr.bf16.mxu0 %v1565
    %6396 = vmatpush1.bf16.msra.mxu0 %v1564
    %6397 = vmatprep.subr.bf16.mxu0 %v1573
    %6398 = vmatpush1.bf16.msra.mxu0 %v1572
    %6399 = vmatprep.subr.bf16.mxu0 %v1581
    %6400 = vmatpush1.bf16.msra.mxu0 %v1580
    %6401 = vmatprep.subr.bf16.mxu0 %v1589
    %6402 = vmatpush1.bf16.msra.mxu0 %v1588
    %6403 = vmatprep.mubr.bf16.mxu0 %v5907
    %6404 = vmatmul.mubr.bf16.gmra.mrb[0].mxu0 %v5906
    %v6405 = vpop.f32.mrb[0].mxu0
    %v6406 = vadd.f32 0.0, %v6405
    %v6407 = vpop.f32.mrb[0].mxu0
    %v6408 = vadd.f32 0.0, %v6407
    %v6409 = vpop.f32.mrb[0].mxu0
    %v6410 = vpop.f32.mrb[0].mxu0
    %6411 = vdwg.mxu0
    %6412 = vmatprep.subr.bf16.mxu0 %v1471
    %6413 = vmatpush1.bf16.msra.mxu0 %v1470
    %6414 = vmatprep.subr.bf16.mxu0 %v1479
    %6415 = vmatpush1.bf16.msra.mxu0 %v1478
    %6416 = vmatprep.subr.bf16.mxu0 %v1487
    %6417 = vmatpush1.bf16.msra.mxu0 %v1486
    %6418 = vmatprep.subr.bf16.mxu0 %v1495
    %6419 = vmatpush1.bf16.msra.mxu0 %v1494
    %6420 = vmatprep.subr.bf16.mxu0 %v1503
    %6421 = vmatpush1.bf16.msra.mxu0 %v1502
    %6422 = vmatprep.subr.bf16.mxu0 %v1511
    %6423 = vmatpush1.bf16.msra.mxu0 %v1510
    %6424 = vmatprep.subr.bf16.mxu0 %v1519
    %6425 = vmatpush1.bf16.msra.mxu0 %v1518
    %6426 = vmatprep.subr.bf16.mxu0 %v1527
    %6427 = vmatpush1.bf16.msra.mxu0 %v1526
    %6428 = vmatprep.subr.bf16.mxu0 %v1535
    %6429 = vmatpush1.bf16.msra.mxu0 %v1534
    %6430 = vmatprep.subr.bf16.mxu0 %v1543
    %6431 = vmatpush1.bf16.msra.mxu0 %v1542
    %6432 = vmatprep.subr.bf16.mxu0 %v1551
    %6433 = vmatpush1.bf16.msra.mxu0 %v1550
    %6434 = vmatprep.subr.bf16.mxu0 %v1559
    %6435 = vmatpush1.bf16.msra.mxu0 %v1558
    %6436 = vmatprep.subr.bf16.mxu0 %v1567
    %6437 = vmatpush1.bf16.msra.mxu0 %v1566
    %6438 = vmatprep.subr.bf16.mxu0 %v1575
    %6439 = vmatpush1.bf16.msra.mxu0 %v1574
    %6440 = vmatprep.subr.bf16.mxu0 %v1583
    %6441 = vmatpush1.bf16.msra.mxu0 %v1582
    %6442 = vmatprep.subr.bf16.mxu0 %v1591
    %6443 = vmatpush1.bf16.msra.mxu0 %v1590
    %6444 = vmatprep.mubr.bf16.mxu0 %v5907
    %6445 = vmatmul.mubr.bf16.gmra.mrb[0].mxu0 %v5906
    %v6446 = vpop.f32.mrb[0].mxu0
    %v6447 = vadd.f32 0.0, %v6446
    %v6448 = vpop.f32.mrb[0].mxu0
    %v6449 = vadd.f32 0.0, %v6448
    %v6450 = vpop.f32.mrb[0].mxu0
    %v6451 = vpop.f32.mrb[0].mxu0
    %6452 = vdwg.mxu0
    %v6453 = vadd.f32 %v6281, %v6324
    %v6454 = vadd.f32 %v6282, %v6326
    %v6455 = vadd.f32 %v6283, %v6365
    %v6456 = vadd.f32 %v6284, %v6367
    %v6457 = vadd.f32 %v6285, %v6406
    %v6458 = vadd.f32 %v6286, %v6408
    %v6459 = vadd.f32 %v6287, %v6447
    %v6460 = vadd.f32 %v6288, %v6449
    %v6461 = vsub.f32 0.0, %v6453
    %v6462 = vsub.f32 0.0, %v6454
    %v6463 = vsub.f32 0.0, %v6455
    %v6464 = vsub.f32 0.0, %v6456
    %v6465 = vmul.f32 %v6461, 1.442695
    %v6466 = vpow.pop %v6465
    %v6467 = vmul.f32 %v6462, 1.442695
    %v6468 = vpow.pop %v6467
    %v6469 = vmul.f32 %v6463, 1.442695
    %v6470 = vpow.pop %v6469
    %v6471 = vmul.f32 %v6464, 1.442695
    %v6472 = vpow.pop %v6471
    %v6473 = vadd.f32 %v6466, 1.0
    %v6474 = vadd.f32 %v6468, 1.0
    %v6475 = vadd.f32 %v6470, 1.0
    %v6476 = vadd.f32 %v6472, 1.0
    %v6477 = vrcp.pop %v6473
    %v6478 = vrcp.pop %v6474
    %v6479 = vrcp.pop %v6475
    %v6480 = vrcp.pop %v6476
    %v6481 = vtanh.pop %v6457
    %v6482 = vtanh.pop %v6458
    %v6483 = vsub.f32 0.0, %v6459
    %v6484 = vsub.f32 0.0, %v6460
    %v6485 = vmul.f32 %v6483, 1.442695
    %v6486 = vpow.pop %v6485
    %v6487 = vmul.f32 %v6484, 1.442695
    %v6488 = vpow.pop %v6487
    %v6489 = vadd.f32 %v6486, 1.0
    %v6490 = vadd.f32 %v6488, 1.0
    %v6491 = vrcp.pop %v6489
    %v6492 = vrcp.pop %v6490
    %v6493 = vmul.f32 %v6479, %v5900
    %v6494 = vmul.f32 %v6480, %v5901
    %v6495 = vmul.f32 %v6477, %v6481
    %v6496 = vmul.f32 %v6478, %v6482
    %v6497 = vadd.f32 %v6493, %v6495
    %v6498 = vadd.f32 %v6494, %v6496
    %v6499 = vtanh.pop %v6497
    %v6500 = vtanh.pop %v6498
    %v6501 = vmul.f32 %v6491, %v6499
    %v6502 = vmul.f32 %v6492, %v6500
    %v6503 = vpack.c.bf16 %v6501, %v6501
    %v6504 = vpack.c.bf16 %v6502, %v6502
    %v6505 = vpack.c.bf16 %v6278, %v6278
    %v6506 = vpack.c.bf16 %v6279, %v6279
    %6507 = vmatprep.subr.bf16.mxu0 %v3011
    %6508 = vmatpush1.bf16.msra.mxu0 %v3010
    %6509 = vmatprep.subr.bf16.mxu0 %v3019
    %6510 = vmatpush1.bf16.msra.mxu0 %v3018
    %6511 = vmatprep.subr.bf16.mxu0 %v3027
    %6512 = vmatpush1.bf16.msra.mxu0 %v3026
    %6513 = vmatprep.subr.bf16.mxu0 %v3035
    %6514 = vmatpush1.bf16.msra.mxu0 %v3034
    %6515 = vmatprep.subr.bf16.mxu0 %v3043
    %6516 = vmatpush1.bf16.msra.mxu0 %v3042
    %6517 = vmatprep.subr.bf16.mxu0 %v3051
    %6518 = vmatpush1.bf16.msra.mxu0 %v3050
    %6519 = vmatprep.subr.bf16.mxu0 %v3059
    %6520 = vmatpush1.bf16.msra.mxu0 %v3058
    %6521 = vmatprep.subr.bf16.mxu0 %v3067
    %6522 = vmatpush1.bf16.msra.mxu0 %v3066
    %6523 = vmatprep.subr.bf16.mxu0 %v3075
    %6524 = vmatpush1.bf16.msra.mxu0 %v3074
    %6525 = vmatprep.subr.bf16.mxu0 %v3083
    %6526 = vmatpush1.bf16.msra.mxu0 %v3082
    %6527 = vmatprep.subr.bf16.mxu0 %v3091
    %6528 = vmatpush1.bf16.msra.mxu0 %v3090
    %6529 = vmatprep.subr.bf16.mxu0 %v3099
    %6530 = vmatpush1.bf16.msra.mxu0 %v3098
    %6531 = vmatprep.subr.bf16.mxu0 %v3107
    %6532 = vmatpush1.bf16.msra.mxu0 %v3106
    %6533 = vmatprep.subr.bf16.mxu0 %v3115
    %6534 = vmatpush1.bf16.msra.mxu0 %v3114
    %6535 = vmatprep.subr.bf16.mxu0 %v3123
    %6536 = vmatpush1.bf16.msra.mxu0 %v3122
    %6537 = vmatprep.subr.bf16.mxu0 %v3131
    %6538 = vmatpush1.bf16.msra.mxu0 %v3130
    %6539 = vmatprep.mubr.bf16.mxu0 %v6504
    %6540 = vmatmul.mubr.bf16.gmra.mrb[0].mxu0 %v6503
    %v6541 = vpop.f32.mrb[0].mxu0
    %v6542 = vadd.f32 %v2205, %v6541
    %v6543 = vpop.f32.mrb[0].mxu0
    %v6544 = vadd.f32 %v2209, %v6543
    %v6545 = vpop.f32.mrb[0].mxu0
    %v6546 = vpop.f32.mrb[0].mxu0
    %6547 = vdwg.mxu0
    %6548 = vmatprep.subr.bf16.mxu0 %v3139
    %6549 = vmatpush1.bf16.msra.mxu0 %v3138
    %6550 = vmatprep.subr.bf16.mxu0 %v3147
    %6551 = vmatpush1.bf16.msra.mxu0 %v3146
    %6552 = vmatprep.subr.bf16.mxu0 %v3155
    %6553 = vmatpush1.bf16.msra.mxu0 %v3154
    %6554 = vmatprep.subr.bf16.mxu0 %v3163
    %6555 = vmatpush1.bf16.msra.mxu0 %v3162
    %6556 = vmatprep.subr.bf16.mxu0 %v3171
    %6557 = vmatpush1.bf16.msra.mxu0 %v3170
    %6558 = vmatprep.subr.bf16.mxu0 %v3179
    %6559 = vmatpush1.bf16.msra.mxu0 %v3178
    %6560 = vmatprep.subr.bf16.mxu0 %v3187
    %6561 = vmatpush1.bf16.msra.mxu0 %v3186
    %6562 = vmatprep.subr.bf16.mxu0 %v3195
    %6563 = vmatpush1.bf16.msra.mxu0 %v3194
    %6564 = vmatprep.subr.bf16.mxu0 %v3203
    %6565 = vmatpush1.bf16.msra.mxu0 %v3202
    %6566 = vmatprep.subr.bf16.mxu0 %v3211
    %6567 = vmatpush1.bf16.msra.mxu0 %v3210
    %6568 = vmatprep.subr.bf16.mxu0 %v3219
    %6569 = vmatpush1.bf16.msra.mxu0 %v3218
    %6570 = vmatprep.subr.bf16.mxu0 %v3227
    %6571 = vmatpush1.bf16.msra.mxu0 %v3226
    %6572 = vmatprep.subr.bf16.mxu0 %v3235
    %6573 = vmatpush1.bf16.msra.mxu0 %v3234
    %6574 = vmatprep.subr.bf16.mxu0 %v3243
    %6575 = vmatpush1.bf16.msra.mxu0 %v3242
    %6576 = vmatprep.subr.bf16.mxu0 %v3251
    %6577 = vmatpush1.bf16.msra.mxu0 %v3250
    %6578 = vmatprep.subr.bf16.mxu0 %v3259
    %6579 = vmatpush1.bf16.msra.mxu0 %v3258
    %6580 = vmatprep.mubr.bf16.mxu0 %v6506
    %6581 = vmatmul.mubr.bf16.gmra.mrb[0].mxu0 %v6505
    %v6582 = vpop.f32.mrb[0].mxu0
    %v6583 = vadd.f32 %v6542, %v6582
    %v6584 = vpop.f32.mrb[0].mxu0
    %v6585 = vadd.f32 %v6544, %v6584
    %v6586 = vpop.f32.mrb[0].mxu0
    %v6587 = vpop.f32.mrb[0].mxu0
    %6588 = vdwg.mxu0
    %6589 = vmatprep.subr.bf16.mxu0 %v3013
    %6590 = vmatpush1.bf16.msra.mxu0 %v3012
    %6591 = vmatprep.subr.bf16.mxu0 %v3021
    %6592 = vmatpush1.bf16.msra.mxu0 %v3020
    %6593 = vmatprep.subr.bf16.mxu0 %v3029
    %6594 = vmatpush1.bf16.msra.mxu0 %v3028
    %6595 = vmatprep.subr.bf16.mxu0 %v3037
    %6596 = vmatpush1.bf16.msra.mxu0 %v3036
    %6597 = vmatprep.subr.bf16.mxu0 %v3045
    %6598 = vmatpush1.bf16.msra.mxu0 %v3044
    %6599 = vmatprep.subr.bf16.mxu0 %v3053
    %6600 = vmatpush1.bf16.msra.mxu0 %v3052
    %6601 = vmatprep.subr.bf16.mxu0 %v3061
    %6602 = vmatpush1.bf16.msra.mxu0 %v3060
    %6603 = vmatprep.subr.bf16.mxu0 %v3069
    %6604 = vmatpush1.bf16.msra.mxu0 %v3068
    %6605 = vmatprep.subr.bf16.mxu0 %v3077
    %6606 = vmatpush1.bf16.msra.mxu0 %v3076
    %6607 = vmatprep.subr.bf16.mxu0 %v3085
    %6608 = vmatpush1.bf16.msra.mxu0 %v3084
    %6609 = vmatprep.subr.bf16.mxu0 %v3093
    %6610 = vmatpush1.bf16.msra.mxu0 %v3092
    %6611 = vmatprep.subr.bf16.mxu0 %v3101
    %6612 = vmatpush1.bf16.msra.mxu0 %v3100
    %6613 = vmatprep.subr.bf16.mxu0 %v3109
    %6614 = vmatpush1.bf16.msra.mxu0 %v3108
    %6615 = vmatprep.subr.bf16.mxu0 %v3117
    %6616 = vmatpush1.bf16.msra.mxu0 %v3116
    %6617 = vmatprep.subr.bf16.mxu0 %v3125
    %6618 = vmatpush1.bf16.msra.mxu0 %v3124
    %6619 = vmatprep.subr.bf16.mxu0 %v3133
    %6620 = vmatpush1.bf16.msra.mxu0 %v3132
    %6621 = vmatprep.mubr.bf16.mxu0 %v6504
    %6622 = vmatmul.mubr.bf16.gmra.mrb[0].mxu0 %v6503
    %v6623 = vpop.f32.mrb[0].mxu0
    %v6624 = vadd.f32 %v2213, %v6623
    %v6625 = vpop.f32.mrb[0].mxu0
    %v6626 = vadd.f32 %v2217, %v6625
    %v6627 = vpop.f32.mrb[0].mxu0
    %v6628 = vpop.f32.mrb[0].mxu0
    %6629 = vdwg.mxu0
    %6630 = vmatprep.subr.bf16.mxu0 %v3141
    %6631 = vmatpush1.bf16.msra.mxu0 %v3140
    %6632 = vmatprep.subr.bf16.mxu0 %v3149
    %6633 = vmatpush1.bf16.msra.mxu0 %v3148
    %6634 = vmatprep.subr.bf16.mxu0 %v3157
    %6635 = vmatpush1.bf16.msra.mxu0 %v3156
    %6636 = vmatprep.subr.bf16.mxu0 %v3165
    %6637 = vmatpush1.bf16.msra.mxu0 %v3164
    %6638 = vmatprep.subr.bf16.mxu0 %v3173
    %6639 = vmatpush1.bf16.msra.mxu0 %v3172
    %6640 = vmatprep.subr.bf16.mxu0 %v3181
    %6641 = vmatpush1.bf16.msra.mxu0 %v3180
    %6642 = vmatprep.subr.bf16.mxu0 %v3189
    %6643 = vmatpush1.bf16.msra.mxu0 %v3188
    %6644 = vmatprep.subr.bf16.mxu0 %v3197
    %6645 = vmatpush1.bf16.msra.mxu0 %v3196
    %6646 = vmatprep.subr.bf16.mxu0 %v3205
    %6647 = vmatpush1.bf16.msra.mxu0 %v3204
    %6648 = vmatprep.subr.bf16.mxu0 %v3213
    %6649 = vmatpush1.bf16.msra.mxu0 %v3212
    %6650 = vmatprep.subr.bf16.mxu0 %v3221
    %6651 = vmatpush1.bf16.msra.mxu0 %v3220
    %6652 = vmatprep.subr.bf16.mxu0 %v3229
    %6653 = vmatpush1.bf16.msra.mxu0 %v3228
    %6654 = vmatprep.subr.bf16.mxu0 %v3237
    %6655 = vmatpush1.bf16.msra.mxu0 %v3236
    %6656 = vmatprep.subr.bf16.mxu0 %v3245
    %6657 = vmatpush1.bf16.msra.mxu0 %v3244
    %6658 = vmatprep.subr.bf16.mxu0 %v3253
    %6659 = vmatpush1.bf16.msra.mxu0 %v3252
    %6660 = vmatprep.subr.bf16.mxu0 %v3261
    %6661 = vmatpush1.bf16.msra.mxu0 %v3260
    %6662 = vmatprep.mubr.bf16.mxu0 %v6506
    %6663 = vmatmul.mubr.bf16.gmra.mrb[0].mxu0 %v6505
    %v6664 = vpop.f32.mrb[0].mxu0
    %v6665 = vadd.f32 %v6624, %v6664
    %v6666 = vpop.f32.mrb[0].mxu0
    %v6667 = vadd.f32 %v6626, %v6666
    %v6668 = vpop.f32.mrb[0].mxu0
    %v6669 = vpop.f32.mrb[0].mxu0
    %6670 = vdwg.mxu0
    %6671 = vmatprep.subr.bf16.mxu0 %v3015
    %6672 = vmatpush1.bf16.msra.mxu0 %v3014
    %6673 = vmatprep.subr.bf16.mxu0 %v3023
    %6674 = vmatpush1.bf16.msra.mxu0 %v3022
    %6675 = vmatprep.subr.bf16.mxu0 %v3031
    %6676 = vmatpush1.bf16.msra.mxu0 %v3030
    %6677 = vmatprep.subr.bf16.mxu0 %v3039
    %6678 = vmatpush1.bf16.msra.mxu0 %v3038
    %6679 = vmatprep.subr.bf16.mxu0 %v3047
    %6680 = vmatpush1.bf16.msra.mxu0 %v3046
    %6681 = vmatprep.subr.bf16.mxu0 %v3055
    %6682 = vmatpush1.bf16.msra.mxu0 %v3054
    %6683 = vmatprep.subr.bf16.mxu0 %v3063
    %6684 = vmatpush1.bf16.msra.mxu0 %v3062
    %6685 = vmatprep.subr.bf16.mxu0 %v3071
    %6686 = vmatpush1.bf16.msra.mxu0 %v3070
    %6687 = vmatprep.subr.bf16.mxu0 %v3079
    %6688 = vmatpush1.bf16.msra.mxu0 %v3078
    %6689 = vmatprep.subr.bf16.mxu0 %v3087
    %6690 = vmatpush1.bf16.msra.mxu0 %v3086
    %6691 = vmatprep.subr.bf16.mxu0 %v3095
    %6692 = vmatpush1.bf16.msra.mxu0 %v3094
    %6693 = vmatprep.subr.bf16.mxu0 %v3103
    %6694 = vmatpush1.bf16.msra.mxu0 %v3102
    %6695 = vmatprep.subr.bf16.mxu0 %v3111
    %6696 = vmatpush1.bf16.msra.mxu0 %v3110
    %6697 = vmatprep.subr.bf16.mxu0 %v3119
    %6698 = vmatpush1.bf16.msra.mxu0 %v3118
    %6699 = vmatprep.subr.bf16.mxu0 %v3127
    %6700 = vmatpush1.bf16.msra.mxu0 %v3126
    %6701 = vmatprep.subr.bf16.mxu0 %v3135
    %6702 = vmatpush1.bf16.msra.mxu0 %v3134
    %6703 = vmatprep.mubr.bf16.mxu0 %v6504
    %6704 = vmatmul.mubr.bf16.gmra.mrb[0].mxu0 %v6503
    %v6705 = vpop.f32.mrb[0].mxu0
    %v6706 = vadd.f32 %v2221, %v6705
    %v6707 = vpop.f32.mrb[0].mxu0
    %v6708 = vadd.f32 %v2225, %v6707
    %v6709 = vpop.f32.mrb[0].mxu0
    %v6710 = vpop.f32.mrb[0].mxu0
    %6711 = vdwg.mxu0
    %6712 = vmatprep.subr.bf16.mxu0 %v3143
    %6713 = vmatpush1.bf16.msra.mxu0 %v3142
    %6714 = vmatprep.subr.bf16.mxu0 %v3151
    %6715 = vmatpush1.bf16.msra.mxu0 %v3150
    %6716 = vmatprep.subr.bf16.mxu0 %v3159
    %6717 = vmatpush1.bf16.msra.mxu0 %v3158
    %6718 = vmatprep.subr.bf16.mxu0 %v3167
    %6719 = vmatpush1.bf16.msra.mxu0 %v3166
    %6720 = vmatprep.subr.bf16.mxu0 %v3175
    %6721 = vmatpush1.bf16.msra.mxu0 %v3174
    %6722 = vmatprep.subr.bf16.mxu0 %v3183
    %6723 = vmatpush1.bf16.msra.mxu0 %v3182
    %6724 = vmatprep.subr.bf16.mxu0 %v3191
    %6725 = vmatpush1.bf16.msra.mxu0 %v3190
    %6726 = vmatprep.subr.bf16.mxu0 %v3199
    %6727 = vmatpush1.bf16.msra.mxu0 %v3198
    %6728 = vmatprep.subr.bf16.mxu0 %v3207
    %6729 = vmatpush1.bf16.msra.mxu0 %v3206
    %6730 = vmatprep.subr.bf16.mxu0 %v3215
    %6731 = vmatpush1.bf16.msra.mxu0 %v3214
    %6732 = vmatprep.subr.bf16.mxu0 %v3223
    %6733 = vmatpush1.bf16.msra.mxu0 %v3222
    %6734 = vmatprep.subr.bf16.mxu0 %v3231
    %6735 = vmatpush1.bf16.msra.mxu0 %v3230
    %6736 = vmatprep.subr.bf16.mxu0 %v3239
    %6737 = vmatpush1.bf16.msra.mxu0 %v3238
    %6738 = vmatprep.subr.bf16.mxu0 %v3247
    %6739 = vmatpush1.bf16.msra.mxu0 %v3246
    %6740 = vmatprep.subr.bf16.mxu0 %v3255
    %6741 = vmatpush1.bf16.msra.mxu0 %v3254
    %6742 = vmatprep.subr.bf16.mxu0 %v3263
    %6743 = vmatpush1.bf16.msra.mxu0 %v3262
    %6744 = vmatprep.mubr.bf16.mxu0 %v6506
    %6745 = vmatmul.mubr.bf16.gmra.mrb[0].mxu0 %v6505
    %v6746 = vpop.f32.mrb[0].mxu0
    %v6747 = vadd.f32 %v6706, %v6746
    %v6748 = vpop.f32.mrb[0].mxu0
    %v6749 = vadd.f32 %v6708, %v6748
    %v6750 = vpop.f32.mrb[0].mxu0
    %v6751 = vpop.f32.mrb[0].mxu0
    %6752 = vdwg.mxu0
    %6753 = vmatprep.subr.bf16.mxu0 %v3017
    %6754 = vmatpush1.bf16.msra.mxu0 %v3016
    %6755 = vmatprep.subr.bf16.mxu0 %v3025
    %6756 = vmatpush1.bf16.msra.mxu0 %v3024
    %6757 = vmatprep.subr.bf16.mxu0 %v3033
    %6758 = vmatpush1.bf16.msra.mxu0 %v3032
    %6759 = vmatprep.subr.bf16.mxu0 %v3041
    %6760 = vmatpush1.bf16.msra.mxu0 %v3040
    %6761 = vmatprep.subr.bf16.mxu0 %v3049
    %6762 = vmatpush1.bf16.msra.mxu0 %v3048
    %6763 = vmatprep.subr.bf16.mxu0 %v3057
    %6764 = vmatpush1.bf16.msra.mxu0 %v3056
    %6765 = vmatprep.subr.bf16.mxu0 %v3065
    %6766 = vmatpush1.bf16.msra.mxu0 %v3064
    %6767 = vmatprep.subr.bf16.mxu0 %v3073
    %6768 = vmatpush1.bf16.msra.mxu0 %v3072
    %6769 = vmatprep.subr.bf16.mxu0 %v3081
    %6770 = vmatpush1.bf16.msra.mxu0 %v3080
    %6771 = vmatprep.subr.bf16.mxu0 %v3089
    %6772 = vmatpush1.bf16.msra.mxu0 %v3088
    %6773 = vmatprep.subr.bf16.mxu0 %v3097
    %6774 = vmatpush1.bf16.msra.mxu0 %v3096
    %6775 = vmatprep.subr.bf16.mxu0 %v3105
    %6776 = vmatpush1.bf16.msra.mxu0 %v3104
    %6777 = vmatprep.subr.bf16.mxu0 %v3113
    %6778 = vmatpush1.bf16.msra.mxu0 %v3112
    %6779 = vmatprep.subr.bf16.mxu0 %v3121
    %6780 = vmatpush1.bf16.msra.mxu0 %v3120
    %6781 = vmatprep.subr.bf16.mxu0 %v3129
    %6782 = vmatpush1.bf16.msra.mxu0 %v3128
    %6783 = vmatprep.subr.bf16.mxu0 %v3137
    %6784 = vmatpush1.bf16.msra.mxu0 %v3136
    %6785 = vmatprep.mubr.bf16.mxu0 %v6504
    %6786 = vmatmul.mubr.bf16.gmra.mrb[0].mxu0 %v6503
    %v6787 = vpop.f32.mrb[0].mxu0
    %v6788 = vadd.f32 %v2229, %v6787
    %v6789 = vpop.f32.mrb[0].mxu0
    %v6790 = vadd.f32 %v2233, %v6789
    %v6791 = vpop.f32.mrb[0].mxu0
    %v6792 = vpop.f32.mrb[0].mxu0
    %6793 = vdwg.mxu0
    %6794 = vmatprep.subr.bf16.mxu0 %v3145
    %6795 = vmatpush1.bf16.msra.mxu0 %v3144
    %6796 = vmatprep.subr.bf16.mxu0 %v3153
    %6797 = vmatpush1.bf16.msra.mxu0 %v3152
    %6798 = vmatprep.subr.bf16.mxu0 %v3161
    %6799 = vmatpush1.bf16.msra.mxu0 %v3160
    %6800 = vmatprep.subr.bf16.mxu0 %v3169
    %6801 = vmatpush1.bf16.msra.mxu0 %v3168
    %6802 = vmatprep.subr.bf16.mxu0 %v3177
    %6803 = vmatpush1.bf16.msra.mxu0 %v3176
    %6804 = vmatprep.subr.bf16.mxu0 %v3185
    %6805 = vmatpush1.bf16.msra.mxu0 %v3184
    %6806 = vmatprep.subr.bf16.mxu0 %v3193
    %6807 = vmatpush1.bf16.msra.mxu0 %v3192
    %6808 = vmatprep.subr.bf16.mxu0 %v3201
    %6809 = vmatpush1.bf16.msra.mxu0 %v3200
    %6810 = vmatprep.subr.bf16.mxu0 %v3209
    %6811 = vmatpush1.bf16.msra.mxu0 %v3208
    %6812 = vmatprep.subr.bf16.mxu0 %v3217
    %6813 = vmatpush1.bf16.msra.mxu0 %v3216
    %6814 = vmatprep.subr.bf16.mxu0 %v3225
    %6815 = vmatpush1.bf16.msra.mxu0 %v3224
    %6816 = vmatprep.subr.bf16.mxu0 %v3233
    %6817 = vmatpush1.bf16.msra.mxu0 %v3232
    %6818 = vmatprep.subr.bf16.mxu0 %v3241
    %6819 = vmatpush1.bf16.msra.mxu0 %v3240
    %6820 = vmatprep.subr.bf16.mxu0 %v3249
    %6821 = vmatpush1.bf16.msra.mxu0 %v3248
    %6822 = vmatprep.subr.bf16.mxu0 %v3257
    %6823 = vmatpush1.bf16.msra.mxu0 %v3256
    %6824 = vmatprep.subr.bf16.mxu0 %v3265
    %6825 = vmatpush1.bf16.msra.mxu0 %v3264
    %6826 = vmatprep.mubr.bf16.mxu0 %v6506
    %6827 = vmatmul.mubr.bf16.gmra.mrb[0].mxu0 %v6505
    %v6828 = vpop.f32.mrb[0].mxu0
    %v6829 = vadd.f32 %v6788, %v6828
    %v6830 = vpop.f32.mrb[0].mxu0
    %v6831 = vadd.f32 %v6790, %v6830
    %v6832 = vpop.f32.mrb[0].mxu0
    %v6833 = vpop.f32.mrb[0].mxu0
    %6834 = vdwg.mxu0
    %v6835 = vsub.f32 0.0, %v6583
    %v6836 = vsub.f32 0.0, %v6585
    %v6837 = vsub.f32 0.0, %v6665
    %v6838 = vsub.f32 0.0, %v6667
    %v6839 = vmul.f32 %v6835, 1.442695
    %v6840 = vpow.pop %v6839
    %v6841 = vmul.f32 %v6836, 1.442695
    %v6842 = vpow.pop %v6841
    %v6843 = vmul.f32 %v6837, 1.442695
    %v6844 = vpow.pop %v6843
    %v6845 = vmul.f32 %v6838, 1.442695
    %v6846 = vpow.pop %v6845
    %v6847 = vadd.f32 %v6840, 1.0
    %v6848 = vadd.f32 %v6842, 1.0
    %v6849 = vadd.f32 %v6844, 1.0
    %v6850 = vadd.f32 %v6846, 1.0
    %v6851 = vrcp.pop %v6847
    %v6852 = vrcp.pop %v6848
    %v6853 = vrcp.pop %v6849
    %v6854 = vrcp.pop %v6850
    %v6855 = vtanh.pop %v6747
    %v6856 = vtanh.pop %v6749
    %v6857 = vsub.f32 0.0, %v6829
    %v6858 = vsub.f32 0.0, %v6831
    %v6859 = vmul.f32 %v6857, 1.442695
    %v6860 = vpow.pop %v6859
    %v6861 = vmul.f32 %v6858, 1.442695
    %v6862 = vpow.pop %v6861
    %v6863 = vadd.f32 %v6860, 1.0
    %v6864 = vadd.f32 %v6862, 1.0
    %v6865 = vrcp.pop %v6863
    %v6866 = vrcp.pop %v6864
    %v6867 = vmul.f32 %v6853, %v6274
    %v6868 = vmul.f32 %v6854, %v6275
    %v6869 = vmul.f32 %v6851, %v6855
    %v6870 = vmul.f32 %v6852, %v6856
    %v6871 = vadd.f32 %v6867, %v6869
    %v6872 = vadd.f32 %v6868, %v6870
    %v6873 = vtanh.pop %v6871
    %v6874 = vtanh.pop %v6872
    %v6875 = vmul.f32 %v6865, %v6873
    %v6876 = vmul.f32 %v6866, %v6874
    %s6877 = scalar_lea.vmem [#allocation2], 384
    %v6878 = vld [vmem:[%s6877] sm:$0xff]
    %v6879 = vld [vmem:[%s6877 + $0x8] sm:$0xff]
    %v6880 = vld [vmem:[%s6877 + $0x10] sm:$0xff]
    %v6881 = vld [vmem:[%s6877 + $0x18] sm:$0xff]
    %v6882 = vld [vmem:[%s6877 + $0x20] sm:$0xff]
    %v6883 = vld [vmem:[%s6877 + $0x28] sm:$0xff]
    %v6884 = vld [vmem:[%s6877 + $0x30] sm:$0xff]
    %v6885 = vld [vmem:[%s6877 + $0x38] sm:$0xff]
    %6886 = vmatprep.subr.bf16.mxu0 %v1465
    %6887 = vmatpush1.bf16.msra.mxu0 %v1464
    %6888 = vmatprep.subr.bf16.mxu0 %v1473
    %6889 = vmatpush1.bf16.msra.mxu0 %v1472
    %6890 = vmatprep.subr.bf16.mxu0 %v1481
    %6891 = vmatpush1.bf16.msra.mxu0 %v1480
    %6892 = vmatprep.subr.bf16.mxu0 %v1489
    %6893 = vmatpush1.bf16.msra.mxu0 %v1488
    %6894 = vmatprep.subr.bf16.mxu0 %v1497
    %6895 = vmatpush1.bf16.msra.mxu0 %v1496
    %6896 = vmatprep.subr.bf16.mxu0 %v1505
    %6897 = vmatpush1.bf16.msra.mxu0 %v1504
    %6898 = vmatprep.subr.bf16.mxu0 %v1513
    %6899 = vmatpush1.bf16.msra.mxu0 %v1512
    %6900 = vmatprep.subr.bf16.mxu0 %v1521
    %6901 = vmatpush1.bf16.msra.mxu0 %v1520
    %6902 = vmatprep.subr.bf16.mxu0 %v1529
    %6903 = vmatpush1.bf16.msra.mxu0 %v1528
    %6904 = vmatprep.subr.bf16.mxu0 %v1537
    %6905 = vmatpush1.bf16.msra.mxu0 %v1536
    %6906 = vmatprep.subr.bf16.mxu0 %v1545
    %6907 = vmatpush1.bf16.msra.mxu0 %v1544
    %6908 = vmatprep.subr.bf16.mxu0 %v1553
    %6909 = vmatpush1.bf16.msra.mxu0 %v1552
    %6910 = vmatprep.subr.bf16.mxu0 %v1561
    %6911 = vmatpush1.bf16.msra.mxu0 %v1560
    %6912 = vmatprep.subr.bf16.mxu0 %v1569
    %6913 = vmatpush1.bf16.msra.mxu0 %v1568
    %6914 = vmatprep.subr.bf16.mxu0 %v1577
    %6915 = vmatpush1.bf16.msra.mxu0 %v1576
    %6916 = vmatprep.subr.bf16.mxu0 %v1585
    %6917 = vmatpush1.bf16.msra.mxu0 %v1584
    %6918 = vmatprep.mubr.bf16.mxu0 %v6504
    %6919 = vmatmul.mubr.bf16.gmra.mrb[0].mxu0 %v6503
    %v6920 = vpop.f32.mrb[0].mxu0
    %v6921 = vadd.f32 0.0, %v6920
    %v6922 = vpop.f32.mrb[0].mxu0
    %v6923 = vadd.f32 0.0, %v6922
    %v6924 = vpop.f32.mrb[0].mxu0
    %v6925 = vpop.f32.mrb[0].mxu0
    %6926 = vdwg.mxu0
    %6927 = vmatprep.subr.bf16.mxu0 %v1467
    %6928 = vmatpush1.bf16.msra.mxu0 %v1466
    %6929 = vmatprep.subr.bf16.mxu0 %v1475
    %6930 = vmatpush1.bf16.msra.mxu0 %v1474
    %6931 = vmatprep.subr.bf16.mxu0 %v1483
    %6932 = vmatpush1.bf16.msra.mxu0 %v1482
    %6933 = vmatprep.subr.bf16.mxu0 %v1491
    %6934 = vmatpush1.bf16.msra.mxu0 %v1490
    %6935 = vmatprep.subr.bf16.mxu0 %v1499
    %6936 = vmatpush1.bf16.msra.mxu0 %v1498
    %6937 = vmatprep.subr.bf16.mxu0 %v1507
    %6938 = vmatpush1.bf16.msra.mxu0 %v1506
    %6939 = vmatprep.subr.bf16.mxu0 %v1515
    %6940 = vmatpush1.bf16.msra.mxu0 %v1514
    %6941 = vmatprep.subr.bf16.mxu0 %v1523
    %6942 = vmatpush1.bf16.msra.mxu0 %v1522
    %6943 = vmatprep.subr.bf16.mxu0 %v1531
    %6944 = vmatpush1.bf16.msra.mxu0 %v1530
    %6945 = vmatprep.subr.bf16.mxu0 %v1539
    %6946 = vmatpush1.bf16.msra.mxu0 %v1538
    %6947 = vmatprep.subr.bf16.mxu0 %v1547
    %6948 = vmatpush1.bf16.msra.mxu0 %v1546
    %6949 = vmatprep.subr.bf16.mxu0 %v1555
    %6950 = vmatpush1.bf16.msra.mxu0 %v1554
    %6951 = vmatprep.subr.bf16.mxu0 %v1563
    %6952 = vmatpush1.bf16.msra.mxu0 %v1562
    %6953 = vmatprep.subr.bf16.mxu0 %v1571
    %6954 = vmatpush1.bf16.msra.mxu0 %v1570
    %6955 = vmatprep.subr.bf16.mxu0 %v1579
    %6956 = vmatpush1.bf16.msra.mxu0 %v1578
    %6957 = vmatprep.subr.bf16.mxu0 %v1587
    %6958 = vmatpush1.bf16.msra.mxu0 %v1586
    %6959 = vmatprep.mubr.bf16.mxu0 %v6504
    %6960 = vmatmul.mubr.bf16.gmra.mrb[0].mxu0 %v6503
    %v6961 = vpop.f32.mrb[0].mxu0
    %v6962 = vadd.f32 0.0, %v6961
    %v6963 = vpop.f32.mrb[0].mxu0
    %v6964 = vadd.f32 0.0, %v6963
    %v6965 = vpop.f32.mrb[0].mxu0
    %v6966 = vpop.f32.mrb[0].mxu0
    %6967 = vdwg.mxu0
    %6968 = vmatprep.subr.bf16.mxu0 %v1469
    %6969 = vmatpush1.bf16.msra.mxu0 %v1468
    %6970 = vmatprep.subr.bf16.mxu0 %v1477
    %6971 = vmatpush1.bf16.msra.mxu0 %v1476
    %6972 = vmatprep.subr.bf16.mxu0 %v1485
    %6973 = vmatpush1.bf16.msra.mxu0 %v1484
    %6974 = vmatprep.subr.bf16.mxu0 %v1493
    %6975 = vmatpush1.bf16.msra.mxu0 %v1492
    %6976 = vmatprep.subr.bf16.mxu0 %v1501
    %6977 = vmatpush1.bf16.msra.mxu0 %v1500
    %6978 = vmatprep.subr.bf16.mxu0 %v1509
    %6979 = vmatpush1.bf16.msra.mxu0 %v1508
    %6980 = vmatprep.subr.bf16.mxu0 %v1517
    %6981 = vmatpush1.bf16.msra.mxu0 %v1516
    %6982 = vmatprep.subr.bf16.mxu0 %v1525
    %6983 = vmatpush1.bf16.msra.mxu0 %v1524
    %6984 = vmatprep.subr.bf16.mxu0 %v1533
    %6985 = vmatpush1.bf16.msra.mxu0 %v1532
    %6986 = vmatprep.subr.bf16.mxu0 %v1541
    %6987 = vmatpush1.bf16.msra.mxu0 %v1540
    %6988 = vmatprep.subr.bf16.mxu0 %v1549
    %6989 = vmatpush1.bf16.msra.mxu0 %v1548
    %6990 = vmatprep.subr.bf16.mxu0 %v1557
    %6991 = vmatpush1.bf16.msra.mxu0 %v1556
    %6992 = vmatprep.subr.bf16.mxu0 %v1565
    %6993 = vmatpush1.bf16.msra.mxu0 %v1564
    %6994 = vmatprep.subr.bf16.mxu0 %v1573
    %6995 = vmatpush1.bf16.msra.mxu0 %v1572
    %6996 = vmatprep.subr.bf16.mxu0 %v1581
    %6997 = vmatpush1.bf16.msra.mxu0 %v1580
    %6998 = vmatprep.subr.bf16.mxu0 %v1589
    %6999 = vmatpush1.bf16.msra.mxu0 %v1588
    %7000 = vmatprep.mubr.bf16.mxu0 %v6504
    %7001 = vmatmul.mubr.bf16.gmra.mrb[0].mxu0 %v6503
    %v7002 = vpop.f32.mrb[0].mxu0
    %v7003 = vadd.f32 0.0, %v7002
    %v7004 = vpop.f32.mrb[0].mxu0
    %v7005 = vadd.f32 0.0, %v7004
    %v7006 = vpop.f32.mrb[0].mxu0
    %v7007 = vpop.f32.mrb[0].mxu0
    %7008 = vdwg.mxu0
    %7009 = vmatprep.subr.bf16.mxu0 %v1471
    %7010 = vmatpush1.bf16.msra.mxu0 %v1470
    %7011 = vmatprep.subr.bf16.mxu0 %v1479
    %7012 = vmatpush1.bf16.msra.mxu0 %v1478
    %7013 = vmatprep.subr.bf16.mxu0 %v1487
    %7014 = vmatpush1.bf16.msra.mxu0 %v1486
    %7015 = vmatprep.subr.bf16.mxu0 %v1495
    %7016 = vmatpush1.bf16.msra.mxu0 %v1494
    %7017 = vmatprep.subr.bf16.mxu0 %v1503
    %7018 = vmatpush1.bf16.msra.mxu0 %v1502
    %7019 = vmatprep.subr.bf16.mxu0 %v1511
    %7020 = vmatpush1.bf16.msra.mxu0 %v1510
    %7021 = vmatprep.subr.bf16.mxu0 %v1519
    %7022 = vmatpush1.bf16.msra.mxu0 %v1518
    %7023 = vmatprep.subr.bf16.mxu0 %v1527
    %7024 = vmatpush1.bf16.msra.mxu0 %v1526
    %7025 = vmatprep.subr.bf16.mxu0 %v1535
    %7026 = vmatpush1.bf16.msra.mxu0 %v1534
    %7027 = vmatprep.subr.bf16.mxu0 %v1543
    %7028 = vmatpush1.bf16.msra.mxu0 %v1542
    %7029 = vmatprep.subr.bf16.mxu0 %v1551
    %7030 = vmatpush1.bf16.msra.mxu0 %v1550
    %7031 = vmatprep.subr.bf16.mxu0 %v1559
    %7032 = vmatpush1.bf16.msra.mxu0 %v1558
    %7033 = vmatprep.subr.bf16.mxu0 %v1567
    %7034 = vmatpush1.bf16.msra.mxu0 %v1566
    %7035 = vmatprep.subr.bf16.mxu0 %v1575
    %7036 = vmatpush1.bf16.msra.mxu0 %v1574
    %7037 = vmatprep.subr.bf16.mxu0 %v1583
    %7038 = vmatpush1.bf16.msra.mxu0 %v1582
    %7039 = vmatprep.subr.bf16.mxu0 %v1591
    %7040 = vmatpush1.bf16.msra.mxu0 %v1590
    %7041 = vmatprep.mubr.bf16.mxu0 %v6504
    %7042 = vmatmul.mubr.bf16.gmra.mrb[0].mxu0 %v6503
    %v7043 = vpop.f32.mrb[0].mxu0
    %v7044 = vadd.f32 0.0, %v7043
    %v7045 = vpop.f32.mrb[0].mxu0
    %v7046 = vadd.f32 0.0, %v7045
    %v7047 = vpop.f32.mrb[0].mxu0
    %v7048 = vpop.f32.mrb[0].mxu0
    %7049 = vdwg.mxu0
    %v7050 = vadd.f32 %v6878, %v6921
    %v7051 = vadd.f32 %v6879, %v6923
    %v7052 = vadd.f32 %v6880, %v6962
    %v7053 = vadd.f32 %v6881, %v6964
    %v7054 = vadd.f32 %v6882, %v7003
    %v7055 = vadd.f32 %v6883, %v7005
    %v7056 = vadd.f32 %v6884, %v7044
    %v7057 = vadd.f32 %v6885, %v7046
    %v7058 = vsub.f32 0.0, %v7050
    %v7059 = vsub.f32 0.0, %v7051
    %v7060 = vsub.f32 0.0, %v7052
    %v7061 = vsub.f32 0.0, %v7053
    %v7062 = vmul.f32 %v7058, 1.442695
    %v7063 = vpow.pop %v7062
    %v7064 = vmul.f32 %v7059, 1.442695
    %v7065 = vpow.pop %v7064
    %v7066 = vmul.f32 %v7060, 1.442695
    %v7067 = vpow.pop %v7066
    %v7068 = vmul.f32 %v7061, 1.442695
    %v7069 = vpow.pop %v7068
    %v7070 = vadd.f32 %v7063, 1.0
    %v7071 = vadd.f32 %v7065, 1.0
    %v7072 = vadd.f32 %v7067, 1.0
    %v7073 = vadd.f32 %v7069, 1.0
    %v7074 = vrcp.pop %v7070
    %v7075 = vrcp.pop %v7071
    %v7076 = vrcp.pop %v7072
    %v7077 = vrcp.pop %v7073
    %v7078 = vtanh.pop %v7054
    %v7079 = vtanh.pop %v7055
    %v7080 = vsub.f32 0.0, %v7056
    %v7081 = vsub.f32 0.0, %v7057
    %v7082 = vmul.f32 %v7080, 1.442695
    %v7083 = vpow.pop %v7082
    %v7084 = vmul.f32 %v7081, 1.442695
    %v7085 = vpow.pop %v7084
    %v7086 = vadd.f32 %v7083, 1.0
    %v7087 = vadd.f32 %v7085, 1.0
    %v7088 = vrcp.pop %v7086
    %v7089 = vrcp.pop %v7087
    %v7090 = vmul.f32 %v7076, %v6497
    %v7091 = vmul.f32 %v7077, %v6498
    %v7092 = vmul.f32 %v7074, %v7078
    %v7093 = vmul.f32 %v7075, %v7079
    %v7094 = vadd.f32 %v7090, %v7092
    %v7095 = vadd.f32 %v7091, %v7093
    %v7096 = vtanh.pop %v7094
    %v7097 = vtanh.pop %v7095
    %v7098 = vmul.f32 %v7088, %v7096
    %v7099 = vmul.f32 %v7089, %v7097
    %v7100 = vpack.c.bf16 %v7098, %v7098
    %v7101 = vpack.c.bf16 %v7099, %v7099
    %v7102 = vpack.c.bf16 %v6875, %v6875
    %v7103 = vpack.c.bf16 %v6876, %v6876
    %7104 = vmatprep.subr.bf16.mxu0 %v3011
    %7105 = vmatpush1.bf16.msra.mxu0 %v3010
    %7106 = vmatprep.subr.bf16.mxu0 %v3019
    %7107 = vmatpush1.bf16.msra.mxu0 %v3018
    %7108 = vmatprep.subr.bf16.mxu0 %v3027
    %7109 = vmatpush1.bf16.msra.mxu0 %v3026
    %7110 = vmatprep.subr.bf16.mxu0 %v3035
    %7111 = vmatpush1.bf16.msra.mxu0 %v3034
    %7112 = vmatprep.subr.bf16.mxu0 %v3043
    %7113 = vmatpush1.bf16.msra.mxu0 %v3042
    %7114 = vmatprep.subr.bf16.mxu0 %v3051
    %7115 = vmatpush1.bf16.msra.mxu0 %v3050
    %7116 = vmatprep.subr.bf16.mxu0 %v3059
    %7117 = vmatpush1.bf16.msra.mxu0 %v3058
    %7118 = vmatprep.subr.bf16.mxu0 %v3067
    %7119 = vmatpush1.bf16.msra.mxu0 %v3066
    %7120 = vmatprep.subr.bf16.mxu0 %v3075
    %7121 = vmatpush1.bf16.msra.mxu0 %v3074
    %7122 = vmatprep.subr.bf16.mxu0 %v3083
    %7123 = vmatpush1.bf16.msra.mxu0 %v3082
    %7124 = vmatprep.subr.bf16.mxu0 %v3091
    %7125 = vmatpush1.bf16.msra.mxu0 %v3090
    %7126 = vmatprep.subr.bf16.mxu0 %v3099
    %7127 = vmatpush1.bf16.msra.mxu0 %v3098
    %7128 = vmatprep.subr.bf16.mxu0 %v3107
    %7129 = vmatpush1.bf16.msra.mxu0 %v3106
    %7130 = vmatprep.subr.bf16.mxu0 %v3115
    %7131 = vmatpush1.bf16.msra.mxu0 %v3114
    %7132 = vmatprep.subr.bf16.mxu0 %v3123
    %7133 = vmatpush1.bf16.msra.mxu0 %v3122
    %7134 = vmatprep.subr.bf16.mxu0 %v3131
    %7135 = vmatpush1.bf16.msra.mxu0 %v3130
    %7136 = vmatprep.mubr.bf16.mxu0 %v7101
    %7137 = vmatmul.mubr.bf16.gmra.mrb[0].mxu0 %v7100
    %v7138 = vpop.f32.mrb[0].mxu0
    %v7139 = vadd.f32 %v2205, %v7138
    %v7140 = vpop.f32.mrb[0].mxu0
    %v7141 = vadd.f32 %v2209, %v7140
    %v7142 = vpop.f32.mrb[0].mxu0
    %v7143 = vpop.f32.mrb[0].mxu0
    %7144 = vdwg.mxu0
    %7145 = vmatprep.subr.bf16.mxu0 %v3139
    %7146 = vmatpush1.bf16.msra.mxu0 %v3138
    %7147 = vmatprep.subr.bf16.mxu0 %v3147
    %7148 = vmatpush1.bf16.msra.mxu0 %v3146
    %7149 = vmatprep.subr.bf16.mxu0 %v3155
    %7150 = vmatpush1.bf16.msra.mxu0 %v3154
    %7151 = vmatprep.subr.bf16.mxu0 %v3163
    %7152 = vmatpush1.bf16.msra.mxu0 %v3162
    %7153 = vmatprep.subr.bf16.mxu0 %v3171
    %7154 = vmatpush1.bf16.msra.mxu0 %v3170
    %7155 = vmatprep.subr.bf16.mxu0 %v3179
    %7156 = vmatpush1.bf16.msra.mxu0 %v3178
    %7157 = vmatprep.subr.bf16.mxu0 %v3187
    %7158 = vmatpush1.bf16.msra.mxu0 %v3186
    %7159 = vmatprep.subr.bf16.mxu0 %v3195
    %7160 = vmatpush1.bf16.msra.mxu0 %v3194
    %7161 = vmatprep.subr.bf16.mxu0 %v3203
    %7162 = vmatpush1.bf16.msra.mxu0 %v3202
    %7163 = vmatprep.subr.bf16.mxu0 %v3211
    %7164 = vmatpush1.bf16.msra.mxu0 %v3210
    %7165 = vmatprep.subr.bf16.mxu0 %v3219
    %7166 = vmatpush1.bf16.msra.mxu0 %v3218
    %7167 = vmatprep.subr.bf16.mxu0 %v3227
    %7168 = vmatpush1.bf16.msra.mxu0 %v3226
    %7169 = vmatprep.subr.bf16.mxu0 %v3235
    %7170 = vmatpush1.bf16.msra.mxu0 %v3234
    %7171 = vmatprep.subr.bf16.mxu0 %v3243
    %7172 = vmatpush1.bf16.msra.mxu0 %v3242
    %7173 = vmatprep.subr.bf16.mxu0 %v3251
    %7174 = vmatpush1.bf16.msra.mxu0 %v3250
    %7175 = vmatprep.subr.bf16.mxu0 %v3259
    %7176 = vmatpush1.bf16.msra.mxu0 %v3258
    %7177 = vmatprep.mubr.bf16.mxu0 %v7103
    %7178 = vmatmul.mubr.bf16.gmra.mrb[0].mxu0 %v7102
    %v7179 = vpop.f32.mrb[0].mxu0
    %v7180 = vadd.f32 %v7139, %v7179
    %v7181 = vpop.f32.mrb[0].mxu0
    %v7182 = vadd.f32 %v7141, %v7181
    %v7183 = vpop.f32.mrb[0].mxu0
    %v7184 = vpop.f32.mrb[0].mxu0
    %7185 = vdwg.mxu0
    %7186 = vmatprep.subr.bf16.mxu0 %v3013
    %7187 = vmatpush1.bf16.msra.mxu0 %v3012
    %7188 = vmatprep.subr.bf16.mxu0 %v3021
    %7189 = vmatpush1.bf16.msra.mxu0 %v3020
    %7190 = vmatprep.subr.bf16.mxu0 %v3029
    %7191 = vmatpush1.bf16.msra.mxu0 %v3028
    %7192 = vmatprep.subr.bf16.mxu0 %v3037
    %7193 = vmatpush1.bf16.msra.mxu0 %v3036
    %7194 = vmatprep.subr.bf16.mxu0 %v3045
    %7195 = vmatpush1.bf16.msra.mxu0 %v3044
    %7196 = vmatprep.subr.bf16.mxu0 %v3053
    %7197 = vmatpush1.bf16.msra.mxu0 %v3052
    %7198 = vmatprep.subr.bf16.mxu0 %v3061
    %7199 = vmatpush1.bf16.msra.mxu0 %v3060
    %7200 = vmatprep.subr.bf16.mxu0 %v3069
    %7201 = vmatpush1.bf16.msra.mxu0 %v3068
    %7202 = vmatprep.subr.bf16.mxu0 %v3077
    %7203 = vmatpush1.bf16.msra.mxu0 %v3076
    %7204 = vmatprep.subr.bf16.mxu0 %v3085
    %7205 = vmatpush1.bf16.msra.mxu0 %v3084
    %7206 = vmatprep.subr.bf16.mxu0 %v3093
    %7207 = vmatpush1.bf16.msra.mxu0 %v3092
    %7208 = vmatprep.subr.bf16.mxu0 %v3101
    %7209 = vmatpush1.bf16.msra.mxu0 %v3100
    %7210 = vmatprep.subr.bf16.mxu0 %v3109
    %7211 = vmatpush1.bf16.msra.mxu0 %v3108
    %7212 = vmatprep.subr.bf16.mxu0 %v3117
    %7213 = vmatpush1.bf16.msra.mxu0 %v3116
    %7214 = vmatprep.subr.bf16.mxu0 %v3125
    %7215 = vmatpush1.bf16.msra.mxu0 %v3124
    %7216 = vmatprep.subr.bf16.mxu0 %v3133
    %7217 = vmatpush1.bf16.msra.mxu0 %v3132
    %7218 = vmatprep.mubr.bf16.mxu0 %v7101
    %7219 = vmatmul.mubr.bf16.gmra.mrb[0].mxu0 %v7100
    %v7220 = vpop.f32.mrb[0].mxu0
    %v7221 = vadd.f32 %v2213, %v7220
    %v7222 = vpop.f32.mrb[0].mxu0
    %v7223 = vadd.f32 %v2217, %v7222
    %v7224 = vpop.f32.mrb[0].mxu0
    %v7225 = vpop.f32.mrb[0].mxu0
    %7226 = vdwg.mxu0
    %7227 = vmatprep.subr.bf16.mxu0 %v3141
    %7228 = vmatpush1.bf16.msra.mxu0 %v3140
    %7229 = vmatprep.subr.bf16.mxu0 %v3149
    %7230 = vmatpush1.bf16.msra.mxu0 %v3148
    %7231 = vmatprep.subr.bf16.mxu0 %v3157
    %7232 = vmatpush1.bf16.msra.mxu0 %v3156
    %7233 = vmatprep.subr.bf16.mxu0 %v3165
    %7234 = vmatpush1.bf16.msra.mxu0 %v3164
    %7235 = vmatprep.subr.bf16.mxu0 %v3173
    %7236 = vmatpush1.bf16.msra.mxu0 %v3172
    %7237 = vmatprep.subr.bf16.mxu0 %v3181
    %7238 = vmatpush1.bf16.msra.mxu0 %v3180
    %7239 = vmatprep.subr.bf16.mxu0 %v3189
    %7240 = vmatpush1.bf16.msra.mxu0 %v3188
    %7241 = vmatprep.subr.bf16.mxu0 %v3197
    %7242 = vmatpush1.bf16.msra.mxu0 %v3196
    %7243 = vmatprep.subr.bf16.mxu0 %v3205
    %7244 = vmatpush1.bf16.msra.mxu0 %v3204
    %7245 = vmatprep.subr.bf16.mxu0 %v3213
    %7246 = vmatpush1.bf16.msra.mxu0 %v3212
    %7247 = vmatprep.subr.bf16.mxu0 %v3221
    %7248 = vmatpush1.bf16.msra.mxu0 %v3220
    %7249 = vmatprep.subr.bf16.mxu0 %v3229
    %7250 = vmatpush1.bf16.msra.mxu0 %v3228
    %7251 = vmatprep.subr.bf16.mxu0 %v3237
    %7252 = vmatpush1.bf16.msra.mxu0 %v3236
    %7253 = vmatprep.subr.bf16.mxu0 %v3245
    %7254 = vmatpush1.bf16.msra.mxu0 %v3244
    %7255 = vmatprep.subr.bf16.mxu0 %v3253
    %7256 = vmatpush1.bf16.msra.mxu0 %v3252
    %7257 = vmatprep.subr.bf16.mxu0 %v3261
    %7258 = vmatpush1.bf16.msra.mxu0 %v3260
    %7259 = vmatprep.mubr.bf16.mxu0 %v7103
    %7260 = vmatmul.mubr.bf16.gmra.mrb[0].mxu0 %v7102
    %v7261 = vpop.f32.mrb[0].mxu0
    %v7262 = vadd.f32 %v7221, %v7261
    %v7263 = vpop.f32.mrb[0].mxu0
    %v7264 = vadd.f32 %v7223, %v7263
    %v7265 = vpop.f32.mrb[0].mxu0
    %v7266 = vpop.f32.mrb[0].mxu0
    %7267 = vdwg.mxu0
    %7268 = vmatprep.subr.bf16.mxu0 %v3015
    %7269 = vmatpush1.bf16.msra.mxu0 %v3014
    %7270 = vmatprep.subr.bf16.mxu0 %v3023
    %7271 = vmatpush1.bf16.msra.mxu0 %v3022
    %7272 = vmatprep.subr.bf16.mxu0 %v3031
    %7273 = vmatpush1.bf16.msra.mxu0 %v3030
    %7274 = vmatprep.subr.bf16.mxu0 %v3039
    %7275 = vmatpush1.bf16.msra.mxu0 %v3038
    %7276 = vmatprep.subr.bf16.mxu0 %v3047
    %7277 = vmatpush1.bf16.msra.mxu0 %v3046
    %7278 = vmatprep.subr.bf16.mxu0 %v3055
    %7279 = vmatpush1.bf16.msra.mxu0 %v3054
    %7280 = vmatprep.subr.bf16.mxu0 %v3063
    %7281 = vmatpush1.bf16.msra.mxu0 %v3062
    %7282 = vmatprep.subr.bf16.mxu0 %v3071
    %7283 = vmatpush1.bf16.msra.mxu0 %v3070
    %7284 = vmatprep.subr.bf16.mxu0 %v3079
    %7285 = vmatpush1.bf16.msra.mxu0 %v3078
    %7286 = vmatprep.subr.bf16.mxu0 %v3087
    %7287 = vmatpush1.bf16.msra.mxu0 %v3086
    %7288 = vmatprep.subr.bf16.mxu0 %v3095
    %7289 = vmatpush1.bf16.msra.mxu0 %v3094
    %7290 = vmatprep.subr.bf16.mxu0 %v3103
    %7291 = vmatpush1.bf16.msra.mxu0 %v3102
    %7292 = vmatprep.subr.bf16.mxu0 %v3111
    %7293 = vmatpush1.bf16.msra.mxu0 %v3110
    %7294 = vmatprep.subr.bf16.mxu0 %v3119
    %7295 = vmatpush1.bf16.msra.mxu0 %v3118
    %7296 = vmatprep.subr.bf16.mxu0 %v3127
    %7297 = vmatpush1.bf16.msra.mxu0 %v3126
    %7298 = vmatprep.subr.bf16.mxu0 %v3135
    %7299 = vmatpush1.bf16.msra.mxu0 %v3134
    %7300 = vmatprep.mubr.bf16.mxu0 %v7101
    %7301 = vmatmul.mubr.bf16.gmra.mrb[0].mxu0 %v7100
    %v7302 = vpop.f32.mrb[0].mxu0
    %v7303 = vadd.f32 %v2221, %v7302
    %v7304 = vpop.f32.mrb[0].mxu0
    %v7305 = vadd.f32 %v2225, %v7304
    %v7306 = vpop.f32.mrb[0].mxu0
    %v7307 = vpop.f32.mrb[0].mxu0
    %7308 = vdwg.mxu0
    %7309 = vmatprep.subr.bf16.mxu0 %v3143
    %7310 = vmatpush1.bf16.msra.mxu0 %v3142
    %7311 = vmatprep.subr.bf16.mxu0 %v3151
    %7312 = vmatpush1.bf16.msra.mxu0 %v3150
    %7313 = vmatprep.subr.bf16.mxu0 %v3159
    %7314 = vmatpush1.bf16.msra.mxu0 %v3158
    %7315 = vmatprep.subr.bf16.mxu0 %v3167
    %7316 = vmatpush1.bf16.msra.mxu0 %v3166
    %7317 = vmatprep.subr.bf16.mxu0 %v3175
    %7318 = vmatpush1.bf16.msra.mxu0 %v3174
    %7319 = vmatprep.subr.bf16.mxu0 %v3183
    %7320 = vmatpush1.bf16.msra.mxu0 %v3182
    %7321 = vmatprep.subr.bf16.mxu0 %v3191
    %7322 = vmatpush1.bf16.msra.mxu0 %v3190
    %7323 = vmatprep.subr.bf16.mxu0 %v3199
    %7324 = vmatpush1.bf16.msra.mxu0 %v3198
    %7325 = vmatprep.subr.bf16.mxu0 %v3207
    %7326 = vmatpush1.bf16.msra.mxu0 %v3206
    %7327 = vmatprep.subr.bf16.mxu0 %v3215
    %7328 = vmatpush1.bf16.msra.mxu0 %v3214
    %7329 = vmatprep.subr.bf16.mxu0 %v3223
    %7330 = vmatpush1.bf16.msra.mxu0 %v3222
    %7331 = vmatprep.subr.bf16.mxu0 %v3231
    %7332 = vmatpush1.bf16.msra.mxu0 %v3230
    %7333 = vmatprep.subr.bf16.mxu0 %v3239
    %7334 = vmatpush1.bf16.msra.mxu0 %v3238
    %7335 = vmatprep.subr.bf16.mxu0 %v3247
    %7336 = vmatpush1.bf16.msra.mxu0 %v3246
    %7337 = vmatprep.subr.bf16.mxu0 %v3255
    %7338 = vmatpush1.bf16.msra.mxu0 %v3254
    %7339 = vmatprep.subr.bf16.mxu0 %v3263
    %7340 = vmatpush1.bf16.msra.mxu0 %v3262
    %7341 = vmatprep.mubr.bf16.mxu0 %v7103
    %7342 = vmatmul.mubr.bf16.gmra.mrb[0].mxu0 %v7102
    %v7343 = vpop.f32.mrb[0].mxu0
    %v7344 = vadd.f32 %v7303, %v7343
    %v7345 = vpop.f32.mrb[0].mxu0
    %v7346 = vadd.f32 %v7305, %v7345
    %v7347 = vpop.f32.mrb[0].mxu0
    %v7348 = vpop.f32.mrb[0].mxu0
    %7349 = vdwg.mxu0
    %7350 = vmatprep.subr.bf16.mxu0 %v3017
    %7351 = vmatpush1.bf16.msra.mxu0 %v3016
    %7352 = vmatprep.subr.bf16.mxu0 %v3025
    %7353 = vmatpush1.bf16.msra.mxu0 %v3024
    %7354 = vmatprep.subr.bf16.mxu0 %v3033
    %7355 = vmatpush1.bf16.msra.mxu0 %v3032
    %7356 = vmatprep.subr.bf16.mxu0 %v3041
    %7357 = vmatpush1.bf16.msra.mxu0 %v3040
    %7358 = vmatprep.subr.bf16.mxu0 %v3049
    %7359 = vmatpush1.bf16.msra.mxu0 %v3048
    %7360 = vmatprep.subr.bf16.mxu0 %v3057
    %7361 = vmatpush1.bf16.msra.mxu0 %v3056
    %7362 = vmatprep.subr.bf16.mxu0 %v3065
    %7363 = vmatpush1.bf16.msra.mxu0 %v3064
    %7364 = vmatprep.subr.bf16.mxu0 %v3073
    %7365 = vmatpush1.bf16.msra.mxu0 %v3072
    %7366 = vmatprep.subr.bf16.mxu0 %v3081
    %7367 = vmatpush1.bf16.msra.mxu0 %v3080
    %7368 = vmatprep.subr.bf16.mxu0 %v3089
    %7369 = vmatpush1.bf16.msra.mxu0 %v3088
    %7370 = vmatprep.subr.bf16.mxu0 %v3097
    %7371 = vmatpush1.bf16.msra.mxu0 %v3096
    %7372 = vmatprep.subr.bf16.mxu0 %v3105
    %7373 = vmatpush1.bf16.msra.mxu0 %v3104
    %7374 = vmatprep.subr.bf16.mxu0 %v3113
    %7375 = vmatpush1.bf16.msra.mxu0 %v3112
    %7376 = vmatprep.subr.bf16.mxu0 %v3121
    %7377 = vmatpush1.bf16.msra.mxu0 %v3120
    %7378 = vmatprep.subr.bf16.mxu0 %v3129
    %7379 = vmatpush1.bf16.msra.mxu0 %v3128
    %7380 = vmatprep.subr.bf16.mxu0 %v3137
    %7381 = vmatpush1.bf16.msra.mxu0 %v3136
    %7382 = vmatprep.mubr.bf16.mxu0 %v7101
    %7383 = vmatmul.mubr.bf16.gmra.mrb[0].mxu0 %v7100
    %v7384 = vpop.f32.mrb[0].mxu0
    %v7385 = vadd.f32 %v2229, %v7384
    %v7386 = vpop.f32.mrb[0].mxu0
    %v7387 = vadd.f32 %v2233, %v7386
    %v7388 = vpop.f32.mrb[0].mxu0
    %v7389 = vpop.f32.mrb[0].mxu0
    %7390 = vdwg.mxu0
    %7391 = vmatprep.subr.bf16.mxu0 %v3145
    %7392 = vmatpush1.bf16.msra.mxu0 %v3144
    %7393 = vmatprep.subr.bf16.mxu0 %v3153
    %7394 = vmatpush1.bf16.msra.mxu0 %v3152
    %7395 = vmatprep.subr.bf16.mxu0 %v3161
    %7396 = vmatpush1.bf16.msra.mxu0 %v3160
    %7397 = vmatprep.subr.bf16.mxu0 %v3169
    %7398 = vmatpush1.bf16.msra.mxu0 %v3168
    %7399 = vmatprep.subr.bf16.mxu0 %v3177
    %7400 = vmatpush1.bf16.msra.mxu0 %v3176
    %7401 = vmatprep.subr.bf16.mxu0 %v3185
    %7402 = vmatpush1.bf16.msra.mxu0 %v3184
    %7403 = vmatprep.subr.bf16.mxu0 %v3193
    %7404 = vmatpush1.bf16.msra.mxu0 %v3192
    %7405 = vmatprep.subr.bf16.mxu0 %v3201
    %7406 = vmatpush1.bf16.msra.mxu0 %v3200
    %7407 = vmatprep.subr.bf16.mxu0 %v3209
    %7408 = vmatpush1.bf16.msra.mxu0 %v3208
    %7409 = vmatprep.subr.bf16.mxu0 %v3217
    %7410 = vmatpush1.bf16.msra.mxu0 %v3216
    %7411 = vmatprep.subr.bf16.mxu0 %v3225
    %7412 = vmatpush1.bf16.msra.mxu0 %v3224
    %7413 = vmatprep.subr.bf16.mxu0 %v3233
    %7414 = vmatpush1.bf16.msra.mxu0 %v3232
    %7415 = vmatprep.subr.bf16.mxu0 %v3241
    %7416 = vmatpush1.bf16.msra.mxu0 %v3240
    %7417 = vmatprep.subr.bf16.mxu0 %v3249
    %7418 = vmatpush1.bf16.msra.mxu0 %v3248
    %7419 = vmatprep.subr.bf16.mxu0 %v3257
    %7420 = vmatpush1.bf16.msra.mxu0 %v3256
    %7421 = vmatprep.subr.bf16.mxu0 %v3265
    %7422 = vmatpush1.bf16.msra.mxu0 %v3264
    %7423 = vmatprep.mubr.bf16.mxu0 %v7103
    %7424 = vmatmul.mubr.bf16.gmra.mrb[0].mxu0 %v7102
    %v7425 = vpop.f32.mrb[0].mxu0
    %v7426 = vadd.f32 %v7385, %v7425
    %v7427 = vpop.f32.mrb[0].mxu0
    %v7428 = vadd.f32 %v7387, %v7427
    %v7429 = vpop.f32.mrb[0].mxu0
    %v7430 = vpop.f32.mrb[0].mxu0
    %7431 = vdwg.mxu0
    %v7432 = vsub.f32 0.0, %v7180
    %v7433 = vsub.f32 0.0, %v7182
    %v7434 = vsub.f32 0.0, %v7262
    %v7435 = vsub.f32 0.0, %v7264
    %v7436 = vmul.f32 %v7432, 1.442695
    %v7437 = vpow.pop %v7436
    %v7438 = vmul.f32 %v7433, 1.442695
    %v7439 = vpow.pop %v7438
    %v7440 = vmul.f32 %v7434, 1.442695
    %v7441 = vpow.pop %v7440
    %v7442 = vmul.f32 %v7435, 1.442695
    %v7443 = vpow.pop %v7442
    %v7444 = vadd.f32 %v7437, 1.0
    %v7445 = vadd.f32 %v7439, 1.0
    %v7446 = vadd.f32 %v7441, 1.0
    %v7447 = vadd.f32 %v7443, 1.0
    %v7448 = vrcp.pop %v7444
    %v7449 = vrcp.pop %v7445
    %v7450 = vrcp.pop %v7446
    %v7451 = vrcp.pop %v7447
    %v7452 = vtanh.pop %v7344
    %v7453 = vtanh.pop %v7346
    %v7454 = vsub.f32 0.0, %v7426
    %v7455 = vsub.f32 0.0, %v7428
    %v7456 = vmul.f32 %v7454, 1.442695
    %v7457 = vpow.pop %v7456
    %v7458 = vmul.f32 %v7455, 1.442695
    %v7459 = vpow.pop %v7458
    %v7460 = vadd.f32 %v7457, 1.0
    %v7461 = vadd.f32 %v7459, 1.0
    %v7462 = vrcp.pop %v7460
    %v7463 = vrcp.pop %v7461
    %v7464 = vmul.f32 %v7450, %v6871
    %v7465 = vmul.f32 %v7451, %v6872
    %v7466 = vmul.f32 %v7448, %v7452
    %v7467 = vmul.f32 %v7449, %v7453
    %v7468 = vadd.f32 %v7464, %v7466
    %v7469 = vadd.f32 %v7465, %v7467
    %v7470 = vtanh.pop %v7468
    %v7471 = vtanh.pop %v7469
    %v7472 = vmul.f32 %v7462, %v7470
    %v7473 = vmul.f32 %v7463, %v7471
    %s7474 = scalar_lea.vmem [#allocation2], 448
    %v7475 = vld [vmem:[%s7474] sm:$0xff]
    %v7476 = vld [vmem:[%s7474 + $0x8] sm:$0xff]
    %v7477 = vld [vmem:[%s7474 + $0x10] sm:$0xff]
    %v7478 = vld [vmem:[%s7474 + $0x18] sm:$0xff]
    %v7479 = vld [vmem:[%s7474 + $0x20] sm:$0xff]
    %v7480 = vld [vmem:[%s7474 + $0x28] sm:$0xff]
    %v7481 = vld [vmem:[%s7474 + $0x30] sm:$0xff]
    %v7482 = vld [vmem:[%s7474 + $0x38] sm:$0xff]
    %7483 = vmatprep.subr.bf16.mxu0 %v1465
    %7484 = vmatpush1.bf16.msra.mxu0 %v1464
    %7485 = vmatprep.subr.bf16.mxu0 %v1473
    %7486 = vmatpush1.bf16.msra.mxu0 %v1472
    %7487 = vmatprep.subr.bf16.mxu0 %v1481
    %7488 = vmatpush1.bf16.msra.mxu0 %v1480
    %7489 = vmatprep.subr.bf16.mxu0 %v1489
    %7490 = vmatpush1.bf16.msra.mxu0 %v1488
    %7491 = vmatprep.subr.bf16.mxu0 %v1497
    %7492 = vmatpush1.bf16.msra.mxu0 %v1496
    %7493 = vmatprep.subr.bf16.mxu0 %v1505
    %7494 = vmatpush1.bf16.msra.mxu0 %v1504
    %7495 = vmatprep.subr.bf16.mxu0 %v1513
    %7496 = vmatpush1.bf16.msra.mxu0 %v1512
    %7497 = vmatprep.subr.bf16.mxu0 %v1521
    %7498 = vmatpush1.bf16.msra.mxu0 %v1520
    %7499 = vmatprep.subr.bf16.mxu0 %v1529
    %7500 = vmatpush1.bf16.msra.mxu0 %v1528
    %7501 = vmatprep.subr.bf16.mxu0 %v1537
    %7502 = vmatpush1.bf16.msra.mxu0 %v1536
    %7503 = vmatprep.subr.bf16.mxu0 %v1545
    %7504 = vmatpush1.bf16.msra.mxu0 %v1544
    %7505 = vmatprep.subr.bf16.mxu0 %v1553
    %7506 = vmatpush1.bf16.msra.mxu0 %v1552
    %7507 = vmatprep.subr.bf16.mxu0 %v1561
    %7508 = vmatpush1.bf16.msra.mxu0 %v1560
    %7509 = vmatprep.subr.bf16.mxu0 %v1569
    %7510 = vmatpush1.bf16.msra.mxu0 %v1568
    %7511 = vmatprep.subr.bf16.mxu0 %v1577
    %7512 = vmatpush1.bf16.msra.mxu0 %v1576
    %7513 = vmatprep.subr.bf16.mxu0 %v1585
    %7514 = vmatpush1.bf16.msra.mxu0 %v1584
    %7515 = vmatprep.mubr.bf16.mxu0 %v7101
    %7516 = vmatmul.mubr.bf16.gmra.mrb[0].mxu0 %v7100
    %v7517 = vpop.f32.mrb[0].mxu0
    %v7518 = vadd.f32 0.0, %v7517
    %v7519 = vpop.f32.mrb[0].mxu0
    %v7520 = vadd.f32 0.0, %v7519
    %v7521 = vpop.f32.mrb[0].mxu0
    %v7522 = vpop.f32.mrb[0].mxu0
    %7523 = vdwg.mxu0
    %7524 = vmatprep.subr.bf16.mxu0 %v1467
    %7525 = vmatpush1.bf16.msra.mxu0 %v1466
    %7526 = vmatprep.subr.bf16.mxu0 %v1475
    %7527 = vmatpush1.bf16.msra.mxu0 %v1474
    %7528 = vmatprep.subr.bf16.mxu0 %v1483
    %7529 = vmatpush1.bf16.msra.mxu0 %v1482
    %7530 = vmatprep.subr.bf16.mxu0 %v1491
    %7531 = vmatpush1.bf16.msra.mxu0 %v1490
    %7532 = vmatprep.subr.bf16.mxu0 %v1499
    %7533 = vmatpush1.bf16.msra.mxu0 %v1498
    %7534 = vmatprep.subr.bf16.mxu0 %v1507
    %7535 = vmatpush1.bf16.msra.mxu0 %v1506
    %7536 = vmatprep.subr.bf16.mxu0 %v1515
    %7537 = vmatpush1.bf16.msra.mxu0 %v1514
    %7538 = vmatprep.subr.bf16.mxu0 %v1523
    %7539 = vmatpush1.bf16.msra.mxu0 %v1522
    %7540 = vmatprep.subr.bf16.mxu0 %v1531
    %7541 = vmatpush1.bf16.msra.mxu0 %v1530
    %7542 = vmatprep.subr.bf16.mxu0 %v1539
    %7543 = vmatpush1.bf16.msra.mxu0 %v1538
    %7544 = vmatprep.subr.bf16.mxu0 %v1547
    %7545 = vmatpush1.bf16.msra.mxu0 %v1546
    %7546 = vmatprep.subr.bf16.mxu0 %v1555
    %7547 = vmatpush1.bf16.msra.mxu0 %v1554
    %7548 = vmatprep.subr.bf16.mxu0 %v1563
    %7549 = vmatpush1.bf16.msra.mxu0 %v1562
    %7550 = vmatprep.subr.bf16.mxu0 %v1571
    %7551 = vmatpush1.bf16.msra.mxu0 %v1570
    %7552 = vmatprep.subr.bf16.mxu0 %v1579
    %7553 = vmatpush1.bf16.msra.mxu0 %v1578
    %7554 = vmatprep.subr.bf16.mxu0 %v1587
    %7555 = vmatpush1.bf16.msra.mxu0 %v1586
    %7556 = vmatprep.mubr.bf16.mxu0 %v7101
    %7557 = vmatmul.mubr.bf16.gmra.mrb[0].mxu0 %v7100
    %v7558 = vpop.f32.mrb[0].mxu0
    %v7559 = vadd.f32 0.0, %v7558
    %v7560 = vpop.f32.mrb[0].mxu0
    %v7561 = vadd.f32 0.0, %v7560
    %v7562 = vpop.f32.mrb[0].mxu0
    %v7563 = vpop.f32.mrb[0].mxu0
    %7564 = vdwg.mxu0
    %7565 = vmatprep.subr.bf16.mxu0 %v1469
    %7566 = vmatpush1.bf16.msra.mxu0 %v1468
    %7567 = vmatprep.subr.bf16.mxu0 %v1477
    %7568 = vmatpush1.bf16.msra.mxu0 %v1476
    %7569 = vmatprep.subr.bf16.mxu0 %v1485
    %7570 = vmatpush1.bf16.msra.mxu0 %v1484
    %7571 = vmatprep.subr.bf16.mxu0 %v1493
    %7572 = vmatpush1.bf16.msra.mxu0 %v1492
    %7573 = vmatprep.subr.bf16.mxu0 %v1501
    %7574 = vmatpush1.bf16.msra.mxu0 %v1500
    %7575 = vmatprep.subr.bf16.mxu0 %v1509
    %7576 = vmatpush1.bf16.msra.mxu0 %v1508
    %7577 = vmatprep.subr.bf16.mxu0 %v1517
    %7578 = vmatpush1.bf16.msra.mxu0 %v1516
    %7579 = vmatprep.subr.bf16.mxu0 %v1525
    %7580 = vmatpush1.bf16.msra.mxu0 %v1524
    %7581 = vmatprep.subr.bf16.mxu0 %v1533
    %7582 = vmatpush1.bf16.msra.mxu0 %v1532
    %7583 = vmatprep.subr.bf16.mxu0 %v1541
    %7584 = vmatpush1.bf16.msra.mxu0 %v1540
    %7585 = vmatprep.subr.bf16.mxu0 %v1549
    %7586 = vmatpush1.bf16.msra.mxu0 %v1548
    %7587 = vmatprep.subr.bf16.mxu0 %v1557
    %7588 = vmatpush1.bf16.msra.mxu0 %v1556
    %7589 = vmatprep.subr.bf16.mxu0 %v1565
    %7590 = vmatpush1.bf16.msra.mxu0 %v1564
    %7591 = vmatprep.subr.bf16.mxu0 %v1573
    %7592 = vmatpush1.bf16.msra.mxu0 %v1572
    %7593 = vmatprep.subr.bf16.mxu0 %v1581
    %7594 = vmatpush1.bf16.msra.mxu0 %v1580
    %7595 = vmatprep.subr.bf16.mxu0 %v1589
    %7596 = vmatpush1.bf16.msra.mxu0 %v1588
    %7597 = vmatprep.mubr.bf16.mxu0 %v7101
    %7598 = vmatmul.mubr.bf16.gmra.mrb[0].mxu0 %v7100
    %v7599 = vpop.f32.mrb[0].mxu0
    %v7600 = vadd.f32 0.0, %v7599
    %v7601 = vpop.f32.mrb[0].mxu0
    %v7602 = vadd.f32 0.0, %v7601
    %v7603 = vpop.f32.mrb[0].mxu0
    %v7604 = vpop.f32.mrb[0].mxu0
    %7605 = vdwg.mxu0
    %7606 = vmatprep.subr.bf16.mxu0 %v1471
    %7607 = vmatpush1.bf16.msra.mxu0 %v1470
    %7608 = vmatprep.subr.bf16.mxu0 %v1479
    %7609 = vmatpush1.bf16.msra.mxu0 %v1478
    %7610 = vmatprep.subr.bf16.mxu0 %v1487
    %7611 = vmatpush1.bf16.msra.mxu0 %v1486
    %7612 = vmatprep.subr.bf16.mxu0 %v1495
    %7613 = vmatpush1.bf16.msra.mxu0 %v1494
    %7614 = vmatprep.subr.bf16.mxu0 %v1503
    %7615 = vmatpush1.bf16.msra.mxu0 %v1502
    %7616 = vmatprep.subr.bf16.mxu0 %v1511
    %7617 = vmatpush1.bf16.msra.mxu0 %v1510
    %7618 = vmatprep.subr.bf16.mxu0 %v1519
    %7619 = vmatpush1.bf16.msra.mxu0 %v1518
    %7620 = vmatprep.subr.bf16.mxu0 %v1527
    %7621 = vmatpush1.bf16.msra.mxu0 %v1526
    %7622 = vmatprep.subr.bf16.mxu0 %v1535
    %7623 = vmatpush1.bf16.msra.mxu0 %v1534
    %7624 = vmatprep.subr.bf16.mxu0 %v1543
    %7625 = vmatpush1.bf16.msra.mxu0 %v1542
    %7626 = vmatprep.subr.bf16.mxu0 %v1551
    %7627 = vmatpush1.bf16.msra.mxu0 %v1550
    %7628 = vmatprep.subr.bf16.mxu0 %v1559
    %7629 = vmatpush1.bf16.msra.mxu0 %v1558
    %7630 = vmatprep.subr.bf16.mxu0 %v1567
    %7631 = vmatpush1.bf16.msra.mxu0 %v1566
    %7632 = vmatprep.subr.bf16.mxu0 %v1575
    %7633 = vmatpush1.bf16.msra.mxu0 %v1574
    %7634 = vmatprep.subr.bf16.mxu0 %v1583
    %7635 = vmatpush1.bf16.msra.mxu0 %v1582
    %7636 = vmatprep.subr.bf16.mxu0 %v1591
    %7637 = vmatpush1.bf16.msra.mxu0 %v1590
    %7638 = vmatprep.mubr.bf16.mxu0 %v7101
    %7639 = vmatmul.mubr.bf16.gmra.mrb[0].mxu0 %v7100
    %v7640 = vpop.f32.mrb[0].mxu0
    %v7641 = vadd.f32 0.0, %v7640
    %v7642 = vpop.f32.mrb[0].mxu0
    %v7643 = vadd.f32 0.0, %v7642
    %v7644 = vpop.f32.mrb[0].mxu0
    %v7645 = vpop.f32.mrb[0].mxu0
    %7646 = vdwg.mxu0
    %v7647 = vadd.f32 %v7475, %v7518
    %v7648 = vadd.f32 %v7476, %v7520
    %v7649 = vadd.f32 %v7477, %v7559
    %v7650 = vadd.f32 %v7478, %v7561
    %v7651 = vadd.f32 %v7479, %v7600
    %v7652 = vadd.f32 %v7480, %v7602
    %v7653 = vadd.f32 %v7481, %v7641
    %v7654 = vadd.f32 %v7482, %v7643
    %v7655 = vsub.f32 0.0, %v7647
    %v7656 = vsub.f32 0.0, %v7648
    %v7657 = vsub.f32 0.0, %v7649
    %v7658 = vsub.f32 0.0, %v7650
    %v7659 = vmul.f32 %v7655, 1.442695
    %v7660 = vpow.pop %v7659
    %v7661 = vmul.f32 %v7656, 1.442695
    %v7662 = vpow.pop %v7661
    %v7663 = vmul.f32 %v7657, 1.442695
    %v7664 = vpow.pop %v7663
    %v7665 = vmul.f32 %v7658, 1.442695
    %v7666 = vpow.pop %v7665
    %v7667 = vadd.f32 %v7660, 1.0
    %v7668 = vadd.f32 %v7662, 1.0
    %v7669 = vadd.f32 %v7664, 1.0
    %v7670 = vadd.f32 %v7666, 1.0
    %v7671 = vrcp.pop %v7667
    %v7672 = vrcp.pop %v7668
    %v7673 = vrcp.pop %v7669
    %v7674 = vrcp.pop %v7670
    %v7675 = vtanh.pop %v7651
    %v7676 = vtanh.pop %v7652
    %v7677 = vsub.f32 0.0, %v7653
    %v7678 = vsub.f32 0.0, %v7654
    %v7679 = vmul.f32 %v7677, 1.442695
    %v7680 = vpow.pop %v7679
    %v7681 = vmul.f32 %v7678, 1.442695
    %v7682 = vpow.pop %v7681
    %v7683 = vadd.f32 %v7680, 1.0
    %v7684 = vadd.f32 %v7682, 1.0
    %v7685 = vrcp.pop %v7683
    %v7686 = vrcp.pop %v7684
    %v7687 = vmul.f32 %v7673, %v7094
    %v7688 = vmul.f32 %v7674, %v7095
    %v7689 = vmul.f32 %v7671, %v7675
    %v7690 = vmul.f32 %v7672, %v7676
    %v7691 = vadd.f32 %v7687, %v7689
    %v7692 = vadd.f32 %v7688, %v7690
    %v7693 = vtanh.pop %v7691
    %v7694 = vtanh.pop %v7692
    %v7695 = vmul.f32 %v7685, %v7693
    %v7696 = vmul.f32 %v7686, %v7694
    %v7697 = vpack.c.bf16 %v7695, %v7695
    %v7698 = vpack.c.bf16 %v7696, %v7696
    %v7699 = vpack.c.bf16 %v7472, %v7472
    %v7700 = vpack.c.bf16 %v7473, %v7473
    %7701 = vmatprep.subr.bf16.mxu0 %v3011
    %7702 = vmatpush1.bf16.msra.mxu0 %v3010
    %7703 = vmatprep.subr.bf16.mxu0 %v3019
    %7704 = vmatpush1.bf16.msra.mxu0 %v3018
    %7705 = vmatprep.subr.bf16.mxu0 %v3027
    %7706 = vmatpush1.bf16.msra.mxu0 %v3026
    %7707 = vmatprep.subr.bf16.mxu0 %v3035
    %7708 = vmatpush1.bf16.msra.mxu0 %v3034
    %7709 = vmatprep.subr.bf16.mxu0 %v3043
    %7710 = vmatpush1.bf16.msra.mxu0 %v3042
    %7711 = vmatprep.subr.bf16.mxu0 %v3051
    %7712 = vmatpush1.bf16.msra.mxu0 %v3050
    %7713 = vmatprep.subr.bf16.mxu0 %v3059
    %7714 = vmatpush1.bf16.msra.mxu0 %v3058
    %7715 = vmatprep.subr.bf16.mxu0 %v3067
    %7716 = vmatpush1.bf16.msra.mxu0 %v3066
    %7717 = vmatprep.subr.bf16.mxu0 %v3075
    %7718 = vmatpush1.bf16.msra.mxu0 %v3074
    %7719 = vmatprep.subr.bf16.mxu0 %v3083
    %7720 = vmatpush1.bf16.msra.mxu0 %v3082
    %7721 = vmatprep.subr.bf16.mxu0 %v3091
    %7722 = vmatpush1.bf16.msra.mxu0 %v3090
    %7723 = vmatprep.subr.bf16.mxu0 %v3099
    %7724 = vmatpush1.bf16.msra.mxu0 %v3098
    %7725 = vmatprep.subr.bf16.mxu0 %v3107
    %7726 = vmatpush1.bf16.msra.mxu0 %v3106
    %7727 = vmatprep.subr.bf16.mxu0 %v3115
    %7728 = vmatpush1.bf16.msra.mxu0 %v3114
    %7729 = vmatprep.subr.bf16.mxu0 %v3123
    %7730 = vmatpush1.bf16.msra.mxu0 %v3122
    %7731 = vmatprep.subr.bf16.mxu0 %v3131
    %7732 = vmatpush1.bf16.msra.mxu0 %v3130
    %7733 = vmatprep.mubr.bf16.mxu0 %v7698
    %7734 = vmatmul.mubr.bf16.gmra.mrb[0].mxu0 %v7697
    %v7735 = vpop.f32.mrb[0].mxu0
    %v7736 = vadd.f32 %v2205, %v7735
    %v7737 = vpop.f32.mrb[0].mxu0
    %v7738 = vadd.f32 %v2209, %v7737
    %v7739 = vpop.f32.mrb[0].mxu0
    %v7740 = vpop.f32.mrb[0].mxu0
    %7741 = vdwg.mxu0
    %7742 = vmatprep.subr.bf16.mxu0 %v3139
    %7743 = vmatpush1.bf16.msra.mxu0 %v3138
    %7744 = vmatprep.subr.bf16.mxu0 %v3147
    %7745 = vmatpush1.bf16.msra.mxu0 %v3146
    %7746 = vmatprep.subr.bf16.mxu0 %v3155
    %7747 = vmatpush1.bf16.msra.mxu0 %v3154
    %7748 = vmatprep.subr.bf16.mxu0 %v3163
    %7749 = vmatpush1.bf16.msra.mxu0 %v3162
    %7750 = vmatprep.subr.bf16.mxu0 %v3171
    %7751 = vmatpush1.bf16.msra.mxu0 %v3170
    %7752 = vmatprep.subr.bf16.mxu0 %v3179
    %7753 = vmatpush1.bf16.msra.mxu0 %v3178
    %7754 = vmatprep.subr.bf16.mxu0 %v3187
    %7755 = vmatpush1.bf16.msra.mxu0 %v3186
    %7756 = vmatprep.subr.bf16.mxu0 %v3195
    %7757 = vmatpush1.bf16.msra.mxu0 %v3194
    %7758 = vmatprep.subr.bf16.mxu0 %v3203
    %7759 = vmatpush1.bf16.msra.mxu0 %v3202
    %7760 = vmatprep.subr.bf16.mxu0 %v3211
    %7761 = vmatpush1.bf16.msra.mxu0 %v3210
    %7762 = vmatprep.subr.bf16.mxu0 %v3219
    %7763 = vmatpush1.bf16.msra.mxu0 %v3218
    %7764 = vmatprep.subr.bf16.mxu0 %v3227
    %7765 = vmatpush1.bf16.msra.mxu0 %v3226
    %7766 = vmatprep.subr.bf16.mxu0 %v3235
    %7767 = vmatpush1.bf16.msra.mxu0 %v3234
    %7768 = vmatprep.subr.bf16.mxu0 %v3243
    %7769 = vmatpush1.bf16.msra.mxu0 %v3242
    %7770 = vmatprep.subr.bf16.mxu0 %v3251
    %7771 = vmatpush1.bf16.msra.mxu0 %v3250
    %7772 = vmatprep.subr.bf16.mxu0 %v3259
    %7773 = vmatpush1.bf16.msra.mxu0 %v3258
    %7774 = vmatprep.mubr.bf16.mxu0 %v7700
    %7775 = vmatmul.mubr.bf16.gmra.mrb[0].mxu0 %v7699
    %v7776 = vpop.f32.mrb[0].mxu0
    %v7777 = vadd.f32 %v7736, %v7776
    %v7778 = vpop.f32.mrb[0].mxu0
    %v7779 = vadd.f32 %v7738, %v7778
    %v7780 = vpop.f32.mrb[0].mxu0
    %v7781 = vpop.f32.mrb[0].mxu0
    %7782 = vdwg.mxu0
    %7783 = vmatprep.subr.bf16.mxu0 %v3013
    %7784 = vmatpush1.bf16.msra.mxu0 %v3012
    %7785 = vmatprep.subr.bf16.mxu0 %v3021
    %7786 = vmatpush1.bf16.msra.mxu0 %v3020
    %7787 = vmatprep.subr.bf16.mxu0 %v3029
    %7788 = vmatpush1.bf16.msra.mxu0 %v3028
    %7789 = vmatprep.subr.bf16.mxu0 %v3037
    %7790 = vmatpush1.bf16.msra.mxu0 %v3036
    %7791 = vmatprep.subr.bf16.mxu0 %v3045
    %7792 = vmatpush1.bf16.msra.mxu0 %v3044
    %7793 = vmatprep.subr.bf16.mxu0 %v3053
    %7794 = vmatpush1.bf16.msra.mxu0 %v3052
    %7795 = vmatprep.subr.bf16.mxu0 %v3061
    %7796 = vmatpush1.bf16.msra.mxu0 %v3060
    %7797 = vmatprep.subr.bf16.mxu0 %v3069
    %7798 = vmatpush1.bf16.msra.mxu0 %v3068
    %7799 = vmatprep.subr.bf16.mxu0 %v3077
    %7800 = vmatpush1.bf16.msra.mxu0 %v3076
    %7801 = vmatprep.subr.bf16.mxu0 %v3085
    %7802 = vmatpush1.bf16.msra.mxu0 %v3084
    %7803 = vmatprep.subr.bf16.mxu0 %v3093
    %7804 = vmatpush1.bf16.msra.mxu0 %v3092
    %7805 = vmatprep.subr.bf16.mxu0 %v3101
    %7806 = vmatpush1.bf16.msra.mxu0 %v3100
    %7807 = vmatprep.subr.bf16.mxu0 %v3109
    %7808 = vmatpush1.bf16.msra.mxu0 %v3108
    %7809 = vmatprep.subr.bf16.mxu0 %v3117
    %7810 = vmatpush1.bf16.msra.mxu0 %v3116
    %7811 = vmatprep.subr.bf16.mxu0 %v3125
    %7812 = vmatpush1.bf16.msra.mxu0 %v3124
    %7813 = vmatprep.subr.bf16.mxu0 %v3133
    %7814 = vmatpush1.bf16.msra.mxu0 %v3132
    %7815 = vmatprep.mubr.bf16.mxu0 %v7698
    %7816 = vmatmul.mubr.bf16.gmra.mrb[0].mxu0 %v7697
    %v7817 = vpop.f32.mrb[0].mxu0
    %v7818 = vadd.f32 %v2213, %v7817
    %v7819 = vpop.f32.mrb[0].mxu0
    %v7820 = vadd.f32 %v2217, %v7819
    %v7821 = vpop.f32.mrb[0].mxu0
    %v7822 = vpop.f32.mrb[0].mxu0
    %7823 = vdwg.mxu0
    %7824 = vmatprep.subr.bf16.mxu0 %v3141
    %7825 = vmatpush1.bf16.msra.mxu0 %v3140
    %7826 = vmatprep.subr.bf16.mxu0 %v3149
    %7827 = vmatpush1.bf16.msra.mxu0 %v3148
    %7828 = vmatprep.subr.bf16.mxu0 %v3157
    %7829 = vmatpush1.bf16.msra.mxu0 %v3156
    %7830 = vmatprep.subr.bf16.mxu0 %v3165
    %7831 = vmatpush1.bf16.msra.mxu0 %v3164
    %7832 = vmatprep.subr.bf16.mxu0 %v3173
    %7833 = vmatpush1.bf16.msra.mxu0 %v3172
    %7834 = vmatprep.subr.bf16.mxu0 %v3181
    %7835 = vmatpush1.bf16.msra.mxu0 %v3180
    %7836 = vmatprep.subr.bf16.mxu0 %v3189
    %7837 = vmatpush1.bf16.msra.mxu0 %v3188
    %7838 = vmatprep.subr.bf16.mxu0 %v3197
    %7839 = vmatpush1.bf16.msra.mxu0 %v3196
    %7840 = vmatprep.subr.bf16.mxu0 %v3205
    %7841 = vmatpush1.bf16.msra.mxu0 %v3204
    %7842 = vmatprep.subr.bf16.mxu0 %v3213
    %7843 = vmatpush1.bf16.msra.mxu0 %v3212
    %7844 = vmatprep.subr.bf16.mxu0 %v3221
    %7845 = vmatpush1.bf16.msra.mxu0 %v3220
    %7846 = vmatprep.subr.bf16.mxu0 %v3229
    %7847 = vmatpush1.bf16.msra.mxu0 %v3228
    %7848 = vmatprep.subr.bf16.mxu0 %v3237
    %7849 = vmatpush1.bf16.msra.mxu0 %v3236
    %7850 = vmatprep.subr.bf16.mxu0 %v3245
    %7851 = vmatpush1.bf16.msra.mxu0 %v3244
    %7852 = vmatprep.subr.bf16.mxu0 %v3253
    %7853 = vmatpush1.bf16.msra.mxu0 %v3252
    %7854 = vmatprep.subr.bf16.mxu0 %v3261
    %7855 = vmatpush1.bf16.msra.mxu0 %v3260
    %7856 = vmatprep.mubr.bf16.mxu0 %v7700
    %7857 = vmatmul.mubr.bf16.gmra.mrb[0].mxu0 %v7699
    %v7858 = vpop.f32.mrb[0].mxu0
    %v7859 = vadd.f32 %v7818, %v7858
    %v7860 = vpop.f32.mrb[0].mxu0
    %v7861 = vadd.f32 %v7820, %v7860
    %v7862 = vpop.f32.mrb[0].mxu0
    %v7863 = vpop.f32.mrb[0].mxu0
    %7864 = vdwg.mxu0
    %7865 = vmatprep.subr.bf16.mxu0 %v3015
    %7866 = vmatpush1.bf16.msra.mxu0 %v3014
    %7867 = vmatprep.subr.bf16.mxu0 %v3023
    %7868 = vmatpush1.bf16.msra.mxu0 %v3022
    %7869 = vmatprep.subr.bf16.mxu0 %v3031
    %7870 = vmatpush1.bf16.msra.mxu0 %v3030
    %7871 = vmatprep.subr.bf16.mxu0 %v3039
    %7872 = vmatpush1.bf16.msra.mxu0 %v3038
    %7873 = vmatprep.subr.bf16.mxu0 %v3047
    %7874 = vmatpush1.bf16.msra.mxu0 %v3046
    %7875 = vmatprep.subr.bf16.mxu0 %v3055
    %7876 = vmatpush1.bf16.msra.mxu0 %v3054
    %7877 = vmatprep.subr.bf16.mxu0 %v3063
    %7878 = vmatpush1.bf16.msra.mxu0 %v3062
    %7879 = vmatprep.subr.bf16.mxu0 %v3071
    %7880 = vmatpush1.bf16.msra.mxu0 %v3070
    %7881 = vmatprep.subr.bf16.mxu0 %v3079
    %7882 = vmatpush1.bf16.msra.mxu0 %v3078
    %7883 = vmatprep.subr.bf16.mxu0 %v3087
    %7884 = vmatpush1.bf16.msra.mxu0 %v3086
    %7885 = vmatprep.subr.bf16.mxu0 %v3095
    %7886 = vmatpush1.bf16.msra.mxu0 %v3094
    %7887 = vmatprep.subr.bf16.mxu0 %v3103
    %7888 = vmatpush1.bf16.msra.mxu0 %v3102
    %7889 = vmatprep.subr.bf16.mxu0 %v3111
    %7890 = vmatpush1.bf16.msra.mxu0 %v3110
    %7891 = vmatprep.subr.bf16.mxu0 %v3119
    %7892 = vmatpush1.bf16.msra.mxu0 %v3118
    %7893 = vmatprep.subr.bf16.mxu0 %v3127
    %7894 = vmatpush1.bf16.msra.mxu0 %v3126
    %7895 = vmatprep.subr.bf16.mxu0 %v3135
    %7896 = vmatpush1.bf16.msra.mxu0 %v3134
    %7897 = vmatprep.mubr.bf16.mxu0 %v7698
    %7898 = vmatmul.mubr.bf16.gmra.mrb[0].mxu0 %v7697
    %v7899 = vpop.f32.mrb[0].mxu0
    %v7900 = vadd.f32 %v2221, %v7899
    %v7901 = vpop.f32.mrb[0].mxu0
    %v7902 = vadd.f32 %v2225, %v7901
    %v7903 = vpop.f32.mrb[0].mxu0
    %v7904 = vpop.f32.mrb[0].mxu0
    %7905 = vdwg.mxu0
    %7906 = vmatprep.subr.bf16.mxu0 %v3143
    %7907 = vmatpush1.bf16.msra.mxu0 %v3142
    %7908 = vmatprep.subr.bf16.mxu0 %v3151
    %7909 = vmatpush1.bf16.msra.mxu0 %v3150
    %7910 = vmatprep.subr.bf16.mxu0 %v3159
    %7911 = vmatpush1.bf16.msra.mxu0 %v3158
    %7912 = vmatprep.subr.bf16.mxu0 %v3167
    %7913 = vmatpush1.bf16.msra.mxu0 %v3166
    %7914 = vmatprep.subr.bf16.mxu0 %v3175
    %7915 = vmatpush1.bf16.msra.mxu0 %v3174
    %7916 = vmatprep.subr.bf16.mxu0 %v3183
    %7917 = vmatpush1.bf16.msra.mxu0 %v3182
    %7918 = vmatprep.subr.bf16.mxu0 %v3191
    %7919 = vmatpush1.bf16.msra.mxu0 %v3190
    %7920 = vmatprep.subr.bf16.mxu0 %v3199
    %7921 = vmatpush1.bf16.msra.mxu0 %v3198
    %7922 = vmatprep.subr.bf16.mxu0 %v3207
    %7923 = vmatpush1.bf16.msra.mxu0 %v3206
    %7924 = vmatprep.subr.bf16.mxu0 %v3215
    %7925 = vmatpush1.bf16.msra.mxu0 %v3214
    %7926 = vmatprep.subr.bf16.mxu0 %v3223
    %7927 = vmatpush1.bf16.msra.mxu0 %v3222
    %7928 = vmatprep.subr.bf16.mxu0 %v3231
    %7929 = vmatpush1.bf16.msra.mxu0 %v3230
    %7930 = vmatprep.subr.bf16.mxu0 %v3239
    %7931 = vmatpush1.bf16.msra.mxu0 %v3238
    %7932 = vmatprep.subr.bf16.mxu0 %v3247
    %7933 = vmatpush1.bf16.msra.mxu0 %v3246
    %7934 = vmatprep.subr.bf16.mxu0 %v3255
    %7935 = vmatpush1.bf16.msra.mxu0 %v3254
    %7936 = vmatprep.subr.bf16.mxu0 %v3263
    %7937 = vmatpush1.bf16.msra.mxu0 %v3262
    %7938 = vmatprep.mubr.bf16.mxu0 %v7700
    %7939 = vmatmul.mubr.bf16.gmra.mrb[0].mxu0 %v7699
    %v7940 = vpop.f32.mrb[0].mxu0
    %v7941 = vadd.f32 %v7900, %v7940
    %v7942 = vpop.f32.mrb[0].mxu0
    %v7943 = vadd.f32 %v7902, %v7942
    %v7944 = vpop.f32.mrb[0].mxu0
    %v7945 = vpop.f32.mrb[0].mxu0
    %7946 = vdwg.mxu0
    %7947 = vmatprep.subr.bf16.mxu0 %v3017
    %7948 = vmatpush1.bf16.msra.mxu0 %v3016
    %7949 = vmatprep.subr.bf16.mxu0 %v3025
    %7950 = vmatpush1.bf16.msra.mxu0 %v3024
    %7951 = vmatprep.subr.bf16.mxu0 %v3033
    %7952 = vmatpush1.bf16.msra.mxu0 %v3032
    %7953 = vmatprep.subr.bf16.mxu0 %v3041
    %7954 = vmatpush1.bf16.msra.mxu0 %v3040
    %7955 = vmatprep.subr.bf16.mxu0 %v3049
    %7956 = vmatpush1.bf16.msra.mxu0 %v3048
    %7957 = vmatprep.subr.bf16.mxu0 %v3057
    %7958 = vmatpush1.bf16.msra.mxu0 %v3056
    %7959 = vmatprep.subr.bf16.mxu0 %v3065
    %7960 = vmatpush1.bf16.msra.mxu0 %v3064
    %7961 = vmatprep.subr.bf16.mxu0 %v3073
    %7962 = vmatpush1.bf16.msra.mxu0 %v3072
    %7963 = vmatprep.subr.bf16.mxu0 %v3081
    %7964 = vmatpush1.bf16.msra.mxu0 %v3080
    %7965 = vmatprep.subr.bf16.mxu0 %v3089
    %7966 = vmatpush1.bf16.msra.mxu0 %v3088
    %7967 = vmatprep.subr.bf16.mxu0 %v3097
    %7968 = vmatpush1.bf16.msra.mxu0 %v3096
    %7969 = vmatprep.subr.bf16.mxu0 %v3105
    %7970 = vmatpush1.bf16.msra.mxu0 %v3104
    %7971 = vmatprep.subr.bf16.mxu0 %v3113
    %7972 = vmatpush1.bf16.msra.mxu0 %v3112
    %7973 = vmatprep.subr.bf16.mxu0 %v3121
    %7974 = vmatpush1.bf16.msra.mxu0 %v3120
    %7975 = vmatprep.subr.bf16.mxu0 %v3129
    %7976 = vmatpush1.bf16.msra.mxu0 %v3128
    %7977 = vmatprep.subr.bf16.mxu0 %v3137
    %7978 = vmatpush1.bf16.msra.mxu0 %v3136
    %7979 = vmatprep.mubr.bf16.mxu0 %v7698
    %7980 = vmatmul.mubr.bf16.gmra.mrb[0].mxu0 %v7697
    %v7981 = vpop.f32.mrb[0].mxu0
    %v7982 = vadd.f32 %v2229, %v7981
    %v7983 = vpop.f32.mrb[0].mxu0
    %v7984 = vadd.f32 %v2233, %v7983
    %v7985 = vpop.f32.mrb[0].mxu0
    %v7986 = vpop.f32.mrb[0].mxu0
    %7987 = vdwg.mxu0
    %7988 = vmatprep.subr.bf16.mxu0 %v3145
    %7989 = vmatpush1.bf16.msra.mxu0 %v3144
    %7990 = vmatprep.subr.bf16.mxu0 %v3153
    %7991 = vmatpush1.bf16.msra.mxu0 %v3152
    %7992 = vmatprep.subr.bf16.mxu0 %v3161
    %7993 = vmatpush1.bf16.msra.mxu0 %v3160
    %7994 = vmatprep.subr.bf16.mxu0 %v3169
    %7995 = vmatpush1.bf16.msra.mxu0 %v3168
    %7996 = vmatprep.subr.bf16.mxu0 %v3177
    %7997 = vmatpush1.bf16.msra.mxu0 %v3176
    %7998 = vmatprep.subr.bf16.mxu0 %v3185
    %7999 = vmatpush1.bf16.msra.mxu0 %v3184
    %8000 = vmatprep.subr.bf16.mxu0 %v3193
    %8001 = vmatpush1.bf16.msra.mxu0 %v3192
    %8002 = vmatprep.subr.bf16.mxu0 %v3201
    %8003 = vmatpush1.bf16.msra.mxu0 %v3200
    %8004 = vmatprep.subr.bf16.mxu0 %v3209
    %8005 = vmatpush1.bf16.msra.mxu0 %v3208
    %8006 = vmatprep.subr.bf16.mxu0 %v3217
    %8007 = vmatpush1.bf16.msra.mxu0 %v3216
    %8008 = vmatprep.subr.bf16.mxu0 %v3225
    %8009 = vmatpush1.bf16.msra.mxu0 %v3224
    %8010 = vmatprep.subr.bf16.mxu0 %v3233
    %8011 = vmatpush1.bf16.msra.mxu0 %v3232
    %8012 = vmatprep.subr.bf16.mxu0 %v3241
    %8013 = vmatpush1.bf16.msra.mxu0 %v3240
    %8014 = vmatprep.subr.bf16.mxu0 %v3249
    %8015 = vmatpush1.bf16.msra.mxu0 %v3248
    %8016 = vmatprep.subr.bf16.mxu0 %v3257
    %8017 = vmatpush1.bf16.msra.mxu0 %v3256
    %8018 = vmatprep.subr.bf16.mxu0 %v3265
    %8019 = vmatpush1.bf16.msra.mxu0 %v3264
    %8020 = vmatprep.mubr.bf16.mxu0 %v7700
    %8021 = vmatmul.mubr.bf16.gmra.mrb[0].mxu0 %v7699
    %v8022 = vpop.f32.mrb[0].mxu0
    %v8023 = vadd.f32 %v7982, %v8022
    %v8024 = vpop.f32.mrb[0].mxu0
    %v8025 = vadd.f32 %v7984, %v8024
    %v8026 = vpop.f32.mrb[0].mxu0
    %v8027 = vpop.f32.mrb[0].mxu0
    %8028 = vdwg.mxu0
    %v8029 = vsub.f32 0.0, %v7777
    %v8030 = vsub.f32 0.0, %v7779
    %v8031 = vsub.f32 0.0, %v7859
    %v8032 = vsub.f32 0.0, %v7861
    %v8033 = vmul.f32 %v8029, 1.442695
    %v8034 = vpow.pop %v8033
    %v8035 = vmul.f32 %v8030, 1.442695
    %v8036 = vpow.pop %v8035
    %v8037 = vmul.f32 %v8031, 1.442695
    %v8038 = vpow.pop %v8037
    %v8039 = vmul.f32 %v8032, 1.442695
    %v8040 = vpow.pop %v8039
    %v8041 = vadd.f32 %v8034, 1.0
    %v8042 = vadd.f32 %v8036, 1.0
    %v8043 = vadd.f32 %v8038, 1.0
    %v8044 = vadd.f32 %v8040, 1.0
    %v8045 = vrcp.pop %v8041
    %v8046 = vrcp.pop %v8042
    %v8047 = vrcp.pop %v8043
    %v8048 = vrcp.pop %v8044
    %v8049 = vtanh.pop %v7941
    %v8050 = vtanh.pop %v7943
    %v8051 = vsub.f32 0.0, %v8023
    %v8052 = vsub.f32 0.0, %v8025
    %v8053 = vmul.f32 %v8051, 1.442695
    %v8054 = vpow.pop %v8053
    %v8055 = vmul.f32 %v8052, 1.442695
    %v8056 = vpow.pop %v8055
    %v8057 = vadd.f32 %v8054, 1.0
    %v8058 = vadd.f32 %v8056, 1.0
    %v8059 = vrcp.pop %v8057
    %v8060 = vrcp.pop %v8058
    %v8061 = vmul.f32 %v8047, %v7468
    %v8062 = vmul.f32 %v8048, %v7469
    %v8063 = vmul.f32 %v8045, %v8049
    %v8064 = vmul.f32 %v8046, %v8050
    %v8065 = vadd.f32 %v8061, %v8063
    %v8066 = vadd.f32 %v8062, %v8064
    %v8067 = vtanh.pop %v8065
    %v8068 = vtanh.pop %v8066
    %v8069 = vmul.f32 %v8059, %v8067
    %v8070 = vmul.f32 %v8060, %v8068
    %v8071 = vpack.c.bf16 %v8069, %v8069
    %v8072 = vpack.c.bf16 %v8070, %v8070
    %v8073 = vld [vmem:[%s8] sm:$0xf]
    %v8074 = vld [vmem:[%s8 + $0x4] sm:$0xf]
    %v8075 = vld [vmem:[%s8 + $0x8] sm:$0xf]
    %v8076 = vld [vmem:[%s8 + $0xc] sm:$0xf]
    %v8077 = vld [vmem:[%s8 + $0x10] sm:$0xf]
    %v8078 = vld [vmem:[%s8 + $0x14] sm:$0xf]
    %v8079 = vld [vmem:[%s8 + $0x18] sm:$0xf]
    %v8080 = vld [vmem:[%s8 + $0x1c] sm:$0xf]
    %v8081 = vld [vmem:[%s8 + $0x20] sm:$0xf]
    %v8082 = vld [vmem:[%s8 + $0x24] sm:$0xf]
    %v8083 = vld [vmem:[%s8 + $0x28] sm:$0xf]
    %v8084 = vld [vmem:[%s8 + $0x2c] sm:$0xf]
    %v8085 = vld [vmem:[%s8 + $0x30] sm:$0xf]
    %v8086 = vld [vmem:[%s8 + $0x34] sm:$0xf]
    %v8087 = vld [vmem:[%s8 + $0x38] sm:$0xf]
    %v8088 = vld [vmem:[%s8 + $0x3c] sm:$0xf]
    %v8089 = vld [vmem:[%s8 + $0x40] sm:$0xf]
    %v8090 = vld [vmem:[%s8 + $0x44] sm:$0xf]
    %v8091 = vld [vmem:[%s8 + $0x48] sm:$0xf]
    %v8092 = vld [vmem:[%s8 + $0x4c] sm:$0xf]
    %v8093 = vld [vmem:[%s8 + $0x50] sm:$0xf]
    %v8094 = vld [vmem:[%s8 + $0x54] sm:$0xf]
    %v8095 = vld [vmem:[%s8 + $0x58] sm:$0xf]
    %v8096 = vld [vmem:[%s8 + $0x5c] sm:$0xf]
    %v8097 = vld [vmem:[%s8 + $0x60] sm:$0xf]
    %v8098 = vld [vmem:[%s8 + $0x64] sm:$0xf]
    %v8099 = vld [vmem:[%s8 + $0x68] sm:$0xf]
    %v8100 = vld [vmem:[%s8 + $0x6c] sm:$0xf]
    %v8101 = vld [vmem:[%s8 + $0x70] sm:$0xf]
    %v8102 = vld [vmem:[%s8 + $0x74] sm:$0xf]
    %v8103 = vld [vmem:[%s8 + $0x78] sm:$0xf]
    %v8104 = vld [vmem:[%s8 + $0x7c] sm:$0xf]
    %v8105 = vld [vmem:[%s9] sm:$0x1]
    %v8107 = vlaneseq
    %v8108 = vshrl.u32 %v8107, 7
    %v8109 = vsub.s32 0, %v8108
    %v8110 = vrot.slane %v8105, %v8109
    %v8144 = vunpack.c.l.b16 %v8073
    %v8145 = vunpack.c.l.b16 %v8074
    %v8146 = vunpack.c.l.b16 %v8075
    %v8147 = vunpack.c.l.b16 %v8076
    %v8148 = vunpack.c.l.b16 %v8077
    %v8149 = vunpack.c.l.b16 %v8078
    %v8150 = vunpack.c.l.b16 %v8079
    %v8151 = vunpack.c.l.b16 %v8080
    %v8152 = vunpack.c.l.b16 %v8081
    %v8153 = vunpack.c.l.b16 %v8082
    %v8154 = vunpack.c.l.b16 %v8083
    %v8155 = vunpack.c.l.b16 %v8084
    %v8156 = vunpack.c.l.b16 %v8085
    %v8157 = vunpack.c.l.b16 %v8086
    %v8158 = vunpack.c.l.b16 %v8087
    %v8159 = vunpack.c.l.b16 %v8088
    %v8160 = vunpack.c.l.b16 %v8089
    %v8161 = vunpack.c.l.b16 %v8090
    %v8162 = vunpack.c.l.b16 %v8091
    %v8163 = vunpack.c.l.b16 %v8092
    %v8164 = vunpack.c.l.b16 %v8093
    %v8165 = vunpack.c.l.b16 %v8094
    %v8166 = vunpack.c.l.b16 %v8095
    %v8167 = vunpack.c.l.b16 %v8096
    %v8168 = vunpack.c.l.b16 %v8097
    %v8169 = vunpack.c.l.b16 %v8098
    %v8170 = vunpack.c.l.b16 %v8099
    %v8171 = vunpack.c.l.b16 %v8100
    %v8172 = vunpack.c.l.b16 %v8101
    %v8173 = vunpack.c.l.b16 %v8102
    %v8174 = vunpack.c.l.b16 %v8103
    %v8175 = vunpack.c.l.b16 %v8104
    %v8176 = vpack.c.b16 %v8145, %v8144
    %v8177 = vpack.c.b16 %v8147, %v8146
    %v8178 = vpack.c.b16 %v8149, %v8148
    %v8179 = vpack.c.b16 %v8151, %v8150
    %v8180 = vpack.c.b16 %v8153, %v8152
    %v8181 = vpack.c.b16 %v8155, %v8154
    %v8182 = vpack.c.b16 %v8157, %v8156
    %v8183 = vpack.c.b16 %v8159, %v8158
    %v8184 = vpack.c.b16 %v8161, %v8160
    %v8185 = vpack.c.b16 %v8163, %v8162
    %v8186 = vpack.c.b16 %v8165, %v8164
    %v8187 = vpack.c.b16 %v8167, %v8166
    %v8188 = vpack.c.b16 %v8169, %v8168
    %v8189 = vpack.c.b16 %v8171, %v8170
    %v8190 = vpack.c.b16 %v8173, %v8172
    %v8191 = vpack.c.b16 %v8175, %v8174
    %8208 = vmatprep.subr.bf16.mxu0 0
    %8209 = vmatpush1.bf16.msra.mxu0 %v8176
    %8210 = vmatprep.subr.bf16.mxu0 0
    %8211 = vmatpush1.bf16.msra.mxu0 %v8177
    %8212 = vmatprep.subr.bf16.mxu0 0
    %8213 = vmatpush1.bf16.msra.mxu0 %v8178
    %8214 = vmatprep.subr.bf16.mxu0 0
    %8215 = vmatpush1.bf16.msra.mxu0 %v8179
    %8216 = vmatprep.subr.bf16.mxu0 0
    %8217 = vmatpush1.bf16.msra.mxu0 %v8180
    %8218 = vmatprep.subr.bf16.mxu0 0
    %8219 = vmatpush1.bf16.msra.mxu0 %v8181
    %8220 = vmatprep.subr.bf16.mxu0 0
    %8221 = vmatpush1.bf16.msra.mxu0 %v8182
    %8222 = vmatprep.subr.bf16.mxu0 0
    %8223 = vmatpush1.bf16.msra.mxu0 %v8183
    %8224 = vmatprep.subr.bf16.mxu0 0
    %8225 = vmatpush1.bf16.msra.mxu0 %v8184
    %8226 = vmatprep.subr.bf16.mxu0 0
    %8227 = vmatpush1.bf16.msra.mxu0 %v8185
    %8228 = vmatprep.subr.bf16.mxu0 0
    %8229 = vmatpush1.bf16.msra.mxu0 %v8186
    %8230 = vmatprep.subr.bf16.mxu0 0
    %8231 = vmatpush1.bf16.msra.mxu0 %v8187
    %8232 = vmatprep.subr.bf16.mxu0 0
    %8233 = vmatpush1.bf16.msra.mxu0 %v8188
    %8234 = vmatprep.subr.bf16.mxu0 0
    %8235 = vmatpush1.bf16.msra.mxu0 %v8189
    %8236 = vmatprep.subr.bf16.mxu0 0
    %8237 = vmatpush1.bf16.msra.mxu0 %v8190
    %8238 = vmatprep.subr.bf16.mxu0 0
    %8239 = vmatpush1.bf16.msra.mxu0 %v8191
    %8240 = vmatprep.mubr.bf16.mxu0 %v8072
    %8241 = vmatmul.mubr.bf16.gmra.mrb[0].mxu0 %v8071
    %v8242 = vpop.f32.mrb[0].mxu0
    %v8243 = vadd.f32 %v8110, %v8242
    %v8244 = vpop.f32.mrb[0].mxu0
    %v8245 = vpop.f32.mrb[0].mxu0
    %v8246 = vpop.f32.mrb[0].mxu0
    %8247 = vdwg.mxu0
    %v8248 = vxor.u32 %v8243, 2147483648
    %v8249 = vmul.f32 %v8248, 1.442695
    %v8250 = vpow.pop %v8249
    %v8251 = vadd.f32 %v8250, 1.0
    %v8252 = vrcp.pop %v8251
    %v8253 = vmul.f32 1.0, %v8252
    %8254 = vst [vmem:[%s10] sm:$0xff] %v8253
    %8255 = vst [vmem:[%s11] sm:$0xff] %v7695
    %8256 = vst [vmem:[%s11 + $0x8] sm:$0xff] %v7696
    %s8257 = scalar_lea.vmem %s11, 16
    %8258 = vst [vmem:[%s8257] sm:$0xff] %v8069
    %8259 = vst [vmem:[%s8257 + $0x8] sm:$0xff] %v8070
    %8260 = vst [vmem:[%s12] sm:$0xff] %v7691
    %8261 = vst [vmem:[%s12 + $0x8] sm:$0xff] %v7692
    %s8262 = scalar_lea.vmem %s12, 16
    %8263 = vst [vmem:[%s8262] sm:$0xff] %v8065
    %8264 = vst [vmem:[%s8262 + $0x8] sm:$0xff] %v8066
    // Predicated region
    $region54: #{lstm_name_forward.1} parent=1 // pred_check
      _
    $region55: #{lstm_name_forward.1} parent=1 // pred_check_branch
      %8266 = sbr.rel (0) target = $region57
    $region56: #{lstm_name_forward.1} parent=1 // pred_region
      _
    $region57: #{lstm_name_forward.1} parent=1 // pred_fallthru
      _
    // Predicated region
    $region58: #{lstm_name_forward.1} parent=1 // pred_check
      _
    $region59: #{lstm_name_forward.1} parent=1 // pred_check_branch
      %8268 = sbr.rel (0) target = $region61
    $region60: #{lstm_name_forward.1} parent=1 // pred_region
      _
    $region61: #{lstm_name_forward.1} parent=1 // pred_fallthru
      _
    // Predicated region
    $region62: #{lstm_name_forward.1} parent=1 // pred_check
      _
    $region63: #{lstm_name_forward.1} parent=1 // pred_check_branch
      %8270 = sbr.rel (0) target = $region65
    $region64: #{lstm_name_forward.1} parent=1 // pred_region
      _
    $region65: #{lstm_name_forward.1} parent=1 // pred_fallthru
      _
    // Predicated region
    $region66: #{lstm_name_forward.1} parent=1 // pred_check
      _
    $region67: #{lstm_name_forward.1} parent=1 // pred_check_branch
      %8272 = sbr.rel (0) target = $region69
    $region68: #{lstm_name_forward.1} parent=1 // pred_region
      _
    $region69: #{lstm_name_forward.1} parent=1 // pred_fallthru
      _
    // Predicated region
    $region70: #{lstm_name_forward.1} parent=1 // pred_check
      _
    $region71: #{lstm_name_forward.1} parent=1 // pred_check_branch
      %8274 = sbr.rel (0) target = $region73
    $region72: #{lstm_name_forward.1} parent=1 // pred_region
      _
    $region73: #{lstm_name_forward.1} parent=1 // pred_fallthru
      _
    // Predicated region
    $region74: #{lstm_name_forward.1} parent=1 // pred_check
      _
    $region75: #{lstm_name_forward.1} parent=1 // pred_check_branch
      %8276 = sbr.rel (0) target = $region77
    $region76: #{lstm_name_forward.1} parent=1 // pred_region
      _
    $region77: #{lstm_name_forward.1} parent=1 // pred_fallthru
      _
    %8277 = vsyncpa [#allocation4], 1
    %8278 = vsyncpa [#allocation6], 1

</llo_original>
